<compile_context>
chip_gen: v7x
topology: tpu7x:2x2x1
jax: 0.10.0
libtpu: 0.0.40
codegen_flags: <defaults>
</compile_context>

<pallas_src>
import math
from collections import namedtuple

import numpy as np
import jax
import jax.numpy as jnp
from jax.experimental import pallas as pl
from jax.experimental.pallas import tpu as pltpu

SphericalPointCloud = namedtuple("SphericalPointCloud", ["xyz", "feats", "anchors"])

KERNEL_CONDENSE_RATIO = 0.7


# ----------------------------------------------------------------------------
# Synthetic deterministic stand-ins for vgtk's .ply assets
# ----------------------------------------------------------------------------
def get_anchors(kanchor=60):
    # TODO(synk): real vgtk anchors are the 60 icosahedral rotations loaded from a
    # .ply asset; deterministic z-rotations are used here instead.
    ang = np.linspace(0.0, 2.0 * np.pi, kanchor, endpoint=False)
    c, s = np.cos(ang), np.sin(ang)
    z, o = np.zeros_like(c), np.ones_like(c)
    R = np.stack([np.stack([c, -s, z], -1),
                  np.stack([s, c, z], -1),
                  np.stack([z, z, o], -1)], -2)
    return jnp.asarray(R, jnp.float32)                       # [na, 3, 3]


def get_spherical_kernel_points(kernel_size, radius):
    # TODO(synk): real vgtk loads spherical kernel point locations from a .ply asset;
    # deterministic Fibonacci-sphere points + centre are used instead.
    n = max(kernel_size - 1, 1)
    i = np.arange(n)
    phi = np.arccos(1.0 - 2.0 * (i + 0.5) / n)
    theta = np.pi * (1.0 + 5.0 ** 0.5) * i
    pts = np.stack([np.sin(phi) * np.cos(theta),
                    np.sin(phi) * np.sin(theta),
                    np.cos(phi)], -1) * radius
    pts = np.concatenate([np.zeros((1, 3)), pts], 0)[:kernel_size]
    return jnp.asarray(pts, jnp.float32)                     # [ks, 3]


# ----------------------------------------------------------------------------
# JAX glue: mirrors L.inter_so3conv_grouping (geometry + index precompute)
# ----------------------------------------------------------------------------
def inter_so3conv_grouping(xyz, feats, stride, n_neighbor, anchors, kernels,
                           radius, sigma, inter_idx=None, inter_w=None):
    """xyz: [nb,3,p1], feats: [nb,c,p1,na]
    -> (inter_idx [nb,p2,nn], inter_w [nb,p2,na,ks,nn], new_xyz [nb,3,p2],
        grouped_feats [nb,c,p2,nn,na], sample_idx [p2])"""
    nb, _, p1 = xyz.shape
    sample_idx = jnp.arange(0, p1, stride, dtype=jnp.int32)
    # TODO(synk): vgtk uses furthest-point sampling when stride > 1.
    new_xyz = xyz[:, :, ::stride]                            # [nb, 3, p2]

    if inter_idx is None:
        d2 = jnp.sum((new_xyz[:, :, :, None] - xyz[:, :, None, :]) ** 2, axis=1)
        # TODO(synk): real ball_query restricts to `radius`; nearest-n is used here
        # (far neighbours receive ~zero kernel weight below anyway).
        _, inter_idx = jax.lax.top_k(-d2, n_neighbor)        # [nb, p2, nn]

    if inter_w is None:
        g_xyz = jax.vmap(lambda p, i: p[:, i])(xyz, inter_idx)        # [nb,3,p2,nn]
        g_xyz = g_xyz - new_xyz[:, :, :, None]
        rk = jnp.einsum("aij,kj->aki", anchors, kernels)               # [na, ks, 3]
        diff = (g_xyz[:, :, :, None, None, :]
                - jnp.transpose(rk, (2, 0, 1))[None, :, None, :, :, None])
        d2k = jnp.sum(diff ** 2, axis=1)                               # [nb,p2,na,ks,nn]
        inter_w = jax.nn.relu(1.0 - d2k / sigma)

    # Neighbour gather (data-dependent indices) done as XLA glue.
    # TODO(synk): could be turned into an in-kernel DMA gather to cut HBM traffic
    # by another ~n_neighbor x.
    grouped_feats = jax.vmap(lambda f, i: f[:, i, :])(feats, inter_idx)  # [nb,c,p2,nn,na]
    return inter_idx, inter_w, new_xyz, grouped_feats, sample_idx


# ----------------------------------------------------------------------------
# Pallas kernel: fused kernel-weight contraction + BasicSO3Conv matmul
# ----------------------------------------------------------------------------
def _inter_so3_kernel(w2_ref, wk_ref, gx_ref, o_ref, h_ref):
    """w2_ref: (co, K) bf16        conv weight, K = c_in * ks_pad
       wk_ref: (1, ks_pad, nn, TM) bf16   anchor-kernel weights tile
       gx_ref: (1, c_in,  nn, TM) bf16   gathered neighbour feats tile
       o_ref : (1, co, TM) f32
       h_ref : (K, TM) bf16        VMEM scratch for the grouped tensor (never in HBM)
    """
    ks_pad = wk_ref.shape[1]
    c_in = gx_ref.shape[1]
    wk = wk_ref[0].astype(jnp.float32)                      # (ks_pad, nn, TM)
    gx = gx_ref[0].astype(jnp.float32)                      # (c_in,  nn, TM)
    for c in range(c_in):                                   # static unroll (small)
        hc = jnp.sum(wk * gx[c][None, :, :], axis=1)        # (ks_pad, TM), f32 accum
        h_ref[c * ks_pad:(c + 1) * ks_pad, :] = hc.astype(h_ref.dtype)
    o_ref[0] = jnp.dot(w2_ref[...], h_ref[...],
                       preferred_element_type=jnp.float32).astype(o_ref.dtype)


def _pick_tile(n_total, ks_pad, nn, c_in, co, budget_bytes=8 * 1024 * 1024):
    """Largest lane tile keeping pipelined blocks inside a conservative VMEM budget
    (safe for v7x's 64 MiB as well as v5e/v6e)."""
    per_lane = (2 * 2 * (ks_pad + c_in) * nn    # double-buffered bf16 inputs
                + 2 * 4 * co                    # double-buffered f32 output
                + 2 * ks_pad * c_in)            # bf16 scratch
    cap = max(128, (budget_bytes // per_lane) // 128 * 128)
    if n_total <= cap:
        return n_total, n_total                 # full-N block, no padding needed
    n_pad = ((n_total + cap - 1) // cap) * cap
    return cap, n_pad


def fused_inter_so3_conv(w2, inter_w, grouped_feats, ks_pad):
    """out[b,o,p,a] = sum_{c,k,n} W[o,c,k] * inter_w[b,p,a,k,n] * grouped[b,c,p,n,a]."""
    nb, c_in, p2, nn, na = grouped_feats.shape
    ks = inter_w.shape[3]
    co = w2.shape[0]
    K = c_in * ks_pad
    N = p2 * na

    # Lane-dense layouts with the merged (p, a) axis last; bf16 to halve HBM bytes.
    wk = jnp.transpose(inter_w, (0, 3, 4, 1, 2)).reshape(nb, ks, nn, N)
    wk = jnp.pad(wk, ((0, 0), (0, ks_pad - ks), (0, 0), (0, 0))).astype(jnp.bfloat16)
    gx = jnp.transpose(grouped_feats, (0, 1, 3, 2, 4)).reshape(nb, c_in, nn, N)
    gx = gx.astype(jnp.bfloat16)

    tm, n_pad = _pick_tile(N, ks_pad, nn, c_in, co)
    if n_pad != N:
        wk = jnp.pad(wk, ((0, 0), (0, 0), (0, 0), (0, n_pad - N)))
        gx = jnp.pad(gx, ((0, 0), (0, 0), (0, 0), (0, n_pad - N)))

    grid = (nb, n_pad // tm)
    out = pl.pallas_call(
        _inter_so3_kernel,
        out_shape=jax.ShapeDtypeStruct((nb, co, n_pad), jnp.float32),
        grid_spec=pltpu.PrefetchScalarGridSpec(
            num_scalar_prefetch=0,
            grid=grid,
            in_specs=[
                pl.BlockSpec((co, K), lambda b, m: (0, 0)),              # W, resident
                pl.BlockSpec((1, ks_pad, nn, tm), lambda b, m: (b, 0, 0, m)),
                pl.BlockSpec((1, c_in, nn, tm), lambda b, m: (b, 0, 0, m)),
            ],
            out_specs=pl.BlockSpec((1, co, tm), lambda b, m: (b, 0, m)),
            scratch_shapes=[pltpu.VMEM((K, tm), jnp.bfloat16)],
        ),
        compiler_params=pltpu.CompilerParams(
            dimension_semantics=("parallel", "parallel"),
            vmem_limit_bytes=64 * 1024 * 1024),
    )(w2, wk, gx)
    return out[:, :, :N].reshape(nb, co, p2, na)


# ----------------------------------------------------------------------------
# Module
# ----------------------------------------------------------------------------
class InterSO3ConvPallas:
    def __init__(self, dim_in, dim_out, kernel_size, stride, radius, sigma,
                 n_neighbor, key, lazy_sample=True, pooling=None, kanchor=60):
        self.dim_in = dim_in
        self.dim_out = dim_out
        self.stride = stride
        self.radius = radius
        self.sigma = sigma
        self.n_neighbor = n_neighbor
        self.lazy_sample = lazy_sample
        self.pooling = pooling
        self.kernels = get_spherical_kernel_points(
            kernel_size, KERNEL_CONDENSE_RATIO * radius)      # [ks, 3]
        self.anchors = get_anchors(kanchor)                   # [na, 3, 3]
        self.kernel_size = int(self.kernels.shape[0])
        # pad the kernel-size axis so K = c_in * ks_pad is bf16-sublane aligned
        self.ks_pad = ((self.kernel_size + 15) // 16) * 16

        # BasicSO3Conv weight: xavier_normal_ with gain = calculate_gain('relu')
        fan_in = dim_in * self.kernel_size
        fan_out = dim_out * self.kernel_size
        std = math.sqrt(2.0) * math.sqrt(2.0 / (fan_in + fan_out))
        self.W = std * jax.random.normal(
            key, (dim_out, dim_in, self.kernel_size), jnp.float32)
        w_pad = jnp.pad(self.W, ((0, 0), (0, 0), (0, self.ks_pad - self.kernel_size)))
        self.W2 = w_pad.reshape(dim_out, dim_in * self.ks_pad).astype(jnp.bfloat16)

    def __call__(self, x: SphericalPointCloud, inter_idx=None, inter_w=None):
        inter_idx, inter_w, new_xyz, grouped_feats, sample_idx = inter_so3conv_grouping(
            x.xyz, x.feats, self.stride, self.n_neighbor, self.anchors,
            self.kernels, self.radius, self.sigma, inter_idx, inter_w)
        feats = fused_inter_so3_conv(self.W2, inter_w, grouped_feats, self.ks_pad)
        return inter_idx, inter_w, sample_idx, SphericalPointCloud(
            new_xyz, feats, self.anchors)


# ----------------------------------------------------------------------------
if __name__ == "__main__":
    key = jax.random.PRNGKey(0)
    k1, k2, k3 = jax.random.split(key, 3)

    nb, dim_in, dim_out = 2, 4, 16
    npoint, kanchor = 64, 60
    kernel_size, stride, radius, sigma, n_neighbor = 12, 2, 0.8, 0.64, 8

    xyz = jax.random.uniform(k1, (nb, 3, npoint), jnp.float32, -1.0, 1.0)
    feats = jax.random.normal(k2, (nb, dim_in, npoint, kanchor), jnp.float32)

    mod = InterSO3ConvPallas(dim_in, dim_out, kernel_size, stride, radius, sigma,
                             n_neighbor, key=k3, kanchor=kanchor)
    x = SphericalPointCloud(xyz, feats, mod.anchors)

    inter_idx, inter_w, sample_idx, out = mod(x)
    jax.block_until_ready(out.feats)

    # Pure-JAX reference for the same forward math (same bf16 input rounding).
    grouped = jax.vmap(lambda f, i: f[:, i, :])(feats, inter_idx)   # [nb,c,p2,nn,na]
    wb = inter_w.astype(jnp.bfloat16).astype(jnp.float32)
    gb = grouped.astype(jnp.bfloat16).astype(jnp.float32)
    Wb = mod.W.astype(jnp.bfloat16).astype(jnp.float32)
    H = jnp.einsum("bpakn,bcpna->bckpa", wb, gb)
    ref = jnp.einsum("ock,bckpa->bopa", Wb, H)

    p2 = npoint // stride
    assert out.feats.shape == (nb, dim_out, p2, kanchor)
    np.testing.assert_allclose(np.asarray(out.feats), np.asarray(ref),
                               rtol=5e-2, atol=5e-2)
    print("KERNEL_OK")
</pallas_src>

<mosaic_0001>
module attributes {stable_mosaic.version = 11 : i64} {
  func.func @_inter_so3_kernel(%arg0: i32, %arg1: i32, %arg2: memref<16x64xbf16, #tpu.memory_space<vmem>>, %arg3: memref<1x16x8x1920xbf16, #tpu.memory_space<vmem>>, %arg4: memref<1x4x8x1920xbf16, #tpu.memory_space<vmem>>, %arg5: memref<1x16x1920xf32, #tpu.memory_space<vmem>>, %arg6: memref<64x1920xbf16, #tpu.memory_space<vmem>>) attributes {dimension_semantics = [#tpu.dimension_semantics<parallel>, #tpu.dimension_semantics<parallel>], iteration_bounds = array<i64: 2, 1>, scalar_prefetch = 0 : i64, scratch_operands = 1 : i64, tpu.core_type = #tpu.core_type<tc>, window_params = [{pipeline_mode = #tpu.pipeline_mode<synchronous>, transform_indices = @transform_0, window_bounds = array<i64: 16, 64>}, {transform_indices = @transform_1, window_bounds = array<i64: 1, 16, 8, 1920>}, {transform_indices = @transform_2, window_bounds = array<i64: 1, 4, 8, 1920>}, {transform_indices = @transform_3, window_bounds = array<i64: 1, 16, 1920>}]} {
    %c0 = arith.constant 0 : index
    %c0_0 = arith.constant 0 : index
    %c0_1 = arith.constant 0 : index
    %c0_2 = arith.constant 0 : index
    %0 = vector.load %arg3[%c0, %c0_0, %c0_1, %c0_2] : memref<1x16x8x1920xbf16, #tpu.memory_space<vmem>>, vector<1x16x8x1920xbf16>
    %1 = vector.shape_cast %0 : vector<1x16x8x1920xbf16> to vector<16x8x1920xbf16>
    %2 = arith.extf %1 : vector<16x8x1920xbf16> to vector<16x8x1920xf32>
    %c0_3 = arith.constant 0 : index
    %c0_4 = arith.constant 0 : index
    %c0_5 = arith.constant 0 : index
    %c0_6 = arith.constant 0 : index
    %3 = vector.load %arg4[%c0_3, %c0_4, %c0_5, %c0_6] : memref<1x4x8x1920xbf16, #tpu.memory_space<vmem>>, vector<1x4x8x1920xbf16>
    %4 = vector.shape_cast %3 : vector<1x4x8x1920xbf16> to vector<4x8x1920xbf16>
    %5 = arith.extf %4 : vector<4x8x1920xbf16> to vector<4x8x1920xf32>
    %6 = vector.extract_strided_slice %5 {offsets = [0, 0, 0], sizes = [1, 8, 1920], strides = [1, 1, 1]} : vector<4x8x1920xf32> to vector<1x8x1920xf32>
    %7 = vector.shape_cast %6 : vector<1x8x1920xf32> to vector<8x1920xf32>
    %8 = vector.shape_cast %7 : vector<8x1920xf32> to vector<1x8x1920xf32>
    %9 = vector.broadcast %8 : vector<1x8x1920xf32> to vector<16x8x1920xf32>
    %10 = arith.mulf %2, %9 : vector<16x8x1920xf32>
    %cst = arith.constant dense<0.000000e+00> : vector<16x1920xf32>
    %11 = vector.multi_reduction <add>, %10, %cst [1] : vector<16x8x1920xf32> to vector<16x1920xf32>
    %12 = arith.truncf %11 : vector<16x1920xf32> to vector<16x1920xbf16>
    %c0_7 = arith.constant 0 : index
    %c0_8 = arith.constant 0 : index
    %13 = vector.load %arg6[%c0_7, %c0_8] : memref<64x1920xbf16, #tpu.memory_space<vmem>>, vector<16x1920xbf16>
    tpu.vector_store %arg6[%c0_7, %c0_8], %12 {strides = array<i32>} : memref<64x1920xbf16, #tpu.memory_space<vmem>>, vector<16x1920xbf16>,
    %14 = vector.extract_strided_slice %5 {offsets = [1, 0, 0], sizes = [1, 8, 1920], strides = [1, 1, 1]} : vector<4x8x1920xf32> to vector<1x8x1920xf32>
    %15 = vector.shape_cast %14 : vector<1x8x1920xf32> to vector<8x1920xf32>
    %16 = vector.shape_cast %15 : vector<8x1920xf32> to vector<1x8x1920xf32>
    %17 = vector.broadcast %16 : vector<1x8x1920xf32> to vector<16x8x1920xf32>
    %18 = arith.mulf %2, %17 : vector<16x8x1920xf32>
    %cst_9 = arith.constant dense<0.000000e+00> : vector<16x1920xf32>
    %19 = vector.multi_reduction <add>, %18, %cst_9 [1] : vector<16x8x1920xf32> to vector<16x1920xf32>
    %20 = arith.truncf %19 : vector<16x1920xf32> to vector<16x1920xbf16>
    %c16 = arith.constant 16 : index
    %c0_10 = arith.constant 0 : index
    %21 = vector.load %arg6[%c16, %c0_10] : memref<64x1920xbf16, #tpu.memory_space<vmem>>, vector<16x1920xbf16>
    tpu.vector_store %arg6[%c16, %c0_10], %20 {strides = array<i32>} : memref<64x1920xbf16, #tpu.memory_space<vmem>>, vector<16x1920xbf16>,
    %22 = vector.extract_strided_slice %5 {offsets = [2, 0, 0], sizes = [1, 8, 1920], strides = [1, 1, 1]} : vector<4x8x1920xf32> to vector<1x8x1920xf32>
    %23 = vector.shape_cast %22 : vector<1x8x1920xf32> to vector<8x1920xf32>
    %24 = vector.shape_cast %23 : vector<8x1920xf32> to vector<1x8x1920xf32>
    %25 = vector.broadcast %24 : vector<1x8x1920xf32> to vector<16x8x1920xf32>
    %26 = arith.mulf %2, %25 : vector<16x8x1920xf32>
    %cst_11 = arith.constant dense<0.000000e+00> : vector<16x1920xf32>
    %27 = vector.multi_reduction <add>, %26, %cst_11 [1] : vector<16x8x1920xf32> to vector<16x1920xf32>
    %28 = arith.truncf %27 : vector<16x1920xf32> to vector<16x1920xbf16>
    %c32 = arith.constant 32 : index
    %c0_12 = arith.constant 0 : index
    %29 = vector.load %arg6[%c32, %c0_12] : memref<64x1920xbf16, #tpu.memory_space<vmem>>, vector<16x1920xbf16>
    tpu.vector_store %arg6[%c32, %c0_12], %28 {strides = array<i32>} : memref<64x1920xbf16, #tpu.memory_space<vmem>>, vector<16x1920xbf16>,
    %30 = vector.extract_strided_slice %5 {offsets = [3, 0, 0], sizes = [1, 8, 1920], strides = [1, 1, 1]} : vector<4x8x1920xf32> to vector<1x8x1920xf32>
    %31 = vector.shape_cast %30 : vector<1x8x1920xf32> to vector<8x1920xf32>
    %32 = vector.shape_cast %31 : vector<8x1920xf32> to vector<1x8x1920xf32>
    %33 = vector.broadcast %32 : vector<1x8x1920xf32> to vector<16x8x1920xf32>
    %34 = arith.mulf %2, %33 : vector<16x8x1920xf32>
    %cst_13 = arith.constant dense<0.000000e+00> : vector<16x1920xf32>
    %35 = vector.multi_reduction <add>, %34, %cst_13 [1] : vector<16x8x1920xf32> to vector<16x1920xf32>
    %36 = arith.truncf %35 : vector<16x1920xf32> to vector<16x1920xbf16>
    %c48 = arith.constant 48 : index
    %c0_14 = arith.constant 0 : index
    %37 = vector.load %arg6[%c48, %c0_14] : memref<64x1920xbf16, #tpu.memory_space<vmem>>, vector<16x1920xbf16>
    tpu.vector_store %arg6[%c48, %c0_14], %36 {strides = array<i32>} : memref<64x1920xbf16, #tpu.memory_space<vmem>>, vector<16x1920xbf16>,
    %c0_15 = arith.constant 0 : index
    %c0_16 = arith.constant 0 : index
    %38 = vector.load %arg2[%c0_15, %c0_16] : memref<16x64xbf16, #tpu.memory_space<vmem>>, vector<16x64xbf16>
    %c0_17 = arith.constant 0 : index
    %c0_18 = arith.constant 0 : index
    %39 = vector.load %arg6[%c0_17, %c0_18] : memref<64x1920xbf16, #tpu.memory_space<vmem>>, vector<64x1920xbf16>
    %cst_19 = arith.constant dense<0.000000e+00> : vector<16x1920xf32>
    %40 = tpu.matmul %38, %39, %cst_19 {dimension_numbers = #tpu.dot_dimension_numbers<[1], [0], [0], [1], [0, 0, 1, 1], [], []>} : vector<16x64xbf16>, vector<64x1920xbf16>, vector<16x1920xf32> -> vector<16x1920xf32>
    %c0_20 = arith.constant 0 : index
    %c0_21 = arith.constant 0 : index
    %c0_22 = arith.constant 0 : index
    %41 = vector.load %arg5[%c0_20, %c0_21, %c0_22] : memref<1x16x1920xf32, #tpu.memory_space<vmem>>, vector<1x16x1920xf32>
    %42 = vector.shape_cast %41 : vector<1x16x1920xf32> to vector<16x1920xf32>
    %43 = vector.shape_cast %40 : vector<16x1920xf32> to vector<1x16x1920xf32>
    tpu.vector_store %arg5[%c0_20, %c0_21, %c0_22], %43 {strides = array<i32>} : memref<1x16x1920xf32, #tpu.memory_space<vmem>>, vector<1x16x1920xf32>,
    return
  }
  func.func @transform_0(%arg0: i32, %arg1: i32) -> (i32, i32) {
    %c0_i32 = arith.constant 0 : i32
    %c0_i32_0 = arith.constant 0 : i32
    %c0_i32_1 = arith.constant 0 : i32
    return %c0_i32, %c0_i32_0 : i32, i32
  }
  func.func @transform_1(%arg0: i32, %arg1: i32) -> (i32, i32, i32, i32) {
    %c0_i32 = arith.constant 0 : i32
    %c0_i32_0 = arith.constant 0 : i32
    %c0_i32_1 = arith.constant 0 : i32
    return %arg0, %c0_i32, %c0_i32_0, %arg1 : i32, i32, i32, i32
  }
  func.func @transform_2(%arg0: i32, %arg1: i32) -> (i32, i32, i32, i32) {
    %c0_i32 = arith.constant 0 : i32
    %c0_i32_0 = arith.constant 0 : i32
    %c0_i32_1 = arith.constant 0 : i32
    return %arg0, %c0_i32, %c0_i32_0, %arg1 : i32, i32, i32, i32
  }
  func.func @transform_3(%arg0: i32, %arg1: i32) -> (i32, i32, i32) {
    %c0_i32 = arith.constant 0 : i32
    %c0_i32_0 = arith.constant 0 : i32
    return %arg0, %c0_i32, %arg1 : i32, i32, i32
  }
}

</mosaic_0001>

<llo_original>
// kernel: tpu_custom_call.1
$region0: #{tpu_custom_call.1}
  #allocation0 [shape = 'u32[]', space=smem, size = 0x4, offset = 0x4, fixed_abs, tag = 'smem constant byte address 0x4 - core index']
  #allocation1 [shape = 'u32[144,128]{1,0:T(1,128)}', space=vmem, size = 0x12000, scoped, tag = 'internal scratch']
  #allocation2 [shape = 'bf16[64,1920]{1,0:T(16,128)(2,1)}', space=vmem, size = 0x3c000, scoped, tag = 'scratch operand']
  %s0 = inlined_call_operand.hbm [shape: bf16[16,64], index: 0, kind: input, shape index: {}]
  %s1 = inlined_call_operand.hbm [shape: bf16[2,16,8,1920], index: 1, kind: input, shape index: {}]
  %s2 = inlined_call_operand.hbm [shape: bf16[2,4,8,1920], index: 2, kind: input, shape index: {}]
  %s3 = inlined_call_operand.hbm [shape: f32[2,16,1920], index: 3, kind: output, shape index: {}]
  %s4 = sld [smem:[#allocation0]]
  $region57: #{tpu_custom_call.1} parent=0
    _
  %s6 = ssub.s32 1, %s4
  %s7 = scalar_select 0, %s6, %s4
  $region1: #{tpu_custom_call.1} parent=0
    #allocation3 [shape = 'u8[4096]{0}', space=vmem, size = 0x1000, scoped, tag = 'input window, operand 0, single buffered']
    #allocation4 [shape = 's32[2]{0}', space=sflag, size = 0x8, scoped, tag = 'scoped memory for tpu_custom_call.1']
    #allocation5 [shape = 's32[2]{0}', space=sflag, size = 0x8, scoped, tag = 'scoped memory for tpu_custom_call.1']
    #allocation6 [shape = 'u8[983040]{0}', space=vmem, size = 0xf0000, scoped, tag = 'input window, operand 1']
    #allocation7 [shape = 's32[2]{0}', space=sflag, size = 0x8, scoped, tag = 'scoped memory for tpu_custom_call.1']
    #allocation8 [shape = 'u8[245760]{0}', space=vmem, size = 0x3c000, scoped, tag = 'input window, operand 2']
    #allocation9 [shape = 'u8[245760]{0}', space=vmem, size = 0x3c000, scoped, tag = 'output window, operand 0']
    %8 = vsyncpa [#allocation4], 0
    %9 = vsyncpa [#allocation7], 0
    %s10 = scalar_lea.sflag [#allocation7], 1
    %11 = vsyncpa %s10, 0
    %12 = vsyncpa [#allocation5], 0
    %s13 = scalar_lea.sflag [#allocation5], 1
    %14 = vsyncpa %s13, 0
    loop: start=0, step=1, limit=4
    $region2: #{tpu_custom_call.1} parent=1 // loop_pre_header
      _
    $region3: #{tpu_custom_call.1} parent=1 // loop_header
      %s16 = sphi 0, %s20
      %p17 = scmp.ge.s32.totalorder %s16, 4
      %s23 = sphi 0, %s35
      %s24 = sphi 0, %s31
      %s25 = sphi 0, %s23
      %s26 = sphi 0, %s24
      %s27 = sphi 0, %s25
      %s28 = sphi 0, %s26
      %s36 = sphi 0, %s36
      %s38 = sphi 0, %s36
      %s39 = sphi 0, %s38
      %s53 = sphi 0, %s39
      %s61 = sphi 0, %s63
      %s64 = sphi 0, %s61
      %s65 = sphi 0, %s64
      %s81 = sphi 0, %s65
      %s89 = sphi 0, %s91
      %s92 = sphi 0, %s89
      %s93 = sphi 0, %s92
      %s109 = sphi 0, %s93
      %s117 = sphi 0, %s119
      %s120 = sphi 0, %s117
      %s121 = sphi 0, %s120
      %s137 = sphi 0, %s121
    $region4: #{tpu_custom_call.1} parent=1 // loop_header_branch
      %19 = sbr.rel (%p17) target = $region8
    $region5: #{tpu_custom_call.1} parent=1 // loop_body
      %s21 = ssub.s32 %s16, 1
      %s22 = ssub.s32 %s16, 2
      %s29 = sadd.s32 1, %s24
      %p30 = scmp.ge.s32.totalorder %s29, 1
      %s31 = scalar_select %p30, 0, %s29
      %s32 = sadd.s32 1, %s23
      %s33 = scalar_select %p30, %s32, %s23
      %p34 = scmp.ge.s32.totalorder %s33, 2
      %s35 = scalar_select %p34, 0, %s33
      %s37 = sadd.s32 %s36, 1
      %p40 = scmp.eq.s32.totalorder %s16, 1
      %p41 = scmp.ne.s32.totalorder %s36, %s38
      %p42 = scmp.eq.s32.totalorder %s16, 0
      %p43 = por %p41, %p42
      %p44 = scmp.ne.s32.totalorder %s36, %s38
      %p45 = scmp.eq.s32.totalorder %s21, 1
      %p46 = por %p44, %p45
      %p47 = scmp.ne.s32.totalorder %s38, %s39
      %p48 = scmp.eq.s32.totalorder %s21, 0
      %p49 = por %p47, %p48
      %p50 = scmp.ne.s32.totalorder %s38, %s39
      %p51 = scmp.eq.s32.totalorder %s22, 1
      %p52 = por %p50, %p51
      %p54 = scmp.ne.s32.totalorder %s39, %s53
      %p55 = scmp.eq.s32.totalorder %s22, 0
      %p56 = por %p54, %p55
      %s57 = ssub.s32 %s23, %s35
      %s58 = ssub.s32 %s24, %s31
      %s59 = sor.u32 %s57, %s58
      %p60 = scmp.eq.s32.totalorder %s59, 0
      %s62 = sadd.s32 %s61, 1
      %s63 = scalar_select %p60, %s61, %s62
      %p66 = pneg %p60
      %p67 = scmp.eq.s32.totalorder %s16, 1
      %p68 = por %p66, %p67
      %p69 = scmp.ne.s32.totalorder %s61, %s64
      %p70 = scmp.eq.s32.totalorder %s16, 0
      %p71 = por %p69, %p70
      %p72 = scmp.ne.s32.totalorder %s61, %s64
      %p73 = scmp.eq.s32.totalorder %s21, 1
      %p74 = por %p72, %p73
      %p75 = scmp.ne.s32.totalorder %s64, %s65
      %p76 = scmp.eq.s32.totalorder %s21, 0
      %p77 = por %p75, %p76
      %p78 = scmp.ne.s32.totalorder %s64, %s65
      %p79 = scmp.eq.s32.totalorder %s22, 1
      %p80 = por %p78, %p79
      %p82 = scmp.ne.s32.totalorder %s65, %s81
      %p83 = scmp.eq.s32.totalorder %s22, 0
      %p84 = por %p82, %p83
      %s85 = ssub.s32 %s23, %s35
      %s86 = ssub.s32 %s24, %s31
      %s87 = sor.u32 %s85, %s86
      %p88 = scmp.eq.s32.totalorder %s87, 0
      %s90 = sadd.s32 %s89, 1
      %s91 = scalar_select %p88, %s89, %s90
      %p94 = pneg %p88
      %p95 = scmp.eq.s32.totalorder %s16, 1
      %p96 = por %p94, %p95
      %p97 = scmp.ne.s32.totalorder %s89, %s92
      %p98 = scmp.eq.s32.totalorder %s16, 0
      %p99 = por %p97, %p98
      %p100 = scmp.ne.s32.totalorder %s89, %s92
      %p101 = scmp.eq.s32.totalorder %s21, 1
      %p102 = por %p100, %p101
      %p103 = scmp.ne.s32.totalorder %s92, %s93
      %p104 = scmp.eq.s32.totalorder %s21, 0
      %p105 = por %p103, %p104
      %p106 = scmp.ne.s32.totalorder %s92, %s93
      %p107 = scmp.eq.s32.totalorder %s22, 1
      %p108 = por %p106, %p107
      %p110 = scmp.ne.s32.totalorder %s93, %s109
      %p111 = scmp.eq.s32.totalorder %s22, 0
      %p112 = por %p110, %p111
      %s113 = ssub.s32 %s23, %s35
      %s114 = ssub.s32 %s24, %s31
      %s115 = sor.u32 %s113, %s114
      %p116 = scmp.eq.s32.totalorder %s115, 0
      %s118 = sadd.s32 %s117, 1
      %s119 = scalar_select %p116, %s117, %s118
      %p122 = pneg %p116
      %p123 = scmp.eq.s32.totalorder %s16, 1
      %p124 = por %p122, %p123
      %p125 = scmp.ne.s32.totalorder %s117, %s120
      %p126 = scmp.eq.s32.totalorder %s16, 0
      %p127 = por %p125, %p126
      %p128 = scmp.ne.s32.totalorder %s117, %s120
      %p129 = scmp.eq.s32.totalorder %s21, 1
      %p130 = por %p128, %p129
      %p131 = scmp.ne.s32.totalorder %s120, %s121
      %p132 = scmp.eq.s32.totalorder %s21, 0
      %p133 = por %p131, %p132
      %p134 = scmp.ne.s32.totalorder %s120, %s121
      %p135 = scmp.eq.s32.totalorder %s22, 1
      %p136 = por %p134, %p135
      %p138 = scmp.ne.s32.totalorder %s121, %s137
      %p139 = scmp.eq.s32.totalorder %s22, 0
      %p140 = por %p138, %p139
      %p141 = scmp.le.s32.totalorder 1, %s16
      %p142 = scmp.lt.s32.totalorder %s16, 3
      %p143 = pnand %p141, %p142
      %p144 = pneg %p143
      // Predicated region
      $region9: #{tpu_custom_call.1} parent=5 // pred_check
        _
      $region10: #{tpu_custom_call.1} parent=5 // pred_check_branch
        %146 = sbr.rel (%p143) target = $region12
      $region11: #{tpu_custom_call.1} parent=5 // pred_region
        %s147 = ssub.s32 %s16, 1
        // Predicated region
        $region13: #{tpu_custom_call.1} parent=11 // pred_check
          %p148 = pneg %p49
        $region14: #{tpu_custom_call.1} parent=11 // pred_check_branch
          %150 = sbr.rel (%p148) target = $region16
        $region15: #{tpu_custom_call.1} parent=11 // pred_region
          %s152 = ssub.s32 128, 128
          %153 = vsyncadd [#allocation4], %s152
          %s154 = sshll.u32 [#allocation3], 4
          %s155 = int_to_ptr.vmem [resolvable:$true] %s154
          %160 = dma.hbm_to_vmem [thread:$0]  %s0, 128, %s155, [#allocation4], 64, 64, 4
        $region16: #{tpu_custom_call.1} parent=11 // pred_fallthru
          _
      $region12: #{tpu_custom_call.1} parent=5 // pred_fallthru
        _
      %p161 = scmp.lt.s32.totalorder %s16, 2
      // Predicated region
      $region17: #{tpu_custom_call.1} parent=5 // pred_check
        %p162 = pneg %p161
      $region18: #{tpu_custom_call.1} parent=5 // pred_check_branch
        %164 = sbr.rel (%p162) target = $region20
      $region19: #{tpu_custom_call.1} parent=5 // pred_region
        // Predicated region
        $region21: #{tpu_custom_call.1} parent=19 // pred_check
          %p165 = pneg %p71
        $region22: #{tpu_custom_call.1} parent=19 // pred_check_branch
          %167 = sbr.rel (%p165) target = $region24
        $region23: #{tpu_custom_call.1} parent=19 // pred_region
          %s168 = sand.u32 %s16, 1
          %s169 = scalar_lea.sflag [#allocation7], %s168
          %s170 = sand.u32 %s61, 1
          %s171 = smul.addr %s170, 960
          %s172 = scalar_lea.vmem [#allocation6], %s171
          %s173 = smul.u32 15, %s24
          %s175 = ssub.s32 15360, 15360
          %176 = vsyncadd %s169, %s175
          %s177 = smul.addr %s23, 240
          %s178 = sadd.s32 %s173, %s177
          %s179 = smul.addr %s178, 64
          %s180 = scalar_lea.hbm %s1, %s179
          %s181 = sshll.u32 %s172, 4
          %s182 = int_to_ptr.vmem [resolvable:$true] %s181
          %187 = dma.hbm_to_vmem [thread:$0]  %s180, 15360, %s182, %s169, 960, 960, 60
        $region24: #{tpu_custom_call.1} parent=19 // pred_fallthru
          _
        // Predicated region
        $region25: #{tpu_custom_call.1} parent=19 // pred_check
          %p188 = pneg %p99
        $region26: #{tpu_custom_call.1} parent=19 // pred_check_branch
          %190 = sbr.rel (%p188) target = $region28
        $region27: #{tpu_custom_call.1} parent=19 // pred_region
          %s191 = sand.u32 %s16, 1
          %s192 = scalar_lea.sflag [#allocation7], %s191
          %s193 = sand.u32 %s89, 1
          %s194 = smul.addr %s193, 240
          %s195 = scalar_lea.vmem [#allocation8], %s194
          %s196 = smul.u32 15, %s24
          %s198 = ssub.s32 3840, 3840
          %199 = vsyncadd %s192, %s198
          %s200 = smul.addr %s23, 60
          %s201 = sadd.s32 %s196, %s200
          %s202 = smul.addr %s201, 64
          %s203 = scalar_lea.hbm %s2, %s202
          %s204 = sshll.u32 %s195, 4
          %s205 = int_to_ptr.vmem [resolvable:$true] %s204
          %210 = dma.hbm_to_vmem [thread:$0]  %s203, 3840, %s205, %s192, 960, 960, 60
        $region28: #{tpu_custom_call.1} parent=19 // pred_fallthru
          _
      $region20: #{tpu_custom_call.1} parent=5 // pred_fallthru
        _
      %p211 = scmp.le.s32.totalorder 1, %s16
      %p212 = scmp.lt.s32.totalorder %s16, 3
      %p213 = pnand %p211, %p212
      %p214 = pneg %p213
      // Predicated region
      $region29: #{tpu_custom_call.1} parent=5 // pred_check
        _
      $region30: #{tpu_custom_call.1} parent=5 // pred_check_branch
        %216 = sbr.rel (%p213) target = $region32
      $region31: #{tpu_custom_call.1} parent=5 // pred_region
        %s217 = ssub.s32 %s16, 1
        // Predicated region
        $region33: #{tpu_custom_call.1} parent=31 // pred_check
          %p218 = pneg %p49
        $region34: #{tpu_custom_call.1} parent=31 // pred_check_branch
          %220 = sbr.rel (%p218) target = $region36
        $region35: #{tpu_custom_call.1} parent=31 // pred_region
          %221 = dma.done [#allocation4], 128
        $region36: #{tpu_custom_call.1} parent=31 // pred_fallthru
          _
        %s222 = sand.u32 %s21, 1
        %s223 = scalar_lea.sflag [#allocation7], %s222
        %s224 = sand.u32 %s64, 1
        %s225 = smul.addr %s224, 960
        %s226 = scalar_lea.vmem [#allocation6], %s225
        // Predicated region
        $region37: #{tpu_custom_call.1} parent=31 // pred_check
          %p227 = pneg %p77
        $region38: #{tpu_custom_call.1} parent=31 // pred_check_branch
          %229 = sbr.rel (%p227) target = $region40
        $region39: #{tpu_custom_call.1} parent=31 // pred_region
          %230 = dma.done %s223, 15360
        $region40: #{tpu_custom_call.1} parent=31 // pred_fallthru
          _
        %s231 = sand.u32 %s21, 1
        %s232 = scalar_lea.sflag [#allocation7], %s231
        %s233 = sand.u32 %s92, 1
        %s234 = smul.addr %s233, 240
        %s235 = scalar_lea.vmem [#allocation8], %s234
        // Predicated region
        $region41: #{tpu_custom_call.1} parent=31 // pred_check
          %p236 = pneg %p105
        $region42: #{tpu_custom_call.1} parent=31 // pred_check_branch
          %238 = sbr.rel (%p236) target = $region44
        $region43: #{tpu_custom_call.1} parent=31 // pred_region
          %239 = dma.done %s232, 3840
        $region44: #{tpu_custom_call.1} parent=31 // pred_fallthru
          _
        %p240 = pneg %p49
        %p241 = pneg %p46
        %s242 = sand.u32 %s21, 1
        %s243 = scalar_lea.sflag [#allocation7], %s242
        %s244 = sand.u32 %s64, 1
        %s245 = smul.addr %s244, 960
        %s246 = scalar_lea.vmem [#allocation6], %s245
        %p247 = pneg %p77
        %p248 = pneg %p74
        %s249 = sand.u32 %s21, 1
        %s250 = scalar_lea.sflag [#allocation7], %s249
        %s251 = sand.u32 %s92, 1
        %s252 = smul.addr %s251, 240
        %s253 = scalar_lea.vmem [#allocation8], %s252
        %p254 = pneg %p105
        %p255 = pneg %p102
        %p256 = pneg %p133
        %p257 = pneg %p130
        %s258 = sand.u32 %s120, 1
        %s259 = scalar_lea.sflag [#allocation5], %s258
        %s260 = sand.u32 %s120, 1
        %s261 = smul.addr %s260, 240
        %s262 = scalar_lea.vmem [#allocation9], %s261
        %s263 = smul.u32 15, %s26
        %s264 = smul.u32 15, %s26
        %s265 = smul.u32 15, %s26
        %v267 = vld [vmem:[%s226] sm:$0xff]
        %v268 = vld [vmem:[%s226 + $0x8] sm:$0xff]
        %v269 = vld [vmem:[%s226 + $0x10] sm:$0xff]
        %v270 = vld [vmem:[%s226 + $0x18] sm:$0xff]
        %v271 = vld [vmem:[%s226 + $0x20] sm:$0xff]
        %v272 = vld [vmem:[%s226 + $0x28] sm:$0xff]
        %v273 = vld [vmem:[%s226 + $0x30] sm:$0xff]
        %v274 = vld [vmem:[%s226 + $0x38] sm:$0xf]
        %v275 = vld [vmem:[%s226 + $0x3c] sm:$0xff]
        %v276 = vld [vmem:[%s226 + $0x44] sm:$0xff]
        %v277 = vld [vmem:[%s226 + $0x4c] sm:$0xff]
        %v278 = vld [vmem:[%s226 + $0x54] sm:$0xff]
        %v279 = vld [vmem:[%s226 + $0x5c] sm:$0xff]
        %v280 = vld [vmem:[%s226 + $0x64] sm:$0xff]
        %v281 = vld [vmem:[%s226 + $0x6c] sm:$0xff]
        %v282 = vld [vmem:[%s226 + $0x74] sm:$0xf]
        %v283 = vld [vmem:[%s226 + $0x78] sm:$0xff]
        %v284 = vld [vmem:[%s226 + $0x80] sm:$0xff]
        %v285 = vld [vmem:[%s226 + $0x88] sm:$0xff]
        %v286 = vld [vmem:[%s226 + $0x90] sm:$0xff]
        %v287 = vld [vmem:[%s226 + $0x98] sm:$0xff]
        %v288 = vld [vmem:[%s226 + $0xa0] sm:$0xff]
        %v289 = vld [vmem:[%s226 + $0xa8] sm:$0xff]
        %v290 = vld [vmem:[%s226 + $0xb0] sm:$0xf]
        %v291 = vld [vmem:[%s226 + $0xb4] sm:$0xff]
        %v292 = vld [vmem:[%s226 + $0xbc] sm:$0xff]
        %v293 = vld [vmem:[%s226 + $0xc4] sm:$0xff]
        %v294 = vld [vmem:[%s226 + $0xcc] sm:$0xff]
        %v295 = vld [vmem:[%s226 + $0xd4] sm:$0xff]
        %v296 = vld [vmem:[%s226 + $0xdc] sm:$0xff]
        %v297 = vld [vmem:[%s226 + $0xe4] sm:$0xff]
        %v298 = vld [vmem:[%s226 + $0xec] sm:$0xf]
        %v299 = vld [vmem:[%s226 + $0xf0] sm:$0xff]
        %v300 = vld [vmem:[%s226 + $0xf8] sm:$0xff]
        %v301 = vld [vmem:[%s226 + $0x100] sm:$0xff]
        %v302 = vld [vmem:[%s226 + $0x108] sm:$0xff]
        %v303 = vld [vmem:[%s226 + $0x110] sm:$0xff]
        %v304 = vld [vmem:[%s226 + $0x118] sm:$0xff]
        %v305 = vld [vmem:[%s226 + $0x120] sm:$0xff]
        %v306 = vld [vmem:[%s226 + $0x128] sm:$0xf]
        %v307 = vld [vmem:[%s226 + $0x12c] sm:$0xff]
        %v308 = vld [vmem:[%s226 + $0x134] sm:$0xff]
        %v309 = vld [vmem:[%s226 + $0x13c] sm:$0xff]
        %v310 = vld [vmem:[%s226 + $0x144] sm:$0xff]
        %v311 = vld [vmem:[%s226 + $0x14c] sm:$0xff]
        %v312 = vld [vmem:[%s226 + $0x154] sm:$0xff]
        %v313 = vld [vmem:[%s226 + $0x15c] sm:$0xff]
        %v314 = vld [vmem:[%s226 + $0x164] sm:$0xf]
        %v315 = vld [vmem:[%s226 + $0x168] sm:$0xff]
        %v316 = vld [vmem:[%s226 + $0x170] sm:$0xff]
        %v317 = vld [vmem:[%s226 + $0x178] sm:$0xff]
        %v318 = vld [vmem:[%s226 + $0x180] sm:$0xff]
        %v319 = vld [vmem:[%s226 + $0x188] sm:$0xff]
        %v320 = vld [vmem:[%s226 + $0x190] sm:$0xff]
        %v321 = vld [vmem:[%s226 + $0x198] sm:$0xff]
        %v322 = vld [vmem:[%s226 + $0x1a0] sm:$0xf]
        %v323 = vld [vmem:[%s226 + $0x1a4] sm:$0xff]
        %v324 = vld [vmem:[%s226 + $0x1ac] sm:$0xff]
        %v325 = vld [vmem:[%s226 + $0x1b4] sm:$0xff]
        %v326 = vld [vmem:[%s226 + $0x1bc] sm:$0xff]
        %v327 = vld [vmem:[%s226 + $0x1c4] sm:$0xff]
        %v328 = vld [vmem:[%s226 + $0x1cc] sm:$0xff]
        %v329 = vld [vmem:[%s226 + $0x1d4] sm:$0xff]
        %v330 = vld [vmem:[%s226 + $0x1dc] sm:$0xf]
        %v331 = vld [vmem:[%s226 + $0x1e0] sm:$0xff]
        %v332 = vld [vmem:[%s226 + $0x1e8] sm:$0xff]
        %v333 = vld [vmem:[%s226 + $0x1f0] sm:$0xff]
        %v334 = vld [vmem:[%s226 + $0x1f8] sm:$0xff]
        %v335 = vld [vmem:[%s226 + $0x200] sm:$0xff]
        %v336 = vld [vmem:[%s226 + $0x208] sm:$0xff]
        %v337 = vld [vmem:[%s226 + $0x210] sm:$0xff]
        %v338 = vld [vmem:[%s226 + $0x218] sm:$0xf]
        %v339 = vld [vmem:[%s226 + $0x21c] sm:$0xff]
        %v340 = vld [vmem:[%s226 + $0x224] sm:$0xff]
        %v341 = vld [vmem:[%s226 + $0x22c] sm:$0xff]
        %v342 = vld [vmem:[%s226 + $0x234] sm:$0xff]
        %v343 = vld [vmem:[%s226 + $0x23c] sm:$0xff]
        %v344 = vld [vmem:[%s226 + $0x244] sm:$0xff]
        %v345 = vld [vmem:[%s226 + $0x24c] sm:$0xff]
        %v346 = vld [vmem:[%s226 + $0x254] sm:$0xf]
        %v347 = vld [vmem:[%s226 + $0x258] sm:$0xff]
        %v348 = vld [vmem:[%s226 + $0x260] sm:$0xff]
        %v349 = vld [vmem:[%s226 + $0x268] sm:$0xff]
        %v350 = vld [vmem:[%s226 + $0x270] sm:$0xff]
        %v351 = vld [vmem:[%s226 + $0x278] sm:$0xff]
        %v352 = vld [vmem:[%s226 + $0x280] sm:$0xff]
        %v353 = vld [vmem:[%s226 + $0x288] sm:$0xff]
        %v354 = vld [vmem:[%s226 + $0x290] sm:$0xf]
        %v355 = vld [vmem:[%s226 + $0x294] sm:$0xff]
        %v356 = vld [vmem:[%s226 + $0x29c] sm:$0xff]
        %v357 = vld [vmem:[%s226 + $0x2a4] sm:$0xff]
        %v358 = vld [vmem:[%s226 + $0x2ac] sm:$0xff]
        %v359 = vld [vmem:[%s226 + $0x2b4] sm:$0xff]
        %v360 = vld [vmem:[%s226 + $0x2bc] sm:$0xff]
        %v361 = vld [vmem:[%s226 + $0x2c4] sm:$0xff]
        %v362 = vld [vmem:[%s226 + $0x2cc] sm:$0xf]
        %v363 = vld [vmem:[%s226 + $0x2d0] sm:$0xff]
        %v364 = vld [vmem:[%s226 + $0x2d8] sm:$0xff]
        %v365 = vld [vmem:[%s226 + $0x2e0] sm:$0xff]
        %v366 = vld [vmem:[%s226 + $0x2e8] sm:$0xff]
        %v367 = vld [vmem:[%s226 + $0x2f0] sm:$0xff]
        %v368 = vld [vmem:[%s226 + $0x2f8] sm:$0xff]
        %v369 = vld [vmem:[%s226 + $0x300] sm:$0xff]
        %v370 = vld [vmem:[%s226 + $0x308] sm:$0xf]
        %v371 = vld [vmem:[%s226 + $0x30c] sm:$0xff]
        %v372 = vld [vmem:[%s226 + $0x314] sm:$0xff]
        %v373 = vld [vmem:[%s226 + $0x31c] sm:$0xff]
        %v374 = vld [vmem:[%s226 + $0x324] sm:$0xff]
        %v375 = vld [vmem:[%s226 + $0x32c] sm:$0xff]
        %v376 = vld [vmem:[%s226 + $0x334] sm:$0xff]
        %v377 = vld [vmem:[%s226 + $0x33c] sm:$0xff]
        %v378 = vld [vmem:[%s226 + $0x344] sm:$0xf]
        %v379 = vld [vmem:[%s226 + $0x348] sm:$0xff]
        %v380 = vld [vmem:[%s226 + $0x350] sm:$0xff]
        %v381 = vld [vmem:[%s226 + $0x358] sm:$0xff]
        %v382 = vld [vmem:[%s226 + $0x360] sm:$0xff]
        %v383 = vld [vmem:[%s226 + $0x368] sm:$0xff]
        %v384 = vld [vmem:[%s226 + $0x370] sm:$0xff]
        %v385 = vld [vmem:[%s226 + $0x378] sm:$0xff]
        %v386 = vld [vmem:[%s226 + $0x380] sm:$0xf]
        %v387 = vld [vmem:[%s226 + $0x384] sm:$0xff]
        %v388 = vld [vmem:[%s226 + $0x38c] sm:$0xff]
        %v389 = vld [vmem:[%s226 + $0x394] sm:$0xff]
        %v390 = vld [vmem:[%s226 + $0x39c] sm:$0xff]
        %v391 = vld [vmem:[%s226 + $0x3a4] sm:$0xff]
        %v392 = vld [vmem:[%s226 + $0x3ac] sm:$0xff]
        %v393 = vld [vmem:[%s226 + $0x3b4] sm:$0xff]
        %v394 = vld [vmem:[%s226 + $0x3bc] sm:$0xf]
        %v395 = vunpack.c.l.bf16 %v267
        %v396 = vunpack.c.h.bf16 %v267
        %v397 = vunpack.c.l.bf16 %v268
        %v398 = vunpack.c.h.bf16 %v268
        %v399 = vunpack.c.l.bf16 %v269
        %v400 = vunpack.c.h.bf16 %v269
        %v401 = vunpack.c.l.bf16 %v270
        %v402 = vunpack.c.h.bf16 %v270
        %v403 = vunpack.c.l.bf16 %v271
        %v404 = vunpack.c.h.bf16 %v271
        %v405 = vunpack.c.l.bf16 %v272
        %v406 = vunpack.c.h.bf16 %v272
        %v407 = vunpack.c.l.bf16 %v273
        %v408 = vunpack.c.h.bf16 %v273
        %v409 = vunpack.c.l.bf16 %v274
        %v410 = vunpack.c.l.bf16 %v275
        %v411 = vunpack.c.h.bf16 %v275
        %v412 = vunpack.c.l.bf16 %v276
        %v413 = vunpack.c.h.bf16 %v276
        %v414 = vunpack.c.l.bf16 %v277
        %v415 = vunpack.c.h.bf16 %v277
        %v416 = vunpack.c.l.bf16 %v278
        %v417 = vunpack.c.h.bf16 %v278
        %v418 = vunpack.c.l.bf16 %v279
        %v419 = vunpack.c.h.bf16 %v279
        %v420 = vunpack.c.l.bf16 %v280
        %v421 = vunpack.c.h.bf16 %v280
        %v422 = vunpack.c.l.bf16 %v281
        %v423 = vunpack.c.h.bf16 %v281
        %v424 = vunpack.c.l.bf16 %v282
        %v425 = vunpack.c.l.bf16 %v283
        %v426 = vunpack.c.h.bf16 %v283
        %v427 = vunpack.c.l.bf16 %v284
        %v428 = vunpack.c.h.bf16 %v284
        %v429 = vunpack.c.l.bf16 %v285
        %v430 = vunpack.c.h.bf16 %v285
        %v431 = vunpack.c.l.bf16 %v286
        %v432 = vunpack.c.h.bf16 %v286
        %v433 = vunpack.c.l.bf16 %v287
        %v434 = vunpack.c.h.bf16 %v287
        %v435 = vunpack.c.l.bf16 %v288
        %v436 = vunpack.c.h.bf16 %v288
        %v437 = vunpack.c.l.bf16 %v289
        %v438 = vunpack.c.h.bf16 %v289
        %v439 = vunpack.c.l.bf16 %v290
        %v440 = vunpack.c.l.bf16 %v291
        %v441 = vunpack.c.h.bf16 %v291
        %v442 = vunpack.c.l.bf16 %v292
        %v443 = vunpack.c.h.bf16 %v292
        %v444 = vunpack.c.l.bf16 %v293
        %v445 = vunpack.c.h.bf16 %v293
        %v446 = vunpack.c.l.bf16 %v294
        %v447 = vunpack.c.h.bf16 %v294
        %v448 = vunpack.c.l.bf16 %v295
        %v449 = vunpack.c.h.bf16 %v295
        %v450 = vunpack.c.l.bf16 %v296
        %v451 = vunpack.c.h.bf16 %v296
        %v452 = vunpack.c.l.bf16 %v297
        %v453 = vunpack.c.h.bf16 %v297
        %v454 = vunpack.c.l.bf16 %v298
        %v455 = vunpack.c.l.bf16 %v299
        %v456 = vunpack.c.h.bf16 %v299
        %v457 = vunpack.c.l.bf16 %v300
        %v458 = vunpack.c.h.bf16 %v300
        %v459 = vunpack.c.l.bf16 %v301
        %v460 = vunpack.c.h.bf16 %v301
        %v461 = vunpack.c.l.bf16 %v302
        %v462 = vunpack.c.h.bf16 %v302
        %v463 = vunpack.c.l.bf16 %v303
        %v464 = vunpack.c.h.bf16 %v303
        %v465 = vunpack.c.l.bf16 %v304
        %v466 = vunpack.c.h.bf16 %v304
        %v467 = vunpack.c.l.bf16 %v305
        %v468 = vunpack.c.h.bf16 %v305
        %v469 = vunpack.c.l.bf16 %v306
        %v470 = vunpack.c.l.bf16 %v307
        %v471 = vunpack.c.h.bf16 %v307
        %v472 = vunpack.c.l.bf16 %v308
        %v473 = vunpack.c.h.bf16 %v308
        %v474 = vunpack.c.l.bf16 %v309
        %v475 = vunpack.c.h.bf16 %v309
        %v476 = vunpack.c.l.bf16 %v310
        %v477 = vunpack.c.h.bf16 %v310
        %v478 = vunpack.c.l.bf16 %v311
        %v479 = vunpack.c.h.bf16 %v311
        %v480 = vunpack.c.l.bf16 %v312
        %v481 = vunpack.c.h.bf16 %v312
        %v482 = vunpack.c.l.bf16 %v313
        %v483 = vunpack.c.h.bf16 %v313
        %v484 = vunpack.c.l.bf16 %v314
        %v485 = vunpack.c.l.bf16 %v315
        %v486 = vunpack.c.h.bf16 %v315
        %v487 = vunpack.c.l.bf16 %v316
        %v488 = vunpack.c.h.bf16 %v316
        %v489 = vunpack.c.l.bf16 %v317
        %v490 = vunpack.c.h.bf16 %v317
        %v491 = vunpack.c.l.bf16 %v318
        %v492 = vunpack.c.h.bf16 %v318
        %v493 = vunpack.c.l.bf16 %v319
        %v494 = vunpack.c.h.bf16 %v319
        %v495 = vunpack.c.l.bf16 %v320
        %v496 = vunpack.c.h.bf16 %v320
        %v497 = vunpack.c.l.bf16 %v321
        %v498 = vunpack.c.h.bf16 %v321
        %v499 = vunpack.c.l.bf16 %v322
        %v500 = vunpack.c.l.bf16 %v323
        %v501 = vunpack.c.h.bf16 %v323
        %v502 = vunpack.c.l.bf16 %v324
        %v503 = vunpack.c.h.bf16 %v324
        %v504 = vunpack.c.l.bf16 %v325
        %v505 = vunpack.c.h.bf16 %v325
        %v506 = vunpack.c.l.bf16 %v326
        %v507 = vunpack.c.h.bf16 %v326
        %v508 = vunpack.c.l.bf16 %v327
        %v509 = vunpack.c.h.bf16 %v327
        %v510 = vunpack.c.l.bf16 %v328
        %v511 = vunpack.c.h.bf16 %v328
        %v512 = vunpack.c.l.bf16 %v329
        %v513 = vunpack.c.h.bf16 %v329
        %v514 = vunpack.c.l.bf16 %v330
        %v515 = vunpack.c.l.bf16 %v331
        %v516 = vunpack.c.h.bf16 %v331
        %v517 = vunpack.c.l.bf16 %v332
        %v518 = vunpack.c.h.bf16 %v332
        %v519 = vunpack.c.l.bf16 %v333
        %v520 = vunpack.c.h.bf16 %v333
        %v521 = vunpack.c.l.bf16 %v334
        %v522 = vunpack.c.h.bf16 %v334
        %v523 = vunpack.c.l.bf16 %v335
        %v524 = vunpack.c.h.bf16 %v335
        %v525 = vunpack.c.l.bf16 %v336
        %v526 = vunpack.c.h.bf16 %v336
        %v527 = vunpack.c.l.bf16 %v337
        %v528 = vunpack.c.h.bf16 %v337
        %v529 = vunpack.c.l.bf16 %v338
        %v530 = vunpack.c.l.bf16 %v339
        %v531 = vunpack.c.h.bf16 %v339
        %v532 = vunpack.c.l.bf16 %v340
        %v533 = vunpack.c.h.bf16 %v340
        %v534 = vunpack.c.l.bf16 %v341
        %v535 = vunpack.c.h.bf16 %v341
        %v536 = vunpack.c.l.bf16 %v342
        %v537 = vunpack.c.h.bf16 %v342
        %v538 = vunpack.c.l.bf16 %v343
        %v539 = vunpack.c.h.bf16 %v343
        %v540 = vunpack.c.l.bf16 %v344
        %v541 = vunpack.c.h.bf16 %v344
        %v542 = vunpack.c.l.bf16 %v345
        %v543 = vunpack.c.h.bf16 %v345
        %v544 = vunpack.c.l.bf16 %v346
        %v545 = vunpack.c.l.bf16 %v347
        %v546 = vunpack.c.h.bf16 %v347
        %v547 = vunpack.c.l.bf16 %v348
        %v548 = vunpack.c.h.bf16 %v348
        %v549 = vunpack.c.l.bf16 %v349
        %v550 = vunpack.c.h.bf16 %v349
        %v551 = vunpack.c.l.bf16 %v350
        %v552 = vunpack.c.h.bf16 %v350
        %v553 = vunpack.c.l.bf16 %v351
        %v554 = vunpack.c.h.bf16 %v351
        %v555 = vunpack.c.l.bf16 %v352
        %v556 = vunpack.c.h.bf16 %v352
        %v557 = vunpack.c.l.bf16 %v353
        %v558 = vunpack.c.h.bf16 %v353
        %v559 = vunpack.c.l.bf16 %v354
        %v560 = vunpack.c.l.bf16 %v355
        %v561 = vunpack.c.h.bf16 %v355
        %v562 = vunpack.c.l.bf16 %v356
        %v563 = vunpack.c.h.bf16 %v356
        %v564 = vunpack.c.l.bf16 %v357
        %v565 = vunpack.c.h.bf16 %v357
        %v566 = vunpack.c.l.bf16 %v358
        %v567 = vunpack.c.h.bf16 %v358
        %v568 = vunpack.c.l.bf16 %v359
        %v569 = vunpack.c.h.bf16 %v359
        %v570 = vunpack.c.l.bf16 %v360
        %v571 = vunpack.c.h.bf16 %v360
        %v572 = vunpack.c.l.bf16 %v361
        %v573 = vunpack.c.h.bf16 %v361
        %v574 = vunpack.c.l.bf16 %v362
        %v575 = vunpack.c.l.bf16 %v363
        %v576 = vunpack.c.h.bf16 %v363
        %v577 = vunpack.c.l.bf16 %v364
        %v578 = vunpack.c.h.bf16 %v364
        %v579 = vunpack.c.l.bf16 %v365
        %v580 = vunpack.c.h.bf16 %v365
        %v581 = vunpack.c.l.bf16 %v366
        %v582 = vunpack.c.h.bf16 %v366
        %v583 = vunpack.c.l.bf16 %v367
        %v584 = vunpack.c.h.bf16 %v367
        %v585 = vunpack.c.l.bf16 %v368
        %v586 = vunpack.c.h.bf16 %v368
        %v587 = vunpack.c.l.bf16 %v369
        %v588 = vunpack.c.h.bf16 %v369
        %v589 = vunpack.c.l.bf16 %v370
        %v590 = vunpack.c.l.bf16 %v371
        %v591 = vunpack.c.h.bf16 %v371
        %v592 = vunpack.c.l.bf16 %v372
        %v593 = vunpack.c.h.bf16 %v372
        %v594 = vunpack.c.l.bf16 %v373
        %v595 = vunpack.c.h.bf16 %v373
        %v596 = vunpack.c.l.bf16 %v374
        %v597 = vunpack.c.h.bf16 %v374
        %v598 = vunpack.c.l.bf16 %v375
        %v599 = vunpack.c.h.bf16 %v375
        %v600 = vunpack.c.l.bf16 %v376
        %v601 = vunpack.c.h.bf16 %v376
        %v602 = vunpack.c.l.bf16 %v377
        %v603 = vunpack.c.h.bf16 %v377
        %v604 = vunpack.c.l.bf16 %v378
        %v605 = vunpack.c.l.bf16 %v379
        %v606 = vunpack.c.h.bf16 %v379
        %v607 = vunpack.c.l.bf16 %v380
        %v608 = vunpack.c.h.bf16 %v380
        %v609 = vunpack.c.l.bf16 %v381
        %v610 = vunpack.c.h.bf16 %v381
        %v611 = vunpack.c.l.bf16 %v382
        %v612 = vunpack.c.h.bf16 %v382
        %v613 = vunpack.c.l.bf16 %v383
        %v614 = vunpack.c.h.bf16 %v383
        %v615 = vunpack.c.l.bf16 %v384
        %v616 = vunpack.c.h.bf16 %v384
        %v617 = vunpack.c.l.bf16 %v385
        %v618 = vunpack.c.h.bf16 %v385
        %v619 = vunpack.c.l.bf16 %v386
        %v620 = vunpack.c.l.bf16 %v387
        %v621 = vunpack.c.h.bf16 %v387
        %v622 = vunpack.c.l.bf16 %v388
        %v623 = vunpack.c.h.bf16 %v388
        %v624 = vunpack.c.l.bf16 %v389
        %v625 = vunpack.c.h.bf16 %v389
        %v626 = vunpack.c.l.bf16 %v390
        %v627 = vunpack.c.h.bf16 %v390
        %v628 = vunpack.c.l.bf16 %v391
        %v629 = vunpack.c.h.bf16 %v391
        %v630 = vunpack.c.l.bf16 %v392
        %v631 = vunpack.c.h.bf16 %v392
        %v632 = vunpack.c.l.bf16 %v393
        %v633 = vunpack.c.h.bf16 %v393
        %v634 = vunpack.c.l.bf16 %v394
        %v635 = vld [vmem:[%s235] sm:$0xff]
        %v636 = vld [vmem:[%s235 + $0x8] sm:$0xff]
        %v637 = vld [vmem:[%s235 + $0x10] sm:$0xff]
        %v638 = vld [vmem:[%s235 + $0x18] sm:$0xff]
        %v639 = vld [vmem:[%s235 + $0x20] sm:$0xff]
        %v640 = vld [vmem:[%s235 + $0x28] sm:$0xff]
        %v641 = vld [vmem:[%s235 + $0x30] sm:$0xff]
        %v642 = vld [vmem:[%s235 + $0x38] sm:$0xf]
        %v643 = vld [vmem:[%s235 + $0x3c] sm:$0xff]
        %v644 = vld [vmem:[%s235 + $0x44] sm:$0xff]
        %v645 = vld [vmem:[%s235 + $0x4c] sm:$0xff]
        %v646 = vld [vmem:[%s235 + $0x54] sm:$0xff]
        %v647 = vld [vmem:[%s235 + $0x5c] sm:$0xff]
        %v648 = vld [vmem:[%s235 + $0x64] sm:$0xff]
        %v649 = vld [vmem:[%s235 + $0x6c] sm:$0xff]
        %v650 = vld [vmem:[%s235 + $0x74] sm:$0xf]
        %v651 = vld [vmem:[%s235 + $0x78] sm:$0xff]
        %v652 = vld [vmem:[%s235 + $0x80] sm:$0xff]
        %v653 = vld [vmem:[%s235 + $0x88] sm:$0xff]
        %v654 = vld [vmem:[%s235 + $0x90] sm:$0xff]
        %v655 = vld [vmem:[%s235 + $0x98] sm:$0xff]
        %v656 = vld [vmem:[%s235 + $0xa0] sm:$0xff]
        %v657 = vld [vmem:[%s235 + $0xa8] sm:$0xff]
        %v658 = vld [vmem:[%s235 + $0xb0] sm:$0xf]
        %v659 = vld [vmem:[%s235 + $0xb4] sm:$0xff]
        %v660 = vld [vmem:[%s235 + $0xbc] sm:$0xff]
        %v661 = vld [vmem:[%s235 + $0xc4] sm:$0xff]
        %v662 = vld [vmem:[%s235 + $0xcc] sm:$0xff]
        %v663 = vld [vmem:[%s235 + $0xd4] sm:$0xff]
        %v664 = vld [vmem:[%s235 + $0xdc] sm:$0xff]
        %v665 = vld [vmem:[%s235 + $0xe4] sm:$0xff]
        %v666 = vld [vmem:[%s235 + $0xec] sm:$0xf]
        %v667 = vunpack.c.l.bf16 %v635
        %v668 = vunpack.c.h.bf16 %v635
        %v669 = vunpack.c.l.bf16 %v636
        %v670 = vunpack.c.h.bf16 %v636
        %v671 = vunpack.c.l.bf16 %v637
        %v672 = vunpack.c.h.bf16 %v637
        %v673 = vunpack.c.l.bf16 %v638
        %v674 = vunpack.c.h.bf16 %v638
        %v675 = vunpack.c.l.bf16 %v639
        %v676 = vunpack.c.h.bf16 %v639
        %v677 = vunpack.c.l.bf16 %v640
        %v678 = vunpack.c.h.bf16 %v640
        %v679 = vunpack.c.l.bf16 %v641
        %v680 = vunpack.c.h.bf16 %v641
        %v681 = vunpack.c.l.bf16 %v642
        %v682 = vunpack.c.l.bf16 %v643
        %v683 = vunpack.c.h.bf16 %v643
        %v684 = vunpack.c.l.bf16 %v644
        %v685 = vunpack.c.h.bf16 %v644
        %v686 = vunpack.c.l.bf16 %v645
        %v687 = vunpack.c.h.bf16 %v645
        %v688 = vunpack.c.l.bf16 %v646
        %v689 = vunpack.c.h.bf16 %v646
        %v690 = vunpack.c.l.bf16 %v647
        %v691 = vunpack.c.h.bf16 %v647
        %v692 = vunpack.c.l.bf16 %v648
        %v693 = vunpack.c.h.bf16 %v648
        %v694 = vunpack.c.l.bf16 %v649
        %v695 = vunpack.c.h.bf16 %v649
        %v696 = vunpack.c.l.bf16 %v650
        %v697 = vunpack.c.l.bf16 %v651
        %v698 = vunpack.c.h.bf16 %v651
        %v699 = vunpack.c.l.bf16 %v652
        %v700 = vunpack.c.h.bf16 %v652
        %v701 = vunpack.c.l.bf16 %v653
        %v702 = vunpack.c.h.bf16 %v653
        %v703 = vunpack.c.l.bf16 %v654
        %v704 = vunpack.c.h.bf16 %v654
        %v705 = vunpack.c.l.bf16 %v655
        %v706 = vunpack.c.h.bf16 %v655
        %v707 = vunpack.c.l.bf16 %v656
        %v708 = vunpack.c.h.bf16 %v656
        %v709 = vunpack.c.l.bf16 %v657
        %v710 = vunpack.c.h.bf16 %v657
        %v711 = vunpack.c.l.bf16 %v658
        %v712 = vunpack.c.l.bf16 %v659
        %v713 = vunpack.c.h.bf16 %v659
        %v714 = vunpack.c.l.bf16 %v660
        %v715 = vunpack.c.h.bf16 %v660
        %v716 = vunpack.c.l.bf16 %v661
        %v717 = vunpack.c.h.bf16 %v661
        %v718 = vunpack.c.l.bf16 %v662
        %v719 = vunpack.c.h.bf16 %v662
        %v720 = vunpack.c.l.bf16 %v663
        %v721 = vunpack.c.h.bf16 %v663
        %v722 = vunpack.c.l.bf16 %v664
        %v723 = vunpack.c.h.bf16 %v664
        %v724 = vunpack.c.l.bf16 %v665
        %v725 = vunpack.c.h.bf16 %v665
        %v726 = vunpack.c.l.bf16 %v666
        %v727 = vmul.f32 %v395, %v667
        %v728 = vmul.f32 %v396, %v668
        %v729 = vmul.f32 %v397, %v669
        %v730 = vmul.f32 %v398, %v670
        %v731 = vmul.f32 %v399, %v671
        %v732 = vmul.f32 %v400, %v672
        %v733 = vmul.f32 %v401, %v673
        %v734 = vmul.f32 %v402, %v674
        %v735 = vmul.f32 %v403, %v675
        %v736 = vmul.f32 %v404, %v676
        %v737 = vmul.f32 %v405, %v677
        %v738 = vmul.f32 %v406, %v678
        %v739 = vmul.f32 %v407, %v679
        %v740 = vmul.f32 %v408, %v680
        %v741 = vmul.f32 %v409, %v681
        %v742 = vmul.f32 %v410, %v667
        %v743 = vmul.f32 %v411, %v668
        %v744 = vmul.f32 %v412, %v669
        %v745 = vmul.f32 %v413, %v670
        %v746 = vmul.f32 %v414, %v671
        %v747 = vmul.f32 %v415, %v672
        %v748 = vmul.f32 %v416, %v673
        %v749 = vmul.f32 %v417, %v674
        %v750 = vmul.f32 %v418, %v675
        %v751 = vmul.f32 %v419, %v676
        %v752 = vmul.f32 %v420, %v677
        %v753 = vmul.f32 %v421, %v678
        %v754 = vmul.f32 %v422, %v679
        %v755 = vmul.f32 %v423, %v680
        %v756 = vmul.f32 %v424, %v681
        %v757 = vmul.f32 %v425, %v667
        %v758 = vmul.f32 %v426, %v668
        %v759 = vmul.f32 %v427, %v669
        %v760 = vmul.f32 %v428, %v670
        %v761 = vmul.f32 %v429, %v671
        %v762 = vmul.f32 %v430, %v672
        %v763 = vmul.f32 %v431, %v673
        %v764 = vmul.f32 %v432, %v674
        %v765 = vmul.f32 %v433, %v675
        %v766 = vmul.f32 %v434, %v676
        %v767 = vmul.f32 %v435, %v677
        %v768 = vmul.f32 %v436, %v678
        %v769 = vmul.f32 %v437, %v679
        %v770 = vmul.f32 %v438, %v680
        %v771 = vmul.f32 %v439, %v681
        %v772 = vmul.f32 %v440, %v667
        %v773 = vmul.f32 %v441, %v668
        %v774 = vmul.f32 %v442, %v669
        %v775 = vmul.f32 %v443, %v670
        %v776 = vmul.f32 %v444, %v671
        %v777 = vmul.f32 %v445, %v672
        %v778 = vmul.f32 %v446, %v673
        %v779 = vmul.f32 %v447, %v674
        %v780 = vmul.f32 %v448, %v675
        %v781 = vmul.f32 %v449, %v676
        %v782 = vmul.f32 %v450, %v677
        %v783 = vmul.f32 %v451, %v678
        %v784 = vmul.f32 %v452, %v679
        %v785 = vmul.f32 %v453, %v680
        %v786 = vmul.f32 %v454, %v681
        %v787 = vmul.f32 %v455, %v667
        %v788 = vmul.f32 %v456, %v668
        %v789 = vmul.f32 %v457, %v669
        %v790 = vmul.f32 %v458, %v670
        %v791 = vmul.f32 %v459, %v671
        %v792 = vmul.f32 %v460, %v672
        %v793 = vmul.f32 %v461, %v673
        %v794 = vmul.f32 %v462, %v674
        %v795 = vmul.f32 %v463, %v675
        %v796 = vmul.f32 %v464, %v676
        %v797 = vmul.f32 %v465, %v677
        %v798 = vmul.f32 %v466, %v678
        %v799 = vmul.f32 %v467, %v679
        %v800 = vmul.f32 %v468, %v680
        %v801 = vmul.f32 %v469, %v681
        %v802 = vmul.f32 %v470, %v667
        %v803 = vmul.f32 %v471, %v668
        %v804 = vmul.f32 %v472, %v669
        %v805 = vmul.f32 %v473, %v670
        %v806 = vmul.f32 %v474, %v671
        %v807 = vmul.f32 %v475, %v672
        %v808 = vmul.f32 %v476, %v673
        %v809 = vmul.f32 %v477, %v674
        %v810 = vmul.f32 %v478, %v675
        %v811 = vmul.f32 %v479, %v676
        %v812 = vmul.f32 %v480, %v677
        %v813 = vmul.f32 %v481, %v678
        %v814 = vmul.f32 %v482, %v679
        %v815 = vmul.f32 %v483, %v680
        %v816 = vmul.f32 %v484, %v681
        %v817 = vmul.f32 %v485, %v667
        %v818 = vmul.f32 %v486, %v668
        %v819 = vmul.f32 %v487, %v669
        %v820 = vmul.f32 %v488, %v670
        %v821 = vmul.f32 %v489, %v671
        %v822 = vmul.f32 %v490, %v672
        %v823 = vmul.f32 %v491, %v673
        %v824 = vmul.f32 %v492, %v674
        %v825 = vmul.f32 %v493, %v675
        %v826 = vmul.f32 %v494, %v676
        %v827 = vmul.f32 %v495, %v677
        %v828 = vmul.f32 %v496, %v678
        %v829 = vmul.f32 %v497, %v679
        %v830 = vmul.f32 %v498, %v680
        %v831 = vmul.f32 %v499, %v681
        %v832 = vmul.f32 %v500, %v667
        %v833 = vmul.f32 %v501, %v668
        %v834 = vmul.f32 %v502, %v669
        %v835 = vmul.f32 %v503, %v670
        %v836 = vmul.f32 %v504, %v671
        %v837 = vmul.f32 %v505, %v672
        %v838 = vmul.f32 %v506, %v673
        %v839 = vmul.f32 %v507, %v674
        %v840 = vmul.f32 %v508, %v675
        %v841 = vmul.f32 %v509, %v676
        %v842 = vmul.f32 %v510, %v677
        %v843 = vmul.f32 %v511, %v678
        %v844 = vmul.f32 %v512, %v679
        %v845 = vmul.f32 %v513, %v680
        %v846 = vmul.f32 %v514, %v681
        %v847 = vmul.f32 %v515, %v667
        %v848 = vmul.f32 %v516, %v668
        %v849 = vmul.f32 %v517, %v669
        %v850 = vmul.f32 %v518, %v670
        %v851 = vmul.f32 %v519, %v671
        %v852 = vmul.f32 %v520, %v672
        %v853 = vmul.f32 %v521, %v673
        %v854 = vmul.f32 %v522, %v674
        %v855 = vmul.f32 %v523, %v675
        %v856 = vmul.f32 %v524, %v676
        %v857 = vmul.f32 %v525, %v677
        %v858 = vmul.f32 %v526, %v678
        %v859 = vmul.f32 %v527, %v679
        %v860 = vmul.f32 %v528, %v680
        %v861 = vmul.f32 %v529, %v681
        %v862 = vmul.f32 %v530, %v667
        %v863 = vmul.f32 %v531, %v668
        %v864 = vmul.f32 %v532, %v669
        %v865 = vmul.f32 %v533, %v670
        %v866 = vmul.f32 %v534, %v671
        %v867 = vmul.f32 %v535, %v672
        %v868 = vmul.f32 %v536, %v673
        %v869 = vmul.f32 %v537, %v674
        %v870 = vmul.f32 %v538, %v675
        %v871 = vmul.f32 %v539, %v676
        %v872 = vmul.f32 %v540, %v677
        %v873 = vmul.f32 %v541, %v678
        %v874 = vmul.f32 %v542, %v679
        %v875 = vmul.f32 %v543, %v680
        %v876 = vmul.f32 %v544, %v681
        %v877 = vmul.f32 %v545, %v667
        %v878 = vmul.f32 %v546, %v668
        %v879 = vmul.f32 %v547, %v669
        %v880 = vmul.f32 %v548, %v670
        %v881 = vmul.f32 %v549, %v671
        %v882 = vmul.f32 %v550, %v672
        %v883 = vmul.f32 %v551, %v673
        %v884 = vmul.f32 %v552, %v674
        %v885 = vmul.f32 %v553, %v675
        %v886 = vmul.f32 %v554, %v676
        %v887 = vmul.f32 %v555, %v677
        %v888 = vmul.f32 %v556, %v678
        %v889 = vmul.f32 %v557, %v679
        %v890 = vmul.f32 %v558, %v680
        %v891 = vmul.f32 %v559, %v681
        %v892 = vmul.f32 %v560, %v667
        %v893 = vmul.f32 %v561, %v668
        %v894 = vmul.f32 %v562, %v669
        %v895 = vmul.f32 %v563, %v670
        %v896 = vmul.f32 %v564, %v671
        %v897 = vmul.f32 %v565, %v672
        %v898 = vmul.f32 %v566, %v673
        %v899 = vmul.f32 %v567, %v674
        %v900 = vmul.f32 %v568, %v675
        %v901 = vmul.f32 %v569, %v676
        %v902 = vmul.f32 %v570, %v677
        %v903 = vmul.f32 %v571, %v678
        %v904 = vmul.f32 %v572, %v679
        %v905 = vmul.f32 %v573, %v680
        %v906 = vmul.f32 %v574, %v681
        %v907 = vmul.f32 %v575, %v667
        %v908 = vmul.f32 %v576, %v668
        %v909 = vmul.f32 %v577, %v669
        %v910 = vmul.f32 %v578, %v670
        %v911 = vmul.f32 %v579, %v671
        %v912 = vmul.f32 %v580, %v672
        %v913 = vmul.f32 %v581, %v673
        %v914 = vmul.f32 %v582, %v674
        %v915 = vmul.f32 %v583, %v675
        %v916 = vmul.f32 %v584, %v676
        %v917 = vmul.f32 %v585, %v677
        %v918 = vmul.f32 %v586, %v678
        %v919 = vmul.f32 %v587, %v679
        %v920 = vmul.f32 %v588, %v680
        %v921 = vmul.f32 %v589, %v681
        %v922 = vmul.f32 %v590, %v667
        %v923 = vmul.f32 %v591, %v668
        %v924 = vmul.f32 %v592, %v669
        %v925 = vmul.f32 %v593, %v670
        %v926 = vmul.f32 %v594, %v671
        %v927 = vmul.f32 %v595, %v672
        %v928 = vmul.f32 %v596, %v673
        %v929 = vmul.f32 %v597, %v674
        %v930 = vmul.f32 %v598, %v675
        %v931 = vmul.f32 %v599, %v676
        %v932 = vmul.f32 %v600, %v677
        %v933 = vmul.f32 %v601, %v678
        %v934 = vmul.f32 %v602, %v679
        %v935 = vmul.f32 %v603, %v680
        %v936 = vmul.f32 %v604, %v681
        %v937 = vmul.f32 %v605, %v667
        %v938 = vmul.f32 %v606, %v668
        %v939 = vmul.f32 %v607, %v669
        %v940 = vmul.f32 %v608, %v670
        %v941 = vmul.f32 %v609, %v671
        %v942 = vmul.f32 %v610, %v672
        %v943 = vmul.f32 %v611, %v673
        %v944 = vmul.f32 %v612, %v674
        %v945 = vmul.f32 %v613, %v675
        %v946 = vmul.f32 %v614, %v676
        %v947 = vmul.f32 %v615, %v677
        %v948 = vmul.f32 %v616, %v678
        %v949 = vmul.f32 %v617, %v679
        %v950 = vmul.f32 %v618, %v680
        %v951 = vmul.f32 %v619, %v681
        %v952 = vmul.f32 %v620, %v667
        %v953 = vmul.f32 %v621, %v668
        %v954 = vmul.f32 %v622, %v669
        %v955 = vmul.f32 %v623, %v670
        %v956 = vmul.f32 %v624, %v671
        %v957 = vmul.f32 %v625, %v672
        %v958 = vmul.f32 %v626, %v673
        %v959 = vmul.f32 %v627, %v674
        %v960 = vmul.f32 %v628, %v675
        %v961 = vmul.f32 %v629, %v676
        %v962 = vmul.f32 %v630, %v677
        %v963 = vmul.f32 %v631, %v678
        %v964 = vmul.f32 %v632, %v679
        %v965 = vmul.f32 %v633, %v680
        %v966 = vmul.f32 %v634, %v681
        %v967 = vrot.slane %v727, 4
        %v968 = vadd.f32 %v727, %v967
        %v969 = vrot.slane %v968, 2
        %v970 = vadd.f32 %v968, %v969
        %v971 = vrot.slane %v970, 1
        %v972 = vadd.f32 %v970, %v971
        %v973 = vrot.slane %v728, 4
        %v974 = vadd.f32 %v728, %v973
        %v975 = vrot.slane %v974, 2
        %v976 = vadd.f32 %v974, %v975
        %v977 = vrot.slane %v976, 1
        %v978 = vadd.f32 %v976, %v977
        %v979 = vrot.slane %v729, 4
        %v980 = vadd.f32 %v729, %v979
        %v981 = vrot.slane %v980, 2
        %v982 = vadd.f32 %v980, %v981
        %v983 = vrot.slane %v982, 1
        %v984 = vadd.f32 %v982, %v983
        %v985 = vrot.slane %v730, 4
        %v986 = vadd.f32 %v730, %v985
        %v987 = vrot.slane %v986, 2
        %v988 = vadd.f32 %v986, %v987
        %v989 = vrot.slane %v988, 1
        %v990 = vadd.f32 %v988, %v989
        %v991 = vrot.slane %v731, 4
        %v992 = vadd.f32 %v731, %v991
        %v993 = vrot.slane %v992, 2
        %v994 = vadd.f32 %v992, %v993
        %v995 = vrot.slane %v994, 1
        %v996 = vadd.f32 %v994, %v995
        %v997 = vrot.slane %v732, 4
        %v998 = vadd.f32 %v732, %v997
        %v999 = vrot.slane %v998, 2
        %v1000 = vadd.f32 %v998, %v999
        %v1001 = vrot.slane %v1000, 1
        %v1002 = vadd.f32 %v1000, %v1001
        %v1003 = vrot.slane %v733, 4
        %v1004 = vadd.f32 %v733, %v1003
        %v1005 = vrot.slane %v1004, 2
        %v1006 = vadd.f32 %v1004, %v1005
        %v1007 = vrot.slane %v1006, 1
        %v1008 = vadd.f32 %v1006, %v1007
        %v1009 = vrot.slane %v734, 4
        %v1010 = vadd.f32 %v734, %v1009
        %v1011 = vrot.slane %v1010, 2
        %v1012 = vadd.f32 %v1010, %v1011
        %v1013 = vrot.slane %v1012, 1
        %v1014 = vadd.f32 %v1012, %v1013
        %v1015 = vrot.slane %v735, 4
        %v1016 = vadd.f32 %v735, %v1015
        %v1017 = vrot.slane %v1016, 2
        %v1018 = vadd.f32 %v1016, %v1017
        %v1019 = vrot.slane %v1018, 1
        %v1020 = vadd.f32 %v1018, %v1019
        %v1021 = vrot.slane %v736, 4
        %v1022 = vadd.f32 %v736, %v1021
        %v1023 = vrot.slane %v1022, 2
        %v1024 = vadd.f32 %v1022, %v1023
        %v1025 = vrot.slane %v1024, 1
        %v1026 = vadd.f32 %v1024, %v1025
        %v1027 = vrot.slane %v737, 4
        %v1028 = vadd.f32 %v737, %v1027
        %v1029 = vrot.slane %v1028, 2
        %v1030 = vadd.f32 %v1028, %v1029
        %v1031 = vrot.slane %v1030, 1
        %v1032 = vadd.f32 %v1030, %v1031
        %v1033 = vrot.slane %v738, 4
        %v1034 = vadd.f32 %v738, %v1033
        %v1035 = vrot.slane %v1034, 2
        %v1036 = vadd.f32 %v1034, %v1035
        %v1037 = vrot.slane %v1036, 1
        %v1038 = vadd.f32 %v1036, %v1037
        %v1039 = vrot.slane %v739, 4
        %v1040 = vadd.f32 %v739, %v1039
        %v1041 = vrot.slane %v1040, 2
        %v1042 = vadd.f32 %v1040, %v1041
        %v1043 = vrot.slane %v1042, 1
        %v1044 = vadd.f32 %v1042, %v1043
        %v1045 = vrot.slane %v740, 4
        %v1046 = vadd.f32 %v740, %v1045
        %v1047 = vrot.slane %v1046, 2
        %v1048 = vadd.f32 %v1046, %v1047
        %v1049 = vrot.slane %v1048, 1
        %v1050 = vadd.f32 %v1048, %v1049
        %v1051 = vrot.slane %v741, 4
        %v1052 = vadd.f32 %v741, %v1051
        %v1053 = vrot.slane %v1052, 2
        %v1054 = vadd.f32 %v1052, %v1053
        %v1055 = vrot.slane %v1054, 1
        %v1056 = vadd.f32 %v1054, %v1055
        %v1057 = vrot.slane %v742, 4
        %v1058 = vadd.f32 %v742, %v1057
        %v1059 = vrot.slane %v1058, 2
        %v1060 = vadd.f32 %v1058, %v1059
        %v1061 = vrot.slane %v1060, 1
        %v1062 = vadd.f32 %v1060, %v1061
        %v1063 = vrot.slane %v743, 4
        %v1064 = vadd.f32 %v743, %v1063
        %v1065 = vrot.slane %v1064, 2
        %v1066 = vadd.f32 %v1064, %v1065
        %v1067 = vrot.slane %v1066, 1
        %v1068 = vadd.f32 %v1066, %v1067
        %v1069 = vrot.slane %v744, 4
        %v1070 = vadd.f32 %v744, %v1069
        %v1071 = vrot.slane %v1070, 2
        %v1072 = vadd.f32 %v1070, %v1071
        %v1073 = vrot.slane %v1072, 1
        %v1074 = vadd.f32 %v1072, %v1073
        %v1075 = vrot.slane %v745, 4
        %v1076 = vadd.f32 %v745, %v1075
        %v1077 = vrot.slane %v1076, 2
        %v1078 = vadd.f32 %v1076, %v1077
        %v1079 = vrot.slane %v1078, 1
        %v1080 = vadd.f32 %v1078, %v1079
        %v1081 = vrot.slane %v746, 4
        %v1082 = vadd.f32 %v746, %v1081
        %v1083 = vrot.slane %v1082, 2
        %v1084 = vadd.f32 %v1082, %v1083
        %v1085 = vrot.slane %v1084, 1
        %v1086 = vadd.f32 %v1084, %v1085
        %v1087 = vrot.slane %v747, 4
        %v1088 = vadd.f32 %v747, %v1087
        %v1089 = vrot.slane %v1088, 2
        %v1090 = vadd.f32 %v1088, %v1089
        %v1091 = vrot.slane %v1090, 1
        %v1092 = vadd.f32 %v1090, %v1091
        %v1093 = vrot.slane %v748, 4
        %v1094 = vadd.f32 %v748, %v1093
        %v1095 = vrot.slane %v1094, 2
        %v1096 = vadd.f32 %v1094, %v1095
        %v1097 = vrot.slane %v1096, 1
        %v1098 = vadd.f32 %v1096, %v1097
        %v1099 = vrot.slane %v749, 4
        %v1100 = vadd.f32 %v749, %v1099
        %v1101 = vrot.slane %v1100, 2
        %v1102 = vadd.f32 %v1100, %v1101
        %v1103 = vrot.slane %v1102, 1
        %v1104 = vadd.f32 %v1102, %v1103
        %v1105 = vrot.slane %v750, 4
        %v1106 = vadd.f32 %v750, %v1105
        %v1107 = vrot.slane %v1106, 2
        %v1108 = vadd.f32 %v1106, %v1107
        %v1109 = vrot.slane %v1108, 1
        %v1110 = vadd.f32 %v1108, %v1109
        %v1111 = vrot.slane %v751, 4
        %v1112 = vadd.f32 %v751, %v1111
        %v1113 = vrot.slane %v1112, 2
        %v1114 = vadd.f32 %v1112, %v1113
        %v1115 = vrot.slane %v1114, 1
        %v1116 = vadd.f32 %v1114, %v1115
        %v1117 = vrot.slane %v752, 4
        %v1118 = vadd.f32 %v752, %v1117
        %v1119 = vrot.slane %v1118, 2
        %v1120 = vadd.f32 %v1118, %v1119
        %v1121 = vrot.slane %v1120, 1
        %v1122 = vadd.f32 %v1120, %v1121
        %v1123 = vrot.slane %v753, 4
        %v1124 = vadd.f32 %v753, %v1123
        %v1125 = vrot.slane %v1124, 2
        %v1126 = vadd.f32 %v1124, %v1125
        %v1127 = vrot.slane %v1126, 1
        %v1128 = vadd.f32 %v1126, %v1127
        %v1129 = vrot.slane %v754, 4
        %v1130 = vadd.f32 %v754, %v1129
        %v1131 = vrot.slane %v1130, 2
        %v1132 = vadd.f32 %v1130, %v1131
        %v1133 = vrot.slane %v1132, 1
        %v1134 = vadd.f32 %v1132, %v1133
        %v1135 = vrot.slane %v755, 4
        %v1136 = vadd.f32 %v755, %v1135
        %v1137 = vrot.slane %v1136, 2
        %v1138 = vadd.f32 %v1136, %v1137
        %v1139 = vrot.slane %v1138, 1
        %v1140 = vadd.f32 %v1138, %v1139
        %v1141 = vrot.slane %v756, 4
        %v1142 = vadd.f32 %v756, %v1141
        %v1143 = vrot.slane %v1142, 2
        %v1144 = vadd.f32 %v1142, %v1143
        %v1145 = vrot.slane %v1144, 1
        %v1146 = vadd.f32 %v1144, %v1145
        %v1147 = vrot.slane %v757, 4
        %v1148 = vadd.f32 %v757, %v1147
        %v1149 = vrot.slane %v1148, 2
        %v1150 = vadd.f32 %v1148, %v1149
        %v1151 = vrot.slane %v1150, 1
        %v1152 = vadd.f32 %v1150, %v1151
        %v1153 = vrot.slane %v758, 4
        %v1154 = vadd.f32 %v758, %v1153
        %v1155 = vrot.slane %v1154, 2
        %v1156 = vadd.f32 %v1154, %v1155
        %v1157 = vrot.slane %v1156, 1
        %v1158 = vadd.f32 %v1156, %v1157
        %v1159 = vrot.slane %v759, 4
        %v1160 = vadd.f32 %v759, %v1159
        %v1161 = vrot.slane %v1160, 2
        %v1162 = vadd.f32 %v1160, %v1161
        %v1163 = vrot.slane %v1162, 1
        %v1164 = vadd.f32 %v1162, %v1163
        %v1165 = vrot.slane %v760, 4
        %v1166 = vadd.f32 %v760, %v1165
        %v1167 = vrot.slane %v1166, 2
        %v1168 = vadd.f32 %v1166, %v1167
        %v1169 = vrot.slane %v1168, 1
        %v1170 = vadd.f32 %v1168, %v1169
        %v1171 = vrot.slane %v761, 4
        %v1172 = vadd.f32 %v761, %v1171
        %v1173 = vrot.slane %v1172, 2
        %v1174 = vadd.f32 %v1172, %v1173
        %v1175 = vrot.slane %v1174, 1
        %v1176 = vadd.f32 %v1174, %v1175
        %v1177 = vrot.slane %v762, 4
        %v1178 = vadd.f32 %v762, %v1177
        %v1179 = vrot.slane %v1178, 2
        %v1180 = vadd.f32 %v1178, %v1179
        %v1181 = vrot.slane %v1180, 1
        %v1182 = vadd.f32 %v1180, %v1181
        %v1183 = vrot.slane %v763, 4
        %v1184 = vadd.f32 %v763, %v1183
        %v1185 = vrot.slane %v1184, 2
        %v1186 = vadd.f32 %v1184, %v1185
        %v1187 = vrot.slane %v1186, 1
        %v1188 = vadd.f32 %v1186, %v1187
        %v1189 = vrot.slane %v764, 4
        %v1190 = vadd.f32 %v764, %v1189
        %v1191 = vrot.slane %v1190, 2
        %v1192 = vadd.f32 %v1190, %v1191
        %v1193 = vrot.slane %v1192, 1
        %v1194 = vadd.f32 %v1192, %v1193
        %v1195 = vrot.slane %v765, 4
        %v1196 = vadd.f32 %v765, %v1195
        %v1197 = vrot.slane %v1196, 2
        %v1198 = vadd.f32 %v1196, %v1197
        %v1199 = vrot.slane %v1198, 1
        %v1200 = vadd.f32 %v1198, %v1199
        %v1201 = vrot.slane %v766, 4
        %v1202 = vadd.f32 %v766, %v1201
        %v1203 = vrot.slane %v1202, 2
        %v1204 = vadd.f32 %v1202, %v1203
        %v1205 = vrot.slane %v1204, 1
        %v1206 = vadd.f32 %v1204, %v1205
        %v1207 = vrot.slane %v767, 4
        %v1208 = vadd.f32 %v767, %v1207
        %v1209 = vrot.slane %v1208, 2
        %v1210 = vadd.f32 %v1208, %v1209
        %v1211 = vrot.slane %v1210, 1
        %v1212 = vadd.f32 %v1210, %v1211
        %v1213 = vrot.slane %v768, 4
        %v1214 = vadd.f32 %v768, %v1213
        %v1215 = vrot.slane %v1214, 2
        %v1216 = vadd.f32 %v1214, %v1215
        %v1217 = vrot.slane %v1216, 1
        %v1218 = vadd.f32 %v1216, %v1217
        %v1219 = vrot.slane %v769, 4
        %v1220 = vadd.f32 %v769, %v1219
        %v1221 = vrot.slane %v1220, 2
        %v1222 = vadd.f32 %v1220, %v1221
        %v1223 = vrot.slane %v1222, 1
        %v1224 = vadd.f32 %v1222, %v1223
        %v1225 = vrot.slane %v770, 4
        %v1226 = vadd.f32 %v770, %v1225
        %v1227 = vrot.slane %v1226, 2
        %v1228 = vadd.f32 %v1226, %v1227
        %v1229 = vrot.slane %v1228, 1
        %v1230 = vadd.f32 %v1228, %v1229
        %v1231 = vrot.slane %v771, 4
        %v1232 = vadd.f32 %v771, %v1231
        %v1233 = vrot.slane %v1232, 2
        %v1234 = vadd.f32 %v1232, %v1233
        %v1235 = vrot.slane %v1234, 1
        %v1236 = vadd.f32 %v1234, %v1235
        %v1237 = vrot.slane %v772, 4
        %v1238 = vadd.f32 %v772, %v1237
        %v1239 = vrot.slane %v1238, 2
        %v1240 = vadd.f32 %v1238, %v1239
        %v1241 = vrot.slane %v1240, 1
        %v1242 = vadd.f32 %v1240, %v1241
        %v1243 = vrot.slane %v773, 4
        %v1244 = vadd.f32 %v773, %v1243
        %v1245 = vrot.slane %v1244, 2
        %v1246 = vadd.f32 %v1244, %v1245
        %v1247 = vrot.slane %v1246, 1
        %v1248 = vadd.f32 %v1246, %v1247
        %v1249 = vrot.slane %v774, 4
        %v1250 = vadd.f32 %v774, %v1249
        %v1251 = vrot.slane %v1250, 2
        %v1252 = vadd.f32 %v1250, %v1251
        %v1253 = vrot.slane %v1252, 1
        %v1254 = vadd.f32 %v1252, %v1253
        %v1255 = vrot.slane %v775, 4
        %v1256 = vadd.f32 %v775, %v1255
        %v1257 = vrot.slane %v1256, 2
        %v1258 = vadd.f32 %v1256, %v1257
        %v1259 = vrot.slane %v1258, 1
        %v1260 = vadd.f32 %v1258, %v1259
        %v1261 = vrot.slane %v776, 4
        %v1262 = vadd.f32 %v776, %v1261
        %v1263 = vrot.slane %v1262, 2
        %v1264 = vadd.f32 %v1262, %v1263
        %v1265 = vrot.slane %v1264, 1
        %v1266 = vadd.f32 %v1264, %v1265
        %v1267 = vrot.slane %v777, 4
        %v1268 = vadd.f32 %v777, %v1267
        %v1269 = vrot.slane %v1268, 2
        %v1270 = vadd.f32 %v1268, %v1269
        %v1271 = vrot.slane %v1270, 1
        %v1272 = vadd.f32 %v1270, %v1271
        %v1273 = vrot.slane %v778, 4
        %v1274 = vadd.f32 %v778, %v1273
        %v1275 = vrot.slane %v1274, 2
        %v1276 = vadd.f32 %v1274, %v1275
        %v1277 = vrot.slane %v1276, 1
        %v1278 = vadd.f32 %v1276, %v1277
        %v1279 = vrot.slane %v779, 4
        %v1280 = vadd.f32 %v779, %v1279
        %v1281 = vrot.slane %v1280, 2
        %v1282 = vadd.f32 %v1280, %v1281
        %v1283 = vrot.slane %v1282, 1
        %v1284 = vadd.f32 %v1282, %v1283
        %v1285 = vrot.slane %v780, 4
        %v1286 = vadd.f32 %v780, %v1285
        %v1287 = vrot.slane %v1286, 2
        %v1288 = vadd.f32 %v1286, %v1287
        %v1289 = vrot.slane %v1288, 1
        %v1290 = vadd.f32 %v1288, %v1289
        %v1291 = vrot.slane %v781, 4
        %v1292 = vadd.f32 %v781, %v1291
        %v1293 = vrot.slane %v1292, 2
        %v1294 = vadd.f32 %v1292, %v1293
        %v1295 = vrot.slane %v1294, 1
        %v1296 = vadd.f32 %v1294, %v1295
        %v1297 = vrot.slane %v782, 4
        %v1298 = vadd.f32 %v782, %v1297
        %v1299 = vrot.slane %v1298, 2
        %v1300 = vadd.f32 %v1298, %v1299
        %v1301 = vrot.slane %v1300, 1
        %v1302 = vadd.f32 %v1300, %v1301
        %v1303 = vrot.slane %v783, 4
        %v1304 = vadd.f32 %v783, %v1303
        %v1305 = vrot.slane %v1304, 2
        %v1306 = vadd.f32 %v1304, %v1305
        %v1307 = vrot.slane %v1306, 1
        %v1308 = vadd.f32 %v1306, %v1307
        %v1309 = vrot.slane %v784, 4
        %v1310 = vadd.f32 %v784, %v1309
        %v1311 = vrot.slane %v1310, 2
        %v1312 = vadd.f32 %v1310, %v1311
        %v1313 = vrot.slane %v1312, 1
        %v1314 = vadd.f32 %v1312, %v1313
        %v1315 = vrot.slane %v785, 4
        %v1316 = vadd.f32 %v785, %v1315
        %v1317 = vrot.slane %v1316, 2
        %v1318 = vadd.f32 %v1316, %v1317
        %v1319 = vrot.slane %v1318, 1
        %v1320 = vadd.f32 %v1318, %v1319
        %v1321 = vrot.slane %v786, 4
        %v1322 = vadd.f32 %v786, %v1321
        %v1323 = vrot.slane %v1322, 2
        %v1324 = vadd.f32 %v1322, %v1323
        %v1325 = vrot.slane %v1324, 1
        %v1326 = vadd.f32 %v1324, %v1325
        %v1327 = vrot.slane %v787, 4
        %v1328 = vadd.f32 %v787, %v1327
        %v1329 = vrot.slane %v1328, 2
        %v1330 = vadd.f32 %v1328, %v1329
        %v1331 = vrot.slane %v1330, 1
        %v1332 = vadd.f32 %v1330, %v1331
        %v1333 = vrot.slane %v788, 4
        %v1334 = vadd.f32 %v788, %v1333
        %v1335 = vrot.slane %v1334, 2
        %v1336 = vadd.f32 %v1334, %v1335
        %v1337 = vrot.slane %v1336, 1
        %v1338 = vadd.f32 %v1336, %v1337
        %v1339 = vrot.slane %v789, 4
        %v1340 = vadd.f32 %v789, %v1339
        %v1341 = vrot.slane %v1340, 2
        %v1342 = vadd.f32 %v1340, %v1341
        %v1343 = vrot.slane %v1342, 1
        %v1344 = vadd.f32 %v1342, %v1343
        %v1345 = vrot.slane %v790, 4
        %v1346 = vadd.f32 %v790, %v1345
        %v1347 = vrot.slane %v1346, 2
        %v1348 = vadd.f32 %v1346, %v1347
        %v1349 = vrot.slane %v1348, 1
        %v1350 = vadd.f32 %v1348, %v1349
        %v1351 = vrot.slane %v791, 4
        %v1352 = vadd.f32 %v791, %v1351
        %v1353 = vrot.slane %v1352, 2
        %v1354 = vadd.f32 %v1352, %v1353
        %v1355 = vrot.slane %v1354, 1
        %v1356 = vadd.f32 %v1354, %v1355
        %v1357 = vrot.slane %v792, 4
        %v1358 = vadd.f32 %v792, %v1357
        %v1359 = vrot.slane %v1358, 2
        %v1360 = vadd.f32 %v1358, %v1359
        %v1361 = vrot.slane %v1360, 1
        %v1362 = vadd.f32 %v1360, %v1361
        %v1363 = vrot.slane %v793, 4
        %v1364 = vadd.f32 %v793, %v1363
        %v1365 = vrot.slane %v1364, 2
        %v1366 = vadd.f32 %v1364, %v1365
        %v1367 = vrot.slane %v1366, 1
        %v1368 = vadd.f32 %v1366, %v1367
        %v1369 = vrot.slane %v794, 4
        %v1370 = vadd.f32 %v794, %v1369
        %v1371 = vrot.slane %v1370, 2
        %v1372 = vadd.f32 %v1370, %v1371
        %v1373 = vrot.slane %v1372, 1
        %v1374 = vadd.f32 %v1372, %v1373
        %v1375 = vrot.slane %v795, 4
        %v1376 = vadd.f32 %v795, %v1375
        %v1377 = vrot.slane %v1376, 2
        %v1378 = vadd.f32 %v1376, %v1377
        %v1379 = vrot.slane %v1378, 1
        %v1380 = vadd.f32 %v1378, %v1379
        %v1381 = vrot.slane %v796, 4
        %v1382 = vadd.f32 %v796, %v1381
        %v1383 = vrot.slane %v1382, 2
        %v1384 = vadd.f32 %v1382, %v1383
        %v1385 = vrot.slane %v1384, 1
        %v1386 = vadd.f32 %v1384, %v1385
        %v1387 = vrot.slane %v797, 4
        %v1388 = vadd.f32 %v797, %v1387
        %v1389 = vrot.slane %v1388, 2
        %v1390 = vadd.f32 %v1388, %v1389
        %v1391 = vrot.slane %v1390, 1
        %v1392 = vadd.f32 %v1390, %v1391
        %v1393 = vrot.slane %v798, 4
        %v1394 = vadd.f32 %v798, %v1393
        %v1395 = vrot.slane %v1394, 2
        %v1396 = vadd.f32 %v1394, %v1395
        %v1397 = vrot.slane %v1396, 1
        %v1398 = vadd.f32 %v1396, %v1397
        %v1399 = vrot.slane %v799, 4
        %v1400 = vadd.f32 %v799, %v1399
        %v1401 = vrot.slane %v1400, 2
        %v1402 = vadd.f32 %v1400, %v1401
        %v1403 = vrot.slane %v1402, 1
        %v1404 = vadd.f32 %v1402, %v1403
        %v1405 = vrot.slane %v800, 4
        %v1406 = vadd.f32 %v800, %v1405
        %v1407 = vrot.slane %v1406, 2
        %v1408 = vadd.f32 %v1406, %v1407
        %v1409 = vrot.slane %v1408, 1
        %v1410 = vadd.f32 %v1408, %v1409
        %v1411 = vrot.slane %v801, 4
        %v1412 = vadd.f32 %v801, %v1411
        %v1413 = vrot.slane %v1412, 2
        %v1414 = vadd.f32 %v1412, %v1413
        %v1415 = vrot.slane %v1414, 1
        %v1416 = vadd.f32 %v1414, %v1415
        %v1417 = vrot.slane %v802, 4
        %v1418 = vadd.f32 %v802, %v1417
        %v1419 = vrot.slane %v1418, 2
        %v1420 = vadd.f32 %v1418, %v1419
        %v1421 = vrot.slane %v1420, 1
        %v1422 = vadd.f32 %v1420, %v1421
        %v1423 = vrot.slane %v803, 4
        %v1424 = vadd.f32 %v803, %v1423
        %v1425 = vrot.slane %v1424, 2
        %v1426 = vadd.f32 %v1424, %v1425
        %v1427 = vrot.slane %v1426, 1
        %v1428 = vadd.f32 %v1426, %v1427
        %v1429 = vrot.slane %v804, 4
        %v1430 = vadd.f32 %v804, %v1429
        %v1431 = vrot.slane %v1430, 2
        %v1432 = vadd.f32 %v1430, %v1431
        %v1433 = vrot.slane %v1432, 1
        %v1434 = vadd.f32 %v1432, %v1433
        %v1435 = vrot.slane %v805, 4
        %v1436 = vadd.f32 %v805, %v1435
        %v1437 = vrot.slane %v1436, 2
        %v1438 = vadd.f32 %v1436, %v1437
        %v1439 = vrot.slane %v1438, 1
        %v1440 = vadd.f32 %v1438, %v1439
        %v1441 = vrot.slane %v806, 4
        %v1442 = vadd.f32 %v806, %v1441
        %v1443 = vrot.slane %v1442, 2
        %v1444 = vadd.f32 %v1442, %v1443
        %v1445 = vrot.slane %v1444, 1
        %v1446 = vadd.f32 %v1444, %v1445
        %v1447 = vrot.slane %v807, 4
        %v1448 = vadd.f32 %v807, %v1447
        %v1449 = vrot.slane %v1448, 2
        %v1450 = vadd.f32 %v1448, %v1449
        %v1451 = vrot.slane %v1450, 1
        %v1452 = vadd.f32 %v1450, %v1451
        %v1453 = vrot.slane %v808, 4
        %v1454 = vadd.f32 %v808, %v1453
        %v1455 = vrot.slane %v1454, 2
        %v1456 = vadd.f32 %v1454, %v1455
        %v1457 = vrot.slane %v1456, 1
        %v1458 = vadd.f32 %v1456, %v1457
        %v1459 = vrot.slane %v809, 4
        %v1460 = vadd.f32 %v809, %v1459
        %v1461 = vrot.slane %v1460, 2
        %v1462 = vadd.f32 %v1460, %v1461
        %v1463 = vrot.slane %v1462, 1
        %v1464 = vadd.f32 %v1462, %v1463
        %v1465 = vrot.slane %v810, 4
        %v1466 = vadd.f32 %v810, %v1465
        %v1467 = vrot.slane %v1466, 2
        %v1468 = vadd.f32 %v1466, %v1467
        %v1469 = vrot.slane %v1468, 1
        %v1470 = vadd.f32 %v1468, %v1469
        %v1471 = vrot.slane %v811, 4
        %v1472 = vadd.f32 %v811, %v1471
        %v1473 = vrot.slane %v1472, 2
        %v1474 = vadd.f32 %v1472, %v1473
        %v1475 = vrot.slane %v1474, 1
        %v1476 = vadd.f32 %v1474, %v1475
        %v1477 = vrot.slane %v812, 4
        %v1478 = vadd.f32 %v812, %v1477
        %v1479 = vrot.slane %v1478, 2
        %v1480 = vadd.f32 %v1478, %v1479
        %v1481 = vrot.slane %v1480, 1
        %v1482 = vadd.f32 %v1480, %v1481
        %v1483 = vrot.slane %v813, 4
        %v1484 = vadd.f32 %v813, %v1483
        %v1485 = vrot.slane %v1484, 2
        %v1486 = vadd.f32 %v1484, %v1485
        %v1487 = vrot.slane %v1486, 1
        %v1488 = vadd.f32 %v1486, %v1487
        %v1489 = vrot.slane %v814, 4
        %v1490 = vadd.f32 %v814, %v1489
        %v1491 = vrot.slane %v1490, 2
        %v1492 = vadd.f32 %v1490, %v1491
        %v1493 = vrot.slane %v1492, 1
        %v1494 = vadd.f32 %v1492, %v1493
        %v1495 = vrot.slane %v815, 4
        %v1496 = vadd.f32 %v815, %v1495
        %v1497 = vrot.slane %v1496, 2
        %v1498 = vadd.f32 %v1496, %v1497
        %v1499 = vrot.slane %v1498, 1
        %v1500 = vadd.f32 %v1498, %v1499
        %v1501 = vrot.slane %v816, 4
        %v1502 = vadd.f32 %v816, %v1501
        %v1503 = vrot.slane %v1502, 2
        %v1504 = vadd.f32 %v1502, %v1503
        %v1505 = vrot.slane %v1504, 1
        %v1506 = vadd.f32 %v1504, %v1505
        %v1507 = vrot.slane %v817, 4
        %v1508 = vadd.f32 %v817, %v1507
        %v1509 = vrot.slane %v1508, 2
        %v1510 = vadd.f32 %v1508, %v1509
        %v1511 = vrot.slane %v1510, 1
        %v1512 = vadd.f32 %v1510, %v1511
        %v1513 = vrot.slane %v818, 4
        %v1514 = vadd.f32 %v818, %v1513
        %v1515 = vrot.slane %v1514, 2
        %v1516 = vadd.f32 %v1514, %v1515
        %v1517 = vrot.slane %v1516, 1
        %v1518 = vadd.f32 %v1516, %v1517
        %v1519 = vrot.slane %v819, 4
        %v1520 = vadd.f32 %v819, %v1519
        %v1521 = vrot.slane %v1520, 2
        %v1522 = vadd.f32 %v1520, %v1521
        %v1523 = vrot.slane %v1522, 1
        %v1524 = vadd.f32 %v1522, %v1523
        %v1525 = vrot.slane %v820, 4
        %v1526 = vadd.f32 %v820, %v1525
        %v1527 = vrot.slane %v1526, 2
        %v1528 = vadd.f32 %v1526, %v1527
        %v1529 = vrot.slane %v1528, 1
        %v1530 = vadd.f32 %v1528, %v1529
        %v1531 = vrot.slane %v821, 4
        %v1532 = vadd.f32 %v821, %v1531
        %v1533 = vrot.slane %v1532, 2
        %v1534 = vadd.f32 %v1532, %v1533
        %v1535 = vrot.slane %v1534, 1
        %v1536 = vadd.f32 %v1534, %v1535
        %v1537 = vrot.slane %v822, 4
        %v1538 = vadd.f32 %v822, %v1537
        %v1539 = vrot.slane %v1538, 2
        %v1540 = vadd.f32 %v1538, %v1539
        %v1541 = vrot.slane %v1540, 1
        %v1542 = vadd.f32 %v1540, %v1541
        %v1543 = vrot.slane %v823, 4
        %v1544 = vadd.f32 %v823, %v1543
        %v1545 = vrot.slane %v1544, 2
        %v1546 = vadd.f32 %v1544, %v1545
        %v1547 = vrot.slane %v1546, 1
        %v1548 = vadd.f32 %v1546, %v1547
        %v1549 = vrot.slane %v824, 4
        %v1550 = vadd.f32 %v824, %v1549
        %v1551 = vrot.slane %v1550, 2
        %v1552 = vadd.f32 %v1550, %v1551
        %v1553 = vrot.slane %v1552, 1
        %v1554 = vadd.f32 %v1552, %v1553
        %v1555 = vrot.slane %v825, 4
        %v1556 = vadd.f32 %v825, %v1555
        %v1557 = vrot.slane %v1556, 2
        %v1558 = vadd.f32 %v1556, %v1557
        %v1559 = vrot.slane %v1558, 1
        %v1560 = vadd.f32 %v1558, %v1559
        %v1561 = vrot.slane %v826, 4
        %v1562 = vadd.f32 %v826, %v1561
        %v1563 = vrot.slane %v1562, 2
        %v1564 = vadd.f32 %v1562, %v1563
        %v1565 = vrot.slane %v1564, 1
        %v1566 = vadd.f32 %v1564, %v1565
        %v1567 = vrot.slane %v827, 4
        %v1568 = vadd.f32 %v827, %v1567
        %v1569 = vrot.slane %v1568, 2
        %v1570 = vadd.f32 %v1568, %v1569
        %v1571 = vrot.slane %v1570, 1
        %v1572 = vadd.f32 %v1570, %v1571
        %v1573 = vrot.slane %v828, 4
        %v1574 = vadd.f32 %v828, %v1573
        %v1575 = vrot.slane %v1574, 2
        %v1576 = vadd.f32 %v1574, %v1575
        %v1577 = vrot.slane %v1576, 1
        %v1578 = vadd.f32 %v1576, %v1577
        %v1579 = vrot.slane %v829, 4
        %v1580 = vadd.f32 %v829, %v1579
        %v1581 = vrot.slane %v1580, 2
        %v1582 = vadd.f32 %v1580, %v1581
        %v1583 = vrot.slane %v1582, 1
        %v1584 = vadd.f32 %v1582, %v1583
        %v1585 = vrot.slane %v830, 4
        %v1586 = vadd.f32 %v830, %v1585
        %v1587 = vrot.slane %v1586, 2
        %v1588 = vadd.f32 %v1586, %v1587
        %v1589 = vrot.slane %v1588, 1
        %v1590 = vadd.f32 %v1588, %v1589
        %v1591 = vrot.slane %v831, 4
        %v1592 = vadd.f32 %v831, %v1591
        %v1593 = vrot.slane %v1592, 2
        %v1594 = vadd.f32 %v1592, %v1593
        %v1595 = vrot.slane %v1594, 1
        %v1596 = vadd.f32 %v1594, %v1595
        %v1597 = vrot.slane %v832, 4
        %v1598 = vadd.f32 %v832, %v1597
        %v1599 = vrot.slane %v1598, 2
        %v1600 = vadd.f32 %v1598, %v1599
        %v1601 = vrot.slane %v1600, 1
        %v1602 = vadd.f32 %v1600, %v1601
        %v1603 = vrot.slane %v833, 4
        %v1604 = vadd.f32 %v833, %v1603
        %v1605 = vrot.slane %v1604, 2
        %v1606 = vadd.f32 %v1604, %v1605
        %v1607 = vrot.slane %v1606, 1
        %v1608 = vadd.f32 %v1606, %v1607
        %v1609 = vrot.slane %v834, 4
        %v1610 = vadd.f32 %v834, %v1609
        %v1611 = vrot.slane %v1610, 2
        %v1612 = vadd.f32 %v1610, %v1611
        %v1613 = vrot.slane %v1612, 1
        %v1614 = vadd.f32 %v1612, %v1613
        %v1615 = vrot.slane %v835, 4
        %v1616 = vadd.f32 %v835, %v1615
        %v1617 = vrot.slane %v1616, 2
        %v1618 = vadd.f32 %v1616, %v1617
        %v1619 = vrot.slane %v1618, 1
        %v1620 = vadd.f32 %v1618, %v1619
        %v1621 = vrot.slane %v836, 4
        %v1622 = vadd.f32 %v836, %v1621
        %v1623 = vrot.slane %v1622, 2
        %v1624 = vadd.f32 %v1622, %v1623
        %v1625 = vrot.slane %v1624, 1
        %v1626 = vadd.f32 %v1624, %v1625
        %v1627 = vrot.slane %v837, 4
        %v1628 = vadd.f32 %v837, %v1627
        %v1629 = vrot.slane %v1628, 2
        %v1630 = vadd.f32 %v1628, %v1629
        %v1631 = vrot.slane %v1630, 1
        %v1632 = vadd.f32 %v1630, %v1631
        %v1633 = vrot.slane %v838, 4
        %v1634 = vadd.f32 %v838, %v1633
        %v1635 = vrot.slane %v1634, 2
        %v1636 = vadd.f32 %v1634, %v1635
        %v1637 = vrot.slane %v1636, 1
        %v1638 = vadd.f32 %v1636, %v1637
        %v1639 = vrot.slane %v839, 4
        %v1640 = vadd.f32 %v839, %v1639
        %v1641 = vrot.slane %v1640, 2
        %v1642 = vadd.f32 %v1640, %v1641
        %v1643 = vrot.slane %v1642, 1
        %v1644 = vadd.f32 %v1642, %v1643
        %v1645 = vrot.slane %v840, 4
        %v1646 = vadd.f32 %v840, %v1645
        %v1647 = vrot.slane %v1646, 2
        %v1648 = vadd.f32 %v1646, %v1647
        %v1649 = vrot.slane %v1648, 1
        %v1650 = vadd.f32 %v1648, %v1649
        %v1651 = vrot.slane %v841, 4
        %v1652 = vadd.f32 %v841, %v1651
        %v1653 = vrot.slane %v1652, 2
        %v1654 = vadd.f32 %v1652, %v1653
        %v1655 = vrot.slane %v1654, 1
        %v1656 = vadd.f32 %v1654, %v1655
        %v1657 = vrot.slane %v842, 4
        %v1658 = vadd.f32 %v842, %v1657
        %v1659 = vrot.slane %v1658, 2
        %v1660 = vadd.f32 %v1658, %v1659
        %v1661 = vrot.slane %v1660, 1
        %v1662 = vadd.f32 %v1660, %v1661
        %v1663 = vrot.slane %v843, 4
        %v1664 = vadd.f32 %v843, %v1663
        %v1665 = vrot.slane %v1664, 2
        %v1666 = vadd.f32 %v1664, %v1665
        %v1667 = vrot.slane %v1666, 1
        %v1668 = vadd.f32 %v1666, %v1667
        %v1669 = vrot.slane %v844, 4
        %v1670 = vadd.f32 %v844, %v1669
        %v1671 = vrot.slane %v1670, 2
        %v1672 = vadd.f32 %v1670, %v1671
        %v1673 = vrot.slane %v1672, 1
        %v1674 = vadd.f32 %v1672, %v1673
        %v1675 = vrot.slane %v845, 4
        %v1676 = vadd.f32 %v845, %v1675
        %v1677 = vrot.slane %v1676, 2
        %v1678 = vadd.f32 %v1676, %v1677
        %v1679 = vrot.slane %v1678, 1
        %v1680 = vadd.f32 %v1678, %v1679
        %v1681 = vrot.slane %v846, 4
        %v1682 = vadd.f32 %v846, %v1681
        %v1683 = vrot.slane %v1682, 2
        %v1684 = vadd.f32 %v1682, %v1683
        %v1685 = vrot.slane %v1684, 1
        %v1686 = vadd.f32 %v1684, %v1685
        %v1687 = vrot.slane %v847, 4
        %v1688 = vadd.f32 %v847, %v1687
        %v1689 = vrot.slane %v1688, 2
        %v1690 = vadd.f32 %v1688, %v1689
        %v1691 = vrot.slane %v1690, 1
        %v1692 = vadd.f32 %v1690, %v1691
        %v1693 = vrot.slane %v848, 4
        %v1694 = vadd.f32 %v848, %v1693
        %v1695 = vrot.slane %v1694, 2
        %v1696 = vadd.f32 %v1694, %v1695
        %v1697 = vrot.slane %v1696, 1
        %v1698 = vadd.f32 %v1696, %v1697
        %v1699 = vrot.slane %v849, 4
        %v1700 = vadd.f32 %v849, %v1699
        %v1701 = vrot.slane %v1700, 2
        %v1702 = vadd.f32 %v1700, %v1701
        %v1703 = vrot.slane %v1702, 1
        %v1704 = vadd.f32 %v1702, %v1703
        %v1705 = vrot.slane %v850, 4
        %v1706 = vadd.f32 %v850, %v1705
        %v1707 = vrot.slane %v1706, 2
        %v1708 = vadd.f32 %v1706, %v1707
        %v1709 = vrot.slane %v1708, 1
        %v1710 = vadd.f32 %v1708, %v1709
        %v1711 = vrot.slane %v851, 4
        %v1712 = vadd.f32 %v851, %v1711
        %v1713 = vrot.slane %v1712, 2
        %v1714 = vadd.f32 %v1712, %v1713
        %v1715 = vrot.slane %v1714, 1
        %v1716 = vadd.f32 %v1714, %v1715
        %v1717 = vrot.slane %v852, 4
        %v1718 = vadd.f32 %v852, %v1717
        %v1719 = vrot.slane %v1718, 2
        %v1720 = vadd.f32 %v1718, %v1719
        %v1721 = vrot.slane %v1720, 1
        %v1722 = vadd.f32 %v1720, %v1721
        %v1723 = vrot.slane %v853, 4
        %v1724 = vadd.f32 %v853, %v1723
        %v1725 = vrot.slane %v1724, 2
        %v1726 = vadd.f32 %v1724, %v1725
        %v1727 = vrot.slane %v1726, 1
        %v1728 = vadd.f32 %v1726, %v1727
        %v1729 = vrot.slane %v854, 4
        %v1730 = vadd.f32 %v854, %v1729
        %v1731 = vrot.slane %v1730, 2
        %v1732 = vadd.f32 %v1730, %v1731
        %v1733 = vrot.slane %v1732, 1
        %v1734 = vadd.f32 %v1732, %v1733
        %v1735 = vrot.slane %v855, 4
        %v1736 = vadd.f32 %v855, %v1735
        %v1737 = vrot.slane %v1736, 2
        %v1738 = vadd.f32 %v1736, %v1737
        %v1739 = vrot.slane %v1738, 1
        %v1740 = vadd.f32 %v1738, %v1739
        %v1741 = vrot.slane %v856, 4
        %v1742 = vadd.f32 %v856, %v1741
        %v1743 = vrot.slane %v1742, 2
        %v1744 = vadd.f32 %v1742, %v1743
        %v1745 = vrot.slane %v1744, 1
        %v1746 = vadd.f32 %v1744, %v1745
        %v1747 = vrot.slane %v857, 4
        %v1748 = vadd.f32 %v857, %v1747
        %v1749 = vrot.slane %v1748, 2
        %v1750 = vadd.f32 %v1748, %v1749
        %v1751 = vrot.slane %v1750, 1
        %v1752 = vadd.f32 %v1750, %v1751
        %v1753 = vrot.slane %v858, 4
        %v1754 = vadd.f32 %v858, %v1753
        %v1755 = vrot.slane %v1754, 2
        %v1756 = vadd.f32 %v1754, %v1755
        %v1757 = vrot.slane %v1756, 1
        %v1758 = vadd.f32 %v1756, %v1757
        %v1759 = vrot.slane %v859, 4
        %v1760 = vadd.f32 %v859, %v1759
        %v1761 = vrot.slane %v1760, 2
        %v1762 = vadd.f32 %v1760, %v1761
        %v1763 = vrot.slane %v1762, 1
        %v1764 = vadd.f32 %v1762, %v1763
        %v1765 = vrot.slane %v860, 4
        %v1766 = vadd.f32 %v860, %v1765
        %v1767 = vrot.slane %v1766, 2
        %v1768 = vadd.f32 %v1766, %v1767
        %v1769 = vrot.slane %v1768, 1
        %v1770 = vadd.f32 %v1768, %v1769
        %v1771 = vrot.slane %v861, 4
        %v1772 = vadd.f32 %v861, %v1771
        %v1773 = vrot.slane %v1772, 2
        %v1774 = vadd.f32 %v1772, %v1773
        %v1775 = vrot.slane %v1774, 1
        %v1776 = vadd.f32 %v1774, %v1775
        %v1777 = vrot.slane %v862, 4
        %v1778 = vadd.f32 %v862, %v1777
        %v1779 = vrot.slane %v1778, 2
        %v1780 = vadd.f32 %v1778, %v1779
        %v1781 = vrot.slane %v1780, 1
        %v1782 = vadd.f32 %v1780, %v1781
        %v1783 = vrot.slane %v863, 4
        %v1784 = vadd.f32 %v863, %v1783
        %v1785 = vrot.slane %v1784, 2
        %v1786 = vadd.f32 %v1784, %v1785
        %v1787 = vrot.slane %v1786, 1
        %v1788 = vadd.f32 %v1786, %v1787
        %v1789 = vrot.slane %v864, 4
        %v1790 = vadd.f32 %v864, %v1789
        %v1791 = vrot.slane %v1790, 2
        %v1792 = vadd.f32 %v1790, %v1791
        %v1793 = vrot.slane %v1792, 1
        %v1794 = vadd.f32 %v1792, %v1793
        %v1795 = vrot.slane %v865, 4
        %v1796 = vadd.f32 %v865, %v1795
        %v1797 = vrot.slane %v1796, 2
        %v1798 = vadd.f32 %v1796, %v1797
        %v1799 = vrot.slane %v1798, 1
        %v1800 = vadd.f32 %v1798, %v1799
        %v1801 = vrot.slane %v866, 4
        %v1802 = vadd.f32 %v866, %v1801
        %v1803 = vrot.slane %v1802, 2
        %v1804 = vadd.f32 %v1802, %v1803
        %v1805 = vrot.slane %v1804, 1
        %v1806 = vadd.f32 %v1804, %v1805
        %v1807 = vrot.slane %v867, 4
        %v1808 = vadd.f32 %v867, %v1807
        %v1809 = vrot.slane %v1808, 2
        %v1810 = vadd.f32 %v1808, %v1809
        %v1811 = vrot.slane %v1810, 1
        %v1812 = vadd.f32 %v1810, %v1811
        %v1813 = vrot.slane %v868, 4
        %v1814 = vadd.f32 %v868, %v1813
        %v1815 = vrot.slane %v1814, 2
        %v1816 = vadd.f32 %v1814, %v1815
        %v1817 = vrot.slane %v1816, 1
        %v1818 = vadd.f32 %v1816, %v1817
        %v1819 = vrot.slane %v869, 4
        %v1820 = vadd.f32 %v869, %v1819
        %v1821 = vrot.slane %v1820, 2
        %v1822 = vadd.f32 %v1820, %v1821
        %v1823 = vrot.slane %v1822, 1
        %v1824 = vadd.f32 %v1822, %v1823
        %v1825 = vrot.slane %v870, 4
        %v1826 = vadd.f32 %v870, %v1825
        %v1827 = vrot.slane %v1826, 2
        %v1828 = vadd.f32 %v1826, %v1827
        %v1829 = vrot.slane %v1828, 1
        %v1830 = vadd.f32 %v1828, %v1829
        %v1831 = vrot.slane %v871, 4
        %v1832 = vadd.f32 %v871, %v1831
        %v1833 = vrot.slane %v1832, 2
        %v1834 = vadd.f32 %v1832, %v1833
        %v1835 = vrot.slane %v1834, 1
        %v1836 = vadd.f32 %v1834, %v1835
        %v1837 = vrot.slane %v872, 4
        %v1838 = vadd.f32 %v872, %v1837
        %v1839 = vrot.slane %v1838, 2
        %v1840 = vadd.f32 %v1838, %v1839
        %v1841 = vrot.slane %v1840, 1
        %v1842 = vadd.f32 %v1840, %v1841
        %v1843 = vrot.slane %v873, 4
        %v1844 = vadd.f32 %v873, %v1843
        %v1845 = vrot.slane %v1844, 2
        %v1846 = vadd.f32 %v1844, %v1845
        %v1847 = vrot.slane %v1846, 1
        %v1848 = vadd.f32 %v1846, %v1847
        %v1849 = vrot.slane %v874, 4
        %v1850 = vadd.f32 %v874, %v1849
        %v1851 = vrot.slane %v1850, 2
        %v1852 = vadd.f32 %v1850, %v1851
        %v1853 = vrot.slane %v1852, 1
        %v1854 = vadd.f32 %v1852, %v1853
        %v1855 = vrot.slane %v875, 4
        %v1856 = vadd.f32 %v875, %v1855
        %v1857 = vrot.slane %v1856, 2
        %v1858 = vadd.f32 %v1856, %v1857
        %v1859 = vrot.slane %v1858, 1
        %v1860 = vadd.f32 %v1858, %v1859
        %v1861 = vrot.slane %v876, 4
        %v1862 = vadd.f32 %v876, %v1861
        %v1863 = vrot.slane %v1862, 2
        %v1864 = vadd.f32 %v1862, %v1863
        %v1865 = vrot.slane %v1864, 1
        %v1866 = vadd.f32 %v1864, %v1865
        %v1867 = vrot.slane %v877, 4
        %v1868 = vadd.f32 %v877, %v1867
        %v1869 = vrot.slane %v1868, 2
        %v1870 = vadd.f32 %v1868, %v1869
        %v1871 = vrot.slane %v1870, 1
        %v1872 = vadd.f32 %v1870, %v1871
        %v1873 = vrot.slane %v878, 4
        %v1874 = vadd.f32 %v878, %v1873
        %v1875 = vrot.slane %v1874, 2
        %v1876 = vadd.f32 %v1874, %v1875
        %v1877 = vrot.slane %v1876, 1
        %v1878 = vadd.f32 %v1876, %v1877
        %v1879 = vrot.slane %v879, 4
        %v1880 = vadd.f32 %v879, %v1879
        %v1881 = vrot.slane %v1880, 2
        %v1882 = vadd.f32 %v1880, %v1881
        %v1883 = vrot.slane %v1882, 1
        %v1884 = vadd.f32 %v1882, %v1883
        %v1885 = vrot.slane %v880, 4
        %v1886 = vadd.f32 %v880, %v1885
        %v1887 = vrot.slane %v1886, 2
        %v1888 = vadd.f32 %v1886, %v1887
        %v1889 = vrot.slane %v1888, 1
        %v1890 = vadd.f32 %v1888, %v1889
        %v1891 = vrot.slane %v881, 4
        %v1892 = vadd.f32 %v881, %v1891
        %v1893 = vrot.slane %v1892, 2
        %v1894 = vadd.f32 %v1892, %v1893
        %v1895 = vrot.slane %v1894, 1
        %v1896 = vadd.f32 %v1894, %v1895
        %v1897 = vrot.slane %v882, 4
        %v1898 = vadd.f32 %v882, %v1897
        %v1899 = vrot.slane %v1898, 2
        %v1900 = vadd.f32 %v1898, %v1899
        %v1901 = vrot.slane %v1900, 1
        %v1902 = vadd.f32 %v1900, %v1901
        %v1903 = vrot.slane %v883, 4
        %v1904 = vadd.f32 %v883, %v1903
        %v1905 = vrot.slane %v1904, 2
        %v1906 = vadd.f32 %v1904, %v1905
        %v1907 = vrot.slane %v1906, 1
        %v1908 = vadd.f32 %v1906, %v1907
        %v1909 = vrot.slane %v884, 4
        %v1910 = vadd.f32 %v884, %v1909
        %v1911 = vrot.slane %v1910, 2
        %v1912 = vadd.f32 %v1910, %v1911
        %v1913 = vrot.slane %v1912, 1
        %v1914 = vadd.f32 %v1912, %v1913
        %v1915 = vrot.slane %v885, 4
        %v1916 = vadd.f32 %v885, %v1915
        %v1917 = vrot.slane %v1916, 2
        %v1918 = vadd.f32 %v1916, %v1917
        %v1919 = vrot.slane %v1918, 1
        %v1920 = vadd.f32 %v1918, %v1919
        %v1921 = vrot.slane %v886, 4
        %v1922 = vadd.f32 %v886, %v1921
        %v1923 = vrot.slane %v1922, 2
        %v1924 = vadd.f32 %v1922, %v1923
        %v1925 = vrot.slane %v1924, 1
        %v1926 = vadd.f32 %v1924, %v1925
        %v1927 = vrot.slane %v887, 4
        %v1928 = vadd.f32 %v887, %v1927
        %v1929 = vrot.slane %v1928, 2
        %v1930 = vadd.f32 %v1928, %v1929
        %v1931 = vrot.slane %v1930, 1
        %v1932 = vadd.f32 %v1930, %v1931
        %v1933 = vrot.slane %v888, 4
        %v1934 = vadd.f32 %v888, %v1933
        %v1935 = vrot.slane %v1934, 2
        %v1936 = vadd.f32 %v1934, %v1935
        %v1937 = vrot.slane %v1936, 1
        %v1938 = vadd.f32 %v1936, %v1937
        %v1939 = vrot.slane %v889, 4
        %v1940 = vadd.f32 %v889, %v1939
        %v1941 = vrot.slane %v1940, 2
        %v1942 = vadd.f32 %v1940, %v1941
        %v1943 = vrot.slane %v1942, 1
        %v1944 = vadd.f32 %v1942, %v1943
        %v1945 = vrot.slane %v890, 4
        %v1946 = vadd.f32 %v890, %v1945
        %v1947 = vrot.slane %v1946, 2
        %v1948 = vadd.f32 %v1946, %v1947
        %v1949 = vrot.slane %v1948, 1
        %v1950 = vadd.f32 %v1948, %v1949
        %v1951 = vrot.slane %v891, 4
        %v1952 = vadd.f32 %v891, %v1951
        %v1953 = vrot.slane %v1952, 2
        %v1954 = vadd.f32 %v1952, %v1953
        %v1955 = vrot.slane %v1954, 1
        %v1956 = vadd.f32 %v1954, %v1955
        %v1957 = vrot.slane %v892, 4
        %v1958 = vadd.f32 %v892, %v1957
        %v1959 = vrot.slane %v1958, 2
        %v1960 = vadd.f32 %v1958, %v1959
        %v1961 = vrot.slane %v1960, 1
        %v1962 = vadd.f32 %v1960, %v1961
        %v1963 = vrot.slane %v893, 4
        %v1964 = vadd.f32 %v893, %v1963
        %v1965 = vrot.slane %v1964, 2
        %v1966 = vadd.f32 %v1964, %v1965
        %v1967 = vrot.slane %v1966, 1
        %v1968 = vadd.f32 %v1966, %v1967
        %v1969 = vrot.slane %v894, 4
        %v1970 = vadd.f32 %v894, %v1969
        %v1971 = vrot.slane %v1970, 2
        %v1972 = vadd.f32 %v1970, %v1971
        %v1973 = vrot.slane %v1972, 1
        %v1974 = vadd.f32 %v1972, %v1973
        %v1975 = vrot.slane %v895, 4
        %v1976 = vadd.f32 %v895, %v1975
        %v1977 = vrot.slane %v1976, 2
        %v1978 = vadd.f32 %v1976, %v1977
        %v1979 = vrot.slane %v1978, 1
        %v1980 = vadd.f32 %v1978, %v1979
        %v1981 = vrot.slane %v896, 4
        %v1982 = vadd.f32 %v896, %v1981
        %v1983 = vrot.slane %v1982, 2
        %v1984 = vadd.f32 %v1982, %v1983
        %v1985 = vrot.slane %v1984, 1
        %v1986 = vadd.f32 %v1984, %v1985
        %v1987 = vrot.slane %v897, 4
        %v1988 = vadd.f32 %v897, %v1987
        %v1989 = vrot.slane %v1988, 2
        %v1990 = vadd.f32 %v1988, %v1989
        %v1991 = vrot.slane %v1990, 1
        %v1992 = vadd.f32 %v1990, %v1991
        %v1993 = vrot.slane %v898, 4
        %v1994 = vadd.f32 %v898, %v1993
        %v1995 = vrot.slane %v1994, 2
        %v1996 = vadd.f32 %v1994, %v1995
        %v1997 = vrot.slane %v1996, 1
        %v1998 = vadd.f32 %v1996, %v1997
        %v1999 = vrot.slane %v899, 4
        %v2000 = vadd.f32 %v899, %v1999
        %v2001 = vrot.slane %v2000, 2
        %v2002 = vadd.f32 %v2000, %v2001
        %v2003 = vrot.slane %v2002, 1
        %v2004 = vadd.f32 %v2002, %v2003
        %v2005 = vrot.slane %v900, 4
        %v2006 = vadd.f32 %v900, %v2005
        %v2007 = vrot.slane %v2006, 2
        %v2008 = vadd.f32 %v2006, %v2007
        %v2009 = vrot.slane %v2008, 1
        %v2010 = vadd.f32 %v2008, %v2009
        %v2011 = vrot.slane %v901, 4
        %v2012 = vadd.f32 %v901, %v2011
        %v2013 = vrot.slane %v2012, 2
        %v2014 = vadd.f32 %v2012, %v2013
        %v2015 = vrot.slane %v2014, 1
        %v2016 = vadd.f32 %v2014, %v2015
        %v2017 = vrot.slane %v902, 4
        %v2018 = vadd.f32 %v902, %v2017
        %v2019 = vrot.slane %v2018, 2
        %v2020 = vadd.f32 %v2018, %v2019
        %v2021 = vrot.slane %v2020, 1
        %v2022 = vadd.f32 %v2020, %v2021
        %v2023 = vrot.slane %v903, 4
        %v2024 = vadd.f32 %v903, %v2023
        %v2025 = vrot.slane %v2024, 2
        %v2026 = vadd.f32 %v2024, %v2025
        %v2027 = vrot.slane %v2026, 1
        %v2028 = vadd.f32 %v2026, %v2027
        %v2029 = vrot.slane %v904, 4
        %v2030 = vadd.f32 %v904, %v2029
        %v2031 = vrot.slane %v2030, 2
        %v2032 = vadd.f32 %v2030, %v2031
        %v2033 = vrot.slane %v2032, 1
        %v2034 = vadd.f32 %v2032, %v2033
        %v2035 = vrot.slane %v905, 4
        %v2036 = vadd.f32 %v905, %v2035
        %v2037 = vrot.slane %v2036, 2
        %v2038 = vadd.f32 %v2036, %v2037
        %v2039 = vrot.slane %v2038, 1
        %v2040 = vadd.f32 %v2038, %v2039
        %v2041 = vrot.slane %v906, 4
        %v2042 = vadd.f32 %v906, %v2041
        %v2043 = vrot.slane %v2042, 2
        %v2044 = vadd.f32 %v2042, %v2043
        %v2045 = vrot.slane %v2044, 1
        %v2046 = vadd.f32 %v2044, %v2045
        %v2047 = vrot.slane %v907, 4
        %v2048 = vadd.f32 %v907, %v2047
        %v2049 = vrot.slane %v2048, 2
        %v2050 = vadd.f32 %v2048, %v2049
        %v2051 = vrot.slane %v2050, 1
        %v2052 = vadd.f32 %v2050, %v2051
        %v2053 = vrot.slane %v908, 4
        %v2054 = vadd.f32 %v908, %v2053
        %v2055 = vrot.slane %v2054, 2
        %v2056 = vadd.f32 %v2054, %v2055
        %v2057 = vrot.slane %v2056, 1
        %v2058 = vadd.f32 %v2056, %v2057
        %v2059 = vrot.slane %v909, 4
        %v2060 = vadd.f32 %v909, %v2059
        %v2061 = vrot.slane %v2060, 2
        %v2062 = vadd.f32 %v2060, %v2061
        %v2063 = vrot.slane %v2062, 1
        %v2064 = vadd.f32 %v2062, %v2063
        %v2065 = vrot.slane %v910, 4
        %v2066 = vadd.f32 %v910, %v2065
        %v2067 = vrot.slane %v2066, 2
        %v2068 = vadd.f32 %v2066, %v2067
        %v2069 = vrot.slane %v2068, 1
        %v2070 = vadd.f32 %v2068, %v2069
        %v2071 = vrot.slane %v911, 4
        %v2072 = vadd.f32 %v911, %v2071
        %v2073 = vrot.slane %v2072, 2
        %v2074 = vadd.f32 %v2072, %v2073
        %v2075 = vrot.slane %v2074, 1
        %v2076 = vadd.f32 %v2074, %v2075
        %v2077 = vrot.slane %v912, 4
        %v2078 = vadd.f32 %v912, %v2077
        %v2079 = vrot.slane %v2078, 2
        %v2080 = vadd.f32 %v2078, %v2079
        %v2081 = vrot.slane %v2080, 1
        %v2082 = vadd.f32 %v2080, %v2081
        %v2083 = vrot.slane %v913, 4
        %v2084 = vadd.f32 %v913, %v2083
        %v2085 = vrot.slane %v2084, 2
        %v2086 = vadd.f32 %v2084, %v2085
        %v2087 = vrot.slane %v2086, 1
        %v2088 = vadd.f32 %v2086, %v2087
        %v2089 = vrot.slane %v914, 4
        %v2090 = vadd.f32 %v914, %v2089
        %v2091 = vrot.slane %v2090, 2
        %v2092 = vadd.f32 %v2090, %v2091
        %v2093 = vrot.slane %v2092, 1
        %v2094 = vadd.f32 %v2092, %v2093
        %v2095 = vrot.slane %v915, 4
        %v2096 = vadd.f32 %v915, %v2095
        %v2097 = vrot.slane %v2096, 2
        %v2098 = vadd.f32 %v2096, %v2097
        %v2099 = vrot.slane %v2098, 1
        %v2100 = vadd.f32 %v2098, %v2099
        %v2101 = vrot.slane %v916, 4
        %v2102 = vadd.f32 %v916, %v2101
        %v2103 = vrot.slane %v2102, 2
        %v2104 = vadd.f32 %v2102, %v2103
        %v2105 = vrot.slane %v2104, 1
        %v2106 = vadd.f32 %v2104, %v2105
        %v2107 = vrot.slane %v917, 4
        %v2108 = vadd.f32 %v917, %v2107
        %v2109 = vrot.slane %v2108, 2
        %v2110 = vadd.f32 %v2108, %v2109
        %v2111 = vrot.slane %v2110, 1
        %v2112 = vadd.f32 %v2110, %v2111
        %v2113 = vrot.slane %v918, 4
        %v2114 = vadd.f32 %v918, %v2113
        %v2115 = vrot.slane %v2114, 2
        %v2116 = vadd.f32 %v2114, %v2115
        %v2117 = vrot.slane %v2116, 1
        %v2118 = vadd.f32 %v2116, %v2117
        %v2119 = vrot.slane %v919, 4
        %v2120 = vadd.f32 %v919, %v2119
        %v2121 = vrot.slane %v2120, 2
        %v2122 = vadd.f32 %v2120, %v2121
        %v2123 = vrot.slane %v2122, 1
        %v2124 = vadd.f32 %v2122, %v2123
        %v2125 = vrot.slane %v920, 4
        %v2126 = vadd.f32 %v920, %v2125
        %v2127 = vrot.slane %v2126, 2
        %v2128 = vadd.f32 %v2126, %v2127
        %v2129 = vrot.slane %v2128, 1
        %v2130 = vadd.f32 %v2128, %v2129
        %v2131 = vrot.slane %v921, 4
        %v2132 = vadd.f32 %v921, %v2131
        %v2133 = vrot.slane %v2132, 2
        %v2134 = vadd.f32 %v2132, %v2133
        %v2135 = vrot.slane %v2134, 1
        %v2136 = vadd.f32 %v2134, %v2135
        %v2137 = vrot.slane %v922, 4
        %v2138 = vadd.f32 %v922, %v2137
        %v2139 = vrot.slane %v2138, 2
        %v2140 = vadd.f32 %v2138, %v2139
        %v2141 = vrot.slane %v2140, 1
        %v2142 = vadd.f32 %v2140, %v2141
        %v2143 = vrot.slane %v923, 4
        %v2144 = vadd.f32 %v923, %v2143
        %v2145 = vrot.slane %v2144, 2
        %v2146 = vadd.f32 %v2144, %v2145
        %v2147 = vrot.slane %v2146, 1
        %v2148 = vadd.f32 %v2146, %v2147
        %v2149 = vrot.slane %v924, 4
        %v2150 = vadd.f32 %v924, %v2149
        %v2151 = vrot.slane %v2150, 2
        %v2152 = vadd.f32 %v2150, %v2151
        %v2153 = vrot.slane %v2152, 1
        %v2154 = vadd.f32 %v2152, %v2153
        %v2155 = vrot.slane %v925, 4
        %v2156 = vadd.f32 %v925, %v2155
        %v2157 = vrot.slane %v2156, 2
        %v2158 = vadd.f32 %v2156, %v2157
        %v2159 = vrot.slane %v2158, 1
        %v2160 = vadd.f32 %v2158, %v2159
        %v2161 = vrot.slane %v926, 4
        %v2162 = vadd.f32 %v926, %v2161
        %v2163 = vrot.slane %v2162, 2
        %v2164 = vadd.f32 %v2162, %v2163
        %v2165 = vrot.slane %v2164, 1
        %v2166 = vadd.f32 %v2164, %v2165
        %v2167 = vrot.slane %v927, 4
        %v2168 = vadd.f32 %v927, %v2167
        %v2169 = vrot.slane %v2168, 2
        %v2170 = vadd.f32 %v2168, %v2169
        %v2171 = vrot.slane %v2170, 1
        %v2172 = vadd.f32 %v2170, %v2171
        %v2173 = vrot.slane %v928, 4
        %v2174 = vadd.f32 %v928, %v2173
        %v2175 = vrot.slane %v2174, 2
        %v2176 = vadd.f32 %v2174, %v2175
        %v2177 = vrot.slane %v2176, 1
        %v2178 = vadd.f32 %v2176, %v2177
        %v2179 = vrot.slane %v929, 4
        %v2180 = vadd.f32 %v929, %v2179
        %v2181 = vrot.slane %v2180, 2
        %v2182 = vadd.f32 %v2180, %v2181
        %v2183 = vrot.slane %v2182, 1
        %v2184 = vadd.f32 %v2182, %v2183
        %v2185 = vrot.slane %v930, 4
        %v2186 = vadd.f32 %v930, %v2185
        %v2187 = vrot.slane %v2186, 2
        %v2188 = vadd.f32 %v2186, %v2187
        %v2189 = vrot.slane %v2188, 1
        %v2190 = vadd.f32 %v2188, %v2189
        %v2191 = vrot.slane %v931, 4
        %v2192 = vadd.f32 %v931, %v2191
        %v2193 = vrot.slane %v2192, 2
        %v2194 = vadd.f32 %v2192, %v2193
        %v2195 = vrot.slane %v2194, 1
        %v2196 = vadd.f32 %v2194, %v2195
        %v2197 = vrot.slane %v932, 4
        %v2198 = vadd.f32 %v932, %v2197
        %v2199 = vrot.slane %v2198, 2
        %v2200 = vadd.f32 %v2198, %v2199
        %v2201 = vrot.slane %v2200, 1
        %v2202 = vadd.f32 %v2200, %v2201
        %v2203 = vrot.slane %v933, 4
        %v2204 = vadd.f32 %v933, %v2203
        %v2205 = vrot.slane %v2204, 2
        %v2206 = vadd.f32 %v2204, %v2205
        %v2207 = vrot.slane %v2206, 1
        %v2208 = vadd.f32 %v2206, %v2207
        %v2209 = vrot.slane %v934, 4
        %v2210 = vadd.f32 %v934, %v2209
        %v2211 = vrot.slane %v2210, 2
        %v2212 = vadd.f32 %v2210, %v2211
        %v2213 = vrot.slane %v2212, 1
        %v2214 = vadd.f32 %v2212, %v2213
        %v2215 = vrot.slane %v935, 4
        %v2216 = vadd.f32 %v935, %v2215
        %v2217 = vrot.slane %v2216, 2
        %v2218 = vadd.f32 %v2216, %v2217
        %v2219 = vrot.slane %v2218, 1
        %v2220 = vadd.f32 %v2218, %v2219
        %v2221 = vrot.slane %v936, 4
        %v2222 = vadd.f32 %v936, %v2221
        %v2223 = vrot.slane %v2222, 2
        %v2224 = vadd.f32 %v2222, %v2223
        %v2225 = vrot.slane %v2224, 1
        %v2226 = vadd.f32 %v2224, %v2225
        %v2227 = vrot.slane %v937, 4
        %v2228 = vadd.f32 %v937, %v2227
        %v2229 = vrot.slane %v2228, 2
        %v2230 = vadd.f32 %v2228, %v2229
        %v2231 = vrot.slane %v2230, 1
        %v2232 = vadd.f32 %v2230, %v2231
        %v2233 = vrot.slane %v938, 4
        %v2234 = vadd.f32 %v938, %v2233
        %v2235 = vrot.slane %v2234, 2
        %v2236 = vadd.f32 %v2234, %v2235
        %v2237 = vrot.slane %v2236, 1
        %v2238 = vadd.f32 %v2236, %v2237
        %v2239 = vrot.slane %v939, 4
        %v2240 = vadd.f32 %v939, %v2239
        %v2241 = vrot.slane %v2240, 2
        %v2242 = vadd.f32 %v2240, %v2241
        %v2243 = vrot.slane %v2242, 1
        %v2244 = vadd.f32 %v2242, %v2243
        %v2245 = vrot.slane %v940, 4
        %v2246 = vadd.f32 %v940, %v2245
        %v2247 = vrot.slane %v2246, 2
        %v2248 = vadd.f32 %v2246, %v2247
        %v2249 = vrot.slane %v2248, 1
        %v2250 = vadd.f32 %v2248, %v2249
        %v2251 = vrot.slane %v941, 4
        %v2252 = vadd.f32 %v941, %v2251
        %v2253 = vrot.slane %v2252, 2
        %v2254 = vadd.f32 %v2252, %v2253
        %v2255 = vrot.slane %v2254, 1
        %v2256 = vadd.f32 %v2254, %v2255
        %v2257 = vrot.slane %v942, 4
        %v2258 = vadd.f32 %v942, %v2257
        %v2259 = vrot.slane %v2258, 2
        %v2260 = vadd.f32 %v2258, %v2259
        %v2261 = vrot.slane %v2260, 1
        %v2262 = vadd.f32 %v2260, %v2261
        %v2263 = vrot.slane %v943, 4
        %v2264 = vadd.f32 %v943, %v2263
        %v2265 = vrot.slane %v2264, 2
        %v2266 = vadd.f32 %v2264, %v2265
        %v2267 = vrot.slane %v2266, 1
        %v2268 = vadd.f32 %v2266, %v2267
        %v2269 = vrot.slane %v944, 4
        %v2270 = vadd.f32 %v944, %v2269
        %v2271 = vrot.slane %v2270, 2
        %v2272 = vadd.f32 %v2270, %v2271
        %v2273 = vrot.slane %v2272, 1
        %v2274 = vadd.f32 %v2272, %v2273
        %v2275 = vrot.slane %v945, 4
        %v2276 = vadd.f32 %v945, %v2275
        %v2277 = vrot.slane %v2276, 2
        %v2278 = vadd.f32 %v2276, %v2277
        %v2279 = vrot.slane %v2278, 1
        %v2280 = vadd.f32 %v2278, %v2279
        %v2281 = vrot.slane %v946, 4
        %v2282 = vadd.f32 %v946, %v2281
        %v2283 = vrot.slane %v2282, 2
        %v2284 = vadd.f32 %v2282, %v2283
        %v2285 = vrot.slane %v2284, 1
        %v2286 = vadd.f32 %v2284, %v2285
        %v2287 = vrot.slane %v947, 4
        %v2288 = vadd.f32 %v947, %v2287
        %v2289 = vrot.slane %v2288, 2
        %v2290 = vadd.f32 %v2288, %v2289
        %v2291 = vrot.slane %v2290, 1
        %v2292 = vadd.f32 %v2290, %v2291
        %v2293 = vrot.slane %v948, 4
        %v2294 = vadd.f32 %v948, %v2293
        %v2295 = vrot.slane %v2294, 2
        %v2296 = vadd.f32 %v2294, %v2295
        %v2297 = vrot.slane %v2296, 1
        %v2298 = vadd.f32 %v2296, %v2297
        %v2299 = vrot.slane %v949, 4
        %v2300 = vadd.f32 %v949, %v2299
        %v2301 = vrot.slane %v2300, 2
        %v2302 = vadd.f32 %v2300, %v2301
        %v2303 = vrot.slane %v2302, 1
        %v2304 = vadd.f32 %v2302, %v2303
        %v2305 = vrot.slane %v950, 4
        %v2306 = vadd.f32 %v950, %v2305
        %v2307 = vrot.slane %v2306, 2
        %v2308 = vadd.f32 %v2306, %v2307
        %v2309 = vrot.slane %v2308, 1
        %v2310 = vadd.f32 %v2308, %v2309
        %v2311 = vrot.slane %v951, 4
        %v2312 = vadd.f32 %v951, %v2311
        %v2313 = vrot.slane %v2312, 2
        %v2314 = vadd.f32 %v2312, %v2313
        %v2315 = vrot.slane %v2314, 1
        %v2316 = vadd.f32 %v2314, %v2315
        %v2317 = vrot.slane %v952, 4
        %v2318 = vadd.f32 %v952, %v2317
        %v2319 = vrot.slane %v2318, 2
        %v2320 = vadd.f32 %v2318, %v2319
        %v2321 = vrot.slane %v2320, 1
        %v2322 = vadd.f32 %v2320, %v2321
        %v2323 = vrot.slane %v953, 4
        %v2324 = vadd.f32 %v953, %v2323
        %v2325 = vrot.slane %v2324, 2
        %v2326 = vadd.f32 %v2324, %v2325
        %v2327 = vrot.slane %v2326, 1
        %v2328 = vadd.f32 %v2326, %v2327
        %v2329 = vrot.slane %v954, 4
        %v2330 = vadd.f32 %v954, %v2329
        %v2331 = vrot.slane %v2330, 2
        %v2332 = vadd.f32 %v2330, %v2331
        %v2333 = vrot.slane %v2332, 1
        %v2334 = vadd.f32 %v2332, %v2333
        %v2335 = vrot.slane %v955, 4
        %v2336 = vadd.f32 %v955, %v2335
        %v2337 = vrot.slane %v2336, 2
        %v2338 = vadd.f32 %v2336, %v2337
        %v2339 = vrot.slane %v2338, 1
        %v2340 = vadd.f32 %v2338, %v2339
        %v2341 = vrot.slane %v956, 4
        %v2342 = vadd.f32 %v956, %v2341
        %v2343 = vrot.slane %v2342, 2
        %v2344 = vadd.f32 %v2342, %v2343
        %v2345 = vrot.slane %v2344, 1
        %v2346 = vadd.f32 %v2344, %v2345
        %v2347 = vrot.slane %v957, 4
        %v2348 = vadd.f32 %v957, %v2347
        %v2349 = vrot.slane %v2348, 2
        %v2350 = vadd.f32 %v2348, %v2349
        %v2351 = vrot.slane %v2350, 1
        %v2352 = vadd.f32 %v2350, %v2351
        %v2353 = vrot.slane %v958, 4
        %v2354 = vadd.f32 %v958, %v2353
        %v2355 = vrot.slane %v2354, 2
        %v2356 = vadd.f32 %v2354, %v2355
        %v2357 = vrot.slane %v2356, 1
        %v2358 = vadd.f32 %v2356, %v2357
        %v2359 = vrot.slane %v959, 4
        %v2360 = vadd.f32 %v959, %v2359
        %v2361 = vrot.slane %v2360, 2
        %v2362 = vadd.f32 %v2360, %v2361
        %v2363 = vrot.slane %v2362, 1
        %v2364 = vadd.f32 %v2362, %v2363
        %v2365 = vrot.slane %v960, 4
        %v2366 = vadd.f32 %v960, %v2365
        %v2367 = vrot.slane %v2366, 2
        %v2368 = vadd.f32 %v2366, %v2367
        %v2369 = vrot.slane %v2368, 1
        %v2370 = vadd.f32 %v2368, %v2369
        %v2371 = vrot.slane %v961, 4
        %v2372 = vadd.f32 %v961, %v2371
        %v2373 = vrot.slane %v2372, 2
        %v2374 = vadd.f32 %v2372, %v2373
        %v2375 = vrot.slane %v2374, 1
        %v2376 = vadd.f32 %v2374, %v2375
        %v2377 = vrot.slane %v962, 4
        %v2378 = vadd.f32 %v962, %v2377
        %v2379 = vrot.slane %v2378, 2
        %v2380 = vadd.f32 %v2378, %v2379
        %v2381 = vrot.slane %v2380, 1
        %v2382 = vadd.f32 %v2380, %v2381
        %v2383 = vrot.slane %v963, 4
        %v2384 = vadd.f32 %v963, %v2383
        %v2385 = vrot.slane %v2384, 2
        %v2386 = vadd.f32 %v2384, %v2385
        %v2387 = vrot.slane %v2386, 1
        %v2388 = vadd.f32 %v2386, %v2387
        %v2389 = vrot.slane %v964, 4
        %v2390 = vadd.f32 %v964, %v2389
        %v2391 = vrot.slane %v2390, 2
        %v2392 = vadd.f32 %v2390, %v2391
        %v2393 = vrot.slane %v2392, 1
        %v2394 = vadd.f32 %v2392, %v2393
        %v2395 = vrot.slane %v965, 4
        %v2396 = vadd.f32 %v965, %v2395
        %v2397 = vrot.slane %v2396, 2
        %v2398 = vadd.f32 %v2396, %v2397
        %v2399 = vrot.slane %v2398, 1
        %v2400 = vadd.f32 %v2398, %v2399
        %v2401 = vrot.slane %v966, 4
        %v2402 = vadd.f32 %v966, %v2401
        %v2403 = vrot.slane %v2402, 2
        %v2404 = vadd.f32 %v2402, %v2403
        %v2405 = vrot.slane %v2404, 1
        %v2406 = vadd.f32 %v2404, %v2405
        %v2407 = vpack.c.bf16 %v972, %v972
        %v2408 = vpack.c.bf16 %v978, %v978
        %v2409 = vpack.c.bf16 %v984, %v984
        %v2410 = vpack.c.bf16 %v990, %v990
        %v2411 = vpack.c.bf16 %v996, %v996
        %v2412 = vpack.c.bf16 %v1002, %v1002
        %v2413 = vpack.c.bf16 %v1008, %v1008
        %v2414 = vpack.c.bf16 %v1014, %v1014
        %v2415 = vpack.c.bf16 %v1020, %v1020
        %v2416 = vpack.c.bf16 %v1026, %v1026
        %v2417 = vpack.c.bf16 %v1032, %v1032
        %v2418 = vpack.c.bf16 %v1038, %v1038
        %v2419 = vpack.c.bf16 %v1044, %v1044
        %v2420 = vpack.c.bf16 %v1050, %v1050
        %v2421 = vpack.c.bf16 %v1056, %v1056
        %v2422 = vpack.c.bf16 %v1062, %v1062
        %v2423 = vpack.c.bf16 %v1068, %v1068
        %v2424 = vpack.c.bf16 %v1074, %v1074
        %v2425 = vpack.c.bf16 %v1080, %v1080
        %v2426 = vpack.c.bf16 %v1086, %v1086
        %v2427 = vpack.c.bf16 %v1092, %v1092
        %v2428 = vpack.c.bf16 %v1098, %v1098
        %v2429 = vpack.c.bf16 %v1104, %v1104
        %v2430 = vpack.c.bf16 %v1110, %v1110
        %v2431 = vpack.c.bf16 %v1116, %v1116
        %v2432 = vpack.c.bf16 %v1122, %v1122
        %v2433 = vpack.c.bf16 %v1128, %v1128
        %v2434 = vpack.c.bf16 %v1134, %v1134
        %v2435 = vpack.c.bf16 %v1140, %v1140
        %v2436 = vpack.c.bf16 %v1146, %v1146
        %v2437 = vpack.c.bf16 %v1152, %v1152
        %v2438 = vpack.c.bf16 %v1158, %v1158
        %v2439 = vpack.c.bf16 %v1164, %v1164
        %v2440 = vpack.c.bf16 %v1170, %v1170
        %v2441 = vpack.c.bf16 %v1176, %v1176
        %v2442 = vpack.c.bf16 %v1182, %v1182
        %v2443 = vpack.c.bf16 %v1188, %v1188
        %v2444 = vpack.c.bf16 %v1194, %v1194
        %v2445 = vpack.c.bf16 %v1200, %v1200
        %v2446 = vpack.c.bf16 %v1206, %v1206
        %v2447 = vpack.c.bf16 %v1212, %v1212
        %v2448 = vpack.c.bf16 %v1218, %v1218
        %v2449 = vpack.c.bf16 %v1224, %v1224
        %v2450 = vpack.c.bf16 %v1230, %v1230
        %v2451 = vpack.c.bf16 %v1236, %v1236
        %v2452 = vpack.c.bf16 %v1242, %v1242
        %v2453 = vpack.c.bf16 %v1248, %v1248
        %v2454 = vpack.c.bf16 %v1254, %v1254
        %v2455 = vpack.c.bf16 %v1260, %v1260
        %v2456 = vpack.c.bf16 %v1266, %v1266
        %v2457 = vpack.c.bf16 %v1272, %v1272
        %v2458 = vpack.c.bf16 %v1278, %v1278
        %v2459 = vpack.c.bf16 %v1284, %v1284
        %v2460 = vpack.c.bf16 %v1290, %v1290
        %v2461 = vpack.c.bf16 %v1296, %v1296
        %v2462 = vpack.c.bf16 %v1302, %v1302
        %v2463 = vpack.c.bf16 %v1308, %v1308
        %v2464 = vpack.c.bf16 %v1314, %v1314
        %v2465 = vpack.c.bf16 %v1320, %v1320
        %v2466 = vpack.c.bf16 %v1326, %v1326
        %v2467 = vpack.c.bf16 %v1332, %v1332
        %v2468 = vpack.c.bf16 %v1338, %v1338
        %v2469 = vpack.c.bf16 %v1344, %v1344
        %v2470 = vpack.c.bf16 %v1350, %v1350
        %v2471 = vpack.c.bf16 %v1356, %v1356
        %v2472 = vpack.c.bf16 %v1362, %v1362
        %v2473 = vpack.c.bf16 %v1368, %v1368
        %v2474 = vpack.c.bf16 %v1374, %v1374
        %v2475 = vpack.c.bf16 %v1380, %v1380
        %v2476 = vpack.c.bf16 %v1386, %v1386
        %v2477 = vpack.c.bf16 %v1392, %v1392
        %v2478 = vpack.c.bf16 %v1398, %v1398
        %v2479 = vpack.c.bf16 %v1404, %v1404
        %v2480 = vpack.c.bf16 %v1410, %v1410
        %v2481 = vpack.c.bf16 %v1416, %v1416
        %v2482 = vpack.c.bf16 %v1422, %v1422
        %v2483 = vpack.c.bf16 %v1428, %v1428
        %v2484 = vpack.c.bf16 %v1434, %v1434
        %v2485 = vpack.c.bf16 %v1440, %v1440
        %v2486 = vpack.c.bf16 %v1446, %v1446
        %v2487 = vpack.c.bf16 %v1452, %v1452
        %v2488 = vpack.c.bf16 %v1458, %v1458
        %v2489 = vpack.c.bf16 %v1464, %v1464
        %v2490 = vpack.c.bf16 %v1470, %v1470
        %v2491 = vpack.c.bf16 %v1476, %v1476
        %v2492 = vpack.c.bf16 %v1482, %v1482
        %v2493 = vpack.c.bf16 %v1488, %v1488
        %v2494 = vpack.c.bf16 %v1494, %v1494
        %v2495 = vpack.c.bf16 %v1500, %v1500
        %v2496 = vpack.c.bf16 %v1506, %v1506
        %v2497 = vpack.c.bf16 %v1512, %v1512
        %v2498 = vpack.c.bf16 %v1518, %v1518
        %v2499 = vpack.c.bf16 %v1524, %v1524
        %v2500 = vpack.c.bf16 %v1530, %v1530
        %v2501 = vpack.c.bf16 %v1536, %v1536
        %v2502 = vpack.c.bf16 %v1542, %v1542
        %v2503 = vpack.c.bf16 %v1548, %v1548
        %v2504 = vpack.c.bf16 %v1554, %v1554
        %v2505 = vpack.c.bf16 %v1560, %v1560
        %v2506 = vpack.c.bf16 %v1566, %v1566
        %v2507 = vpack.c.bf16 %v1572, %v1572
        %v2508 = vpack.c.bf16 %v1578, %v1578
        %v2509 = vpack.c.bf16 %v1584, %v1584
        %v2510 = vpack.c.bf16 %v1590, %v1590
        %v2511 = vpack.c.bf16 %v1596, %v1596
        %v2512 = vpack.c.bf16 %v1602, %v1602
        %v2513 = vpack.c.bf16 %v1608, %v1608
        %v2514 = vpack.c.bf16 %v1614, %v1614
        %v2515 = vpack.c.bf16 %v1620, %v1620
        %v2516 = vpack.c.bf16 %v1626, %v1626
        %v2517 = vpack.c.bf16 %v1632, %v1632
        %v2518 = vpack.c.bf16 %v1638, %v1638
        %v2519 = vpack.c.bf16 %v1644, %v1644
        %v2520 = vpack.c.bf16 %v1650, %v1650
        %v2521 = vpack.c.bf16 %v1656, %v1656
        %v2522 = vpack.c.bf16 %v1662, %v1662
        %v2523 = vpack.c.bf16 %v1668, %v1668
        %v2524 = vpack.c.bf16 %v1674, %v1674
        %v2525 = vpack.c.bf16 %v1680, %v1680
        %v2526 = vpack.c.bf16 %v1686, %v1686
        %v2527 = vpack.c.bf16 %v1692, %v1692
        %v2528 = vpack.c.bf16 %v1698, %v1698
        %v2529 = vpack.c.bf16 %v1704, %v1704
        %v2530 = vpack.c.bf16 %v1710, %v1710
        %v2531 = vpack.c.bf16 %v1716, %v1716
        %v2532 = vpack.c.bf16 %v1722, %v1722
        %v2533 = vpack.c.bf16 %v1728, %v1728
        %v2534 = vpack.c.bf16 %v1734, %v1734
        %v2535 = vpack.c.bf16 %v1740, %v1740
        %v2536 = vpack.c.bf16 %v1746, %v1746
        %v2537 = vpack.c.bf16 %v1752, %v1752
        %v2538 = vpack.c.bf16 %v1758, %v1758
        %v2539 = vpack.c.bf16 %v1764, %v1764
        %v2540 = vpack.c.bf16 %v1770, %v1770
        %v2541 = vpack.c.bf16 %v1776, %v1776
        %v2542 = vpack.c.bf16 %v1782, %v1782
        %v2543 = vpack.c.bf16 %v1788, %v1788
        %v2544 = vpack.c.bf16 %v1794, %v1794
        %v2545 = vpack.c.bf16 %v1800, %v1800
        %v2546 = vpack.c.bf16 %v1806, %v1806
        %v2547 = vpack.c.bf16 %v1812, %v1812
        %v2548 = vpack.c.bf16 %v1818, %v1818
        %v2549 = vpack.c.bf16 %v1824, %v1824
        %v2550 = vpack.c.bf16 %v1830, %v1830
        %v2551 = vpack.c.bf16 %v1836, %v1836
        %v2552 = vpack.c.bf16 %v1842, %v1842
        %v2553 = vpack.c.bf16 %v1848, %v1848
        %v2554 = vpack.c.bf16 %v1854, %v1854
        %v2555 = vpack.c.bf16 %v1860, %v1860
        %v2556 = vpack.c.bf16 %v1866, %v1866
        %v2557 = vpack.c.bf16 %v1872, %v1872
        %v2558 = vpack.c.bf16 %v1878, %v1878
        %v2559 = vpack.c.bf16 %v1884, %v1884
        %v2560 = vpack.c.bf16 %v1890, %v1890
        %v2561 = vpack.c.bf16 %v1896, %v1896
        %v2562 = vpack.c.bf16 %v1902, %v1902
        %v2563 = vpack.c.bf16 %v1908, %v1908
        %v2564 = vpack.c.bf16 %v1914, %v1914
        %v2565 = vpack.c.bf16 %v1920, %v1920
        %v2566 = vpack.c.bf16 %v1926, %v1926
        %v2567 = vpack.c.bf16 %v1932, %v1932
        %v2568 = vpack.c.bf16 %v1938, %v1938
        %v2569 = vpack.c.bf16 %v1944, %v1944
        %v2570 = vpack.c.bf16 %v1950, %v1950
        %v2571 = vpack.c.bf16 %v1956, %v1956
        %v2572 = vpack.c.bf16 %v1962, %v1962
        %v2573 = vpack.c.bf16 %v1968, %v1968
        %v2574 = vpack.c.bf16 %v1974, %v1974
        %v2575 = vpack.c.bf16 %v1980, %v1980
        %v2576 = vpack.c.bf16 %v1986, %v1986
        %v2577 = vpack.c.bf16 %v1992, %v1992
        %v2578 = vpack.c.bf16 %v1998, %v1998
        %v2579 = vpack.c.bf16 %v2004, %v2004
        %v2580 = vpack.c.bf16 %v2010, %v2010
        %v2581 = vpack.c.bf16 %v2016, %v2016
        %v2582 = vpack.c.bf16 %v2022, %v2022
        %v2583 = vpack.c.bf16 %v2028, %v2028
        %v2584 = vpack.c.bf16 %v2034, %v2034
        %v2585 = vpack.c.bf16 %v2040, %v2040
        %v2586 = vpack.c.bf16 %v2046, %v2046
        %v2587 = vpack.c.bf16 %v2052, %v2052
        %v2588 = vpack.c.bf16 %v2058, %v2058
        %v2589 = vpack.c.bf16 %v2064, %v2064
        %v2590 = vpack.c.bf16 %v2070, %v2070
        %v2591 = vpack.c.bf16 %v2076, %v2076
        %v2592 = vpack.c.bf16 %v2082, %v2082
        %v2593 = vpack.c.bf16 %v2088, %v2088
        %v2594 = vpack.c.bf16 %v2094, %v2094
        %v2595 = vpack.c.bf16 %v2100, %v2100
        %v2596 = vpack.c.bf16 %v2106, %v2106
        %v2597 = vpack.c.bf16 %v2112, %v2112
        %v2598 = vpack.c.bf16 %v2118, %v2118
        %v2599 = vpack.c.bf16 %v2124, %v2124
        %v2600 = vpack.c.bf16 %v2130, %v2130
        %v2601 = vpack.c.bf16 %v2136, %v2136
        %v2602 = vpack.c.bf16 %v2142, %v2142
        %v2603 = vpack.c.bf16 %v2148, %v2148
        %v2604 = vpack.c.bf16 %v2154, %v2154
        %v2605 = vpack.c.bf16 %v2160, %v2160
        %v2606 = vpack.c.bf16 %v2166, %v2166
        %v2607 = vpack.c.bf16 %v2172, %v2172
        %v2608 = vpack.c.bf16 %v2178, %v2178
        %v2609 = vpack.c.bf16 %v2184, %v2184
        %v2610 = vpack.c.bf16 %v2190, %v2190
        %v2611 = vpack.c.bf16 %v2196, %v2196
        %v2612 = vpack.c.bf16 %v2202, %v2202
        %v2613 = vpack.c.bf16 %v2208, %v2208
        %v2614 = vpack.c.bf16 %v2214, %v2214
        %v2615 = vpack.c.bf16 %v2220, %v2220
        %v2616 = vpack.c.bf16 %v2226, %v2226
        %v2617 = vpack.c.bf16 %v2232, %v2232
        %v2618 = vpack.c.bf16 %v2238, %v2238
        %v2619 = vpack.c.bf16 %v2244, %v2244
        %v2620 = vpack.c.bf16 %v2250, %v2250
        %v2621 = vpack.c.bf16 %v2256, %v2256
        %v2622 = vpack.c.bf16 %v2262, %v2262
        %v2623 = vpack.c.bf16 %v2268, %v2268
        %v2624 = vpack.c.bf16 %v2274, %v2274
        %v2625 = vpack.c.bf16 %v2280, %v2280
        %v2626 = vpack.c.bf16 %v2286, %v2286
        %v2627 = vpack.c.bf16 %v2292, %v2292
        %v2628 = vpack.c.bf16 %v2298, %v2298
        %v2629 = vpack.c.bf16 %v2304, %v2304
        %v2630 = vpack.c.bf16 %v2310, %v2310
        %v2631 = vpack.c.bf16 %v2316, %v2316
        %v2632 = vpack.c.bf16 %v2322, %v2322
        %v2633 = vpack.c.bf16 %v2328, %v2328
        %v2634 = vpack.c.bf16 %v2334, %v2334
        %v2635 = vpack.c.bf16 %v2340, %v2340
        %v2636 = vpack.c.bf16 %v2346, %v2346
        %v2637 = vpack.c.bf16 %v2352, %v2352
        %v2638 = vpack.c.bf16 %v2358, %v2358
        %v2639 = vpack.c.bf16 %v2364, %v2364
        %v2640 = vpack.c.bf16 %v2370, %v2370
        %v2641 = vpack.c.bf16 %v2376, %v2376
        %v2642 = vpack.c.bf16 %v2382, %v2382
        %v2643 = vpack.c.bf16 %v2388, %v2388
        %v2644 = vpack.c.bf16 %v2394, %v2394
        %v2645 = vpack.c.bf16 %v2400, %v2400
        %v2646 = vpack.c.bf16 %v2406, %v2406
        %v2887 = vunpack.c.l.b16 %v2407
        %v2888 = vunpack.c.l.b16 %v2408
        %v2889 = vunpack.c.l.b16 %v2409
        %v2890 = vunpack.c.l.b16 %v2410
        %v2891 = vunpack.c.l.b16 %v2411
        %v2892 = vunpack.c.l.b16 %v2412
        %v2893 = vunpack.c.l.b16 %v2413
        %v2894 = vunpack.c.l.b16 %v2414
        %v2895 = vunpack.c.l.b16 %v2415
        %v2896 = vunpack.c.l.b16 %v2416
        %v2897 = vunpack.c.l.b16 %v2417
        %v2898 = vunpack.c.l.b16 %v2418
        %v2899 = vunpack.c.l.b16 %v2419
        %v2900 = vunpack.c.l.b16 %v2420
        %v2901 = vunpack.c.l.b16 %v2421
        %v2902 = vunpack.c.l.b16 %v2422
        %v2903 = vunpack.c.l.b16 %v2423
        %v2904 = vunpack.c.l.b16 %v2424
        %v2905 = vunpack.c.l.b16 %v2425
        %v2906 = vunpack.c.l.b16 %v2426
        %v2907 = vunpack.c.l.b16 %v2427
        %v2908 = vunpack.c.l.b16 %v2428
        %v2909 = vunpack.c.l.b16 %v2429
        %v2910 = vunpack.c.l.b16 %v2430
        %v2911 = vunpack.c.l.b16 %v2431
        %v2912 = vunpack.c.l.b16 %v2432
        %v2913 = vunpack.c.l.b16 %v2433
        %v2914 = vunpack.c.l.b16 %v2434
        %v2915 = vunpack.c.l.b16 %v2435
        %v2916 = vunpack.c.l.b16 %v2436
        %v2917 = vunpack.c.l.b16 %v2437
        %v2918 = vunpack.c.l.b16 %v2438
        %v2919 = vunpack.c.l.b16 %v2439
        %v2920 = vunpack.c.l.b16 %v2440
        %v2921 = vunpack.c.l.b16 %v2441
        %v2922 = vunpack.c.l.b16 %v2442
        %v2923 = vunpack.c.l.b16 %v2443
        %v2924 = vunpack.c.l.b16 %v2444
        %v2925 = vunpack.c.l.b16 %v2445
        %v2926 = vunpack.c.l.b16 %v2446
        %v2927 = vunpack.c.l.b16 %v2447
        %v2928 = vunpack.c.l.b16 %v2448
        %v2929 = vunpack.c.l.b16 %v2449
        %v2930 = vunpack.c.l.b16 %v2450
        %v2931 = vunpack.c.l.b16 %v2451
        %v2932 = vunpack.c.l.b16 %v2452
        %v2933 = vunpack.c.l.b16 %v2453
        %v2934 = vunpack.c.l.b16 %v2454
        %v2935 = vunpack.c.l.b16 %v2455
        %v2936 = vunpack.c.l.b16 %v2456
        %v2937 = vunpack.c.l.b16 %v2457
        %v2938 = vunpack.c.l.b16 %v2458
        %v2939 = vunpack.c.l.b16 %v2459
        %v2940 = vunpack.c.l.b16 %v2460
        %v2941 = vunpack.c.l.b16 %v2461
        %v2942 = vunpack.c.l.b16 %v2462
        %v2943 = vunpack.c.l.b16 %v2463
        %v2944 = vunpack.c.l.b16 %v2464
        %v2945 = vunpack.c.l.b16 %v2465
        %v2946 = vunpack.c.l.b16 %v2466
        %v2947 = vunpack.c.l.b16 %v2467
        %v2948 = vunpack.c.l.b16 %v2468
        %v2949 = vunpack.c.l.b16 %v2469
        %v2950 = vunpack.c.l.b16 %v2470
        %v2951 = vunpack.c.l.b16 %v2471
        %v2952 = vunpack.c.l.b16 %v2472
        %v2953 = vunpack.c.l.b16 %v2473
        %v2954 = vunpack.c.l.b16 %v2474
        %v2955 = vunpack.c.l.b16 %v2475
        %v2956 = vunpack.c.l.b16 %v2476
        %v2957 = vunpack.c.l.b16 %v2477
        %v2958 = vunpack.c.l.b16 %v2478
        %v2959 = vunpack.c.l.b16 %v2479
        %v2960 = vunpack.c.l.b16 %v2480
        %v2961 = vunpack.c.l.b16 %v2481
        %v2962 = vunpack.c.l.b16 %v2482
        %v2963 = vunpack.c.l.b16 %v2483
        %v2964 = vunpack.c.l.b16 %v2484
        %v2965 = vunpack.c.l.b16 %v2485
        %v2966 = vunpack.c.l.b16 %v2486
        %v2967 = vunpack.c.l.b16 %v2487
        %v2968 = vunpack.c.l.b16 %v2488
        %v2969 = vunpack.c.l.b16 %v2489
        %v2970 = vunpack.c.l.b16 %v2490
        %v2971 = vunpack.c.l.b16 %v2491
        %v2972 = vunpack.c.l.b16 %v2492
        %v2973 = vunpack.c.l.b16 %v2493
        %v2974 = vunpack.c.l.b16 %v2494
        %v2975 = vunpack.c.l.b16 %v2495
        %v2976 = vunpack.c.l.b16 %v2496
        %v2977 = vunpack.c.l.b16 %v2497
        %v2978 = vunpack.c.l.b16 %v2498
        %v2979 = vunpack.c.l.b16 %v2499
        %v2980 = vunpack.c.l.b16 %v2500
        %v2981 = vunpack.c.l.b16 %v2501
        %v2982 = vunpack.c.l.b16 %v2502
        %v2983 = vunpack.c.l.b16 %v2503
        %v2984 = vunpack.c.l.b16 %v2504
        %v2985 = vunpack.c.l.b16 %v2505
        %v2986 = vunpack.c.l.b16 %v2506
        %v2987 = vunpack.c.l.b16 %v2507
        %v2988 = vunpack.c.l.b16 %v2508
        %v2989 = vunpack.c.l.b16 %v2509
        %v2990 = vunpack.c.l.b16 %v2510
        %v2991 = vunpack.c.l.b16 %v2511
        %v2992 = vunpack.c.l.b16 %v2512
        %v2993 = vunpack.c.l.b16 %v2513
        %v2994 = vunpack.c.l.b16 %v2514
        %v2995 = vunpack.c.l.b16 %v2515
        %v2996 = vunpack.c.l.b16 %v2516
        %v2997 = vunpack.c.l.b16 %v2517
        %v2998 = vunpack.c.l.b16 %v2518
        %v2999 = vunpack.c.l.b16 %v2519
        %v3000 = vunpack.c.l.b16 %v2520
        %v3001 = vunpack.c.l.b16 %v2521
        %v3002 = vunpack.c.l.b16 %v2522
        %v3003 = vunpack.c.l.b16 %v2523
        %v3004 = vunpack.c.l.b16 %v2524
        %v3005 = vunpack.c.l.b16 %v2525
        %v3006 = vunpack.c.l.b16 %v2526
        %v3007 = vunpack.c.l.b16 %v2527
        %v3008 = vunpack.c.l.b16 %v2528
        %v3009 = vunpack.c.l.b16 %v2529
        %v3010 = vunpack.c.l.b16 %v2530
        %v3011 = vunpack.c.l.b16 %v2531
        %v3012 = vunpack.c.l.b16 %v2532
        %v3013 = vunpack.c.l.b16 %v2533
        %v3014 = vunpack.c.l.b16 %v2534
        %v3015 = vunpack.c.l.b16 %v2535
        %v3016 = vunpack.c.l.b16 %v2536
        %v3017 = vunpack.c.l.b16 %v2537
        %v3018 = vunpack.c.l.b16 %v2538
        %v3019 = vunpack.c.l.b16 %v2539
        %v3020 = vunpack.c.l.b16 %v2540
        %v3021 = vunpack.c.l.b16 %v2541
        %v3022 = vunpack.c.l.b16 %v2542
        %v3023 = vunpack.c.l.b16 %v2543
        %v3024 = vunpack.c.l.b16 %v2544
        %v3025 = vunpack.c.l.b16 %v2545
        %v3026 = vunpack.c.l.b16 %v2546
        %v3027 = vunpack.c.l.b16 %v2547
        %v3028 = vunpack.c.l.b16 %v2548
        %v3029 = vunpack.c.l.b16 %v2549
        %v3030 = vunpack.c.l.b16 %v2550
        %v3031 = vunpack.c.l.b16 %v2551
        %v3032 = vunpack.c.l.b16 %v2552
        %v3033 = vunpack.c.l.b16 %v2553
        %v3034 = vunpack.c.l.b16 %v2554
        %v3035 = vunpack.c.l.b16 %v2555
        %v3036 = vunpack.c.l.b16 %v2556
        %v3037 = vunpack.c.l.b16 %v2557
        %v3038 = vunpack.c.l.b16 %v2558
        %v3039 = vunpack.c.l.b16 %v2559
        %v3040 = vunpack.c.l.b16 %v2560
        %v3041 = vunpack.c.l.b16 %v2561
        %v3042 = vunpack.c.l.b16 %v2562
        %v3043 = vunpack.c.l.b16 %v2563
        %v3044 = vunpack.c.l.b16 %v2564
        %v3045 = vunpack.c.l.b16 %v2565
        %v3046 = vunpack.c.l.b16 %v2566
        %v3047 = vunpack.c.l.b16 %v2567
        %v3048 = vunpack.c.l.b16 %v2568
        %v3049 = vunpack.c.l.b16 %v2569
        %v3050 = vunpack.c.l.b16 %v2570
        %v3051 = vunpack.c.l.b16 %v2571
        %v3052 = vunpack.c.l.b16 %v2572
        %v3053 = vunpack.c.l.b16 %v2573
        %v3054 = vunpack.c.l.b16 %v2574
        %v3055 = vunpack.c.l.b16 %v2575
        %v3056 = vunpack.c.l.b16 %v2576
        %v3057 = vunpack.c.l.b16 %v2577
        %v3058 = vunpack.c.l.b16 %v2578
        %v3059 = vunpack.c.l.b16 %v2579
        %v3060 = vunpack.c.l.b16 %v2580
        %v3061 = vunpack.c.l.b16 %v2581
        %v3062 = vunpack.c.l.b16 %v2582
        %v3063 = vunpack.c.l.b16 %v2583
        %v3064 = vunpack.c.l.b16 %v2584
        %v3065 = vunpack.c.l.b16 %v2585
        %v3066 = vunpack.c.l.b16 %v2586
        %v3067 = vunpack.c.l.b16 %v2587
        %v3068 = vunpack.c.l.b16 %v2588
        %v3069 = vunpack.c.l.b16 %v2589
        %v3070 = vunpack.c.l.b16 %v2590
        %v3071 = vunpack.c.l.b16 %v2591
        %v3072 = vunpack.c.l.b16 %v2592
        %v3073 = vunpack.c.l.b16 %v2593
        %v3074 = vunpack.c.l.b16 %v2594
        %v3075 = vunpack.c.l.b16 %v2595
        %v3076 = vunpack.c.l.b16 %v2596
        %v3077 = vunpack.c.l.b16 %v2597
        %v3078 = vunpack.c.l.b16 %v2598
        %v3079 = vunpack.c.l.b16 %v2599
        %v3080 = vunpack.c.l.b16 %v2600
        %v3081 = vunpack.c.l.b16 %v2601
        %v3082 = vunpack.c.l.b16 %v2602
        %v3083 = vunpack.c.l.b16 %v2603
        %v3084 = vunpack.c.l.b16 %v2604
        %v3085 = vunpack.c.l.b16 %v2605
        %v3086 = vunpack.c.l.b16 %v2606
        %v3087 = vunpack.c.l.b16 %v2607
        %v3088 = vunpack.c.l.b16 %v2608
        %v3089 = vunpack.c.l.b16 %v2609
        %v3090 = vunpack.c.l.b16 %v2610
        %v3091 = vunpack.c.l.b16 %v2611
        %v3092 = vunpack.c.l.b16 %v2612
        %v3093 = vunpack.c.l.b16 %v2613
        %v3094 = vunpack.c.l.b16 %v2614
        %v3095 = vunpack.c.l.b16 %v2615
        %v3096 = vunpack.c.l.b16 %v2616
        %v3097 = vunpack.c.l.b16 %v2617
        %v3098 = vunpack.c.l.b16 %v2618
        %v3099 = vunpack.c.l.b16 %v2619
        %v3100 = vunpack.c.l.b16 %v2620
        %v3101 = vunpack.c.l.b16 %v2621
        %v3102 = vunpack.c.l.b16 %v2622
        %v3103 = vunpack.c.l.b16 %v2623
        %v3104 = vunpack.c.l.b16 %v2624
        %v3105 = vunpack.c.l.b16 %v2625
        %v3106 = vunpack.c.l.b16 %v2626
        %v3107 = vunpack.c.l.b16 %v2627
        %v3108 = vunpack.c.l.b16 %v2628
        %v3109 = vunpack.c.l.b16 %v2629
        %v3110 = vunpack.c.l.b16 %v2630
        %v3111 = vunpack.c.l.b16 %v2631
        %v3112 = vunpack.c.l.b16 %v2632
        %v3113 = vunpack.c.l.b16 %v2633
        %v3114 = vunpack.c.l.b16 %v2634
        %v3115 = vunpack.c.l.b16 %v2635
        %v3116 = vunpack.c.l.b16 %v2636
        %v3117 = vunpack.c.l.b16 %v2637
        %v3118 = vunpack.c.l.b16 %v2638
        %v3119 = vunpack.c.l.b16 %v2639
        %v3120 = vunpack.c.l.b16 %v2640
        %v3121 = vunpack.c.l.b16 %v2641
        %v3122 = vunpack.c.l.b16 %v2642
        %v3123 = vunpack.c.l.b16 %v2643
        %v3124 = vunpack.c.l.b16 %v2644
        %v3125 = vunpack.c.l.b16 %v2645
        %v3126 = vunpack.c.l.b16 %v2646
        %vm3127 = vcmask 1041409
        %v3128 = vsel %vm3127, %v2902, %v2887
        %vm3129 = vcmask 1042434
        %v3130 = vsel %vm3129, %v2917, %v3128
        %vm3131 = vcmask 1043459
        %v3132 = vsel %vm3131, %v2932, %v3130
        %vm3133 = vcmask 1044484
        %v3134 = vsel %vm3133, %v2947, %v3132
        %vm3135 = vcmask 1045509
        %v3136 = vsel %vm3135, %v2962, %v3134
        %vm3137 = vcmask 1046534
        %v3138 = vsel %vm3137, %v2977, %v3136
        %vm3139 = vcmask 1047559
        %v3140 = vsel %vm3139, %v2992, %v3138
        %v3141 = vsel %vm3127, %v2903, %v2888
        %v3142 = vsel %vm3129, %v2918, %v3141
        %v3143 = vsel %vm3131, %v2933, %v3142
        %v3144 = vsel %vm3133, %v2948, %v3143
        %v3145 = vsel %vm3135, %v2963, %v3144
        %v3146 = vsel %vm3137, %v2978, %v3145
        %v3147 = vsel %vm3139, %v2993, %v3146
        %v3148 = vsel %vm3127, %v2904, %v2889
        %v3149 = vsel %vm3129, %v2919, %v3148
        %v3150 = vsel %vm3131, %v2934, %v3149
        %v3151 = vsel %vm3133, %v2949, %v3150
        %v3152 = vsel %vm3135, %v2964, %v3151
        %v3153 = vsel %vm3137, %v2979, %v3152
        %v3154 = vsel %vm3139, %v2994, %v3153
        %v3155 = vsel %vm3127, %v2905, %v2890
        %v3156 = vsel %vm3129, %v2920, %v3155
        %v3157 = vsel %vm3131, %v2935, %v3156
        %v3158 = vsel %vm3133, %v2950, %v3157
        %v3159 = vsel %vm3135, %v2965, %v3158
        %v3160 = vsel %vm3137, %v2980, %v3159
        %v3161 = vsel %vm3139, %v2995, %v3160
        %v3162 = vsel %vm3127, %v2906, %v2891
        %v3163 = vsel %vm3129, %v2921, %v3162
        %v3164 = vsel %vm3131, %v2936, %v3163
        %v3165 = vsel %vm3133, %v2951, %v3164
        %v3166 = vsel %vm3135, %v2966, %v3165
        %v3167 = vsel %vm3137, %v2981, %v3166
        %v3168 = vsel %vm3139, %v2996, %v3167
        %v3169 = vsel %vm3127, %v2907, %v2892
        %v3170 = vsel %vm3129, %v2922, %v3169
        %v3171 = vsel %vm3131, %v2937, %v3170
        %v3172 = vsel %vm3133, %v2952, %v3171
        %v3173 = vsel %vm3135, %v2967, %v3172
        %v3174 = vsel %vm3137, %v2982, %v3173
        %v3175 = vsel %vm3139, %v2997, %v3174
        %v3176 = vsel %vm3127, %v2908, %v2893
        %v3177 = vsel %vm3129, %v2923, %v3176
        %v3178 = vsel %vm3131, %v2938, %v3177
        %v3179 = vsel %vm3133, %v2953, %v3178
        %v3180 = vsel %vm3135, %v2968, %v3179
        %v3181 = vsel %vm3137, %v2983, %v3180
        %v3182 = vsel %vm3139, %v2998, %v3181
        %v3183 = vsel %vm3127, %v2909, %v2894
        %v3184 = vsel %vm3129, %v2924, %v3183
        %v3185 = vsel %vm3131, %v2939, %v3184
        %v3186 = vsel %vm3133, %v2954, %v3185
        %v3187 = vsel %vm3135, %v2969, %v3186
        %v3188 = vsel %vm3137, %v2984, %v3187
        %v3189 = vsel %vm3139, %v2999, %v3188
        %v3190 = vsel %vm3127, %v2910, %v2895
        %v3191 = vsel %vm3129, %v2925, %v3190
        %v3192 = vsel %vm3131, %v2940, %v3191
        %v3193 = vsel %vm3133, %v2955, %v3192
        %v3194 = vsel %vm3135, %v2970, %v3193
        %v3195 = vsel %vm3137, %v2985, %v3194
        %v3196 = vsel %vm3139, %v3000, %v3195
        %v3197 = vsel %vm3127, %v2911, %v2896
        %v3198 = vsel %vm3129, %v2926, %v3197
        %v3199 = vsel %vm3131, %v2941, %v3198
        %v3200 = vsel %vm3133, %v2956, %v3199
        %v3201 = vsel %vm3135, %v2971, %v3200
        %v3202 = vsel %vm3137, %v2986, %v3201
        %v3203 = vsel %vm3139, %v3001, %v3202
        %v3204 = vsel %vm3127, %v2912, %v2897
        %v3205 = vsel %vm3129, %v2927, %v3204
        %v3206 = vsel %vm3131, %v2942, %v3205
        %v3207 = vsel %vm3133, %v2957, %v3206
        %v3208 = vsel %vm3135, %v2972, %v3207
        %v3209 = vsel %vm3137, %v2987, %v3208
        %v3210 = vsel %vm3139, %v3002, %v3209
        %v3211 = vsel %vm3127, %v2913, %v2898
        %v3212 = vsel %vm3129, %v2928, %v3211
        %v3213 = vsel %vm3131, %v2943, %v3212
        %v3214 = vsel %vm3133, %v2958, %v3213
        %v3215 = vsel %vm3135, %v2973, %v3214
        %v3216 = vsel %vm3137, %v2988, %v3215
        %v3217 = vsel %vm3139, %v3003, %v3216
        %v3218 = vsel %vm3127, %v2914, %v2899
        %v3219 = vsel %vm3129, %v2929, %v3218
        %v3220 = vsel %vm3131, %v2944, %v3219
        %v3221 = vsel %vm3133, %v2959, %v3220
        %v3222 = vsel %vm3135, %v2974, %v3221
        %v3223 = vsel %vm3137, %v2989, %v3222
        %v3224 = vsel %vm3139, %v3004, %v3223
        %v3225 = vsel %vm3127, %v2915, %v2900
        %v3226 = vsel %vm3129, %v2930, %v3225
        %v3227 = vsel %vm3131, %v2945, %v3226
        %v3228 = vsel %vm3133, %v2960, %v3227
        %v3229 = vsel %vm3135, %v2975, %v3228
        %v3230 = vsel %vm3137, %v2990, %v3229
        %v3231 = vsel %vm3139, %v3005, %v3230
        %v3232 = vsel %vm3127, %v2916, %v2901
        %v3233 = vsel %vm3129, %v2931, %v3232
        %v3234 = vsel %vm3131, %v2946, %v3233
        %v3235 = vsel %vm3133, %v2961, %v3234
        %v3236 = vsel %vm3135, %v2976, %v3235
        %v3237 = vsel %vm3137, %v2991, %v3236
        %v3238 = vsel %vm3139, %v3006, %v3237
        %v3239 = vsel %vm3127, %v3022, %v3007
        %v3240 = vsel %vm3129, %v3037, %v3239
        %v3241 = vsel %vm3131, %v3052, %v3240
        %v3242 = vsel %vm3133, %v3067, %v3241
        %v3243 = vsel %vm3135, %v3082, %v3242
        %v3244 = vsel %vm3137, %v3097, %v3243
        %v3245 = vsel %vm3139, %v3112, %v3244
        %v3246 = vsel %vm3127, %v3023, %v3008
        %v3247 = vsel %vm3129, %v3038, %v3246
        %v3248 = vsel %vm3131, %v3053, %v3247
        %v3249 = vsel %vm3133, %v3068, %v3248
        %v3250 = vsel %vm3135, %v3083, %v3249
        %v3251 = vsel %vm3137, %v3098, %v3250
        %v3252 = vsel %vm3139, %v3113, %v3251
        %v3253 = vsel %vm3127, %v3024, %v3009
        %v3254 = vsel %vm3129, %v3039, %v3253
        %v3255 = vsel %vm3131, %v3054, %v3254
        %v3256 = vsel %vm3133, %v3069, %v3255
        %v3257 = vsel %vm3135, %v3084, %v3256
        %v3258 = vsel %vm3137, %v3099, %v3257
        %v3259 = vsel %vm3139, %v3114, %v3258
        %v3260 = vsel %vm3127, %v3025, %v3010
        %v3261 = vsel %vm3129, %v3040, %v3260
        %v3262 = vsel %vm3131, %v3055, %v3261
        %v3263 = vsel %vm3133, %v3070, %v3262
        %v3264 = vsel %vm3135, %v3085, %v3263
        %v3265 = vsel %vm3137, %v3100, %v3264
        %v3266 = vsel %vm3139, %v3115, %v3265
        %v3267 = vsel %vm3127, %v3026, %v3011
        %v3268 = vsel %vm3129, %v3041, %v3267
        %v3269 = vsel %vm3131, %v3056, %v3268
        %v3270 = vsel %vm3133, %v3071, %v3269
        %v3271 = vsel %vm3135, %v3086, %v3270
        %v3272 = vsel %vm3137, %v3101, %v3271
        %v3273 = vsel %vm3139, %v3116, %v3272
        %v3274 = vsel %vm3127, %v3027, %v3012
        %v3275 = vsel %vm3129, %v3042, %v3274
        %v3276 = vsel %vm3131, %v3057, %v3275
        %v3277 = vsel %vm3133, %v3072, %v3276
        %v3278 = vsel %vm3135, %v3087, %v3277
        %v3279 = vsel %vm3137, %v3102, %v3278
        %v3280 = vsel %vm3139, %v3117, %v3279
        %v3281 = vsel %vm3127, %v3028, %v3013
        %v3282 = vsel %vm3129, %v3043, %v3281
        %v3283 = vsel %vm3131, %v3058, %v3282
        %v3284 = vsel %vm3133, %v3073, %v3283
        %v3285 = vsel %vm3135, %v3088, %v3284
        %v3286 = vsel %vm3137, %v3103, %v3285
        %v3287 = vsel %vm3139, %v3118, %v3286
        %v3288 = vsel %vm3127, %v3029, %v3014
        %v3289 = vsel %vm3129, %v3044, %v3288
        %v3290 = vsel %vm3131, %v3059, %v3289
        %v3291 = vsel %vm3133, %v3074, %v3290
        %v3292 = vsel %vm3135, %v3089, %v3291
        %v3293 = vsel %vm3137, %v3104, %v3292
        %v3294 = vsel %vm3139, %v3119, %v3293
        %v3295 = vsel %vm3127, %v3030, %v3015
        %v3296 = vsel %vm3129, %v3045, %v3295
        %v3297 = vsel %vm3131, %v3060, %v3296
        %v3298 = vsel %vm3133, %v3075, %v3297
        %v3299 = vsel %vm3135, %v3090, %v3298
        %v3300 = vsel %vm3137, %v3105, %v3299
        %v3301 = vsel %vm3139, %v3120, %v3300
        %v3302 = vsel %vm3127, %v3031, %v3016
        %v3303 = vsel %vm3129, %v3046, %v3302
        %v3304 = vsel %vm3131, %v3061, %v3303
        %v3305 = vsel %vm3133, %v3076, %v3304
        %v3306 = vsel %vm3135, %v3091, %v3305
        %v3307 = vsel %vm3137, %v3106, %v3306
        %v3308 = vsel %vm3139, %v3121, %v3307
        %v3309 = vsel %vm3127, %v3032, %v3017
        %v3310 = vsel %vm3129, %v3047, %v3309
        %v3311 = vsel %vm3131, %v3062, %v3310
        %v3312 = vsel %vm3133, %v3077, %v3311
        %v3313 = vsel %vm3135, %v3092, %v3312
        %v3314 = vsel %vm3137, %v3107, %v3313
        %v3315 = vsel %vm3139, %v3122, %v3314
        %v3316 = vsel %vm3127, %v3033, %v3018
        %v3317 = vsel %vm3129, %v3048, %v3316
        %v3318 = vsel %vm3131, %v3063, %v3317
        %v3319 = vsel %vm3133, %v3078, %v3318
        %v3320 = vsel %vm3135, %v3093, %v3319
        %v3321 = vsel %vm3137, %v3108, %v3320
        %v3322 = vsel %vm3139, %v3123, %v3321
        %v3323 = vsel %vm3127, %v3034, %v3019
        %v3324 = vsel %vm3129, %v3049, %v3323
        %v3325 = vsel %vm3131, %v3064, %v3324
        %v3326 = vsel %vm3133, %v3079, %v3325
        %v3327 = vsel %vm3135, %v3094, %v3326
        %v3328 = vsel %vm3137, %v3109, %v3327
        %v3329 = vsel %vm3139, %v3124, %v3328
        %v3330 = vsel %vm3127, %v3035, %v3020
        %v3331 = vsel %vm3129, %v3050, %v3330
        %v3332 = vsel %vm3131, %v3065, %v3331
        %v3333 = vsel %vm3133, %v3080, %v3332
        %v3334 = vsel %vm3135, %v3095, %v3333
        %v3335 = vsel %vm3137, %v3110, %v3334
        %v3336 = vsel %vm3139, %v3125, %v3335
        %v3337 = vsel %vm3127, %v3036, %v3021
        %v3338 = vsel %vm3129, %v3051, %v3337
        %v3339 = vsel %vm3131, %v3066, %v3338
        %v3340 = vsel %vm3133, %v3081, %v3339
        %v3341 = vsel %vm3135, %v3096, %v3340
        %v3342 = vsel %vm3137, %v3111, %v3341
        %v3343 = vsel %vm3139, %v3126, %v3342
        %v3344 = vpack.c.b16 %v3245, %v3140
        %v3345 = vpack.c.b16 %v3252, %v3147
        %v3346 = vpack.c.b16 %v3259, %v3154
        %v3347 = vpack.c.b16 %v3266, %v3161
        %v3348 = vpack.c.b16 %v3273, %v3168
        %v3349 = vpack.c.b16 %v3280, %v3175
        %v3350 = vpack.c.b16 %v3287, %v3182
        %v3351 = vpack.c.b16 %v3294, %v3189
        %v3352 = vpack.c.b16 %v3301, %v3196
        %v3353 = vpack.c.b16 %v3308, %v3203
        %v3354 = vpack.c.b16 %v3315, %v3210
        %v3355 = vpack.c.b16 %v3322, %v3217
        %v3356 = vpack.c.b16 %v3329, %v3224
        %v3357 = vpack.c.b16 %v3336, %v3231
        %v3358 = vpack.c.b16 %v3343, %v3238
        %3374 = vst [vmem:[#allocation2] sm:$0xff] %v3344
        %3375 = vst [vmem:[#allocation2 + $0x8] sm:$0xff] %v3345
        %3376 = vst [vmem:[#allocation2 + $0x10] sm:$0xff] %v3346
        %3377 = vst [vmem:[#allocation2 + $0x18] sm:$0xff] %v3347
        %3378 = vst [vmem:[#allocation2 + $0x20] sm:$0xff] %v3348
        %3379 = vst [vmem:[#allocation2 + $0x28] sm:$0xff] %v3349
        %3380 = vst [vmem:[#allocation2 + $0x30] sm:$0xff] %v3350
        %3381 = vst [vmem:[#allocation2 + $0x38] sm:$0xff] %v3351
        %3382 = vst [vmem:[#allocation2 + $0x40] sm:$0xff] %v3352
        %3383 = vst [vmem:[#allocation2 + $0x48] sm:$0xff] %v3353
        %3384 = vst [vmem:[#allocation2 + $0x50] sm:$0xff] %v3354
        %3385 = vst [vmem:[#allocation2 + $0x58] sm:$0xff] %v3355
        %3386 = vst [vmem:[#allocation2 + $0x60] sm:$0xff] %v3356
        %3387 = vst [vmem:[#allocation2 + $0x68] sm:$0xff] %v3357
        %3388 = vst [vmem:[#allocation2 + $0x70] sm:$0xff] %v3358
        %v3389 = vmul.f32 %v395, %v682
        %v3390 = vmul.f32 %v396, %v683
        %v3391 = vmul.f32 %v397, %v684
        %v3392 = vmul.f32 %v398, %v685
        %v3393 = vmul.f32 %v399, %v686
        %v3394 = vmul.f32 %v400, %v687
        %v3395 = vmul.f32 %v401, %v688
        %v3396 = vmul.f32 %v402, %v689
        %v3397 = vmul.f32 %v403, %v690
        %v3398 = vmul.f32 %v404, %v691
        %v3399 = vmul.f32 %v405, %v692
        %v3400 = vmul.f32 %v406, %v693
        %v3401 = vmul.f32 %v407, %v694
        %v3402 = vmul.f32 %v408, %v695
        %v3403 = vmul.f32 %v409, %v696
        %v3404 = vmul.f32 %v410, %v682
        %v3405 = vmul.f32 %v411, %v683
        %v3406 = vmul.f32 %v412, %v684
        %v3407 = vmul.f32 %v413, %v685
        %v3408 = vmul.f32 %v414, %v686
        %v3409 = vmul.f32 %v415, %v687
        %v3410 = vmul.f32 %v416, %v688
        %v3411 = vmul.f32 %v417, %v689
        %v3412 = vmul.f32 %v418, %v690
        %v3413 = vmul.f32 %v419, %v691
        %v3414 = vmul.f32 %v420, %v692
        %v3415 = vmul.f32 %v421, %v693
        %v3416 = vmul.f32 %v422, %v694
        %v3417 = vmul.f32 %v423, %v695
        %v3418 = vmul.f32 %v424, %v696
        %v3419 = vmul.f32 %v425, %v682
        %v3420 = vmul.f32 %v426, %v683
        %v3421 = vmul.f32 %v427, %v684
        %v3422 = vmul.f32 %v428, %v685
        %v3423 = vmul.f32 %v429, %v686
        %v3424 = vmul.f32 %v430, %v687
        %v3425 = vmul.f32 %v431, %v688
        %v3426 = vmul.f32 %v432, %v689
        %v3427 = vmul.f32 %v433, %v690
        %v3428 = vmul.f32 %v434, %v691
        %v3429 = vmul.f32 %v435, %v692
        %v3430 = vmul.f32 %v436, %v693
        %v3431 = vmul.f32 %v437, %v694
        %v3432 = vmul.f32 %v438, %v695
        %v3433 = vmul.f32 %v439, %v696
        %v3434 = vmul.f32 %v440, %v682
        %v3435 = vmul.f32 %v441, %v683
        %v3436 = vmul.f32 %v442, %v684
        %v3437 = vmul.f32 %v443, %v685
        %v3438 = vmul.f32 %v444, %v686
        %v3439 = vmul.f32 %v445, %v687
        %v3440 = vmul.f32 %v446, %v688
        %v3441 = vmul.f32 %v447, %v689
        %v3442 = vmul.f32 %v448, %v690
        %v3443 = vmul.f32 %v449, %v691
        %v3444 = vmul.f32 %v450, %v692
        %v3445 = vmul.f32 %v451, %v693
        %v3446 = vmul.f32 %v452, %v694
        %v3447 = vmul.f32 %v453, %v695
        %v3448 = vmul.f32 %v454, %v696
        %v3449 = vmul.f32 %v455, %v682
        %v3450 = vmul.f32 %v456, %v683
        %v3451 = vmul.f32 %v457, %v684
        %v3452 = vmul.f32 %v458, %v685
        %v3453 = vmul.f32 %v459, %v686
        %v3454 = vmul.f32 %v460, %v687
        %v3455 = vmul.f32 %v461, %v688
        %v3456 = vmul.f32 %v462, %v689
        %v3457 = vmul.f32 %v463, %v690
        %v3458 = vmul.f32 %v464, %v691
        %v3459 = vmul.f32 %v465, %v692
        %v3460 = vmul.f32 %v466, %v693
        %v3461 = vmul.f32 %v467, %v694
        %v3462 = vmul.f32 %v468, %v695
        %v3463 = vmul.f32 %v469, %v696
        %v3464 = vmul.f32 %v470, %v682
        %v3465 = vmul.f32 %v471, %v683
        %v3466 = vmul.f32 %v472, %v684
        %v3467 = vmul.f32 %v473, %v685
        %v3468 = vmul.f32 %v474, %v686
        %v3469 = vmul.f32 %v475, %v687
        %v3470 = vmul.f32 %v476, %v688
        %v3471 = vmul.f32 %v477, %v689
        %v3472 = vmul.f32 %v478, %v690
        %v3473 = vmul.f32 %v479, %v691
        %v3474 = vmul.f32 %v480, %v692
        %v3475 = vmul.f32 %v481, %v693
        %v3476 = vmul.f32 %v482, %v694
        %v3477 = vmul.f32 %v483, %v695
        %v3478 = vmul.f32 %v484, %v696
        %v3479 = vmul.f32 %v485, %v682
        %v3480 = vmul.f32 %v486, %v683
        %v3481 = vmul.f32 %v487, %v684
        %v3482 = vmul.f32 %v488, %v685
        %v3483 = vmul.f32 %v489, %v686
        %v3484 = vmul.f32 %v490, %v687
        %v3485 = vmul.f32 %v491, %v688
        %v3486 = vmul.f32 %v492, %v689
        %v3487 = vmul.f32 %v493, %v690
        %v3488 = vmul.f32 %v494, %v691
        %v3489 = vmul.f32 %v495, %v692
        %v3490 = vmul.f32 %v496, %v693
        %v3491 = vmul.f32 %v497, %v694
        %v3492 = vmul.f32 %v498, %v695
        %v3493 = vmul.f32 %v499, %v696
        %v3494 = vmul.f32 %v500, %v682
        %v3495 = vmul.f32 %v501, %v683
        %v3496 = vmul.f32 %v502, %v684
        %v3497 = vmul.f32 %v503, %v685
        %v3498 = vmul.f32 %v504, %v686
        %v3499 = vmul.f32 %v505, %v687
        %v3500 = vmul.f32 %v506, %v688
        %v3501 = vmul.f32 %v507, %v689
        %v3502 = vmul.f32 %v508, %v690
        %v3503 = vmul.f32 %v509, %v691
        %v3504 = vmul.f32 %v510, %v692
        %v3505 = vmul.f32 %v511, %v693
        %v3506 = vmul.f32 %v512, %v694
        %v3507 = vmul.f32 %v513, %v695
        %v3508 = vmul.f32 %v514, %v696
        %v3509 = vmul.f32 %v515, %v682
        %v3510 = vmul.f32 %v516, %v683
        %v3511 = vmul.f32 %v517, %v684
        %v3512 = vmul.f32 %v518, %v685
        %v3513 = vmul.f32 %v519, %v686
        %v3514 = vmul.f32 %v520, %v687
        %v3515 = vmul.f32 %v521, %v688
        %v3516 = vmul.f32 %v522, %v689
        %v3517 = vmul.f32 %v523, %v690
        %v3518 = vmul.f32 %v524, %v691
        %v3519 = vmul.f32 %v525, %v692
        %v3520 = vmul.f32 %v526, %v693
        %v3521 = vmul.f32 %v527, %v694
        %v3522 = vmul.f32 %v528, %v695
        %v3523 = vmul.f32 %v529, %v696
        %v3524 = vmul.f32 %v530, %v682
        %v3525 = vmul.f32 %v531, %v683
        %v3526 = vmul.f32 %v532, %v684
        %v3527 = vmul.f32 %v533, %v685
        %v3528 = vmul.f32 %v534, %v686
        %v3529 = vmul.f32 %v535, %v687
        %v3530 = vmul.f32 %v536, %v688
        %v3531 = vmul.f32 %v537, %v689
        %v3532 = vmul.f32 %v538, %v690
        %v3533 = vmul.f32 %v539, %v691
        %v3534 = vmul.f32 %v540, %v692
        %v3535 = vmul.f32 %v541, %v693
        %v3536 = vmul.f32 %v542, %v694
        %v3537 = vmul.f32 %v543, %v695
        %v3538 = vmul.f32 %v544, %v696
        %v3539 = vmul.f32 %v545, %v682
        %v3540 = vmul.f32 %v546, %v683
        %v3541 = vmul.f32 %v547, %v684
        %v3542 = vmul.f32 %v548, %v685
        %v3543 = vmul.f32 %v549, %v686
        %v3544 = vmul.f32 %v550, %v687
        %v3545 = vmul.f32 %v551, %v688
        %v3546 = vmul.f32 %v552, %v689
        %v3547 = vmul.f32 %v553, %v690
        %v3548 = vmul.f32 %v554, %v691
        %v3549 = vmul.f32 %v555, %v692
        %v3550 = vmul.f32 %v556, %v693
        %v3551 = vmul.f32 %v557, %v694
        %v3552 = vmul.f32 %v558, %v695
        %v3553 = vmul.f32 %v559, %v696
        %v3554 = vmul.f32 %v560, %v682
        %v3555 = vmul.f32 %v561, %v683
        %v3556 = vmul.f32 %v562, %v684
        %v3557 = vmul.f32 %v563, %v685
        %v3558 = vmul.f32 %v564, %v686
        %v3559 = vmul.f32 %v565, %v687
        %v3560 = vmul.f32 %v566, %v688
        %v3561 = vmul.f32 %v567, %v689
        %v3562 = vmul.f32 %v568, %v690
        %v3563 = vmul.f32 %v569, %v691
        %v3564 = vmul.f32 %v570, %v692
        %v3565 = vmul.f32 %v571, %v693
        %v3566 = vmul.f32 %v572, %v694
        %v3567 = vmul.f32 %v573, %v695
        %v3568 = vmul.f32 %v574, %v696
        %v3569 = vmul.f32 %v575, %v682
        %v3570 = vmul.f32 %v576, %v683
        %v3571 = vmul.f32 %v577, %v684
        %v3572 = vmul.f32 %v578, %v685
        %v3573 = vmul.f32 %v579, %v686
        %v3574 = vmul.f32 %v580, %v687
        %v3575 = vmul.f32 %v581, %v688
        %v3576 = vmul.f32 %v582, %v689
        %v3577 = vmul.f32 %v583, %v690
        %v3578 = vmul.f32 %v584, %v691
        %v3579 = vmul.f32 %v585, %v692
        %v3580 = vmul.f32 %v586, %v693
        %v3581 = vmul.f32 %v587, %v694
        %v3582 = vmul.f32 %v588, %v695
        %v3583 = vmul.f32 %v589, %v696
        %v3584 = vmul.f32 %v590, %v682
        %v3585 = vmul.f32 %v591, %v683
        %v3586 = vmul.f32 %v592, %v684
        %v3587 = vmul.f32 %v593, %v685
        %v3588 = vmul.f32 %v594, %v686
        %v3589 = vmul.f32 %v595, %v687
        %v3590 = vmul.f32 %v596, %v688
        %v3591 = vmul.f32 %v597, %v689
        %v3592 = vmul.f32 %v598, %v690
        %v3593 = vmul.f32 %v599, %v691
        %v3594 = vmul.f32 %v600, %v692
        %v3595 = vmul.f32 %v601, %v693
        %v3596 = vmul.f32 %v602, %v694
        %v3597 = vmul.f32 %v603, %v695
        %v3598 = vmul.f32 %v604, %v696
        %v3599 = vmul.f32 %v605, %v682
        %v3600 = vmul.f32 %v606, %v683
        %v3601 = vmul.f32 %v607, %v684
        %v3602 = vmul.f32 %v608, %v685
        %v3603 = vmul.f32 %v609, %v686
        %v3604 = vmul.f32 %v610, %v687
        %v3605 = vmul.f32 %v611, %v688
        %v3606 = vmul.f32 %v612, %v689
        %v3607 = vmul.f32 %v613, %v690
        %v3608 = vmul.f32 %v614, %v691
        %v3609 = vmul.f32 %v615, %v692
        %v3610 = vmul.f32 %v616, %v693
        %v3611 = vmul.f32 %v617, %v694
        %v3612 = vmul.f32 %v618, %v695
        %v3613 = vmul.f32 %v619, %v696
        %v3614 = vmul.f32 %v620, %v682
        %v3615 = vmul.f32 %v621, %v683
        %v3616 = vmul.f32 %v622, %v684
        %v3617 = vmul.f32 %v623, %v685
        %v3618 = vmul.f32 %v624, %v686
        %v3619 = vmul.f32 %v625, %v687
        %v3620 = vmul.f32 %v626, %v688
        %v3621 = vmul.f32 %v627, %v689
        %v3622 = vmul.f32 %v628, %v690
        %v3623 = vmul.f32 %v629, %v691
        %v3624 = vmul.f32 %v630, %v692
        %v3625 = vmul.f32 %v631, %v693
        %v3626 = vmul.f32 %v632, %v694
        %v3627 = vmul.f32 %v633, %v695
        %v3628 = vmul.f32 %v634, %v696
        %v3629 = vrot.slane %v3389, 4
        %v3630 = vadd.f32 %v3389, %v3629
        %v3631 = vrot.slane %v3630, 2
        %v3632 = vadd.f32 %v3630, %v3631
        %v3633 = vrot.slane %v3632, 1
        %v3634 = vadd.f32 %v3632, %v3633
        %v3635 = vrot.slane %v3390, 4
        %v3636 = vadd.f32 %v3390, %v3635
        %v3637 = vrot.slane %v3636, 2
        %v3638 = vadd.f32 %v3636, %v3637
        %v3639 = vrot.slane %v3638, 1
        %v3640 = vadd.f32 %v3638, %v3639
        %v3641 = vrot.slane %v3391, 4
        %v3642 = vadd.f32 %v3391, %v3641
        %v3643 = vrot.slane %v3642, 2
        %v3644 = vadd.f32 %v3642, %v3643
        %v3645 = vrot.slane %v3644, 1
        %v3646 = vadd.f32 %v3644, %v3645
        %v3647 = vrot.slane %v3392, 4
        %v3648 = vadd.f32 %v3392, %v3647
        %v3649 = vrot.slane %v3648, 2
        %v3650 = vadd.f32 %v3648, %v3649
        %v3651 = vrot.slane %v3650, 1
        %v3652 = vadd.f32 %v3650, %v3651
        %v3653 = vrot.slane %v3393, 4
        %v3654 = vadd.f32 %v3393, %v3653
        %v3655 = vrot.slane %v3654, 2
        %v3656 = vadd.f32 %v3654, %v3655
        %v3657 = vrot.slane %v3656, 1
        %v3658 = vadd.f32 %v3656, %v3657
        %v3659 = vrot.slane %v3394, 4
        %v3660 = vadd.f32 %v3394, %v3659
        %v3661 = vrot.slane %v3660, 2
        %v3662 = vadd.f32 %v3660, %v3661
        %v3663 = vrot.slane %v3662, 1
        %v3664 = vadd.f32 %v3662, %v3663
        %v3665 = vrot.slane %v3395, 4
        %v3666 = vadd.f32 %v3395, %v3665
        %v3667 = vrot.slane %v3666, 2
        %v3668 = vadd.f32 %v3666, %v3667
        %v3669 = vrot.slane %v3668, 1
        %v3670 = vadd.f32 %v3668, %v3669
        %v3671 = vrot.slane %v3396, 4
        %v3672 = vadd.f32 %v3396, %v3671
        %v3673 = vrot.slane %v3672, 2
        %v3674 = vadd.f32 %v3672, %v3673
        %v3675 = vrot.slane %v3674, 1
        %v3676 = vadd.f32 %v3674, %v3675
        %v3677 = vrot.slane %v3397, 4
        %v3678 = vadd.f32 %v3397, %v3677
        %v3679 = vrot.slane %v3678, 2
        %v3680 = vadd.f32 %v3678, %v3679
        %v3681 = vrot.slane %v3680, 1
        %v3682 = vadd.f32 %v3680, %v3681
        %v3683 = vrot.slane %v3398, 4
        %v3684 = vadd.f32 %v3398, %v3683
        %v3685 = vrot.slane %v3684, 2
        %v3686 = vadd.f32 %v3684, %v3685
        %v3687 = vrot.slane %v3686, 1
        %v3688 = vadd.f32 %v3686, %v3687
        %v3689 = vrot.slane %v3399, 4
        %v3690 = vadd.f32 %v3399, %v3689
        %v3691 = vrot.slane %v3690, 2
        %v3692 = vadd.f32 %v3690, %v3691
        %v3693 = vrot.slane %v3692, 1
        %v3694 = vadd.f32 %v3692, %v3693
        %v3695 = vrot.slane %v3400, 4
        %v3696 = vadd.f32 %v3400, %v3695
        %v3697 = vrot.slane %v3696, 2
        %v3698 = vadd.f32 %v3696, %v3697
        %v3699 = vrot.slane %v3698, 1
        %v3700 = vadd.f32 %v3698, %v3699
        %v3701 = vrot.slane %v3401, 4
        %v3702 = vadd.f32 %v3401, %v3701
        %v3703 = vrot.slane %v3702, 2
        %v3704 = vadd.f32 %v3702, %v3703
        %v3705 = vrot.slane %v3704, 1
        %v3706 = vadd.f32 %v3704, %v3705
        %v3707 = vrot.slane %v3402, 4
        %v3708 = vadd.f32 %v3402, %v3707
        %v3709 = vrot.slane %v3708, 2
        %v3710 = vadd.f32 %v3708, %v3709
        %v3711 = vrot.slane %v3710, 1
        %v3712 = vadd.f32 %v3710, %v3711
        %v3713 = vrot.slane %v3403, 4
        %v3714 = vadd.f32 %v3403, %v3713
        %v3715 = vrot.slane %v3714, 2
        %v3716 = vadd.f32 %v3714, %v3715
        %v3717 = vrot.slane %v3716, 1
        %v3718 = vadd.f32 %v3716, %v3717
        %v3719 = vrot.slane %v3404, 4
        %v3720 = vadd.f32 %v3404, %v3719
        %v3721 = vrot.slane %v3720, 2
        %v3722 = vadd.f32 %v3720, %v3721
        %v3723 = vrot.slane %v3722, 1
        %v3724 = vadd.f32 %v3722, %v3723
        %v3725 = vrot.slane %v3405, 4
        %v3726 = vadd.f32 %v3405, %v3725
        %v3727 = vrot.slane %v3726, 2
        %v3728 = vadd.f32 %v3726, %v3727
        %v3729 = vrot.slane %v3728, 1
        %v3730 = vadd.f32 %v3728, %v3729
        %v3731 = vrot.slane %v3406, 4
        %v3732 = vadd.f32 %v3406, %v3731
        %v3733 = vrot.slane %v3732, 2
        %v3734 = vadd.f32 %v3732, %v3733
        %v3735 = vrot.slane %v3734, 1
        %v3736 = vadd.f32 %v3734, %v3735
        %v3737 = vrot.slane %v3407, 4
        %v3738 = vadd.f32 %v3407, %v3737
        %v3739 = vrot.slane %v3738, 2
        %v3740 = vadd.f32 %v3738, %v3739
        %v3741 = vrot.slane %v3740, 1
        %v3742 = vadd.f32 %v3740, %v3741
        %v3743 = vrot.slane %v3408, 4
        %v3744 = vadd.f32 %v3408, %v3743
        %v3745 = vrot.slane %v3744, 2
        %v3746 = vadd.f32 %v3744, %v3745
        %v3747 = vrot.slane %v3746, 1
        %v3748 = vadd.f32 %v3746, %v3747
        %v3749 = vrot.slane %v3409, 4
        %v3750 = vadd.f32 %v3409, %v3749
        %v3751 = vrot.slane %v3750, 2
        %v3752 = vadd.f32 %v3750, %v3751
        %v3753 = vrot.slane %v3752, 1
        %v3754 = vadd.f32 %v3752, %v3753
        %v3755 = vrot.slane %v3410, 4
        %v3756 = vadd.f32 %v3410, %v3755
        %v3757 = vrot.slane %v3756, 2
        %v3758 = vadd.f32 %v3756, %v3757
        %v3759 = vrot.slane %v3758, 1
        %v3760 = vadd.f32 %v3758, %v3759
        %v3761 = vrot.slane %v3411, 4
        %v3762 = vadd.f32 %v3411, %v3761
        %v3763 = vrot.slane %v3762, 2
        %v3764 = vadd.f32 %v3762, %v3763
        %v3765 = vrot.slane %v3764, 1
        %v3766 = vadd.f32 %v3764, %v3765
        %v3767 = vrot.slane %v3412, 4
        %v3768 = vadd.f32 %v3412, %v3767
        %v3769 = vrot.slane %v3768, 2
        %v3770 = vadd.f32 %v3768, %v3769
        %v3771 = vrot.slane %v3770, 1
        %v3772 = vadd.f32 %v3770, %v3771
        %v3773 = vrot.slane %v3413, 4
        %v3774 = vadd.f32 %v3413, %v3773
        %v3775 = vrot.slane %v3774, 2
        %v3776 = vadd.f32 %v3774, %v3775
        %v3777 = vrot.slane %v3776, 1
        %v3778 = vadd.f32 %v3776, %v3777
        %v3779 = vrot.slane %v3414, 4
        %v3780 = vadd.f32 %v3414, %v3779
        %v3781 = vrot.slane %v3780, 2
        %v3782 = vadd.f32 %v3780, %v3781
        %v3783 = vrot.slane %v3782, 1
        %v3784 = vadd.f32 %v3782, %v3783
        %v3785 = vrot.slane %v3415, 4
        %v3786 = vadd.f32 %v3415, %v3785
        %v3787 = vrot.slane %v3786, 2
        %v3788 = vadd.f32 %v3786, %v3787
        %v3789 = vrot.slane %v3788, 1
        %v3790 = vadd.f32 %v3788, %v3789
        %v3791 = vrot.slane %v3416, 4
        %v3792 = vadd.f32 %v3416, %v3791
        %v3793 = vrot.slane %v3792, 2
        %v3794 = vadd.f32 %v3792, %v3793
        %v3795 = vrot.slane %v3794, 1
        %v3796 = vadd.f32 %v3794, %v3795
        %v3797 = vrot.slane %v3417, 4
        %v3798 = vadd.f32 %v3417, %v3797
        %v3799 = vrot.slane %v3798, 2
        %v3800 = vadd.f32 %v3798, %v3799
        %v3801 = vrot.slane %v3800, 1
        %v3802 = vadd.f32 %v3800, %v3801
        %v3803 = vrot.slane %v3418, 4
        %v3804 = vadd.f32 %v3418, %v3803
        %v3805 = vrot.slane %v3804, 2
        %v3806 = vadd.f32 %v3804, %v3805
        %v3807 = vrot.slane %v3806, 1
        %v3808 = vadd.f32 %v3806, %v3807
        %v3809 = vrot.slane %v3419, 4
        %v3810 = vadd.f32 %v3419, %v3809
        %v3811 = vrot.slane %v3810, 2
        %v3812 = vadd.f32 %v3810, %v3811
        %v3813 = vrot.slane %v3812, 1
        %v3814 = vadd.f32 %v3812, %v3813
        %v3815 = vrot.slane %v3420, 4
        %v3816 = vadd.f32 %v3420, %v3815
        %v3817 = vrot.slane %v3816, 2
        %v3818 = vadd.f32 %v3816, %v3817
        %v3819 = vrot.slane %v3818, 1
        %v3820 = vadd.f32 %v3818, %v3819
        %v3821 = vrot.slane %v3421, 4
        %v3822 = vadd.f32 %v3421, %v3821
        %v3823 = vrot.slane %v3822, 2
        %v3824 = vadd.f32 %v3822, %v3823
        %v3825 = vrot.slane %v3824, 1
        %v3826 = vadd.f32 %v3824, %v3825
        %v3827 = vrot.slane %v3422, 4
        %v3828 = vadd.f32 %v3422, %v3827
        %v3829 = vrot.slane %v3828, 2
        %v3830 = vadd.f32 %v3828, %v3829
        %v3831 = vrot.slane %v3830, 1
        %v3832 = vadd.f32 %v3830, %v3831
        %v3833 = vrot.slane %v3423, 4
        %v3834 = vadd.f32 %v3423, %v3833
        %v3835 = vrot.slane %v3834, 2
        %v3836 = vadd.f32 %v3834, %v3835
        %v3837 = vrot.slane %v3836, 1
        %v3838 = vadd.f32 %v3836, %v3837
        %v3839 = vrot.slane %v3424, 4
        %v3840 = vadd.f32 %v3424, %v3839
        %v3841 = vrot.slane %v3840, 2
        %v3842 = vadd.f32 %v3840, %v3841
        %v3843 = vrot.slane %v3842, 1
        %v3844 = vadd.f32 %v3842, %v3843
        %v3845 = vrot.slane %v3425, 4
        %v3846 = vadd.f32 %v3425, %v3845
        %v3847 = vrot.slane %v3846, 2
        %v3848 = vadd.f32 %v3846, %v3847
        %v3849 = vrot.slane %v3848, 1
        %v3850 = vadd.f32 %v3848, %v3849
        %v3851 = vrot.slane %v3426, 4
        %v3852 = vadd.f32 %v3426, %v3851
        %v3853 = vrot.slane %v3852, 2
        %v3854 = vadd.f32 %v3852, %v3853
        %v3855 = vrot.slane %v3854, 1
        %v3856 = vadd.f32 %v3854, %v3855
        %v3857 = vrot.slane %v3427, 4
        %v3858 = vadd.f32 %v3427, %v3857
        %v3859 = vrot.slane %v3858, 2
        %v3860 = vadd.f32 %v3858, %v3859
        %v3861 = vrot.slane %v3860, 1
        %v3862 = vadd.f32 %v3860, %v3861
        %v3863 = vrot.slane %v3428, 4
        %v3864 = vadd.f32 %v3428, %v3863
        %v3865 = vrot.slane %v3864, 2
        %v3866 = vadd.f32 %v3864, %v3865
        %v3867 = vrot.slane %v3866, 1
        %v3868 = vadd.f32 %v3866, %v3867
        %v3869 = vrot.slane %v3429, 4
        %v3870 = vadd.f32 %v3429, %v3869
        %v3871 = vrot.slane %v3870, 2
        %v3872 = vadd.f32 %v3870, %v3871
        %v3873 = vrot.slane %v3872, 1
        %v3874 = vadd.f32 %v3872, %v3873
        %v3875 = vrot.slane %v3430, 4
        %v3876 = vadd.f32 %v3430, %v3875
        %v3877 = vrot.slane %v3876, 2
        %v3878 = vadd.f32 %v3876, %v3877
        %v3879 = vrot.slane %v3878, 1
        %v3880 = vadd.f32 %v3878, %v3879
        %v3881 = vrot.slane %v3431, 4
        %v3882 = vadd.f32 %v3431, %v3881
        %v3883 = vrot.slane %v3882, 2
        %v3884 = vadd.f32 %v3882, %v3883
        %v3885 = vrot.slane %v3884, 1
        %v3886 = vadd.f32 %v3884, %v3885
        %v3887 = vrot.slane %v3432, 4
        %v3888 = vadd.f32 %v3432, %v3887
        %v3889 = vrot.slane %v3888, 2
        %v3890 = vadd.f32 %v3888, %v3889
        %v3891 = vrot.slane %v3890, 1
        %v3892 = vadd.f32 %v3890, %v3891
        %v3893 = vrot.slane %v3433, 4
        %v3894 = vadd.f32 %v3433, %v3893
        %v3895 = vrot.slane %v3894, 2
        %v3896 = vadd.f32 %v3894, %v3895
        %v3897 = vrot.slane %v3896, 1
        %v3898 = vadd.f32 %v3896, %v3897
        %v3899 = vrot.slane %v3434, 4
        %v3900 = vadd.f32 %v3434, %v3899
        %v3901 = vrot.slane %v3900, 2
        %v3902 = vadd.f32 %v3900, %v3901
        %v3903 = vrot.slane %v3902, 1
        %v3904 = vadd.f32 %v3902, %v3903
        %v3905 = vrot.slane %v3435, 4
        %v3906 = vadd.f32 %v3435, %v3905
        %v3907 = vrot.slane %v3906, 2
        %v3908 = vadd.f32 %v3906, %v3907
        %v3909 = vrot.slane %v3908, 1
        %v3910 = vadd.f32 %v3908, %v3909
        %v3911 = vrot.slane %v3436, 4
        %v3912 = vadd.f32 %v3436, %v3911
        %v3913 = vrot.slane %v3912, 2
        %v3914 = vadd.f32 %v3912, %v3913
        %v3915 = vrot.slane %v3914, 1
        %v3916 = vadd.f32 %v3914, %v3915
        %v3917 = vrot.slane %v3437, 4
        %v3918 = vadd.f32 %v3437, %v3917
        %v3919 = vrot.slane %v3918, 2
        %v3920 = vadd.f32 %v3918, %v3919
        %v3921 = vrot.slane %v3920, 1
        %v3922 = vadd.f32 %v3920, %v3921
        %v3923 = vrot.slane %v3438, 4
        %v3924 = vadd.f32 %v3438, %v3923
        %v3925 = vrot.slane %v3924, 2
        %v3926 = vadd.f32 %v3924, %v3925
        %v3927 = vrot.slane %v3926, 1
        %v3928 = vadd.f32 %v3926, %v3927
        %v3929 = vrot.slane %v3439, 4
        %v3930 = vadd.f32 %v3439, %v3929
        %v3931 = vrot.slane %v3930, 2
        %v3932 = vadd.f32 %v3930, %v3931
        %v3933 = vrot.slane %v3932, 1
        %v3934 = vadd.f32 %v3932, %v3933
        %v3935 = vrot.slane %v3440, 4
        %v3936 = vadd.f32 %v3440, %v3935
        %v3937 = vrot.slane %v3936, 2
        %v3938 = vadd.f32 %v3936, %v3937
        %v3939 = vrot.slane %v3938, 1
        %v3940 = vadd.f32 %v3938, %v3939
        %v3941 = vrot.slane %v3441, 4
        %v3942 = vadd.f32 %v3441, %v3941
        %v3943 = vrot.slane %v3942, 2
        %v3944 = vadd.f32 %v3942, %v3943
        %v3945 = vrot.slane %v3944, 1
        %v3946 = vadd.f32 %v3944, %v3945
        %v3947 = vrot.slane %v3442, 4
        %v3948 = vadd.f32 %v3442, %v3947
        %v3949 = vrot.slane %v3948, 2
        %v3950 = vadd.f32 %v3948, %v3949
        %v3951 = vrot.slane %v3950, 1
        %v3952 = vadd.f32 %v3950, %v3951
        %v3953 = vrot.slane %v3443, 4
        %v3954 = vadd.f32 %v3443, %v3953
        %v3955 = vrot.slane %v3954, 2
        %v3956 = vadd.f32 %v3954, %v3955
        %v3957 = vrot.slane %v3956, 1
        %v3958 = vadd.f32 %v3956, %v3957
        %v3959 = vrot.slane %v3444, 4
        %v3960 = vadd.f32 %v3444, %v3959
        %v3961 = vrot.slane %v3960, 2
        %v3962 = vadd.f32 %v3960, %v3961
        %v3963 = vrot.slane %v3962, 1
        %v3964 = vadd.f32 %v3962, %v3963
        %v3965 = vrot.slane %v3445, 4
        %v3966 = vadd.f32 %v3445, %v3965
        %v3967 = vrot.slane %v3966, 2
        %v3968 = vadd.f32 %v3966, %v3967
        %v3969 = vrot.slane %v3968, 1
        %v3970 = vadd.f32 %v3968, %v3969
        %v3971 = vrot.slane %v3446, 4
        %v3972 = vadd.f32 %v3446, %v3971
        %v3973 = vrot.slane %v3972, 2
        %v3974 = vadd.f32 %v3972, %v3973
        %v3975 = vrot.slane %v3974, 1
        %v3976 = vadd.f32 %v3974, %v3975
        %v3977 = vrot.slane %v3447, 4
        %v3978 = vadd.f32 %v3447, %v3977
        %v3979 = vrot.slane %v3978, 2
        %v3980 = vadd.f32 %v3978, %v3979
        %v3981 = vrot.slane %v3980, 1
        %v3982 = vadd.f32 %v3980, %v3981
        %v3983 = vrot.slane %v3448, 4
        %v3984 = vadd.f32 %v3448, %v3983
        %v3985 = vrot.slane %v3984, 2
        %v3986 = vadd.f32 %v3984, %v3985
        %v3987 = vrot.slane %v3986, 1
        %v3988 = vadd.f32 %v3986, %v3987
        %v3989 = vrot.slane %v3449, 4
        %v3990 = vadd.f32 %v3449, %v3989
        %v3991 = vrot.slane %v3990, 2
        %v3992 = vadd.f32 %v3990, %v3991
        %v3993 = vrot.slane %v3992, 1
        %v3994 = vadd.f32 %v3992, %v3993
        %v3995 = vrot.slane %v3450, 4
        %v3996 = vadd.f32 %v3450, %v3995
        %v3997 = vrot.slane %v3996, 2
        %v3998 = vadd.f32 %v3996, %v3997
        %v3999 = vrot.slane %v3998, 1
        %v4000 = vadd.f32 %v3998, %v3999
        %v4001 = vrot.slane %v3451, 4
        %v4002 = vadd.f32 %v3451, %v4001
        %v4003 = vrot.slane %v4002, 2
        %v4004 = vadd.f32 %v4002, %v4003
        %v4005 = vrot.slane %v4004, 1
        %v4006 = vadd.f32 %v4004, %v4005
        %v4007 = vrot.slane %v3452, 4
        %v4008 = vadd.f32 %v3452, %v4007
        %v4009 = vrot.slane %v4008, 2
        %v4010 = vadd.f32 %v4008, %v4009
        %v4011 = vrot.slane %v4010, 1
        %v4012 = vadd.f32 %v4010, %v4011
        %v4013 = vrot.slane %v3453, 4
        %v4014 = vadd.f32 %v3453, %v4013
        %v4015 = vrot.slane %v4014, 2
        %v4016 = vadd.f32 %v4014, %v4015
        %v4017 = vrot.slane %v4016, 1
        %v4018 = vadd.f32 %v4016, %v4017
        %v4019 = vrot.slane %v3454, 4
        %v4020 = vadd.f32 %v3454, %v4019
        %v4021 = vrot.slane %v4020, 2
        %v4022 = vadd.f32 %v4020, %v4021
        %v4023 = vrot.slane %v4022, 1
        %v4024 = vadd.f32 %v4022, %v4023
        %v4025 = vrot.slane %v3455, 4
        %v4026 = vadd.f32 %v3455, %v4025
        %v4027 = vrot.slane %v4026, 2
        %v4028 = vadd.f32 %v4026, %v4027
        %v4029 = vrot.slane %v4028, 1
        %v4030 = vadd.f32 %v4028, %v4029
        %v4031 = vrot.slane %v3456, 4
        %v4032 = vadd.f32 %v3456, %v4031
        %v4033 = vrot.slane %v4032, 2
        %v4034 = vadd.f32 %v4032, %v4033
        %v4035 = vrot.slane %v4034, 1
        %v4036 = vadd.f32 %v4034, %v4035
        %v4037 = vrot.slane %v3457, 4
        %v4038 = vadd.f32 %v3457, %v4037
        %v4039 = vrot.slane %v4038, 2
        %v4040 = vadd.f32 %v4038, %v4039
        %v4041 = vrot.slane %v4040, 1
        %v4042 = vadd.f32 %v4040, %v4041
        %v4043 = vrot.slane %v3458, 4
        %v4044 = vadd.f32 %v3458, %v4043
        %v4045 = vrot.slane %v4044, 2
        %v4046 = vadd.f32 %v4044, %v4045
        %v4047 = vrot.slane %v4046, 1
        %v4048 = vadd.f32 %v4046, %v4047
        %v4049 = vrot.slane %v3459, 4
        %v4050 = vadd.f32 %v3459, %v4049
        %v4051 = vrot.slane %v4050, 2
        %v4052 = vadd.f32 %v4050, %v4051
        %v4053 = vrot.slane %v4052, 1
        %v4054 = vadd.f32 %v4052, %v4053
        %v4055 = vrot.slane %v3460, 4
        %v4056 = vadd.f32 %v3460, %v4055
        %v4057 = vrot.slane %v4056, 2
        %v4058 = vadd.f32 %v4056, %v4057
        %v4059 = vrot.slane %v4058, 1
        %v4060 = vadd.f32 %v4058, %v4059
        %v4061 = vrot.slane %v3461, 4
        %v4062 = vadd.f32 %v3461, %v4061
        %v4063 = vrot.slane %v4062, 2
        %v4064 = vadd.f32 %v4062, %v4063
        %v4065 = vrot.slane %v4064, 1
        %v4066 = vadd.f32 %v4064, %v4065
        %v4067 = vrot.slane %v3462, 4
        %v4068 = vadd.f32 %v3462, %v4067
        %v4069 = vrot.slane %v4068, 2
        %v4070 = vadd.f32 %v4068, %v4069
        %v4071 = vrot.slane %v4070, 1
        %v4072 = vadd.f32 %v4070, %v4071
        %v4073 = vrot.slane %v3463, 4
        %v4074 = vadd.f32 %v3463, %v4073
        %v4075 = vrot.slane %v4074, 2
        %v4076 = vadd.f32 %v4074, %v4075
        %v4077 = vrot.slane %v4076, 1
        %v4078 = vadd.f32 %v4076, %v4077
        %v4079 = vrot.slane %v3464, 4
        %v4080 = vadd.f32 %v3464, %v4079
        %v4081 = vrot.slane %v4080, 2
        %v4082 = vadd.f32 %v4080, %v4081
        %v4083 = vrot.slane %v4082, 1
        %v4084 = vadd.f32 %v4082, %v4083
        %v4085 = vrot.slane %v3465, 4
        %v4086 = vadd.f32 %v3465, %v4085
        %v4087 = vrot.slane %v4086, 2
        %v4088 = vadd.f32 %v4086, %v4087
        %v4089 = vrot.slane %v4088, 1
        %v4090 = vadd.f32 %v4088, %v4089
        %v4091 = vrot.slane %v3466, 4
        %v4092 = vadd.f32 %v3466, %v4091
        %v4093 = vrot.slane %v4092, 2
        %v4094 = vadd.f32 %v4092, %v4093
        %v4095 = vrot.slane %v4094, 1
        %v4096 = vadd.f32 %v4094, %v4095
        %v4097 = vrot.slane %v3467, 4
        %v4098 = vadd.f32 %v3467, %v4097
        %v4099 = vrot.slane %v4098, 2
        %v4100 = vadd.f32 %v4098, %v4099
        %v4101 = vrot.slane %v4100, 1
        %v4102 = vadd.f32 %v4100, %v4101
        %v4103 = vrot.slane %v3468, 4
        %v4104 = vadd.f32 %v3468, %v4103
        %v4105 = vrot.slane %v4104, 2
        %v4106 = vadd.f32 %v4104, %v4105
        %v4107 = vrot.slane %v4106, 1
        %v4108 = vadd.f32 %v4106, %v4107
        %v4109 = vrot.slane %v3469, 4
        %v4110 = vadd.f32 %v3469, %v4109
        %v4111 = vrot.slane %v4110, 2
        %v4112 = vadd.f32 %v4110, %v4111
        %v4113 = vrot.slane %v4112, 1
        %v4114 = vadd.f32 %v4112, %v4113
        %v4115 = vrot.slane %v3470, 4
        %v4116 = vadd.f32 %v3470, %v4115
        %v4117 = vrot.slane %v4116, 2
        %v4118 = vadd.f32 %v4116, %v4117
        %v4119 = vrot.slane %v4118, 1
        %v4120 = vadd.f32 %v4118, %v4119
        %v4121 = vrot.slane %v3471, 4
        %v4122 = vadd.f32 %v3471, %v4121
        %v4123 = vrot.slane %v4122, 2
        %v4124 = vadd.f32 %v4122, %v4123
        %v4125 = vrot.slane %v4124, 1
        %v4126 = vadd.f32 %v4124, %v4125
        %v4127 = vrot.slane %v3472, 4
        %v4128 = vadd.f32 %v3472, %v4127
        %v4129 = vrot.slane %v4128, 2
        %v4130 = vadd.f32 %v4128, %v4129
        %v4131 = vrot.slane %v4130, 1
        %v4132 = vadd.f32 %v4130, %v4131
        %v4133 = vrot.slane %v3473, 4
        %v4134 = vadd.f32 %v3473, %v4133
        %v4135 = vrot.slane %v4134, 2
        %v4136 = vadd.f32 %v4134, %v4135
        %v4137 = vrot.slane %v4136, 1
        %v4138 = vadd.f32 %v4136, %v4137
        %v4139 = vrot.slane %v3474, 4
        %v4140 = vadd.f32 %v3474, %v4139
        %v4141 = vrot.slane %v4140, 2
        %v4142 = vadd.f32 %v4140, %v4141
        %v4143 = vrot.slane %v4142, 1
        %v4144 = vadd.f32 %v4142, %v4143
        %v4145 = vrot.slane %v3475, 4
        %v4146 = vadd.f32 %v3475, %v4145
        %v4147 = vrot.slane %v4146, 2
        %v4148 = vadd.f32 %v4146, %v4147
        %v4149 = vrot.slane %v4148, 1
        %v4150 = vadd.f32 %v4148, %v4149
        %v4151 = vrot.slane %v3476, 4
        %v4152 = vadd.f32 %v3476, %v4151
        %v4153 = vrot.slane %v4152, 2
        %v4154 = vadd.f32 %v4152, %v4153
        %v4155 = vrot.slane %v4154, 1
        %v4156 = vadd.f32 %v4154, %v4155
        %v4157 = vrot.slane %v3477, 4
        %v4158 = vadd.f32 %v3477, %v4157
        %v4159 = vrot.slane %v4158, 2
        %v4160 = vadd.f32 %v4158, %v4159
        %v4161 = vrot.slane %v4160, 1
        %v4162 = vadd.f32 %v4160, %v4161
        %v4163 = vrot.slane %v3478, 4
        %v4164 = vadd.f32 %v3478, %v4163
        %v4165 = vrot.slane %v4164, 2
        %v4166 = vadd.f32 %v4164, %v4165
        %v4167 = vrot.slane %v4166, 1
        %v4168 = vadd.f32 %v4166, %v4167
        %v4169 = vrot.slane %v3479, 4
        %v4170 = vadd.f32 %v3479, %v4169
        %v4171 = vrot.slane %v4170, 2
        %v4172 = vadd.f32 %v4170, %v4171
        %v4173 = vrot.slane %v4172, 1
        %v4174 = vadd.f32 %v4172, %v4173
        %v4175 = vrot.slane %v3480, 4
        %v4176 = vadd.f32 %v3480, %v4175
        %v4177 = vrot.slane %v4176, 2
        %v4178 = vadd.f32 %v4176, %v4177
        %v4179 = vrot.slane %v4178, 1
        %v4180 = vadd.f32 %v4178, %v4179
        %v4181 = vrot.slane %v3481, 4
        %v4182 = vadd.f32 %v3481, %v4181
        %v4183 = vrot.slane %v4182, 2
        %v4184 = vadd.f32 %v4182, %v4183
        %v4185 = vrot.slane %v4184, 1
        %v4186 = vadd.f32 %v4184, %v4185
        %v4187 = vrot.slane %v3482, 4
        %v4188 = vadd.f32 %v3482, %v4187
        %v4189 = vrot.slane %v4188, 2
        %v4190 = vadd.f32 %v4188, %v4189
        %v4191 = vrot.slane %v4190, 1
        %v4192 = vadd.f32 %v4190, %v4191
        %v4193 = vrot.slane %v3483, 4
        %v4194 = vadd.f32 %v3483, %v4193
        %v4195 = vrot.slane %v4194, 2
        %v4196 = vadd.f32 %v4194, %v4195
        %v4197 = vrot.slane %v4196, 1
        %v4198 = vadd.f32 %v4196, %v4197
        %v4199 = vrot.slane %v3484, 4
        %v4200 = vadd.f32 %v3484, %v4199
        %v4201 = vrot.slane %v4200, 2
        %v4202 = vadd.f32 %v4200, %v4201
        %v4203 = vrot.slane %v4202, 1
        %v4204 = vadd.f32 %v4202, %v4203
        %v4205 = vrot.slane %v3485, 4
        %v4206 = vadd.f32 %v3485, %v4205
        %v4207 = vrot.slane %v4206, 2
        %v4208 = vadd.f32 %v4206, %v4207
        %v4209 = vrot.slane %v4208, 1
        %v4210 = vadd.f32 %v4208, %v4209
        %v4211 = vrot.slane %v3486, 4
        %v4212 = vadd.f32 %v3486, %v4211
        %v4213 = vrot.slane %v4212, 2
        %v4214 = vadd.f32 %v4212, %v4213
        %v4215 = vrot.slane %v4214, 1
        %v4216 = vadd.f32 %v4214, %v4215
        %v4217 = vrot.slane %v3487, 4
        %v4218 = vadd.f32 %v3487, %v4217
        %v4219 = vrot.slane %v4218, 2
        %v4220 = vadd.f32 %v4218, %v4219
        %v4221 = vrot.slane %v4220, 1
        %v4222 = vadd.f32 %v4220, %v4221
        %v4223 = vrot.slane %v3488, 4
        %v4224 = vadd.f32 %v3488, %v4223
        %v4225 = vrot.slane %v4224, 2
        %v4226 = vadd.f32 %v4224, %v4225
        %v4227 = vrot.slane %v4226, 1
        %v4228 = vadd.f32 %v4226, %v4227
        %v4229 = vrot.slane %v3489, 4
        %v4230 = vadd.f32 %v3489, %v4229
        %v4231 = vrot.slane %v4230, 2
        %v4232 = vadd.f32 %v4230, %v4231
        %v4233 = vrot.slane %v4232, 1
        %v4234 = vadd.f32 %v4232, %v4233
        %v4235 = vrot.slane %v3490, 4
        %v4236 = vadd.f32 %v3490, %v4235
        %v4237 = vrot.slane %v4236, 2
        %v4238 = vadd.f32 %v4236, %v4237
        %v4239 = vrot.slane %v4238, 1
        %v4240 = vadd.f32 %v4238, %v4239
        %v4241 = vrot.slane %v3491, 4
        %v4242 = vadd.f32 %v3491, %v4241
        %v4243 = vrot.slane %v4242, 2
        %v4244 = vadd.f32 %v4242, %v4243
        %v4245 = vrot.slane %v4244, 1
        %v4246 = vadd.f32 %v4244, %v4245
        %v4247 = vrot.slane %v3492, 4
        %v4248 = vadd.f32 %v3492, %v4247
        %v4249 = vrot.slane %v4248, 2
        %v4250 = vadd.f32 %v4248, %v4249
        %v4251 = vrot.slane %v4250, 1
        %v4252 = vadd.f32 %v4250, %v4251
        %v4253 = vrot.slane %v3493, 4
        %v4254 = vadd.f32 %v3493, %v4253
        %v4255 = vrot.slane %v4254, 2
        %v4256 = vadd.f32 %v4254, %v4255
        %v4257 = vrot.slane %v4256, 1
        %v4258 = vadd.f32 %v4256, %v4257
        %v4259 = vrot.slane %v3494, 4
        %v4260 = vadd.f32 %v3494, %v4259
        %v4261 = vrot.slane %v4260, 2
        %v4262 = vadd.f32 %v4260, %v4261
        %v4263 = vrot.slane %v4262, 1
        %v4264 = vadd.f32 %v4262, %v4263
        %v4265 = vrot.slane %v3495, 4
        %v4266 = vadd.f32 %v3495, %v4265
        %v4267 = vrot.slane %v4266, 2
        %v4268 = vadd.f32 %v4266, %v4267
        %v4269 = vrot.slane %v4268, 1
        %v4270 = vadd.f32 %v4268, %v4269
        %v4271 = vrot.slane %v3496, 4
        %v4272 = vadd.f32 %v3496, %v4271
        %v4273 = vrot.slane %v4272, 2
        %v4274 = vadd.f32 %v4272, %v4273
        %v4275 = vrot.slane %v4274, 1
        %v4276 = vadd.f32 %v4274, %v4275
        %v4277 = vrot.slane %v3497, 4
        %v4278 = vadd.f32 %v3497, %v4277
        %v4279 = vrot.slane %v4278, 2
        %v4280 = vadd.f32 %v4278, %v4279
        %v4281 = vrot.slane %v4280, 1
        %v4282 = vadd.f32 %v4280, %v4281
        %v4283 = vrot.slane %v3498, 4
        %v4284 = vadd.f32 %v3498, %v4283
        %v4285 = vrot.slane %v4284, 2
        %v4286 = vadd.f32 %v4284, %v4285
        %v4287 = vrot.slane %v4286, 1
        %v4288 = vadd.f32 %v4286, %v4287
        %v4289 = vrot.slane %v3499, 4
        %v4290 = vadd.f32 %v3499, %v4289
        %v4291 = vrot.slane %v4290, 2
        %v4292 = vadd.f32 %v4290, %v4291
        %v4293 = vrot.slane %v4292, 1
        %v4294 = vadd.f32 %v4292, %v4293
        %v4295 = vrot.slane %v3500, 4
        %v4296 = vadd.f32 %v3500, %v4295
        %v4297 = vrot.slane %v4296, 2
        %v4298 = vadd.f32 %v4296, %v4297
        %v4299 = vrot.slane %v4298, 1
        %v4300 = vadd.f32 %v4298, %v4299
        %v4301 = vrot.slane %v3501, 4
        %v4302 = vadd.f32 %v3501, %v4301
        %v4303 = vrot.slane %v4302, 2
        %v4304 = vadd.f32 %v4302, %v4303
        %v4305 = vrot.slane %v4304, 1
        %v4306 = vadd.f32 %v4304, %v4305
        %v4307 = vrot.slane %v3502, 4
        %v4308 = vadd.f32 %v3502, %v4307
        %v4309 = vrot.slane %v4308, 2
        %v4310 = vadd.f32 %v4308, %v4309
        %v4311 = vrot.slane %v4310, 1
        %v4312 = vadd.f32 %v4310, %v4311
        %v4313 = vrot.slane %v3503, 4
        %v4314 = vadd.f32 %v3503, %v4313
        %v4315 = vrot.slane %v4314, 2
        %v4316 = vadd.f32 %v4314, %v4315
        %v4317 = vrot.slane %v4316, 1
        %v4318 = vadd.f32 %v4316, %v4317
        %v4319 = vrot.slane %v3504, 4
        %v4320 = vadd.f32 %v3504, %v4319
        %v4321 = vrot.slane %v4320, 2
        %v4322 = vadd.f32 %v4320, %v4321
        %v4323 = vrot.slane %v4322, 1
        %v4324 = vadd.f32 %v4322, %v4323
        %v4325 = vrot.slane %v3505, 4
        %v4326 = vadd.f32 %v3505, %v4325
        %v4327 = vrot.slane %v4326, 2
        %v4328 = vadd.f32 %v4326, %v4327
        %v4329 = vrot.slane %v4328, 1
        %v4330 = vadd.f32 %v4328, %v4329
        %v4331 = vrot.slane %v3506, 4
        %v4332 = vadd.f32 %v3506, %v4331
        %v4333 = vrot.slane %v4332, 2
        %v4334 = vadd.f32 %v4332, %v4333
        %v4335 = vrot.slane %v4334, 1
        %v4336 = vadd.f32 %v4334, %v4335
        %v4337 = vrot.slane %v3507, 4
        %v4338 = vadd.f32 %v3507, %v4337
        %v4339 = vrot.slane %v4338, 2
        %v4340 = vadd.f32 %v4338, %v4339
        %v4341 = vrot.slane %v4340, 1
        %v4342 = vadd.f32 %v4340, %v4341
        %v4343 = vrot.slane %v3508, 4
        %v4344 = vadd.f32 %v3508, %v4343
        %v4345 = vrot.slane %v4344, 2
        %v4346 = vadd.f32 %v4344, %v4345
        %v4347 = vrot.slane %v4346, 1
        %v4348 = vadd.f32 %v4346, %v4347
        %v4349 = vrot.slane %v3509, 4
        %v4350 = vadd.f32 %v3509, %v4349
        %v4351 = vrot.slane %v4350, 2
        %v4352 = vadd.f32 %v4350, %v4351
        %v4353 = vrot.slane %v4352, 1
        %v4354 = vadd.f32 %v4352, %v4353
        %v4355 = vrot.slane %v3510, 4
        %v4356 = vadd.f32 %v3510, %v4355
        %v4357 = vrot.slane %v4356, 2
        %v4358 = vadd.f32 %v4356, %v4357
        %v4359 = vrot.slane %v4358, 1
        %v4360 = vadd.f32 %v4358, %v4359
        %v4361 = vrot.slane %v3511, 4
        %v4362 = vadd.f32 %v3511, %v4361
        %v4363 = vrot.slane %v4362, 2
        %v4364 = vadd.f32 %v4362, %v4363
        %v4365 = vrot.slane %v4364, 1
        %v4366 = vadd.f32 %v4364, %v4365
        %v4367 = vrot.slane %v3512, 4
        %v4368 = vadd.f32 %v3512, %v4367
        %v4369 = vrot.slane %v4368, 2
        %v4370 = vadd.f32 %v4368, %v4369
        %v4371 = vrot.slane %v4370, 1
        %v4372 = vadd.f32 %v4370, %v4371
        %v4373 = vrot.slane %v3513, 4
        %v4374 = vadd.f32 %v3513, %v4373
        %v4375 = vrot.slane %v4374, 2
        %v4376 = vadd.f32 %v4374, %v4375
        %v4377 = vrot.slane %v4376, 1
        %v4378 = vadd.f32 %v4376, %v4377
        %v4379 = vrot.slane %v3514, 4
        %v4380 = vadd.f32 %v3514, %v4379
        %v4381 = vrot.slane %v4380, 2
        %v4382 = vadd.f32 %v4380, %v4381
        %v4383 = vrot.slane %v4382, 1
        %v4384 = vadd.f32 %v4382, %v4383
        %v4385 = vrot.slane %v3515, 4
        %v4386 = vadd.f32 %v3515, %v4385
        %v4387 = vrot.slane %v4386, 2
        %v4388 = vadd.f32 %v4386, %v4387
        %v4389 = vrot.slane %v4388, 1
        %v4390 = vadd.f32 %v4388, %v4389
        %v4391 = vrot.slane %v3516, 4
        %v4392 = vadd.f32 %v3516, %v4391
        %v4393 = vrot.slane %v4392, 2
        %v4394 = vadd.f32 %v4392, %v4393
        %v4395 = vrot.slane %v4394, 1
        %v4396 = vadd.f32 %v4394, %v4395
        %v4397 = vrot.slane %v3517, 4
        %v4398 = vadd.f32 %v3517, %v4397
        %v4399 = vrot.slane %v4398, 2
        %v4400 = vadd.f32 %v4398, %v4399
        %v4401 = vrot.slane %v4400, 1
        %v4402 = vadd.f32 %v4400, %v4401
        %v4403 = vrot.slane %v3518, 4
        %v4404 = vadd.f32 %v3518, %v4403
        %v4405 = vrot.slane %v4404, 2
        %v4406 = vadd.f32 %v4404, %v4405
        %v4407 = vrot.slane %v4406, 1
        %v4408 = vadd.f32 %v4406, %v4407
        %v4409 = vrot.slane %v3519, 4
        %v4410 = vadd.f32 %v3519, %v4409
        %v4411 = vrot.slane %v4410, 2
        %v4412 = vadd.f32 %v4410, %v4411
        %v4413 = vrot.slane %v4412, 1
        %v4414 = vadd.f32 %v4412, %v4413
        %v4415 = vrot.slane %v3520, 4
        %v4416 = vadd.f32 %v3520, %v4415
        %v4417 = vrot.slane %v4416, 2
        %v4418 = vadd.f32 %v4416, %v4417
        %v4419 = vrot.slane %v4418, 1
        %v4420 = vadd.f32 %v4418, %v4419
        %v4421 = vrot.slane %v3521, 4
        %v4422 = vadd.f32 %v3521, %v4421
        %v4423 = vrot.slane %v4422, 2
        %v4424 = vadd.f32 %v4422, %v4423
        %v4425 = vrot.slane %v4424, 1
        %v4426 = vadd.f32 %v4424, %v4425
        %v4427 = vrot.slane %v3522, 4
        %v4428 = vadd.f32 %v3522, %v4427
        %v4429 = vrot.slane %v4428, 2
        %v4430 = vadd.f32 %v4428, %v4429
        %v4431 = vrot.slane %v4430, 1
        %v4432 = vadd.f32 %v4430, %v4431
        %v4433 = vrot.slane %v3523, 4
        %v4434 = vadd.f32 %v3523, %v4433
        %v4435 = vrot.slane %v4434, 2
        %v4436 = vadd.f32 %v4434, %v4435
        %v4437 = vrot.slane %v4436, 1
        %v4438 = vadd.f32 %v4436, %v4437
        %v4439 = vrot.slane %v3524, 4
        %v4440 = vadd.f32 %v3524, %v4439
        %v4441 = vrot.slane %v4440, 2
        %v4442 = vadd.f32 %v4440, %v4441
        %v4443 = vrot.slane %v4442, 1
        %v4444 = vadd.f32 %v4442, %v4443
        %v4445 = vrot.slane %v3525, 4
        %v4446 = vadd.f32 %v3525, %v4445
        %v4447 = vrot.slane %v4446, 2
        %v4448 = vadd.f32 %v4446, %v4447
        %v4449 = vrot.slane %v4448, 1
        %v4450 = vadd.f32 %v4448, %v4449
        %v4451 = vrot.slane %v3526, 4
        %v4452 = vadd.f32 %v3526, %v4451
        %v4453 = vrot.slane %v4452, 2
        %v4454 = vadd.f32 %v4452, %v4453
        %v4455 = vrot.slane %v4454, 1
        %v4456 = vadd.f32 %v4454, %v4455
        %v4457 = vrot.slane %v3527, 4
        %v4458 = vadd.f32 %v3527, %v4457
        %v4459 = vrot.slane %v4458, 2
        %v4460 = vadd.f32 %v4458, %v4459
        %v4461 = vrot.slane %v4460, 1
        %v4462 = vadd.f32 %v4460, %v4461
        %v4463 = vrot.slane %v3528, 4
        %v4464 = vadd.f32 %v3528, %v4463
        %v4465 = vrot.slane %v4464, 2
        %v4466 = vadd.f32 %v4464, %v4465
        %v4467 = vrot.slane %v4466, 1
        %v4468 = vadd.f32 %v4466, %v4467
        %v4469 = vrot.slane %v3529, 4
        %v4470 = vadd.f32 %v3529, %v4469
        %v4471 = vrot.slane %v4470, 2
        %v4472 = vadd.f32 %v4470, %v4471
        %v4473 = vrot.slane %v4472, 1
        %v4474 = vadd.f32 %v4472, %v4473
        %v4475 = vrot.slane %v3530, 4
        %v4476 = vadd.f32 %v3530, %v4475
        %v4477 = vrot.slane %v4476, 2
        %v4478 = vadd.f32 %v4476, %v4477
        %v4479 = vrot.slane %v4478, 1
        %v4480 = vadd.f32 %v4478, %v4479
        %v4481 = vrot.slane %v3531, 4
        %v4482 = vadd.f32 %v3531, %v4481
        %v4483 = vrot.slane %v4482, 2
        %v4484 = vadd.f32 %v4482, %v4483
        %v4485 = vrot.slane %v4484, 1
        %v4486 = vadd.f32 %v4484, %v4485
        %v4487 = vrot.slane %v3532, 4
        %v4488 = vadd.f32 %v3532, %v4487
        %v4489 = vrot.slane %v4488, 2
        %v4490 = vadd.f32 %v4488, %v4489
        %v4491 = vrot.slane %v4490, 1
        %v4492 = vadd.f32 %v4490, %v4491
        %v4493 = vrot.slane %v3533, 4
        %v4494 = vadd.f32 %v3533, %v4493
        %v4495 = vrot.slane %v4494, 2
        %v4496 = vadd.f32 %v4494, %v4495
        %v4497 = vrot.slane %v4496, 1
        %v4498 = vadd.f32 %v4496, %v4497
        %v4499 = vrot.slane %v3534, 4
        %v4500 = vadd.f32 %v3534, %v4499
        %v4501 = vrot.slane %v4500, 2
        %v4502 = vadd.f32 %v4500, %v4501
        %v4503 = vrot.slane %v4502, 1
        %v4504 = vadd.f32 %v4502, %v4503
        %v4505 = vrot.slane %v3535, 4
        %v4506 = vadd.f32 %v3535, %v4505
        %v4507 = vrot.slane %v4506, 2
        %v4508 = vadd.f32 %v4506, %v4507
        %v4509 = vrot.slane %v4508, 1
        %v4510 = vadd.f32 %v4508, %v4509
        %v4511 = vrot.slane %v3536, 4
        %v4512 = vadd.f32 %v3536, %v4511
        %v4513 = vrot.slane %v4512, 2
        %v4514 = vadd.f32 %v4512, %v4513
        %v4515 = vrot.slane %v4514, 1
        %v4516 = vadd.f32 %v4514, %v4515
        %v4517 = vrot.slane %v3537, 4
        %v4518 = vadd.f32 %v3537, %v4517
        %v4519 = vrot.slane %v4518, 2
        %v4520 = vadd.f32 %v4518, %v4519
        %v4521 = vrot.slane %v4520, 1
        %v4522 = vadd.f32 %v4520, %v4521
        %v4523 = vrot.slane %v3538, 4
        %v4524 = vadd.f32 %v3538, %v4523
        %v4525 = vrot.slane %v4524, 2
        %v4526 = vadd.f32 %v4524, %v4525
        %v4527 = vrot.slane %v4526, 1
        %v4528 = vadd.f32 %v4526, %v4527
        %v4529 = vrot.slane %v3539, 4
        %v4530 = vadd.f32 %v3539, %v4529
        %v4531 = vrot.slane %v4530, 2
        %v4532 = vadd.f32 %v4530, %v4531
        %v4533 = vrot.slane %v4532, 1
        %v4534 = vadd.f32 %v4532, %v4533
        %v4535 = vrot.slane %v3540, 4
        %v4536 = vadd.f32 %v3540, %v4535
        %v4537 = vrot.slane %v4536, 2
        %v4538 = vadd.f32 %v4536, %v4537
        %v4539 = vrot.slane %v4538, 1
        %v4540 = vadd.f32 %v4538, %v4539
        %v4541 = vrot.slane %v3541, 4
        %v4542 = vadd.f32 %v3541, %v4541
        %v4543 = vrot.slane %v4542, 2
        %v4544 = vadd.f32 %v4542, %v4543
        %v4545 = vrot.slane %v4544, 1
        %v4546 = vadd.f32 %v4544, %v4545
        %v4547 = vrot.slane %v3542, 4
        %v4548 = vadd.f32 %v3542, %v4547
        %v4549 = vrot.slane %v4548, 2
        %v4550 = vadd.f32 %v4548, %v4549
        %v4551 = vrot.slane %v4550, 1
        %v4552 = vadd.f32 %v4550, %v4551
        %v4553 = vrot.slane %v3543, 4
        %v4554 = vadd.f32 %v3543, %v4553
        %v4555 = vrot.slane %v4554, 2
        %v4556 = vadd.f32 %v4554, %v4555
        %v4557 = vrot.slane %v4556, 1
        %v4558 = vadd.f32 %v4556, %v4557
        %v4559 = vrot.slane %v3544, 4
        %v4560 = vadd.f32 %v3544, %v4559
        %v4561 = vrot.slane %v4560, 2
        %v4562 = vadd.f32 %v4560, %v4561
        %v4563 = vrot.slane %v4562, 1
        %v4564 = vadd.f32 %v4562, %v4563
        %v4565 = vrot.slane %v3545, 4
        %v4566 = vadd.f32 %v3545, %v4565
        %v4567 = vrot.slane %v4566, 2
        %v4568 = vadd.f32 %v4566, %v4567
        %v4569 = vrot.slane %v4568, 1
        %v4570 = vadd.f32 %v4568, %v4569
        %v4571 = vrot.slane %v3546, 4
        %v4572 = vadd.f32 %v3546, %v4571
        %v4573 = vrot.slane %v4572, 2
        %v4574 = vadd.f32 %v4572, %v4573
        %v4575 = vrot.slane %v4574, 1
        %v4576 = vadd.f32 %v4574, %v4575
        %v4577 = vrot.slane %v3547, 4
        %v4578 = vadd.f32 %v3547, %v4577
        %v4579 = vrot.slane %v4578, 2
        %v4580 = vadd.f32 %v4578, %v4579
        %v4581 = vrot.slane %v4580, 1
        %v4582 = vadd.f32 %v4580, %v4581
        %v4583 = vrot.slane %v3548, 4
        %v4584 = vadd.f32 %v3548, %v4583
        %v4585 = vrot.slane %v4584, 2
        %v4586 = vadd.f32 %v4584, %v4585
        %v4587 = vrot.slane %v4586, 1
        %v4588 = vadd.f32 %v4586, %v4587
        %v4589 = vrot.slane %v3549, 4
        %v4590 = vadd.f32 %v3549, %v4589
        %v4591 = vrot.slane %v4590, 2
        %v4592 = vadd.f32 %v4590, %v4591
        %v4593 = vrot.slane %v4592, 1
        %v4594 = vadd.f32 %v4592, %v4593
        %v4595 = vrot.slane %v3550, 4
        %v4596 = vadd.f32 %v3550, %v4595
        %v4597 = vrot.slane %v4596, 2
        %v4598 = vadd.f32 %v4596, %v4597
        %v4599 = vrot.slane %v4598, 1
        %v4600 = vadd.f32 %v4598, %v4599
        %v4601 = vrot.slane %v3551, 4
        %v4602 = vadd.f32 %v3551, %v4601
        %v4603 = vrot.slane %v4602, 2
        %v4604 = vadd.f32 %v4602, %v4603
        %v4605 = vrot.slane %v4604, 1
        %v4606 = vadd.f32 %v4604, %v4605
        %v4607 = vrot.slane %v3552, 4
        %v4608 = vadd.f32 %v3552, %v4607
        %v4609 = vrot.slane %v4608, 2
        %v4610 = vadd.f32 %v4608, %v4609
        %v4611 = vrot.slane %v4610, 1
        %v4612 = vadd.f32 %v4610, %v4611
        %v4613 = vrot.slane %v3553, 4
        %v4614 = vadd.f32 %v3553, %v4613
        %v4615 = vrot.slane %v4614, 2
        %v4616 = vadd.f32 %v4614, %v4615
        %v4617 = vrot.slane %v4616, 1
        %v4618 = vadd.f32 %v4616, %v4617
        %v4619 = vrot.slane %v3554, 4
        %v4620 = vadd.f32 %v3554, %v4619
        %v4621 = vrot.slane %v4620, 2
        %v4622 = vadd.f32 %v4620, %v4621
        %v4623 = vrot.slane %v4622, 1
        %v4624 = vadd.f32 %v4622, %v4623
        %v4625 = vrot.slane %v3555, 4
        %v4626 = vadd.f32 %v3555, %v4625
        %v4627 = vrot.slane %v4626, 2
        %v4628 = vadd.f32 %v4626, %v4627
        %v4629 = vrot.slane %v4628, 1
        %v4630 = vadd.f32 %v4628, %v4629
        %v4631 = vrot.slane %v3556, 4
        %v4632 = vadd.f32 %v3556, %v4631
        %v4633 = vrot.slane %v4632, 2
        %v4634 = vadd.f32 %v4632, %v4633
        %v4635 = vrot.slane %v4634, 1
        %v4636 = vadd.f32 %v4634, %v4635
        %v4637 = vrot.slane %v3557, 4
        %v4638 = vadd.f32 %v3557, %v4637
        %v4639 = vrot.slane %v4638, 2
        %v4640 = vadd.f32 %v4638, %v4639
        %v4641 = vrot.slane %v4640, 1
        %v4642 = vadd.f32 %v4640, %v4641
        %v4643 = vrot.slane %v3558, 4
        %v4644 = vadd.f32 %v3558, %v4643
        %v4645 = vrot.slane %v4644, 2
        %v4646 = vadd.f32 %v4644, %v4645
        %v4647 = vrot.slane %v4646, 1
        %v4648 = vadd.f32 %v4646, %v4647
        %v4649 = vrot.slane %v3559, 4
        %v4650 = vadd.f32 %v3559, %v4649
        %v4651 = vrot.slane %v4650, 2
        %v4652 = vadd.f32 %v4650, %v4651
        %v4653 = vrot.slane %v4652, 1
        %v4654 = vadd.f32 %v4652, %v4653
        %v4655 = vrot.slane %v3560, 4
        %v4656 = vadd.f32 %v3560, %v4655
        %v4657 = vrot.slane %v4656, 2
        %v4658 = vadd.f32 %v4656, %v4657
        %v4659 = vrot.slane %v4658, 1
        %v4660 = vadd.f32 %v4658, %v4659
        %v4661 = vrot.slane %v3561, 4
        %v4662 = vadd.f32 %v3561, %v4661
        %v4663 = vrot.slane %v4662, 2
        %v4664 = vadd.f32 %v4662, %v4663
        %v4665 = vrot.slane %v4664, 1
        %v4666 = vadd.f32 %v4664, %v4665
        %v4667 = vrot.slane %v3562, 4
        %v4668 = vadd.f32 %v3562, %v4667
        %v4669 = vrot.slane %v4668, 2
        %v4670 = vadd.f32 %v4668, %v4669
        %v4671 = vrot.slane %v4670, 1
        %v4672 = vadd.f32 %v4670, %v4671
        %v4673 = vrot.slane %v3563, 4
        %v4674 = vadd.f32 %v3563, %v4673
        %v4675 = vrot.slane %v4674, 2
        %v4676 = vadd.f32 %v4674, %v4675
        %v4677 = vrot.slane %v4676, 1
        %v4678 = vadd.f32 %v4676, %v4677
        %v4679 = vrot.slane %v3564, 4
        %v4680 = vadd.f32 %v3564, %v4679
        %v4681 = vrot.slane %v4680, 2
        %v4682 = vadd.f32 %v4680, %v4681
        %v4683 = vrot.slane %v4682, 1
        %v4684 = vadd.f32 %v4682, %v4683
        %v4685 = vrot.slane %v3565, 4
        %v4686 = vadd.f32 %v3565, %v4685
        %v4687 = vrot.slane %v4686, 2
        %v4688 = vadd.f32 %v4686, %v4687
        %v4689 = vrot.slane %v4688, 1
        %v4690 = vadd.f32 %v4688, %v4689
        %v4691 = vrot.slane %v3566, 4
        %v4692 = vadd.f32 %v3566, %v4691
        %v4693 = vrot.slane %v4692, 2
        %v4694 = vadd.f32 %v4692, %v4693
        %v4695 = vrot.slane %v4694, 1
        %v4696 = vadd.f32 %v4694, %v4695
        %v4697 = vrot.slane %v3567, 4
        %v4698 = vadd.f32 %v3567, %v4697
        %v4699 = vrot.slane %v4698, 2
        %v4700 = vadd.f32 %v4698, %v4699
        %v4701 = vrot.slane %v4700, 1
        %v4702 = vadd.f32 %v4700, %v4701
        %v4703 = vrot.slane %v3568, 4
        %v4704 = vadd.f32 %v3568, %v4703
        %v4705 = vrot.slane %v4704, 2
        %v4706 = vadd.f32 %v4704, %v4705
        %v4707 = vrot.slane %v4706, 1
        %v4708 = vadd.f32 %v4706, %v4707
        %v4709 = vrot.slane %v3569, 4
        %v4710 = vadd.f32 %v3569, %v4709
        %v4711 = vrot.slane %v4710, 2
        %v4712 = vadd.f32 %v4710, %v4711
        %v4713 = vrot.slane %v4712, 1
        %v4714 = vadd.f32 %v4712, %v4713
        %v4715 = vrot.slane %v3570, 4
        %v4716 = vadd.f32 %v3570, %v4715
        %v4717 = vrot.slane %v4716, 2
        %v4718 = vadd.f32 %v4716, %v4717
        %v4719 = vrot.slane %v4718, 1
        %v4720 = vadd.f32 %v4718, %v4719
        %v4721 = vrot.slane %v3571, 4
        %v4722 = vadd.f32 %v3571, %v4721
        %v4723 = vrot.slane %v4722, 2
        %v4724 = vadd.f32 %v4722, %v4723
        %v4725 = vrot.slane %v4724, 1
        %v4726 = vadd.f32 %v4724, %v4725
        %v4727 = vrot.slane %v3572, 4
        %v4728 = vadd.f32 %v3572, %v4727
        %v4729 = vrot.slane %v4728, 2
        %v4730 = vadd.f32 %v4728, %v4729
        %v4731 = vrot.slane %v4730, 1
        %v4732 = vadd.f32 %v4730, %v4731
        %v4733 = vrot.slane %v3573, 4
        %v4734 = vadd.f32 %v3573, %v4733
        %v4735 = vrot.slane %v4734, 2
        %v4736 = vadd.f32 %v4734, %v4735
        %v4737 = vrot.slane %v4736, 1
        %v4738 = vadd.f32 %v4736, %v4737
        %v4739 = vrot.slane %v3574, 4
        %v4740 = vadd.f32 %v3574, %v4739
        %v4741 = vrot.slane %v4740, 2
        %v4742 = vadd.f32 %v4740, %v4741
        %v4743 = vrot.slane %v4742, 1
        %v4744 = vadd.f32 %v4742, %v4743
        %v4745 = vrot.slane %v3575, 4
        %v4746 = vadd.f32 %v3575, %v4745
        %v4747 = vrot.slane %v4746, 2
        %v4748 = vadd.f32 %v4746, %v4747
        %v4749 = vrot.slane %v4748, 1
        %v4750 = vadd.f32 %v4748, %v4749
        %v4751 = vrot.slane %v3576, 4
        %v4752 = vadd.f32 %v3576, %v4751
        %v4753 = vrot.slane %v4752, 2
        %v4754 = vadd.f32 %v4752, %v4753
        %v4755 = vrot.slane %v4754, 1
        %v4756 = vadd.f32 %v4754, %v4755
        %v4757 = vrot.slane %v3577, 4
        %v4758 = vadd.f32 %v3577, %v4757
        %v4759 = vrot.slane %v4758, 2
        %v4760 = vadd.f32 %v4758, %v4759
        %v4761 = vrot.slane %v4760, 1
        %v4762 = vadd.f32 %v4760, %v4761
        %v4763 = vrot.slane %v3578, 4
        %v4764 = vadd.f32 %v3578, %v4763
        %v4765 = vrot.slane %v4764, 2
        %v4766 = vadd.f32 %v4764, %v4765
        %v4767 = vrot.slane %v4766, 1
        %v4768 = vadd.f32 %v4766, %v4767
        %v4769 = vrot.slane %v3579, 4
        %v4770 = vadd.f32 %v3579, %v4769
        %v4771 = vrot.slane %v4770, 2
        %v4772 = vadd.f32 %v4770, %v4771
        %v4773 = vrot.slane %v4772, 1
        %v4774 = vadd.f32 %v4772, %v4773
        %v4775 = vrot.slane %v3580, 4
        %v4776 = vadd.f32 %v3580, %v4775
        %v4777 = vrot.slane %v4776, 2
        %v4778 = vadd.f32 %v4776, %v4777
        %v4779 = vrot.slane %v4778, 1
        %v4780 = vadd.f32 %v4778, %v4779
        %v4781 = vrot.slane %v3581, 4
        %v4782 = vadd.f32 %v3581, %v4781
        %v4783 = vrot.slane %v4782, 2
        %v4784 = vadd.f32 %v4782, %v4783
        %v4785 = vrot.slane %v4784, 1
        %v4786 = vadd.f32 %v4784, %v4785
        %v4787 = vrot.slane %v3582, 4
        %v4788 = vadd.f32 %v3582, %v4787
        %v4789 = vrot.slane %v4788, 2
        %v4790 = vadd.f32 %v4788, %v4789
        %v4791 = vrot.slane %v4790, 1
        %v4792 = vadd.f32 %v4790, %v4791
        %v4793 = vrot.slane %v3583, 4
        %v4794 = vadd.f32 %v3583, %v4793
        %v4795 = vrot.slane %v4794, 2
        %v4796 = vadd.f32 %v4794, %v4795
        %v4797 = vrot.slane %v4796, 1
        %v4798 = vadd.f32 %v4796, %v4797
        %v4799 = vrot.slane %v3584, 4
        %v4800 = vadd.f32 %v3584, %v4799
        %v4801 = vrot.slane %v4800, 2
        %v4802 = vadd.f32 %v4800, %v4801
        %v4803 = vrot.slane %v4802, 1
        %v4804 = vadd.f32 %v4802, %v4803
        %v4805 = vrot.slane %v3585, 4
        %v4806 = vadd.f32 %v3585, %v4805
        %v4807 = vrot.slane %v4806, 2
        %v4808 = vadd.f32 %v4806, %v4807
        %v4809 = vrot.slane %v4808, 1
        %v4810 = vadd.f32 %v4808, %v4809
        %v4811 = vrot.slane %v3586, 4
        %v4812 = vadd.f32 %v3586, %v4811
        %v4813 = vrot.slane %v4812, 2
        %v4814 = vadd.f32 %v4812, %v4813
        %v4815 = vrot.slane %v4814, 1
        %v4816 = vadd.f32 %v4814, %v4815
        %v4817 = vrot.slane %v3587, 4
        %v4818 = vadd.f32 %v3587, %v4817
        %v4819 = vrot.slane %v4818, 2
        %v4820 = vadd.f32 %v4818, %v4819
        %v4821 = vrot.slane %v4820, 1
        %v4822 = vadd.f32 %v4820, %v4821
        %v4823 = vrot.slane %v3588, 4
        %v4824 = vadd.f32 %v3588, %v4823
        %v4825 = vrot.slane %v4824, 2
        %v4826 = vadd.f32 %v4824, %v4825
        %v4827 = vrot.slane %v4826, 1
        %v4828 = vadd.f32 %v4826, %v4827
        %v4829 = vrot.slane %v3589, 4
        %v4830 = vadd.f32 %v3589, %v4829
        %v4831 = vrot.slane %v4830, 2
        %v4832 = vadd.f32 %v4830, %v4831
        %v4833 = vrot.slane %v4832, 1
        %v4834 = vadd.f32 %v4832, %v4833
        %v4835 = vrot.slane %v3590, 4
        %v4836 = vadd.f32 %v3590, %v4835
        %v4837 = vrot.slane %v4836, 2
        %v4838 = vadd.f32 %v4836, %v4837
        %v4839 = vrot.slane %v4838, 1
        %v4840 = vadd.f32 %v4838, %v4839
        %v4841 = vrot.slane %v3591, 4
        %v4842 = vadd.f32 %v3591, %v4841
        %v4843 = vrot.slane %v4842, 2
        %v4844 = vadd.f32 %v4842, %v4843
        %v4845 = vrot.slane %v4844, 1
        %v4846 = vadd.f32 %v4844, %v4845
        %v4847 = vrot.slane %v3592, 4
        %v4848 = vadd.f32 %v3592, %v4847
        %v4849 = vrot.slane %v4848, 2
        %v4850 = vadd.f32 %v4848, %v4849
        %v4851 = vrot.slane %v4850, 1
        %v4852 = vadd.f32 %v4850, %v4851
        %v4853 = vrot.slane %v3593, 4
        %v4854 = vadd.f32 %v3593, %v4853
        %v4855 = vrot.slane %v4854, 2
        %v4856 = vadd.f32 %v4854, %v4855
        %v4857 = vrot.slane %v4856, 1
        %v4858 = vadd.f32 %v4856, %v4857
        %v4859 = vrot.slane %v3594, 4
        %v4860 = vadd.f32 %v3594, %v4859
        %v4861 = vrot.slane %v4860, 2
        %v4862 = vadd.f32 %v4860, %v4861
        %v4863 = vrot.slane %v4862, 1
        %v4864 = vadd.f32 %v4862, %v4863
        %v4865 = vrot.slane %v3595, 4
        %v4866 = vadd.f32 %v3595, %v4865
        %v4867 = vrot.slane %v4866, 2
        %v4868 = vadd.f32 %v4866, %v4867
        %v4869 = vrot.slane %v4868, 1
        %v4870 = vadd.f32 %v4868, %v4869
        %v4871 = vrot.slane %v3596, 4
        %v4872 = vadd.f32 %v3596, %v4871
        %v4873 = vrot.slane %v4872, 2
        %v4874 = vadd.f32 %v4872, %v4873
        %v4875 = vrot.slane %v4874, 1
        %v4876 = vadd.f32 %v4874, %v4875
        %v4877 = vrot.slane %v3597, 4
        %v4878 = vadd.f32 %v3597, %v4877
        %v4879 = vrot.slane %v4878, 2
        %v4880 = vadd.f32 %v4878, %v4879
        %v4881 = vrot.slane %v4880, 1
        %v4882 = vadd.f32 %v4880, %v4881
        %v4883 = vrot.slane %v3598, 4
        %v4884 = vadd.f32 %v3598, %v4883
        %v4885 = vrot.slane %v4884, 2
        %v4886 = vadd.f32 %v4884, %v4885
        %v4887 = vrot.slane %v4886, 1
        %v4888 = vadd.f32 %v4886, %v4887
        %v4889 = vrot.slane %v3599, 4
        %v4890 = vadd.f32 %v3599, %v4889
        %v4891 = vrot.slane %v4890, 2
        %v4892 = vadd.f32 %v4890, %v4891
        %v4893 = vrot.slane %v4892, 1
        %v4894 = vadd.f32 %v4892, %v4893
        %v4895 = vrot.slane %v3600, 4
        %v4896 = vadd.f32 %v3600, %v4895
        %v4897 = vrot.slane %v4896, 2
        %v4898 = vadd.f32 %v4896, %v4897
        %v4899 = vrot.slane %v4898, 1
        %v4900 = vadd.f32 %v4898, %v4899
        %v4901 = vrot.slane %v3601, 4
        %v4902 = vadd.f32 %v3601, %v4901
        %v4903 = vrot.slane %v4902, 2
        %v4904 = vadd.f32 %v4902, %v4903
        %v4905 = vrot.slane %v4904, 1
        %v4906 = vadd.f32 %v4904, %v4905
        %v4907 = vrot.slane %v3602, 4
        %v4908 = vadd.f32 %v3602, %v4907
        %v4909 = vrot.slane %v4908, 2
        %v4910 = vadd.f32 %v4908, %v4909
        %v4911 = vrot.slane %v4910, 1
        %v4912 = vadd.f32 %v4910, %v4911
        %v4913 = vrot.slane %v3603, 4
        %v4914 = vadd.f32 %v3603, %v4913
        %v4915 = vrot.slane %v4914, 2
        %v4916 = vadd.f32 %v4914, %v4915
        %v4917 = vrot.slane %v4916, 1
        %v4918 = vadd.f32 %v4916, %v4917
        %v4919 = vrot.slane %v3604, 4
        %v4920 = vadd.f32 %v3604, %v4919
        %v4921 = vrot.slane %v4920, 2
        %v4922 = vadd.f32 %v4920, %v4921
        %v4923 = vrot.slane %v4922, 1
        %v4924 = vadd.f32 %v4922, %v4923
        %v4925 = vrot.slane %v3605, 4
        %v4926 = vadd.f32 %v3605, %v4925
        %v4927 = vrot.slane %v4926, 2
        %v4928 = vadd.f32 %v4926, %v4927
        %v4929 = vrot.slane %v4928, 1
        %v4930 = vadd.f32 %v4928, %v4929
        %v4931 = vrot.slane %v3606, 4
        %v4932 = vadd.f32 %v3606, %v4931
        %v4933 = vrot.slane %v4932, 2
        %v4934 = vadd.f32 %v4932, %v4933
        %v4935 = vrot.slane %v4934, 1
        %v4936 = vadd.f32 %v4934, %v4935
        %v4937 = vrot.slane %v3607, 4
        %v4938 = vadd.f32 %v3607, %v4937
        %v4939 = vrot.slane %v4938, 2
        %v4940 = vadd.f32 %v4938, %v4939
        %v4941 = vrot.slane %v4940, 1
        %v4942 = vadd.f32 %v4940, %v4941
        %v4943 = vrot.slane %v3608, 4
        %v4944 = vadd.f32 %v3608, %v4943
        %v4945 = vrot.slane %v4944, 2
        %v4946 = vadd.f32 %v4944, %v4945
        %v4947 = vrot.slane %v4946, 1
        %v4948 = vadd.f32 %v4946, %v4947
        %v4949 = vrot.slane %v3609, 4
        %v4950 = vadd.f32 %v3609, %v4949
        %v4951 = vrot.slane %v4950, 2
        %v4952 = vadd.f32 %v4950, %v4951
        %v4953 = vrot.slane %v4952, 1
        %v4954 = vadd.f32 %v4952, %v4953
        %v4955 = vrot.slane %v3610, 4
        %v4956 = vadd.f32 %v3610, %v4955
        %v4957 = vrot.slane %v4956, 2
        %v4958 = vadd.f32 %v4956, %v4957
        %v4959 = vrot.slane %v4958, 1
        %v4960 = vadd.f32 %v4958, %v4959
        %v4961 = vrot.slane %v3611, 4
        %v4962 = vadd.f32 %v3611, %v4961
        %v4963 = vrot.slane %v4962, 2
        %v4964 = vadd.f32 %v4962, %v4963
        %v4965 = vrot.slane %v4964, 1
        %v4966 = vadd.f32 %v4964, %v4965
        %v4967 = vrot.slane %v3612, 4
        %v4968 = vadd.f32 %v3612, %v4967
        %v4969 = vrot.slane %v4968, 2
        %v4970 = vadd.f32 %v4968, %v4969
        %v4971 = vrot.slane %v4970, 1
        %v4972 = vadd.f32 %v4970, %v4971
        %v4973 = vrot.slane %v3613, 4
        %v4974 = vadd.f32 %v3613, %v4973
        %v4975 = vrot.slane %v4974, 2
        %v4976 = vadd.f32 %v4974, %v4975
        %v4977 = vrot.slane %v4976, 1
        %v4978 = vadd.f32 %v4976, %v4977
        %v4979 = vrot.slane %v3614, 4
        %v4980 = vadd.f32 %v3614, %v4979
        %v4981 = vrot.slane %v4980, 2
        %v4982 = vadd.f32 %v4980, %v4981
        %v4983 = vrot.slane %v4982, 1
        %v4984 = vadd.f32 %v4982, %v4983
        %v4985 = vrot.slane %v3615, 4
        %v4986 = vadd.f32 %v3615, %v4985
        %v4987 = vrot.slane %v4986, 2
        %v4988 = vadd.f32 %v4986, %v4987
        %v4989 = vrot.slane %v4988, 1
        %v4990 = vadd.f32 %v4988, %v4989
        %v4991 = vrot.slane %v3616, 4
        %v4992 = vadd.f32 %v3616, %v4991
        %v4993 = vrot.slane %v4992, 2
        %v4994 = vadd.f32 %v4992, %v4993
        %v4995 = vrot.slane %v4994, 1
        %v4996 = vadd.f32 %v4994, %v4995
        %v4997 = vrot.slane %v3617, 4
        %v4998 = vadd.f32 %v3617, %v4997
        %v4999 = vrot.slane %v4998, 2
        %v5000 = vadd.f32 %v4998, %v4999
        %v5001 = vrot.slane %v5000, 1
        %v5002 = vadd.f32 %v5000, %v5001
        %v5003 = vrot.slane %v3618, 4
        %v5004 = vadd.f32 %v3618, %v5003
        %v5005 = vrot.slane %v5004, 2
        %v5006 = vadd.f32 %v5004, %v5005
        %v5007 = vrot.slane %v5006, 1
        %v5008 = vadd.f32 %v5006, %v5007
        %v5009 = vrot.slane %v3619, 4
        %v5010 = vadd.f32 %v3619, %v5009
        %v5011 = vrot.slane %v5010, 2
        %v5012 = vadd.f32 %v5010, %v5011
        %v5013 = vrot.slane %v5012, 1
        %v5014 = vadd.f32 %v5012, %v5013
        %v5015 = vrot.slane %v3620, 4
        %v5016 = vadd.f32 %v3620, %v5015
        %v5017 = vrot.slane %v5016, 2
        %v5018 = vadd.f32 %v5016, %v5017
        %v5019 = vrot.slane %v5018, 1
        %v5020 = vadd.f32 %v5018, %v5019
        %v5021 = vrot.slane %v3621, 4
        %v5022 = vadd.f32 %v3621, %v5021
        %v5023 = vrot.slane %v5022, 2
        %v5024 = vadd.f32 %v5022, %v5023
        %v5025 = vrot.slane %v5024, 1
        %v5026 = vadd.f32 %v5024, %v5025
        %v5027 = vrot.slane %v3622, 4
        %v5028 = vadd.f32 %v3622, %v5027
        %v5029 = vrot.slane %v5028, 2
        %v5030 = vadd.f32 %v5028, %v5029
        %v5031 = vrot.slane %v5030, 1
        %v5032 = vadd.f32 %v5030, %v5031
        %v5033 = vrot.slane %v3623, 4
        %v5034 = vadd.f32 %v3623, %v5033
        %v5035 = vrot.slane %v5034, 2
        %v5036 = vadd.f32 %v5034, %v5035
        %v5037 = vrot.slane %v5036, 1
        %v5038 = vadd.f32 %v5036, %v5037
        %v5039 = vrot.slane %v3624, 4
        %v5040 = vadd.f32 %v3624, %v5039
        %v5041 = vrot.slane %v5040, 2
        %v5042 = vadd.f32 %v5040, %v5041
        %v5043 = vrot.slane %v5042, 1
        %v5044 = vadd.f32 %v5042, %v5043
        %v5045 = vrot.slane %v3625, 4
        %v5046 = vadd.f32 %v3625, %v5045
        %v5047 = vrot.slane %v5046, 2
        %v5048 = vadd.f32 %v5046, %v5047
        %v5049 = vrot.slane %v5048, 1
        %v5050 = vadd.f32 %v5048, %v5049
        %v5051 = vrot.slane %v3626, 4
        %v5052 = vadd.f32 %v3626, %v5051
        %v5053 = vrot.slane %v5052, 2
        %v5054 = vadd.f32 %v5052, %v5053
        %v5055 = vrot.slane %v5054, 1
        %v5056 = vadd.f32 %v5054, %v5055
        %v5057 = vrot.slane %v3627, 4
        %v5058 = vadd.f32 %v3627, %v5057
        %v5059 = vrot.slane %v5058, 2
        %v5060 = vadd.f32 %v5058, %v5059
        %v5061 = vrot.slane %v5060, 1
        %v5062 = vadd.f32 %v5060, %v5061
        %v5063 = vrot.slane %v3628, 4
        %v5064 = vadd.f32 %v3628, %v5063
        %v5065 = vrot.slane %v5064, 2
        %v5066 = vadd.f32 %v5064, %v5065
        %v5067 = vrot.slane %v5066, 1
        %v5068 = vadd.f32 %v5066, %v5067
        %v5069 = vpack.c.bf16 %v3634, %v3634
        %v5070 = vpack.c.bf16 %v3640, %v3640
        %v5071 = vpack.c.bf16 %v3646, %v3646
        %v5072 = vpack.c.bf16 %v3652, %v3652
        %v5073 = vpack.c.bf16 %v3658, %v3658
        %v5074 = vpack.c.bf16 %v3664, %v3664
        %v5075 = vpack.c.bf16 %v3670, %v3670
        %v5076 = vpack.c.bf16 %v3676, %v3676
        %v5077 = vpack.c.bf16 %v3682, %v3682
        %v5078 = vpack.c.bf16 %v3688, %v3688
        %v5079 = vpack.c.bf16 %v3694, %v3694
        %v5080 = vpack.c.bf16 %v3700, %v3700
        %v5081 = vpack.c.bf16 %v3706, %v3706
        %v5082 = vpack.c.bf16 %v3712, %v3712
        %v5083 = vpack.c.bf16 %v3718, %v3718
        %v5084 = vpack.c.bf16 %v3724, %v3724
        %v5085 = vpack.c.bf16 %v3730, %v3730
        %v5086 = vpack.c.bf16 %v3736, %v3736
        %v5087 = vpack.c.bf16 %v3742, %v3742
        %v5088 = vpack.c.bf16 %v3748, %v3748
        %v5089 = vpack.c.bf16 %v3754, %v3754
        %v5090 = vpack.c.bf16 %v3760, %v3760
        %v5091 = vpack.c.bf16 %v3766, %v3766
        %v5092 = vpack.c.bf16 %v3772, %v3772
        %v5093 = vpack.c.bf16 %v3778, %v3778
        %v5094 = vpack.c.bf16 %v3784, %v3784
        %v5095 = vpack.c.bf16 %v3790, %v3790
        %v5096 = vpack.c.bf16 %v3796, %v3796
        %v5097 = vpack.c.bf16 %v3802, %v3802
        %v5098 = vpack.c.bf16 %v3808, %v3808
        %v5099 = vpack.c.bf16 %v3814, %v3814
        %v5100 = vpack.c.bf16 %v3820, %v3820
        %v5101 = vpack.c.bf16 %v3826, %v3826
        %v5102 = vpack.c.bf16 %v3832, %v3832
        %v5103 = vpack.c.bf16 %v3838, %v3838
        %v5104 = vpack.c.bf16 %v3844, %v3844
        %v5105 = vpack.c.bf16 %v3850, %v3850
        %v5106 = vpack.c.bf16 %v3856, %v3856
        %v5107 = vpack.c.bf16 %v3862, %v3862
        %v5108 = vpack.c.bf16 %v3868, %v3868
        %v5109 = vpack.c.bf16 %v3874, %v3874
        %v5110 = vpack.c.bf16 %v3880, %v3880
        %v5111 = vpack.c.bf16 %v3886, %v3886
        %v5112 = vpack.c.bf16 %v3892, %v3892
        %v5113 = vpack.c.bf16 %v3898, %v3898
        %v5114 = vpack.c.bf16 %v3904, %v3904
        %v5115 = vpack.c.bf16 %v3910, %v3910
        %v5116 = vpack.c.bf16 %v3916, %v3916
        %v5117 = vpack.c.bf16 %v3922, %v3922
        %v5118 = vpack.c.bf16 %v3928, %v3928
        %v5119 = vpack.c.bf16 %v3934, %v3934
        %v5120 = vpack.c.bf16 %v3940, %v3940
        %v5121 = vpack.c.bf16 %v3946, %v3946
        %v5122 = vpack.c.bf16 %v3952, %v3952
        %v5123 = vpack.c.bf16 %v3958, %v3958
        %v5124 = vpack.c.bf16 %v3964, %v3964
        %v5125 = vpack.c.bf16 %v3970, %v3970
        %v5126 = vpack.c.bf16 %v3976, %v3976
        %v5127 = vpack.c.bf16 %v3982, %v3982
        %v5128 = vpack.c.bf16 %v3988, %v3988
        %v5129 = vpack.c.bf16 %v3994, %v3994
        %v5130 = vpack.c.bf16 %v4000, %v4000
        %v5131 = vpack.c.bf16 %v4006, %v4006
        %v5132 = vpack.c.bf16 %v4012, %v4012
        %v5133 = vpack.c.bf16 %v4018, %v4018
        %v5134 = vpack.c.bf16 %v4024, %v4024
        %v5135 = vpack.c.bf16 %v4030, %v4030
        %v5136 = vpack.c.bf16 %v4036, %v4036
        %v5137 = vpack.c.bf16 %v4042, %v4042
        %v5138 = vpack.c.bf16 %v4048, %v4048
        %v5139 = vpack.c.bf16 %v4054, %v4054
        %v5140 = vpack.c.bf16 %v4060, %v4060
        %v5141 = vpack.c.bf16 %v4066, %v4066
        %v5142 = vpack.c.bf16 %v4072, %v4072
        %v5143 = vpack.c.bf16 %v4078, %v4078
        %v5144 = vpack.c.bf16 %v4084, %v4084
        %v5145 = vpack.c.bf16 %v4090, %v4090
        %v5146 = vpack.c.bf16 %v4096, %v4096
        %v5147 = vpack.c.bf16 %v4102, %v4102
        %v5148 = vpack.c.bf16 %v4108, %v4108
        %v5149 = vpack.c.bf16 %v4114, %v4114
        %v5150 = vpack.c.bf16 %v4120, %v4120
        %v5151 = vpack.c.bf16 %v4126, %v4126
        %v5152 = vpack.c.bf16 %v4132, %v4132
        %v5153 = vpack.c.bf16 %v4138, %v4138
        %v5154 = vpack.c.bf16 %v4144, %v4144
        %v5155 = vpack.c.bf16 %v4150, %v4150
        %v5156 = vpack.c.bf16 %v4156, %v4156
        %v5157 = vpack.c.bf16 %v4162, %v4162
        %v5158 = vpack.c.bf16 %v4168, %v4168
        %v5159 = vpack.c.bf16 %v4174, %v4174
        %v5160 = vpack.c.bf16 %v4180, %v4180
        %v5161 = vpack.c.bf16 %v4186, %v4186
        %v5162 = vpack.c.bf16 %v4192, %v4192
        %v5163 = vpack.c.bf16 %v4198, %v4198
        %v5164 = vpack.c.bf16 %v4204, %v4204
        %v5165 = vpack.c.bf16 %v4210, %v4210
        %v5166 = vpack.c.bf16 %v4216, %v4216
        %v5167 = vpack.c.bf16 %v4222, %v4222
        %v5168 = vpack.c.bf16 %v4228, %v4228
        %v5169 = vpack.c.bf16 %v4234, %v4234
        %v5170 = vpack.c.bf16 %v4240, %v4240
        %v5171 = vpack.c.bf16 %v4246, %v4246
        %v5172 = vpack.c.bf16 %v4252, %v4252
        %v5173 = vpack.c.bf16 %v4258, %v4258
        %v5174 = vpack.c.bf16 %v4264, %v4264
        %v5175 = vpack.c.bf16 %v4270, %v4270
        %v5176 = vpack.c.bf16 %v4276, %v4276
        %v5177 = vpack.c.bf16 %v4282, %v4282
        %v5178 = vpack.c.bf16 %v4288, %v4288
        %v5179 = vpack.c.bf16 %v4294, %v4294
        %v5180 = vpack.c.bf16 %v4300, %v4300
        %v5181 = vpack.c.bf16 %v4306, %v4306
        %v5182 = vpack.c.bf16 %v4312, %v4312
        %v5183 = vpack.c.bf16 %v4318, %v4318
        %v5184 = vpack.c.bf16 %v4324, %v4324
        %v5185 = vpack.c.bf16 %v4330, %v4330
        %v5186 = vpack.c.bf16 %v4336, %v4336
        %v5187 = vpack.c.bf16 %v4342, %v4342
        %v5188 = vpack.c.bf16 %v4348, %v4348
        %v5189 = vpack.c.bf16 %v4354, %v4354
        %v5190 = vpack.c.bf16 %v4360, %v4360
        %v5191 = vpack.c.bf16 %v4366, %v4366
        %v5192 = vpack.c.bf16 %v4372, %v4372
        %v5193 = vpack.c.bf16 %v4378, %v4378
        %v5194 = vpack.c.bf16 %v4384, %v4384
        %v5195 = vpack.c.bf16 %v4390, %v4390
        %v5196 = vpack.c.bf16 %v4396, %v4396
        %v5197 = vpack.c.bf16 %v4402, %v4402
        %v5198 = vpack.c.bf16 %v4408, %v4408
        %v5199 = vpack.c.bf16 %v4414, %v4414
        %v5200 = vpack.c.bf16 %v4420, %v4420
        %v5201 = vpack.c.bf16 %v4426, %v4426
        %v5202 = vpack.c.bf16 %v4432, %v4432
        %v5203 = vpack.c.bf16 %v4438, %v4438
        %v5204 = vpack.c.bf16 %v4444, %v4444
        %v5205 = vpack.c.bf16 %v4450, %v4450
        %v5206 = vpack.c.bf16 %v4456, %v4456
        %v5207 = vpack.c.bf16 %v4462, %v4462
        %v5208 = vpack.c.bf16 %v4468, %v4468
        %v5209 = vpack.c.bf16 %v4474, %v4474
        %v5210 = vpack.c.bf16 %v4480, %v4480
        %v5211 = vpack.c.bf16 %v4486, %v4486
        %v5212 = vpack.c.bf16 %v4492, %v4492
        %v5213 = vpack.c.bf16 %v4498, %v4498
        %v5214 = vpack.c.bf16 %v4504, %v4504
        %v5215 = vpack.c.bf16 %v4510, %v4510
        %v5216 = vpack.c.bf16 %v4516, %v4516
        %v5217 = vpack.c.bf16 %v4522, %v4522
        %v5218 = vpack.c.bf16 %v4528, %v4528
        %v5219 = vpack.c.bf16 %v4534, %v4534
        %v5220 = vpack.c.bf16 %v4540, %v4540
        %v5221 = vpack.c.bf16 %v4546, %v4546
        %v5222 = vpack.c.bf16 %v4552, %v4552
        %v5223 = vpack.c.bf16 %v4558, %v4558
        %v5224 = vpack.c.bf16 %v4564, %v4564
        %v5225 = vpack.c.bf16 %v4570, %v4570
        %v5226 = vpack.c.bf16 %v4576, %v4576
        %v5227 = vpack.c.bf16 %v4582, %v4582
        %v5228 = vpack.c.bf16 %v4588, %v4588
        %v5229 = vpack.c.bf16 %v4594, %v4594
        %v5230 = vpack.c.bf16 %v4600, %v4600
        %v5231 = vpack.c.bf16 %v4606, %v4606
        %v5232 = vpack.c.bf16 %v4612, %v4612
        %v5233 = vpack.c.bf16 %v4618, %v4618
        %v5234 = vpack.c.bf16 %v4624, %v4624
        %v5235 = vpack.c.bf16 %v4630, %v4630
        %v5236 = vpack.c.bf16 %v4636, %v4636
        %v5237 = vpack.c.bf16 %v4642, %v4642
        %v5238 = vpack.c.bf16 %v4648, %v4648
        %v5239 = vpack.c.bf16 %v4654, %v4654
        %v5240 = vpack.c.bf16 %v4660, %v4660
        %v5241 = vpack.c.bf16 %v4666, %v4666
        %v5242 = vpack.c.bf16 %v4672, %v4672
        %v5243 = vpack.c.bf16 %v4678, %v4678
        %v5244 = vpack.c.bf16 %v4684, %v4684
        %v5245 = vpack.c.bf16 %v4690, %v4690
        %v5246 = vpack.c.bf16 %v4696, %v4696
        %v5247 = vpack.c.bf16 %v4702, %v4702
        %v5248 = vpack.c.bf16 %v4708, %v4708
        %v5249 = vpack.c.bf16 %v4714, %v4714
        %v5250 = vpack.c.bf16 %v4720, %v4720
        %v5251 = vpack.c.bf16 %v4726, %v4726
        %v5252 = vpack.c.bf16 %v4732, %v4732
        %v5253 = vpack.c.bf16 %v4738, %v4738
        %v5254 = vpack.c.bf16 %v4744, %v4744
        %v5255 = vpack.c.bf16 %v4750, %v4750
        %v5256 = vpack.c.bf16 %v4756, %v4756
        %v5257 = vpack.c.bf16 %v4762, %v4762
        %v5258 = vpack.c.bf16 %v4768, %v4768
        %v5259 = vpack.c.bf16 %v4774, %v4774
        %v5260 = vpack.c.bf16 %v4780, %v4780
        %v5261 = vpack.c.bf16 %v4786, %v4786
        %v5262 = vpack.c.bf16 %v4792, %v4792
        %v5263 = vpack.c.bf16 %v4798, %v4798
        %v5264 = vpack.c.bf16 %v4804, %v4804
        %v5265 = vpack.c.bf16 %v4810, %v4810
        %v5266 = vpack.c.bf16 %v4816, %v4816
        %v5267 = vpack.c.bf16 %v4822, %v4822
        %v5268 = vpack.c.bf16 %v4828, %v4828
        %v5269 = vpack.c.bf16 %v4834, %v4834
        %v5270 = vpack.c.bf16 %v4840, %v4840
        %v5271 = vpack.c.bf16 %v4846, %v4846
        %v5272 = vpack.c.bf16 %v4852, %v4852
        %v5273 = vpack.c.bf16 %v4858, %v4858
        %v5274 = vpack.c.bf16 %v4864, %v4864
        %v5275 = vpack.c.bf16 %v4870, %v4870
        %v5276 = vpack.c.bf16 %v4876, %v4876
        %v5277 = vpack.c.bf16 %v4882, %v4882
        %v5278 = vpack.c.bf16 %v4888, %v4888
        %v5279 = vpack.c.bf16 %v4894, %v4894
        %v5280 = vpack.c.bf16 %v4900, %v4900
        %v5281 = vpack.c.bf16 %v4906, %v4906
        %v5282 = vpack.c.bf16 %v4912, %v4912
        %v5283 = vpack.c.bf16 %v4918, %v4918
        %v5284 = vpack.c.bf16 %v4924, %v4924
        %v5285 = vpack.c.bf16 %v4930, %v4930
        %v5286 = vpack.c.bf16 %v4936, %v4936
        %v5287 = vpack.c.bf16 %v4942, %v4942
        %v5288 = vpack.c.bf16 %v4948, %v4948
        %v5289 = vpack.c.bf16 %v4954, %v4954
        %v5290 = vpack.c.bf16 %v4960, %v4960
        %v5291 = vpack.c.bf16 %v4966, %v4966
        %v5292 = vpack.c.bf16 %v4972, %v4972
        %v5293 = vpack.c.bf16 %v4978, %v4978
        %v5294 = vpack.c.bf16 %v4984, %v4984
        %v5295 = vpack.c.bf16 %v4990, %v4990
        %v5296 = vpack.c.bf16 %v4996, %v4996
        %v5297 = vpack.c.bf16 %v5002, %v5002
        %v5298 = vpack.c.bf16 %v5008, %v5008
        %v5299 = vpack.c.bf16 %v5014, %v5014
        %v5300 = vpack.c.bf16 %v5020, %v5020
        %v5301 = vpack.c.bf16 %v5026, %v5026
        %v5302 = vpack.c.bf16 %v5032, %v5032
        %v5303 = vpack.c.bf16 %v5038, %v5038
        %v5304 = vpack.c.bf16 %v5044, %v5044
        %v5305 = vpack.c.bf16 %v5050, %v5050
        %v5306 = vpack.c.bf16 %v5056, %v5056
        %v5307 = vpack.c.bf16 %v5062, %v5062
        %v5308 = vpack.c.bf16 %v5068, %v5068
        %v5549 = vunpack.c.l.b16 %v5069
        %v5550 = vunpack.c.l.b16 %v5070
        %v5551 = vunpack.c.l.b16 %v5071
        %v5552 = vunpack.c.l.b16 %v5072
        %v5553 = vunpack.c.l.b16 %v5073
        %v5554 = vunpack.c.l.b16 %v5074
        %v5555 = vunpack.c.l.b16 %v5075
        %v5556 = vunpack.c.l.b16 %v5076
        %v5557 = vunpack.c.l.b16 %v5077
        %v5558 = vunpack.c.l.b16 %v5078
        %v5559 = vunpack.c.l.b16 %v5079
        %v5560 = vunpack.c.l.b16 %v5080
        %v5561 = vunpack.c.l.b16 %v5081
        %v5562 = vunpack.c.l.b16 %v5082
        %v5563 = vunpack.c.l.b16 %v5083
        %v5564 = vunpack.c.l.b16 %v5084
        %v5565 = vunpack.c.l.b16 %v5085
        %v5566 = vunpack.c.l.b16 %v5086
        %v5567 = vunpack.c.l.b16 %v5087
        %v5568 = vunpack.c.l.b16 %v5088
        %v5569 = vunpack.c.l.b16 %v5089
        %v5570 = vunpack.c.l.b16 %v5090
        %v5571 = vunpack.c.l.b16 %v5091
        %v5572 = vunpack.c.l.b16 %v5092
        %v5573 = vunpack.c.l.b16 %v5093
        %v5574 = vunpack.c.l.b16 %v5094
        %v5575 = vunpack.c.l.b16 %v5095
        %v5576 = vunpack.c.l.b16 %v5096
        %v5577 = vunpack.c.l.b16 %v5097
        %v5578 = vunpack.c.l.b16 %v5098
        %v5579 = vunpack.c.l.b16 %v5099
        %v5580 = vunpack.c.l.b16 %v5100
        %v5581 = vunpack.c.l.b16 %v5101
        %v5582 = vunpack.c.l.b16 %v5102
        %v5583 = vunpack.c.l.b16 %v5103
        %v5584 = vunpack.c.l.b16 %v5104
        %v5585 = vunpack.c.l.b16 %v5105
        %v5586 = vunpack.c.l.b16 %v5106
        %v5587 = vunpack.c.l.b16 %v5107
        %v5588 = vunpack.c.l.b16 %v5108
        %v5589 = vunpack.c.l.b16 %v5109
        %v5590 = vunpack.c.l.b16 %v5110
        %v5591 = vunpack.c.l.b16 %v5111
        %v5592 = vunpack.c.l.b16 %v5112
        %v5593 = vunpack.c.l.b16 %v5113
        %v5594 = vunpack.c.l.b16 %v5114
        %v5595 = vunpack.c.l.b16 %v5115
        %v5596 = vunpack.c.l.b16 %v5116
        %v5597 = vunpack.c.l.b16 %v5117
        %v5598 = vunpack.c.l.b16 %v5118
        %v5599 = vunpack.c.l.b16 %v5119
        %v5600 = vunpack.c.l.b16 %v5120
        %v5601 = vunpack.c.l.b16 %v5121
        %v5602 = vunpack.c.l.b16 %v5122
        %v5603 = vunpack.c.l.b16 %v5123
        %v5604 = vunpack.c.l.b16 %v5124
        %v5605 = vunpack.c.l.b16 %v5125
        %v5606 = vunpack.c.l.b16 %v5126
        %v5607 = vunpack.c.l.b16 %v5127
        %v5608 = vunpack.c.l.b16 %v5128
        %v5609 = vunpack.c.l.b16 %v5129
        %v5610 = vunpack.c.l.b16 %v5130
        %v5611 = vunpack.c.l.b16 %v5131
        %v5612 = vunpack.c.l.b16 %v5132
        %v5613 = vunpack.c.l.b16 %v5133
        %v5614 = vunpack.c.l.b16 %v5134
        %v5615 = vunpack.c.l.b16 %v5135
        %v5616 = vunpack.c.l.b16 %v5136
        %v5617 = vunpack.c.l.b16 %v5137
        %v5618 = vunpack.c.l.b16 %v5138
        %v5619 = vunpack.c.l.b16 %v5139
        %v5620 = vunpack.c.l.b16 %v5140
        %v5621 = vunpack.c.l.b16 %v5141
        %v5622 = vunpack.c.l.b16 %v5142
        %v5623 = vunpack.c.l.b16 %v5143
        %v5624 = vunpack.c.l.b16 %v5144
        %v5625 = vunpack.c.l.b16 %v5145
        %v5626 = vunpack.c.l.b16 %v5146
        %v5627 = vunpack.c.l.b16 %v5147
        %v5628 = vunpack.c.l.b16 %v5148
        %v5629 = vunpack.c.l.b16 %v5149
        %v5630 = vunpack.c.l.b16 %v5150
        %v5631 = vunpack.c.l.b16 %v5151
        %v5632 = vunpack.c.l.b16 %v5152
        %v5633 = vunpack.c.l.b16 %v5153
        %v5634 = vunpack.c.l.b16 %v5154
        %v5635 = vunpack.c.l.b16 %v5155
        %v5636 = vunpack.c.l.b16 %v5156
        %v5637 = vunpack.c.l.b16 %v5157
        %v5638 = vunpack.c.l.b16 %v5158
        %v5639 = vunpack.c.l.b16 %v5159
        %v5640 = vunpack.c.l.b16 %v5160
        %v5641 = vunpack.c.l.b16 %v5161
        %v5642 = vunpack.c.l.b16 %v5162
        %v5643 = vunpack.c.l.b16 %v5163
        %v5644 = vunpack.c.l.b16 %v5164
        %v5645 = vunpack.c.l.b16 %v5165
        %v5646 = vunpack.c.l.b16 %v5166
        %v5647 = vunpack.c.l.b16 %v5167
        %v5648 = vunpack.c.l.b16 %v5168
        %v5649 = vunpack.c.l.b16 %v5169
        %v5650 = vunpack.c.l.b16 %v5170
        %v5651 = vunpack.c.l.b16 %v5171
        %v5652 = vunpack.c.l.b16 %v5172
        %v5653 = vunpack.c.l.b16 %v5173
        %v5654 = vunpack.c.l.b16 %v5174
        %v5655 = vunpack.c.l.b16 %v5175
        %v5656 = vunpack.c.l.b16 %v5176
        %v5657 = vunpack.c.l.b16 %v5177
        %v5658 = vunpack.c.l.b16 %v5178
        %v5659 = vunpack.c.l.b16 %v5179
        %v5660 = vunpack.c.l.b16 %v5180
        %v5661 = vunpack.c.l.b16 %v5181
        %v5662 = vunpack.c.l.b16 %v5182
        %v5663 = vunpack.c.l.b16 %v5183
        %v5664 = vunpack.c.l.b16 %v5184
        %v5665 = vunpack.c.l.b16 %v5185
        %v5666 = vunpack.c.l.b16 %v5186
        %v5667 = vunpack.c.l.b16 %v5187
        %v5668 = vunpack.c.l.b16 %v5188
        %v5669 = vunpack.c.l.b16 %v5189
        %v5670 = vunpack.c.l.b16 %v5190
        %v5671 = vunpack.c.l.b16 %v5191
        %v5672 = vunpack.c.l.b16 %v5192
        %v5673 = vunpack.c.l.b16 %v5193
        %v5674 = vunpack.c.l.b16 %v5194
        %v5675 = vunpack.c.l.b16 %v5195
        %v5676 = vunpack.c.l.b16 %v5196
        %v5677 = vunpack.c.l.b16 %v5197
        %v5678 = vunpack.c.l.b16 %v5198
        %v5679 = vunpack.c.l.b16 %v5199
        %v5680 = vunpack.c.l.b16 %v5200
        %v5681 = vunpack.c.l.b16 %v5201
        %v5682 = vunpack.c.l.b16 %v5202
        %v5683 = vunpack.c.l.b16 %v5203
        %v5684 = vunpack.c.l.b16 %v5204
        %v5685 = vunpack.c.l.b16 %v5205
        %v5686 = vunpack.c.l.b16 %v5206
        %v5687 = vunpack.c.l.b16 %v5207
        %v5688 = vunpack.c.l.b16 %v5208
        %v5689 = vunpack.c.l.b16 %v5209
        %v5690 = vunpack.c.l.b16 %v5210
        %v5691 = vunpack.c.l.b16 %v5211
        %v5692 = vunpack.c.l.b16 %v5212
        %v5693 = vunpack.c.l.b16 %v5213
        %v5694 = vunpack.c.l.b16 %v5214
        %v5695 = vunpack.c.l.b16 %v5215
        %v5696 = vunpack.c.l.b16 %v5216
        %v5697 = vunpack.c.l.b16 %v5217
        %v5698 = vunpack.c.l.b16 %v5218
        %v5699 = vunpack.c.l.b16 %v5219
        %v5700 = vunpack.c.l.b16 %v5220
        %v5701 = vunpack.c.l.b16 %v5221
        %v5702 = vunpack.c.l.b16 %v5222
        %v5703 = vunpack.c.l.b16 %v5223
        %v5704 = vunpack.c.l.b16 %v5224
        %v5705 = vunpack.c.l.b16 %v5225
        %v5706 = vunpack.c.l.b16 %v5226
        %v5707 = vunpack.c.l.b16 %v5227
        %v5708 = vunpack.c.l.b16 %v5228
        %v5709 = vunpack.c.l.b16 %v5229
        %v5710 = vunpack.c.l.b16 %v5230
        %v5711 = vunpack.c.l.b16 %v5231
        %v5712 = vunpack.c.l.b16 %v5232
        %v5713 = vunpack.c.l.b16 %v5233
        %v5714 = vunpack.c.l.b16 %v5234
        %v5715 = vunpack.c.l.b16 %v5235
        %v5716 = vunpack.c.l.b16 %v5236
        %v5717 = vunpack.c.l.b16 %v5237
        %v5718 = vunpack.c.l.b16 %v5238
        %v5719 = vunpack.c.l.b16 %v5239
        %v5720 = vunpack.c.l.b16 %v5240
        %v5721 = vunpack.c.l.b16 %v5241
        %v5722 = vunpack.c.l.b16 %v5242
        %v5723 = vunpack.c.l.b16 %v5243
        %v5724 = vunpack.c.l.b16 %v5244
        %v5725 = vunpack.c.l.b16 %v5245
        %v5726 = vunpack.c.l.b16 %v5246
        %v5727 = vunpack.c.l.b16 %v5247
        %v5728 = vunpack.c.l.b16 %v5248
        %v5729 = vunpack.c.l.b16 %v5249
        %v5730 = vunpack.c.l.b16 %v5250
        %v5731 = vunpack.c.l.b16 %v5251
        %v5732 = vunpack.c.l.b16 %v5252
        %v5733 = vunpack.c.l.b16 %v5253
        %v5734 = vunpack.c.l.b16 %v5254
        %v5735 = vunpack.c.l.b16 %v5255
        %v5736 = vunpack.c.l.b16 %v5256
        %v5737 = vunpack.c.l.b16 %v5257
        %v5738 = vunpack.c.l.b16 %v5258
        %v5739 = vunpack.c.l.b16 %v5259
        %v5740 = vunpack.c.l.b16 %v5260
        %v5741 = vunpack.c.l.b16 %v5261
        %v5742 = vunpack.c.l.b16 %v5262
        %v5743 = vunpack.c.l.b16 %v5263
        %v5744 = vunpack.c.l.b16 %v5264
        %v5745 = vunpack.c.l.b16 %v5265
        %v5746 = vunpack.c.l.b16 %v5266
        %v5747 = vunpack.c.l.b16 %v5267
        %v5748 = vunpack.c.l.b16 %v5268
        %v5749 = vunpack.c.l.b16 %v5269
        %v5750 = vunpack.c.l.b16 %v5270
        %v5751 = vunpack.c.l.b16 %v5271
        %v5752 = vunpack.c.l.b16 %v5272
        %v5753 = vunpack.c.l.b16 %v5273
        %v5754 = vunpack.c.l.b16 %v5274
        %v5755 = vunpack.c.l.b16 %v5275
        %v5756 = vunpack.c.l.b16 %v5276
        %v5757 = vunpack.c.l.b16 %v5277
        %v5758 = vunpack.c.l.b16 %v5278
        %v5759 = vunpack.c.l.b16 %v5279
        %v5760 = vunpack.c.l.b16 %v5280
        %v5761 = vunpack.c.l.b16 %v5281
        %v5762 = vunpack.c.l.b16 %v5282
        %v5763 = vunpack.c.l.b16 %v5283
        %v5764 = vunpack.c.l.b16 %v5284
        %v5765 = vunpack.c.l.b16 %v5285
        %v5766 = vunpack.c.l.b16 %v5286
        %v5767 = vunpack.c.l.b16 %v5287
        %v5768 = vunpack.c.l.b16 %v5288
        %v5769 = vunpack.c.l.b16 %v5289
        %v5770 = vunpack.c.l.b16 %v5290
        %v5771 = vunpack.c.l.b16 %v5291
        %v5772 = vunpack.c.l.b16 %v5292
        %v5773 = vunpack.c.l.b16 %v5293
        %v5774 = vunpack.c.l.b16 %v5294
        %v5775 = vunpack.c.l.b16 %v5295
        %v5776 = vunpack.c.l.b16 %v5296
        %v5777 = vunpack.c.l.b16 %v5297
        %v5778 = vunpack.c.l.b16 %v5298
        %v5779 = vunpack.c.l.b16 %v5299
        %v5780 = vunpack.c.l.b16 %v5300
        %v5781 = vunpack.c.l.b16 %v5301
        %v5782 = vunpack.c.l.b16 %v5302
        %v5783 = vunpack.c.l.b16 %v5303
        %v5784 = vunpack.c.l.b16 %v5304
        %v5785 = vunpack.c.l.b16 %v5305
        %v5786 = vunpack.c.l.b16 %v5306
        %v5787 = vunpack.c.l.b16 %v5307
        %v5788 = vunpack.c.l.b16 %v5308
        %v5789 = vsel %vm3127, %v5564, %v5549
        %v5790 = vsel %vm3129, %v5579, %v5789
        %v5791 = vsel %vm3131, %v5594, %v5790
        %v5792 = vsel %vm3133, %v5609, %v5791
        %v5793 = vsel %vm3135, %v5624, %v5792
        %v5794 = vsel %vm3137, %v5639, %v5793
        %v5795 = vsel %vm3139, %v5654, %v5794
        %v5796 = vsel %vm3127, %v5565, %v5550
        %v5797 = vsel %vm3129, %v5580, %v5796
        %v5798 = vsel %vm3131, %v5595, %v5797
        %v5799 = vsel %vm3133, %v5610, %v5798
        %v5800 = vsel %vm3135, %v5625, %v5799
        %v5801 = vsel %vm3137, %v5640, %v5800
        %v5802 = vsel %vm3139, %v5655, %v5801
        %v5803 = vsel %vm3127, %v5566, %v5551
        %v5804 = vsel %vm3129, %v5581, %v5803
        %v5805 = vsel %vm3131, %v5596, %v5804
        %v5806 = vsel %vm3133, %v5611, %v5805
        %v5807 = vsel %vm3135, %v5626, %v5806
        %v5808 = vsel %vm3137, %v5641, %v5807
        %v5809 = vsel %vm3139, %v5656, %v5808
        %v5810 = vsel %vm3127, %v5567, %v5552
        %v5811 = vsel %vm3129, %v5582, %v5810
        %v5812 = vsel %vm3131, %v5597, %v5811
        %v5813 = vsel %vm3133, %v5612, %v5812
        %v5814 = vsel %vm3135, %v5627, %v5813
        %v5815 = vsel %vm3137, %v5642, %v5814
        %v5816 = vsel %vm3139, %v5657, %v5815
        %v5817 = vsel %vm3127, %v5568, %v5553
        %v5818 = vsel %vm3129, %v5583, %v5817
        %v5819 = vsel %vm3131, %v5598, %v5818
        %v5820 = vsel %vm3133, %v5613, %v5819
        %v5821 = vsel %vm3135, %v5628, %v5820
        %v5822 = vsel %vm3137, %v5643, %v5821
        %v5823 = vsel %vm3139, %v5658, %v5822
        %v5824 = vsel %vm3127, %v5569, %v5554
        %v5825 = vsel %vm3129, %v5584, %v5824
        %v5826 = vsel %vm3131, %v5599, %v5825
        %v5827 = vsel %vm3133, %v5614, %v5826
        %v5828 = vsel %vm3135, %v5629, %v5827
        %v5829 = vsel %vm3137, %v5644, %v5828
        %v5830 = vsel %vm3139, %v5659, %v5829
        %v5831 = vsel %vm3127, %v5570, %v5555
        %v5832 = vsel %vm3129, %v5585, %v5831
        %v5833 = vsel %vm3131, %v5600, %v5832
        %v5834 = vsel %vm3133, %v5615, %v5833
        %v5835 = vsel %vm3135, %v5630, %v5834
        %v5836 = vsel %vm3137, %v5645, %v5835
        %v5837 = vsel %vm3139, %v5660, %v5836
        %v5838 = vsel %vm3127, %v5571, %v5556
        %v5839 = vsel %vm3129, %v5586, %v5838
        %v5840 = vsel %vm3131, %v5601, %v5839
        %v5841 = vsel %vm3133, %v5616, %v5840
        %v5842 = vsel %vm3135, %v5631, %v5841
        %v5843 = vsel %vm3137, %v5646, %v5842
        %v5844 = vsel %vm3139, %v5661, %v5843
        %v5845 = vsel %vm3127, %v5572, %v5557
        %v5846 = vsel %vm3129, %v5587, %v5845
        %v5847 = vsel %vm3131, %v5602, %v5846
        %v5848 = vsel %vm3133, %v5617, %v5847
        %v5849 = vsel %vm3135, %v5632, %v5848
        %v5850 = vsel %vm3137, %v5647, %v5849
        %v5851 = vsel %vm3139, %v5662, %v5850
        %v5852 = vsel %vm3127, %v5573, %v5558
        %v5853 = vsel %vm3129, %v5588, %v5852
        %v5854 = vsel %vm3131, %v5603, %v5853
        %v5855 = vsel %vm3133, %v5618, %v5854
        %v5856 = vsel %vm3135, %v5633, %v5855
        %v5857 = vsel %vm3137, %v5648, %v5856
        %v5858 = vsel %vm3139, %v5663, %v5857
        %v5859 = vsel %vm3127, %v5574, %v5559
        %v5860 = vsel %vm3129, %v5589, %v5859
        %v5861 = vsel %vm3131, %v5604, %v5860
        %v5862 = vsel %vm3133, %v5619, %v5861
        %v5863 = vsel %vm3135, %v5634, %v5862
        %v5864 = vsel %vm3137, %v5649, %v5863
        %v5865 = vsel %vm3139, %v5664, %v5864
        %v5866 = vsel %vm3127, %v5575, %v5560
        %v5867 = vsel %vm3129, %v5590, %v5866
        %v5868 = vsel %vm3131, %v5605, %v5867
        %v5869 = vsel %vm3133, %v5620, %v5868
        %v5870 = vsel %vm3135, %v5635, %v5869
        %v5871 = vsel %vm3137, %v5650, %v5870
        %v5872 = vsel %vm3139, %v5665, %v5871
        %v5873 = vsel %vm3127, %v5576, %v5561
        %v5874 = vsel %vm3129, %v5591, %v5873
        %v5875 = vsel %vm3131, %v5606, %v5874
        %v5876 = vsel %vm3133, %v5621, %v5875
        %v5877 = vsel %vm3135, %v5636, %v5876
        %v5878 = vsel %vm3137, %v5651, %v5877
        %v5879 = vsel %vm3139, %v5666, %v5878
        %v5880 = vsel %vm3127, %v5577, %v5562
        %v5881 = vsel %vm3129, %v5592, %v5880
        %v5882 = vsel %vm3131, %v5607, %v5881
        %v5883 = vsel %vm3133, %v5622, %v5882
        %v5884 = vsel %vm3135, %v5637, %v5883
        %v5885 = vsel %vm3137, %v5652, %v5884
        %v5886 = vsel %vm3139, %v5667, %v5885
        %v5887 = vsel %vm3127, %v5578, %v5563
        %v5888 = vsel %vm3129, %v5593, %v5887
        %v5889 = vsel %vm3131, %v5608, %v5888
        %v5890 = vsel %vm3133, %v5623, %v5889
        %v5891 = vsel %vm3135, %v5638, %v5890
        %v5892 = vsel %vm3137, %v5653, %v5891
        %v5893 = vsel %vm3139, %v5668, %v5892
        %v5894 = vsel %vm3127, %v5684, %v5669
        %v5895 = vsel %vm3129, %v5699, %v5894
        %v5896 = vsel %vm3131, %v5714, %v5895
        %v5897 = vsel %vm3133, %v5729, %v5896
        %v5898 = vsel %vm3135, %v5744, %v5897
        %v5899 = vsel %vm3137, %v5759, %v5898
        %v5900 = vsel %vm3139, %v5774, %v5899
        %v5901 = vsel %vm3127, %v5685, %v5670
        %v5902 = vsel %vm3129, %v5700, %v5901
        %v5903 = vsel %vm3131, %v5715, %v5902
        %v5904 = vsel %vm3133, %v5730, %v5903
        %v5905 = vsel %vm3135, %v5745, %v5904
        %v5906 = vsel %vm3137, %v5760, %v5905
        %v5907 = vsel %vm3139, %v5775, %v5906
        %v5908 = vsel %vm3127, %v5686, %v5671
        %v5909 = vsel %vm3129, %v5701, %v5908
        %v5910 = vsel %vm3131, %v5716, %v5909
        %v5911 = vsel %vm3133, %v5731, %v5910
        %v5912 = vsel %vm3135, %v5746, %v5911
        %v5913 = vsel %vm3137, %v5761, %v5912
        %v5914 = vsel %vm3139, %v5776, %v5913
        %v5915 = vsel %vm3127, %v5687, %v5672
        %v5916 = vsel %vm3129, %v5702, %v5915
        %v5917 = vsel %vm3131, %v5717, %v5916
        %v5918 = vsel %vm3133, %v5732, %v5917
        %v5919 = vsel %vm3135, %v5747, %v5918
        %v5920 = vsel %vm3137, %v5762, %v5919
        %v5921 = vsel %vm3139, %v5777, %v5920
        %v5922 = vsel %vm3127, %v5688, %v5673
        %v5923 = vsel %vm3129, %v5703, %v5922
        %v5924 = vsel %vm3131, %v5718, %v5923
        %v5925 = vsel %vm3133, %v5733, %v5924
        %v5926 = vsel %vm3135, %v5748, %v5925
        %v5927 = vsel %vm3137, %v5763, %v5926
        %v5928 = vsel %vm3139, %v5778, %v5927
        %v5929 = vsel %vm3127, %v5689, %v5674
        %v5930 = vsel %vm3129, %v5704, %v5929
        %v5931 = vsel %vm3131, %v5719, %v5930
        %v5932 = vsel %vm3133, %v5734, %v5931
        %v5933 = vsel %vm3135, %v5749, %v5932
        %v5934 = vsel %vm3137, %v5764, %v5933
        %v5935 = vsel %vm3139, %v5779, %v5934
        %v5936 = vsel %vm3127, %v5690, %v5675
        %v5937 = vsel %vm3129, %v5705, %v5936
        %v5938 = vsel %vm3131, %v5720, %v5937
        %v5939 = vsel %vm3133, %v5735, %v5938
        %v5940 = vsel %vm3135, %v5750, %v5939
        %v5941 = vsel %vm3137, %v5765, %v5940
        %v5942 = vsel %vm3139, %v5780, %v5941
        %v5943 = vsel %vm3127, %v5691, %v5676
        %v5944 = vsel %vm3129, %v5706, %v5943
        %v5945 = vsel %vm3131, %v5721, %v5944
        %v5946 = vsel %vm3133, %v5736, %v5945
        %v5947 = vsel %vm3135, %v5751, %v5946
        %v5948 = vsel %vm3137, %v5766, %v5947
        %v5949 = vsel %vm3139, %v5781, %v5948
        %v5950 = vsel %vm3127, %v5692, %v5677
        %v5951 = vsel %vm3129, %v5707, %v5950
        %v5952 = vsel %vm3131, %v5722, %v5951
        %v5953 = vsel %vm3133, %v5737, %v5952
        %v5954 = vsel %vm3135, %v5752, %v5953
        %v5955 = vsel %vm3137, %v5767, %v5954
        %v5956 = vsel %vm3139, %v5782, %v5955
        %v5957 = vsel %vm3127, %v5693, %v5678
        %v5958 = vsel %vm3129, %v5708, %v5957
        %v5959 = vsel %vm3131, %v5723, %v5958
        %v5960 = vsel %vm3133, %v5738, %v5959
        %v5961 = vsel %vm3135, %v5753, %v5960
        %v5962 = vsel %vm3137, %v5768, %v5961
        %v5963 = vsel %vm3139, %v5783, %v5962
        %v5964 = vsel %vm3127, %v5694, %v5679
        %v5965 = vsel %vm3129, %v5709, %v5964
        %v5966 = vsel %vm3131, %v5724, %v5965
        %v5967 = vsel %vm3133, %v5739, %v5966
        %v5968 = vsel %vm3135, %v5754, %v5967
        %v5969 = vsel %vm3137, %v5769, %v5968
        %v5970 = vsel %vm3139, %v5784, %v5969
        %v5971 = vsel %vm3127, %v5695, %v5680
        %v5972 = vsel %vm3129, %v5710, %v5971
        %v5973 = vsel %vm3131, %v5725, %v5972
        %v5974 = vsel %vm3133, %v5740, %v5973
        %v5975 = vsel %vm3135, %v5755, %v5974
        %v5976 = vsel %vm3137, %v5770, %v5975
        %v5977 = vsel %vm3139, %v5785, %v5976
        %v5978 = vsel %vm3127, %v5696, %v5681
        %v5979 = vsel %vm3129, %v5711, %v5978
        %v5980 = vsel %vm3131, %v5726, %v5979
        %v5981 = vsel %vm3133, %v5741, %v5980
        %v5982 = vsel %vm3135, %v5756, %v5981
        %v5983 = vsel %vm3137, %v5771, %v5982
        %v5984 = vsel %vm3139, %v5786, %v5983
        %v5985 = vsel %vm3127, %v5697, %v5682
        %v5986 = vsel %vm3129, %v5712, %v5985
        %v5987 = vsel %vm3131, %v5727, %v5986
        %v5988 = vsel %vm3133, %v5742, %v5987
        %v5989 = vsel %vm3135, %v5757, %v5988
        %v5990 = vsel %vm3137, %v5772, %v5989
        %v5991 = vsel %vm3139, %v5787, %v5990
        %v5992 = vsel %vm3127, %v5698, %v5683
        %v5993 = vsel %vm3129, %v5713, %v5992
        %v5994 = vsel %vm3131, %v5728, %v5993
        %v5995 = vsel %vm3133, %v5743, %v5994
        %v5996 = vsel %vm3135, %v5758, %v5995
        %v5997 = vsel %vm3137, %v5773, %v5996
        %v5998 = vsel %vm3139, %v5788, %v5997
        %v5999 = vpack.c.b16 %v5900, %v5795
        %v6000 = vpack.c.b16 %v5907, %v5802
        %v6001 = vpack.c.b16 %v5914, %v5809
        %v6002 = vpack.c.b16 %v5921, %v5816
        %v6003 = vpack.c.b16 %v5928, %v5823
        %v6004 = vpack.c.b16 %v5935, %v5830
        %v6005 = vpack.c.b16 %v5942, %v5837
        %v6006 = vpack.c.b16 %v5949, %v5844
        %v6007 = vpack.c.b16 %v5956, %v5851
        %v6008 = vpack.c.b16 %v5963, %v5858
        %v6009 = vpack.c.b16 %v5970, %v5865
        %v6010 = vpack.c.b16 %v5977, %v5872
        %v6011 = vpack.c.b16 %v5984, %v5879
        %v6012 = vpack.c.b16 %v5991, %v5886
        %v6013 = vpack.c.b16 %v5998, %v5893
        %6029 = vst [vmem:[#allocation2 + $0x78] sm:$0xff] %v5999
        %6030 = vst [vmem:[#allocation2 + $0x80] sm:$0xff] %v6000
        %6031 = vst [vmem:[#allocation2 + $0x88] sm:$0xff] %v6001
        %6032 = vst [vmem:[#allocation2 + $0x90] sm:$0xff] %v6002
        %6033 = vst [vmem:[#allocation2 + $0x98] sm:$0xff] %v6003
        %6034 = vst [vmem:[#allocation2 + $0xa0] sm:$0xff] %v6004
        %6035 = vst [vmem:[#allocation2 + $0xa8] sm:$0xff] %v6005
        %6036 = vst [vmem:[#allocation2 + $0xb0] sm:$0xff] %v6006
        %6037 = vst [vmem:[#allocation2 + $0xb8] sm:$0xff] %v6007
        %6038 = vst [vmem:[#allocation2 + $0xc0] sm:$0xff] %v6008
        %6039 = vst [vmem:[#allocation2 + $0xc8] sm:$0xff] %v6009
        %6040 = vst [vmem:[#allocation2 + $0xd0] sm:$0xff] %v6010
        %6041 = vst [vmem:[#allocation2 + $0xd8] sm:$0xff] %v6011
        %6042 = vst [vmem:[#allocation2 + $0xe0] sm:$0xff] %v6012
        %6043 = vst [vmem:[#allocation2 + $0xe8] sm:$0xff] %v6013
        %v6044 = vmul.f32 %v395, %v697
        %v6045 = vmul.f32 %v396, %v698
        %v6046 = vmul.f32 %v397, %v699
        %v6047 = vmul.f32 %v398, %v700
        %v6048 = vmul.f32 %v399, %v701
        %v6049 = vmul.f32 %v400, %v702
        %v6050 = vmul.f32 %v401, %v703
        %v6051 = vmul.f32 %v402, %v704
        %v6052 = vmul.f32 %v403, %v705
        %v6053 = vmul.f32 %v404, %v706
        %v6054 = vmul.f32 %v405, %v707
        %v6055 = vmul.f32 %v406, %v708
        %v6056 = vmul.f32 %v407, %v709
        %v6057 = vmul.f32 %v408, %v710
        %v6058 = vmul.f32 %v409, %v711
        %v6059 = vmul.f32 %v410, %v697
        %v6060 = vmul.f32 %v411, %v698
        %v6061 = vmul.f32 %v412, %v699
        %v6062 = vmul.f32 %v413, %v700
        %v6063 = vmul.f32 %v414, %v701
        %v6064 = vmul.f32 %v415, %v702
        %v6065 = vmul.f32 %v416, %v703
        %v6066 = vmul.f32 %v417, %v704
        %v6067 = vmul.f32 %v418, %v705
        %v6068 = vmul.f32 %v419, %v706
        %v6069 = vmul.f32 %v420, %v707
        %v6070 = vmul.f32 %v421, %v708
        %v6071 = vmul.f32 %v422, %v709
        %v6072 = vmul.f32 %v423, %v710
        %v6073 = vmul.f32 %v424, %v711
        %v6074 = vmul.f32 %v425, %v697
        %v6075 = vmul.f32 %v426, %v698
        %v6076 = vmul.f32 %v427, %v699
        %v6077 = vmul.f32 %v428, %v700
        %v6078 = vmul.f32 %v429, %v701
        %v6079 = vmul.f32 %v430, %v702
        %v6080 = vmul.f32 %v431, %v703
        %v6081 = vmul.f32 %v432, %v704
        %v6082 = vmul.f32 %v433, %v705
        %v6083 = vmul.f32 %v434, %v706
        %v6084 = vmul.f32 %v435, %v707
        %v6085 = vmul.f32 %v436, %v708
        %v6086 = vmul.f32 %v437, %v709
        %v6087 = vmul.f32 %v438, %v710
        %v6088 = vmul.f32 %v439, %v711
        %v6089 = vmul.f32 %v440, %v697
        %v6090 = vmul.f32 %v441, %v698
        %v6091 = vmul.f32 %v442, %v699
        %v6092 = vmul.f32 %v443, %v700
        %v6093 = vmul.f32 %v444, %v701
        %v6094 = vmul.f32 %v445, %v702
        %v6095 = vmul.f32 %v446, %v703
        %v6096 = vmul.f32 %v447, %v704
        %v6097 = vmul.f32 %v448, %v705
        %v6098 = vmul.f32 %v449, %v706
        %v6099 = vmul.f32 %v450, %v707
        %v6100 = vmul.f32 %v451, %v708
        %v6101 = vmul.f32 %v452, %v709
        %v6102 = vmul.f32 %v453, %v710
        %v6103 = vmul.f32 %v454, %v711
        %v6104 = vmul.f32 %v455, %v697
        %v6105 = vmul.f32 %v456, %v698
        %v6106 = vmul.f32 %v457, %v699
        %v6107 = vmul.f32 %v458, %v700
        %v6108 = vmul.f32 %v459, %v701
        %v6109 = vmul.f32 %v460, %v702
        %v6110 = vmul.f32 %v461, %v703
        %v6111 = vmul.f32 %v462, %v704
        %v6112 = vmul.f32 %v463, %v705
        %v6113 = vmul.f32 %v464, %v706
        %v6114 = vmul.f32 %v465, %v707
        %v6115 = vmul.f32 %v466, %v708
        %v6116 = vmul.f32 %v467, %v709
        %v6117 = vmul.f32 %v468, %v710
        %v6118 = vmul.f32 %v469, %v711
        %v6119 = vmul.f32 %v470, %v697
        %v6120 = vmul.f32 %v471, %v698
        %v6121 = vmul.f32 %v472, %v699
        %v6122 = vmul.f32 %v473, %v700
        %v6123 = vmul.f32 %v474, %v701
        %v6124 = vmul.f32 %v475, %v702
        %v6125 = vmul.f32 %v476, %v703
        %v6126 = vmul.f32 %v477, %v704
        %v6127 = vmul.f32 %v478, %v705
        %v6128 = vmul.f32 %v479, %v706
        %v6129 = vmul.f32 %v480, %v707
        %v6130 = vmul.f32 %v481, %v708
        %v6131 = vmul.f32 %v482, %v709
        %v6132 = vmul.f32 %v483, %v710
        %v6133 = vmul.f32 %v484, %v711
        %v6134 = vmul.f32 %v485, %v697
        %v6135 = vmul.f32 %v486, %v698
        %v6136 = vmul.f32 %v487, %v699
        %v6137 = vmul.f32 %v488, %v700
        %v6138 = vmul.f32 %v489, %v701
        %v6139 = vmul.f32 %v490, %v702
        %v6140 = vmul.f32 %v491, %v703
        %v6141 = vmul.f32 %v492, %v704
        %v6142 = vmul.f32 %v493, %v705
        %v6143 = vmul.f32 %v494, %v706
        %v6144 = vmul.f32 %v495, %v707
        %v6145 = vmul.f32 %v496, %v708
        %v6146 = vmul.f32 %v497, %v709
        %v6147 = vmul.f32 %v498, %v710
        %v6148 = vmul.f32 %v499, %v711
        %v6149 = vmul.f32 %v500, %v697
        %v6150 = vmul.f32 %v501, %v698
        %v6151 = vmul.f32 %v502, %v699
        %v6152 = vmul.f32 %v503, %v700
        %v6153 = vmul.f32 %v504, %v701
        %v6154 = vmul.f32 %v505, %v702
        %v6155 = vmul.f32 %v506, %v703
        %v6156 = vmul.f32 %v507, %v704
        %v6157 = vmul.f32 %v508, %v705
        %v6158 = vmul.f32 %v509, %v706
        %v6159 = vmul.f32 %v510, %v707
        %v6160 = vmul.f32 %v511, %v708
        %v6161 = vmul.f32 %v512, %v709
        %v6162 = vmul.f32 %v513, %v710
        %v6163 = vmul.f32 %v514, %v711
        %v6164 = vmul.f32 %v515, %v697
        %v6165 = vmul.f32 %v516, %v698
        %v6166 = vmul.f32 %v517, %v699
        %v6167 = vmul.f32 %v518, %v700
        %v6168 = vmul.f32 %v519, %v701
        %v6169 = vmul.f32 %v520, %v702
        %v6170 = vmul.f32 %v521, %v703
        %v6171 = vmul.f32 %v522, %v704
        %v6172 = vmul.f32 %v523, %v705
        %v6173 = vmul.f32 %v524, %v706
        %v6174 = vmul.f32 %v525, %v707
        %v6175 = vmul.f32 %v526, %v708
        %v6176 = vmul.f32 %v527, %v709
        %v6177 = vmul.f32 %v528, %v710
        %v6178 = vmul.f32 %v529, %v711
        %v6179 = vmul.f32 %v530, %v697
        %v6180 = vmul.f32 %v531, %v698
        %v6181 = vmul.f32 %v532, %v699
        %v6182 = vmul.f32 %v533, %v700
        %v6183 = vmul.f32 %v534, %v701
        %v6184 = vmul.f32 %v535, %v702
        %v6185 = vmul.f32 %v536, %v703
        %v6186 = vmul.f32 %v537, %v704
        %v6187 = vmul.f32 %v538, %v705
        %v6188 = vmul.f32 %v539, %v706
        %v6189 = vmul.f32 %v540, %v707
        %v6190 = vmul.f32 %v541, %v708
        %v6191 = vmul.f32 %v542, %v709
        %v6192 = vmul.f32 %v543, %v710
        %v6193 = vmul.f32 %v544, %v711
        %v6194 = vmul.f32 %v545, %v697
        %v6195 = vmul.f32 %v546, %v698
        %v6196 = vmul.f32 %v547, %v699
        %v6197 = vmul.f32 %v548, %v700
        %v6198 = vmul.f32 %v549, %v701
        %v6199 = vmul.f32 %v550, %v702
        %v6200 = vmul.f32 %v551, %v703
        %v6201 = vmul.f32 %v552, %v704
        %v6202 = vmul.f32 %v553, %v705
        %v6203 = vmul.f32 %v554, %v706
        %v6204 = vmul.f32 %v555, %v707
        %v6205 = vmul.f32 %v556, %v708
        %v6206 = vmul.f32 %v557, %v709
        %v6207 = vmul.f32 %v558, %v710
        %v6208 = vmul.f32 %v559, %v711
        %v6209 = vmul.f32 %v560, %v697
        %v6210 = vmul.f32 %v561, %v698
        %v6211 = vmul.f32 %v562, %v699
        %v6212 = vmul.f32 %v563, %v700
        %v6213 = vmul.f32 %v564, %v701
        %v6214 = vmul.f32 %v565, %v702
        %v6215 = vmul.f32 %v566, %v703
        %v6216 = vmul.f32 %v567, %v704
        %v6217 = vmul.f32 %v568, %v705
        %v6218 = vmul.f32 %v569, %v706
        %v6219 = vmul.f32 %v570, %v707
        %v6220 = vmul.f32 %v571, %v708
        %v6221 = vmul.f32 %v572, %v709
        %v6222 = vmul.f32 %v573, %v710
        %v6223 = vmul.f32 %v574, %v711
        %v6224 = vmul.f32 %v575, %v697
        %v6225 = vmul.f32 %v576, %v698
        %v6226 = vmul.f32 %v577, %v699
        %v6227 = vmul.f32 %v578, %v700
        %v6228 = vmul.f32 %v579, %v701
        %v6229 = vmul.f32 %v580, %v702
        %v6230 = vmul.f32 %v581, %v703
        %v6231 = vmul.f32 %v582, %v704
        %v6232 = vmul.f32 %v583, %v705
        %v6233 = vmul.f32 %v584, %v706
        %v6234 = vmul.f32 %v585, %v707
        %v6235 = vmul.f32 %v586, %v708
        %v6236 = vmul.f32 %v587, %v709
        %v6237 = vmul.f32 %v588, %v710
        %v6238 = vmul.f32 %v589, %v711
        %v6239 = vmul.f32 %v590, %v697
        %v6240 = vmul.f32 %v591, %v698
        %v6241 = vmul.f32 %v592, %v699
        %v6242 = vmul.f32 %v593, %v700
        %v6243 = vmul.f32 %v594, %v701
        %v6244 = vmul.f32 %v595, %v702
        %v6245 = vmul.f32 %v596, %v703
        %v6246 = vmul.f32 %v597, %v704
        %v6247 = vmul.f32 %v598, %v705
        %v6248 = vmul.f32 %v599, %v706
        %v6249 = vmul.f32 %v600, %v707
        %v6250 = vmul.f32 %v601, %v708
        %v6251 = vmul.f32 %v602, %v709
        %v6252 = vmul.f32 %v603, %v710
        %v6253 = vmul.f32 %v604, %v711
        %v6254 = vmul.f32 %v605, %v697
        %v6255 = vmul.f32 %v606, %v698
        %v6256 = vmul.f32 %v607, %v699
        %v6257 = vmul.f32 %v608, %v700
        %v6258 = vmul.f32 %v609, %v701
        %v6259 = vmul.f32 %v610, %v702
        %v6260 = vmul.f32 %v611, %v703
        %v6261 = vmul.f32 %v612, %v704
        %v6262 = vmul.f32 %v613, %v705
        %v6263 = vmul.f32 %v614, %v706
        %v6264 = vmul.f32 %v615, %v707
        %v6265 = vmul.f32 %v616, %v708
        %v6266 = vmul.f32 %v617, %v709
        %v6267 = vmul.f32 %v618, %v710
        %v6268 = vmul.f32 %v619, %v711
        %v6269 = vmul.f32 %v620, %v697
        %v6270 = vmul.f32 %v621, %v698
        %v6271 = vmul.f32 %v622, %v699
        %v6272 = vmul.f32 %v623, %v700
        %v6273 = vmul.f32 %v624, %v701
        %v6274 = vmul.f32 %v625, %v702
        %v6275 = vmul.f32 %v626, %v703
        %v6276 = vmul.f32 %v627, %v704
        %v6277 = vmul.f32 %v628, %v705
        %v6278 = vmul.f32 %v629, %v706
        %v6279 = vmul.f32 %v630, %v707
        %v6280 = vmul.f32 %v631, %v708
        %v6281 = vmul.f32 %v632, %v709
        %v6282 = vmul.f32 %v633, %v710
        %v6283 = vmul.f32 %v634, %v711
        %v6284 = vrot.slane %v6044, 4
        %v6285 = vadd.f32 %v6044, %v6284
        %v6286 = vrot.slane %v6285, 2
        %v6287 = vadd.f32 %v6285, %v6286
        %v6288 = vrot.slane %v6287, 1
        %v6289 = vadd.f32 %v6287, %v6288
        %v6290 = vrot.slane %v6045, 4
        %v6291 = vadd.f32 %v6045, %v6290
        %v6292 = vrot.slane %v6291, 2
        %v6293 = vadd.f32 %v6291, %v6292
        %v6294 = vrot.slane %v6293, 1
        %v6295 = vadd.f32 %v6293, %v6294
        %v6296 = vrot.slane %v6046, 4
        %v6297 = vadd.f32 %v6046, %v6296
        %v6298 = vrot.slane %v6297, 2
        %v6299 = vadd.f32 %v6297, %v6298
        %v6300 = vrot.slane %v6299, 1
        %v6301 = vadd.f32 %v6299, %v6300
        %v6302 = vrot.slane %v6047, 4
        %v6303 = vadd.f32 %v6047, %v6302
        %v6304 = vrot.slane %v6303, 2
        %v6305 = vadd.f32 %v6303, %v6304
        %v6306 = vrot.slane %v6305, 1
        %v6307 = vadd.f32 %v6305, %v6306
        %v6308 = vrot.slane %v6048, 4
        %v6309 = vadd.f32 %v6048, %v6308
        %v6310 = vrot.slane %v6309, 2
        %v6311 = vadd.f32 %v6309, %v6310
        %v6312 = vrot.slane %v6311, 1
        %v6313 = vadd.f32 %v6311, %v6312
        %v6314 = vrot.slane %v6049, 4
        %v6315 = vadd.f32 %v6049, %v6314
        %v6316 = vrot.slane %v6315, 2
        %v6317 = vadd.f32 %v6315, %v6316
        %v6318 = vrot.slane %v6317, 1
        %v6319 = vadd.f32 %v6317, %v6318
        %v6320 = vrot.slane %v6050, 4
        %v6321 = vadd.f32 %v6050, %v6320
        %v6322 = vrot.slane %v6321, 2
        %v6323 = vadd.f32 %v6321, %v6322
        %v6324 = vrot.slane %v6323, 1
        %v6325 = vadd.f32 %v6323, %v6324
        %v6326 = vrot.slane %v6051, 4
        %v6327 = vadd.f32 %v6051, %v6326
        %v6328 = vrot.slane %v6327, 2
        %v6329 = vadd.f32 %v6327, %v6328
        %v6330 = vrot.slane %v6329, 1
        %v6331 = vadd.f32 %v6329, %v6330
        %v6332 = vrot.slane %v6052, 4
        %v6333 = vadd.f32 %v6052, %v6332
        %v6334 = vrot.slane %v6333, 2
        %v6335 = vadd.f32 %v6333, %v6334
        %v6336 = vrot.slane %v6335, 1
        %v6337 = vadd.f32 %v6335, %v6336
        %v6338 = vrot.slane %v6053, 4
        %v6339 = vadd.f32 %v6053, %v6338
        %v6340 = vrot.slane %v6339, 2
        %v6341 = vadd.f32 %v6339, %v6340
        %v6342 = vrot.slane %v6341, 1
        %v6343 = vadd.f32 %v6341, %v6342
        %v6344 = vrot.slane %v6054, 4
        %v6345 = vadd.f32 %v6054, %v6344
        %v6346 = vrot.slane %v6345, 2
        %v6347 = vadd.f32 %v6345, %v6346
        %v6348 = vrot.slane %v6347, 1
        %v6349 = vadd.f32 %v6347, %v6348
        %v6350 = vrot.slane %v6055, 4
        %v6351 = vadd.f32 %v6055, %v6350
        %v6352 = vrot.slane %v6351, 2
        %v6353 = vadd.f32 %v6351, %v6352
        %v6354 = vrot.slane %v6353, 1
        %v6355 = vadd.f32 %v6353, %v6354
        %v6356 = vrot.slane %v6056, 4
        %v6357 = vadd.f32 %v6056, %v6356
        %v6358 = vrot.slane %v6357, 2
        %v6359 = vadd.f32 %v6357, %v6358
        %v6360 = vrot.slane %v6359, 1
        %v6361 = vadd.f32 %v6359, %v6360
        %v6362 = vrot.slane %v6057, 4
        %v6363 = vadd.f32 %v6057, %v6362
        %v6364 = vrot.slane %v6363, 2
        %v6365 = vadd.f32 %v6363, %v6364
        %v6366 = vrot.slane %v6365, 1
        %v6367 = vadd.f32 %v6365, %v6366
        %v6368 = vrot.slane %v6058, 4
        %v6369 = vadd.f32 %v6058, %v6368
        %v6370 = vrot.slane %v6369, 2
        %v6371 = vadd.f32 %v6369, %v6370
        %v6372 = vrot.slane %v6371, 1
        %v6373 = vadd.f32 %v6371, %v6372
        %v6374 = vrot.slane %v6059, 4
        %v6375 = vadd.f32 %v6059, %v6374
        %v6376 = vrot.slane %v6375, 2
        %v6377 = vadd.f32 %v6375, %v6376
        %v6378 = vrot.slane %v6377, 1
        %v6379 = vadd.f32 %v6377, %v6378
        %v6380 = vrot.slane %v6060, 4
        %v6381 = vadd.f32 %v6060, %v6380
        %v6382 = vrot.slane %v6381, 2
        %v6383 = vadd.f32 %v6381, %v6382
        %v6384 = vrot.slane %v6383, 1
        %v6385 = vadd.f32 %v6383, %v6384
        %v6386 = vrot.slane %v6061, 4
        %v6387 = vadd.f32 %v6061, %v6386
        %v6388 = vrot.slane %v6387, 2
        %v6389 = vadd.f32 %v6387, %v6388
        %v6390 = vrot.slane %v6389, 1
        %v6391 = vadd.f32 %v6389, %v6390
        %v6392 = vrot.slane %v6062, 4
        %v6393 = vadd.f32 %v6062, %v6392
        %v6394 = vrot.slane %v6393, 2
        %v6395 = vadd.f32 %v6393, %v6394
        %v6396 = vrot.slane %v6395, 1
        %v6397 = vadd.f32 %v6395, %v6396
        %v6398 = vrot.slane %v6063, 4
        %v6399 = vadd.f32 %v6063, %v6398
        %v6400 = vrot.slane %v6399, 2
        %v6401 = vadd.f32 %v6399, %v6400
        %v6402 = vrot.slane %v6401, 1
        %v6403 = vadd.f32 %v6401, %v6402
        %v6404 = vrot.slane %v6064, 4
        %v6405 = vadd.f32 %v6064, %v6404
        %v6406 = vrot.slane %v6405, 2
        %v6407 = vadd.f32 %v6405, %v6406
        %v6408 = vrot.slane %v6407, 1
        %v6409 = vadd.f32 %v6407, %v6408
        %v6410 = vrot.slane %v6065, 4
        %v6411 = vadd.f32 %v6065, %v6410
        %v6412 = vrot.slane %v6411, 2
        %v6413 = vadd.f32 %v6411, %v6412
        %v6414 = vrot.slane %v6413, 1
        %v6415 = vadd.f32 %v6413, %v6414
        %v6416 = vrot.slane %v6066, 4
        %v6417 = vadd.f32 %v6066, %v6416
        %v6418 = vrot.slane %v6417, 2
        %v6419 = vadd.f32 %v6417, %v6418
        %v6420 = vrot.slane %v6419, 1
        %v6421 = vadd.f32 %v6419, %v6420
        %v6422 = vrot.slane %v6067, 4
        %v6423 = vadd.f32 %v6067, %v6422
        %v6424 = vrot.slane %v6423, 2
        %v6425 = vadd.f32 %v6423, %v6424
        %v6426 = vrot.slane %v6425, 1
        %v6427 = vadd.f32 %v6425, %v6426
        %v6428 = vrot.slane %v6068, 4
        %v6429 = vadd.f32 %v6068, %v6428
        %v6430 = vrot.slane %v6429, 2
        %v6431 = vadd.f32 %v6429, %v6430
        %v6432 = vrot.slane %v6431, 1
        %v6433 = vadd.f32 %v6431, %v6432
        %v6434 = vrot.slane %v6069, 4
        %v6435 = vadd.f32 %v6069, %v6434
        %v6436 = vrot.slane %v6435, 2
        %v6437 = vadd.f32 %v6435, %v6436
        %v6438 = vrot.slane %v6437, 1
        %v6439 = vadd.f32 %v6437, %v6438
        %v6440 = vrot.slane %v6070, 4
        %v6441 = vadd.f32 %v6070, %v6440
        %v6442 = vrot.slane %v6441, 2
        %v6443 = vadd.f32 %v6441, %v6442
        %v6444 = vrot.slane %v6443, 1
        %v6445 = vadd.f32 %v6443, %v6444
        %v6446 = vrot.slane %v6071, 4
        %v6447 = vadd.f32 %v6071, %v6446
        %v6448 = vrot.slane %v6447, 2
        %v6449 = vadd.f32 %v6447, %v6448
        %v6450 = vrot.slane %v6449, 1
        %v6451 = vadd.f32 %v6449, %v6450
        %v6452 = vrot.slane %v6072, 4
        %v6453 = vadd.f32 %v6072, %v6452
        %v6454 = vrot.slane %v6453, 2
        %v6455 = vadd.f32 %v6453, %v6454
        %v6456 = vrot.slane %v6455, 1
        %v6457 = vadd.f32 %v6455, %v6456
        %v6458 = vrot.slane %v6073, 4
        %v6459 = vadd.f32 %v6073, %v6458
        %v6460 = vrot.slane %v6459, 2
        %v6461 = vadd.f32 %v6459, %v6460
        %v6462 = vrot.slane %v6461, 1
        %v6463 = vadd.f32 %v6461, %v6462
        %v6464 = vrot.slane %v6074, 4
        %v6465 = vadd.f32 %v6074, %v6464
        %v6466 = vrot.slane %v6465, 2
        %v6467 = vadd.f32 %v6465, %v6466
        %v6468 = vrot.slane %v6467, 1
        %v6469 = vadd.f32 %v6467, %v6468
        %v6470 = vrot.slane %v6075, 4
        %v6471 = vadd.f32 %v6075, %v6470
        %v6472 = vrot.slane %v6471, 2
        %v6473 = vadd.f32 %v6471, %v6472
        %v6474 = vrot.slane %v6473, 1
        %v6475 = vadd.f32 %v6473, %v6474
        %v6476 = vrot.slane %v6076, 4
        %v6477 = vadd.f32 %v6076, %v6476
        %v6478 = vrot.slane %v6477, 2
        %v6479 = vadd.f32 %v6477, %v6478
        %v6480 = vrot.slane %v6479, 1
        %v6481 = vadd.f32 %v6479, %v6480
        %v6482 = vrot.slane %v6077, 4
        %v6483 = vadd.f32 %v6077, %v6482
        %v6484 = vrot.slane %v6483, 2
        %v6485 = vadd.f32 %v6483, %v6484
        %v6486 = vrot.slane %v6485, 1
        %v6487 = vadd.f32 %v6485, %v6486
        %v6488 = vrot.slane %v6078, 4
        %v6489 = vadd.f32 %v6078, %v6488
        %v6490 = vrot.slane %v6489, 2
        %v6491 = vadd.f32 %v6489, %v6490
        %v6492 = vrot.slane %v6491, 1
        %v6493 = vadd.f32 %v6491, %v6492
        %v6494 = vrot.slane %v6079, 4
        %v6495 = vadd.f32 %v6079, %v6494
        %v6496 = vrot.slane %v6495, 2
        %v6497 = vadd.f32 %v6495, %v6496
        %v6498 = vrot.slane %v6497, 1
        %v6499 = vadd.f32 %v6497, %v6498
        %v6500 = vrot.slane %v6080, 4
        %v6501 = vadd.f32 %v6080, %v6500
        %v6502 = vrot.slane %v6501, 2
        %v6503 = vadd.f32 %v6501, %v6502
        %v6504 = vrot.slane %v6503, 1
        %v6505 = vadd.f32 %v6503, %v6504
        %v6506 = vrot.slane %v6081, 4
        %v6507 = vadd.f32 %v6081, %v6506
        %v6508 = vrot.slane %v6507, 2
        %v6509 = vadd.f32 %v6507, %v6508
        %v6510 = vrot.slane %v6509, 1
        %v6511 = vadd.f32 %v6509, %v6510
        %v6512 = vrot.slane %v6082, 4
        %v6513 = vadd.f32 %v6082, %v6512
        %v6514 = vrot.slane %v6513, 2
        %v6515 = vadd.f32 %v6513, %v6514
        %v6516 = vrot.slane %v6515, 1
        %v6517 = vadd.f32 %v6515, %v6516
        %v6518 = vrot.slane %v6083, 4
        %v6519 = vadd.f32 %v6083, %v6518
        %v6520 = vrot.slane %v6519, 2
        %v6521 = vadd.f32 %v6519, %v6520
        %v6522 = vrot.slane %v6521, 1
        %v6523 = vadd.f32 %v6521, %v6522
        %v6524 = vrot.slane %v6084, 4
        %v6525 = vadd.f32 %v6084, %v6524
        %v6526 = vrot.slane %v6525, 2
        %v6527 = vadd.f32 %v6525, %v6526
        %v6528 = vrot.slane %v6527, 1
        %v6529 = vadd.f32 %v6527, %v6528
        %v6530 = vrot.slane %v6085, 4
        %v6531 = vadd.f32 %v6085, %v6530
        %v6532 = vrot.slane %v6531, 2
        %v6533 = vadd.f32 %v6531, %v6532
        %v6534 = vrot.slane %v6533, 1
        %v6535 = vadd.f32 %v6533, %v6534
        %v6536 = vrot.slane %v6086, 4
        %v6537 = vadd.f32 %v6086, %v6536
        %v6538 = vrot.slane %v6537, 2
        %v6539 = vadd.f32 %v6537, %v6538
        %v6540 = vrot.slane %v6539, 1
        %v6541 = vadd.f32 %v6539, %v6540
        %v6542 = vrot.slane %v6087, 4
        %v6543 = vadd.f32 %v6087, %v6542
        %v6544 = vrot.slane %v6543, 2
        %v6545 = vadd.f32 %v6543, %v6544
        %v6546 = vrot.slane %v6545, 1
        %v6547 = vadd.f32 %v6545, %v6546
        %v6548 = vrot.slane %v6088, 4
        %v6549 = vadd.f32 %v6088, %v6548
        %v6550 = vrot.slane %v6549, 2
        %v6551 = vadd.f32 %v6549, %v6550
        %v6552 = vrot.slane %v6551, 1
        %v6553 = vadd.f32 %v6551, %v6552
        %v6554 = vrot.slane %v6089, 4
        %v6555 = vadd.f32 %v6089, %v6554
        %v6556 = vrot.slane %v6555, 2
        %v6557 = vadd.f32 %v6555, %v6556
        %v6558 = vrot.slane %v6557, 1
        %v6559 = vadd.f32 %v6557, %v6558
        %v6560 = vrot.slane %v6090, 4
        %v6561 = vadd.f32 %v6090, %v6560
        %v6562 = vrot.slane %v6561, 2
        %v6563 = vadd.f32 %v6561, %v6562
        %v6564 = vrot.slane %v6563, 1
        %v6565 = vadd.f32 %v6563, %v6564
        %v6566 = vrot.slane %v6091, 4
        %v6567 = vadd.f32 %v6091, %v6566
        %v6568 = vrot.slane %v6567, 2
        %v6569 = vadd.f32 %v6567, %v6568
        %v6570 = vrot.slane %v6569, 1
        %v6571 = vadd.f32 %v6569, %v6570
        %v6572 = vrot.slane %v6092, 4
        %v6573 = vadd.f32 %v6092, %v6572
        %v6574 = vrot.slane %v6573, 2
        %v6575 = vadd.f32 %v6573, %v6574
        %v6576 = vrot.slane %v6575, 1
        %v6577 = vadd.f32 %v6575, %v6576
        %v6578 = vrot.slane %v6093, 4
        %v6579 = vadd.f32 %v6093, %v6578
        %v6580 = vrot.slane %v6579, 2
        %v6581 = vadd.f32 %v6579, %v6580
        %v6582 = vrot.slane %v6581, 1
        %v6583 = vadd.f32 %v6581, %v6582
        %v6584 = vrot.slane %v6094, 4
        %v6585 = vadd.f32 %v6094, %v6584
        %v6586 = vrot.slane %v6585, 2
        %v6587 = vadd.f32 %v6585, %v6586
        %v6588 = vrot.slane %v6587, 1
        %v6589 = vadd.f32 %v6587, %v6588
        %v6590 = vrot.slane %v6095, 4
        %v6591 = vadd.f32 %v6095, %v6590
        %v6592 = vrot.slane %v6591, 2
        %v6593 = vadd.f32 %v6591, %v6592
        %v6594 = vrot.slane %v6593, 1
        %v6595 = vadd.f32 %v6593, %v6594
        %v6596 = vrot.slane %v6096, 4
        %v6597 = vadd.f32 %v6096, %v6596
        %v6598 = vrot.slane %v6597, 2
        %v6599 = vadd.f32 %v6597, %v6598
        %v6600 = vrot.slane %v6599, 1
        %v6601 = vadd.f32 %v6599, %v6600
        %v6602 = vrot.slane %v6097, 4
        %v6603 = vadd.f32 %v6097, %v6602
        %v6604 = vrot.slane %v6603, 2
        %v6605 = vadd.f32 %v6603, %v6604
        %v6606 = vrot.slane %v6605, 1
        %v6607 = vadd.f32 %v6605, %v6606
        %v6608 = vrot.slane %v6098, 4
        %v6609 = vadd.f32 %v6098, %v6608
        %v6610 = vrot.slane %v6609, 2
        %v6611 = vadd.f32 %v6609, %v6610
        %v6612 = vrot.slane %v6611, 1
        %v6613 = vadd.f32 %v6611, %v6612
        %v6614 = vrot.slane %v6099, 4
        %v6615 = vadd.f32 %v6099, %v6614
        %v6616 = vrot.slane %v6615, 2
        %v6617 = vadd.f32 %v6615, %v6616
        %v6618 = vrot.slane %v6617, 1
        %v6619 = vadd.f32 %v6617, %v6618
        %v6620 = vrot.slane %v6100, 4
        %v6621 = vadd.f32 %v6100, %v6620
        %v6622 = vrot.slane %v6621, 2
        %v6623 = vadd.f32 %v6621, %v6622
        %v6624 = vrot.slane %v6623, 1
        %v6625 = vadd.f32 %v6623, %v6624
        %v6626 = vrot.slane %v6101, 4
        %v6627 = vadd.f32 %v6101, %v6626
        %v6628 = vrot.slane %v6627, 2
        %v6629 = vadd.f32 %v6627, %v6628
        %v6630 = vrot.slane %v6629, 1
        %v6631 = vadd.f32 %v6629, %v6630
        %v6632 = vrot.slane %v6102, 4
        %v6633 = vadd.f32 %v6102, %v6632
        %v6634 = vrot.slane %v6633, 2
        %v6635 = vadd.f32 %v6633, %v6634
        %v6636 = vrot.slane %v6635, 1
        %v6637 = vadd.f32 %v6635, %v6636
        %v6638 = vrot.slane %v6103, 4
        %v6639 = vadd.f32 %v6103, %v6638
        %v6640 = vrot.slane %v6639, 2
        %v6641 = vadd.f32 %v6639, %v6640
        %v6642 = vrot.slane %v6641, 1
        %v6643 = vadd.f32 %v6641, %v6642
        %v6644 = vrot.slane %v6104, 4
        %v6645 = vadd.f32 %v6104, %v6644
        %v6646 = vrot.slane %v6645, 2
        %v6647 = vadd.f32 %v6645, %v6646
        %v6648 = vrot.slane %v6647, 1
        %v6649 = vadd.f32 %v6647, %v6648
        %v6650 = vrot.slane %v6105, 4
        %v6651 = vadd.f32 %v6105, %v6650
        %v6652 = vrot.slane %v6651, 2
        %v6653 = vadd.f32 %v6651, %v6652
        %v6654 = vrot.slane %v6653, 1
        %v6655 = vadd.f32 %v6653, %v6654
        %v6656 = vrot.slane %v6106, 4
        %v6657 = vadd.f32 %v6106, %v6656
        %v6658 = vrot.slane %v6657, 2
        %v6659 = vadd.f32 %v6657, %v6658
        %v6660 = vrot.slane %v6659, 1
        %v6661 = vadd.f32 %v6659, %v6660
        %v6662 = vrot.slane %v6107, 4
        %v6663 = vadd.f32 %v6107, %v6662
        %v6664 = vrot.slane %v6663, 2
        %v6665 = vadd.f32 %v6663, %v6664
        %v6666 = vrot.slane %v6665, 1
        %v6667 = vadd.f32 %v6665, %v6666
        %v6668 = vrot.slane %v6108, 4
        %v6669 = vadd.f32 %v6108, %v6668
        %v6670 = vrot.slane %v6669, 2
        %v6671 = vadd.f32 %v6669, %v6670
        %v6672 = vrot.slane %v6671, 1
        %v6673 = vadd.f32 %v6671, %v6672
        %v6674 = vrot.slane %v6109, 4
        %v6675 = vadd.f32 %v6109, %v6674
        %v6676 = vrot.slane %v6675, 2
        %v6677 = vadd.f32 %v6675, %v6676
        %v6678 = vrot.slane %v6677, 1
        %v6679 = vadd.f32 %v6677, %v6678
        %v6680 = vrot.slane %v6110, 4
        %v6681 = vadd.f32 %v6110, %v6680
        %v6682 = vrot.slane %v6681, 2
        %v6683 = vadd.f32 %v6681, %v6682
        %v6684 = vrot.slane %v6683, 1
        %v6685 = vadd.f32 %v6683, %v6684
        %v6686 = vrot.slane %v6111, 4
        %v6687 = vadd.f32 %v6111, %v6686
        %v6688 = vrot.slane %v6687, 2
        %v6689 = vadd.f32 %v6687, %v6688
        %v6690 = vrot.slane %v6689, 1
        %v6691 = vadd.f32 %v6689, %v6690
        %v6692 = vrot.slane %v6112, 4
        %v6693 = vadd.f32 %v6112, %v6692
        %v6694 = vrot.slane %v6693, 2
        %v6695 = vadd.f32 %v6693, %v6694
        %v6696 = vrot.slane %v6695, 1
        %v6697 = vadd.f32 %v6695, %v6696
        %v6698 = vrot.slane %v6113, 4
        %v6699 = vadd.f32 %v6113, %v6698
        %v6700 = vrot.slane %v6699, 2
        %v6701 = vadd.f32 %v6699, %v6700
        %v6702 = vrot.slane %v6701, 1
        %v6703 = vadd.f32 %v6701, %v6702
        %v6704 = vrot.slane %v6114, 4
        %v6705 = vadd.f32 %v6114, %v6704
        %v6706 = vrot.slane %v6705, 2
        %v6707 = vadd.f32 %v6705, %v6706
        %v6708 = vrot.slane %v6707, 1
        %v6709 = vadd.f32 %v6707, %v6708
        %v6710 = vrot.slane %v6115, 4
        %v6711 = vadd.f32 %v6115, %v6710
        %v6712 = vrot.slane %v6711, 2
        %v6713 = vadd.f32 %v6711, %v6712
        %v6714 = vrot.slane %v6713, 1
        %v6715 = vadd.f32 %v6713, %v6714
        %v6716 = vrot.slane %v6116, 4
        %v6717 = vadd.f32 %v6116, %v6716
        %v6718 = vrot.slane %v6717, 2
        %v6719 = vadd.f32 %v6717, %v6718
        %v6720 = vrot.slane %v6719, 1
        %v6721 = vadd.f32 %v6719, %v6720
        %v6722 = vrot.slane %v6117, 4
        %v6723 = vadd.f32 %v6117, %v6722
        %v6724 = vrot.slane %v6723, 2
        %v6725 = vadd.f32 %v6723, %v6724
        %v6726 = vrot.slane %v6725, 1
        %v6727 = vadd.f32 %v6725, %v6726
        %v6728 = vrot.slane %v6118, 4
        %v6729 = vadd.f32 %v6118, %v6728
        %v6730 = vrot.slane %v6729, 2
        %v6731 = vadd.f32 %v6729, %v6730
        %v6732 = vrot.slane %v6731, 1
        %v6733 = vadd.f32 %v6731, %v6732
        %v6734 = vrot.slane %v6119, 4
        %v6735 = vadd.f32 %v6119, %v6734
        %v6736 = vrot.slane %v6735, 2
        %v6737 = vadd.f32 %v6735, %v6736
        %v6738 = vrot.slane %v6737, 1
        %v6739 = vadd.f32 %v6737, %v6738
        %v6740 = vrot.slane %v6120, 4
        %v6741 = vadd.f32 %v6120, %v6740
        %v6742 = vrot.slane %v6741, 2
        %v6743 = vadd.f32 %v6741, %v6742
        %v6744 = vrot.slane %v6743, 1
        %v6745 = vadd.f32 %v6743, %v6744
        %v6746 = vrot.slane %v6121, 4
        %v6747 = vadd.f32 %v6121, %v6746
        %v6748 = vrot.slane %v6747, 2
        %v6749 = vadd.f32 %v6747, %v6748
        %v6750 = vrot.slane %v6749, 1
        %v6751 = vadd.f32 %v6749, %v6750
        %v6752 = vrot.slane %v6122, 4
        %v6753 = vadd.f32 %v6122, %v6752
        %v6754 = vrot.slane %v6753, 2
        %v6755 = vadd.f32 %v6753, %v6754
        %v6756 = vrot.slane %v6755, 1
        %v6757 = vadd.f32 %v6755, %v6756
        %v6758 = vrot.slane %v6123, 4
        %v6759 = vadd.f32 %v6123, %v6758
        %v6760 = vrot.slane %v6759, 2
        %v6761 = vadd.f32 %v6759, %v6760
        %v6762 = vrot.slane %v6761, 1
        %v6763 = vadd.f32 %v6761, %v6762
        %v6764 = vrot.slane %v6124, 4
        %v6765 = vadd.f32 %v6124, %v6764
        %v6766 = vrot.slane %v6765, 2
        %v6767 = vadd.f32 %v6765, %v6766
        %v6768 = vrot.slane %v6767, 1
        %v6769 = vadd.f32 %v6767, %v6768
        %v6770 = vrot.slane %v6125, 4
        %v6771 = vadd.f32 %v6125, %v6770
        %v6772 = vrot.slane %v6771, 2
        %v6773 = vadd.f32 %v6771, %v6772
        %v6774 = vrot.slane %v6773, 1
        %v6775 = vadd.f32 %v6773, %v6774
        %v6776 = vrot.slane %v6126, 4
        %v6777 = vadd.f32 %v6126, %v6776
        %v6778 = vrot.slane %v6777, 2
        %v6779 = vadd.f32 %v6777, %v6778
        %v6780 = vrot.slane %v6779, 1
        %v6781 = vadd.f32 %v6779, %v6780
        %v6782 = vrot.slane %v6127, 4
        %v6783 = vadd.f32 %v6127, %v6782
        %v6784 = vrot.slane %v6783, 2
        %v6785 = vadd.f32 %v6783, %v6784
        %v6786 = vrot.slane %v6785, 1
        %v6787 = vadd.f32 %v6785, %v6786
        %v6788 = vrot.slane %v6128, 4
        %v6789 = vadd.f32 %v6128, %v6788
        %v6790 = vrot.slane %v6789, 2
        %v6791 = vadd.f32 %v6789, %v6790
        %v6792 = vrot.slane %v6791, 1
        %v6793 = vadd.f32 %v6791, %v6792
        %v6794 = vrot.slane %v6129, 4
        %v6795 = vadd.f32 %v6129, %v6794
        %v6796 = vrot.slane %v6795, 2
        %v6797 = vadd.f32 %v6795, %v6796
        %v6798 = vrot.slane %v6797, 1
        %v6799 = vadd.f32 %v6797, %v6798
        %v6800 = vrot.slane %v6130, 4
        %v6801 = vadd.f32 %v6130, %v6800
        %v6802 = vrot.slane %v6801, 2
        %v6803 = vadd.f32 %v6801, %v6802
        %v6804 = vrot.slane %v6803, 1
        %v6805 = vadd.f32 %v6803, %v6804
        %v6806 = vrot.slane %v6131, 4
        %v6807 = vadd.f32 %v6131, %v6806
        %v6808 = vrot.slane %v6807, 2
        %v6809 = vadd.f32 %v6807, %v6808
        %v6810 = vrot.slane %v6809, 1
        %v6811 = vadd.f32 %v6809, %v6810
        %v6812 = vrot.slane %v6132, 4
        %v6813 = vadd.f32 %v6132, %v6812
        %v6814 = vrot.slane %v6813, 2
        %v6815 = vadd.f32 %v6813, %v6814
        %v6816 = vrot.slane %v6815, 1
        %v6817 = vadd.f32 %v6815, %v6816
        %v6818 = vrot.slane %v6133, 4
        %v6819 = vadd.f32 %v6133, %v6818
        %v6820 = vrot.slane %v6819, 2
        %v6821 = vadd.f32 %v6819, %v6820
        %v6822 = vrot.slane %v6821, 1
        %v6823 = vadd.f32 %v6821, %v6822
        %v6824 = vrot.slane %v6134, 4
        %v6825 = vadd.f32 %v6134, %v6824
        %v6826 = vrot.slane %v6825, 2
        %v6827 = vadd.f32 %v6825, %v6826
        %v6828 = vrot.slane %v6827, 1
        %v6829 = vadd.f32 %v6827, %v6828
        %v6830 = vrot.slane %v6135, 4
        %v6831 = vadd.f32 %v6135, %v6830
        %v6832 = vrot.slane %v6831, 2
        %v6833 = vadd.f32 %v6831, %v6832
        %v6834 = vrot.slane %v6833, 1
        %v6835 = vadd.f32 %v6833, %v6834
        %v6836 = vrot.slane %v6136, 4
        %v6837 = vadd.f32 %v6136, %v6836
        %v6838 = vrot.slane %v6837, 2
        %v6839 = vadd.f32 %v6837, %v6838
        %v6840 = vrot.slane %v6839, 1
        %v6841 = vadd.f32 %v6839, %v6840
        %v6842 = vrot.slane %v6137, 4
        %v6843 = vadd.f32 %v6137, %v6842
        %v6844 = vrot.slane %v6843, 2
        %v6845 = vadd.f32 %v6843, %v6844
        %v6846 = vrot.slane %v6845, 1
        %v6847 = vadd.f32 %v6845, %v6846
        %v6848 = vrot.slane %v6138, 4
        %v6849 = vadd.f32 %v6138, %v6848
        %v6850 = vrot.slane %v6849, 2
        %v6851 = vadd.f32 %v6849, %v6850
        %v6852 = vrot.slane %v6851, 1
        %v6853 = vadd.f32 %v6851, %v6852
        %v6854 = vrot.slane %v6139, 4
        %v6855 = vadd.f32 %v6139, %v6854
        %v6856 = vrot.slane %v6855, 2
        %v6857 = vadd.f32 %v6855, %v6856
        %v6858 = vrot.slane %v6857, 1
        %v6859 = vadd.f32 %v6857, %v6858
        %v6860 = vrot.slane %v6140, 4
        %v6861 = vadd.f32 %v6140, %v6860
        %v6862 = vrot.slane %v6861, 2
        %v6863 = vadd.f32 %v6861, %v6862
        %v6864 = vrot.slane %v6863, 1
        %v6865 = vadd.f32 %v6863, %v6864
        %v6866 = vrot.slane %v6141, 4
        %v6867 = vadd.f32 %v6141, %v6866
        %v6868 = vrot.slane %v6867, 2
        %v6869 = vadd.f32 %v6867, %v6868
        %v6870 = vrot.slane %v6869, 1
        %v6871 = vadd.f32 %v6869, %v6870
        %v6872 = vrot.slane %v6142, 4
        %v6873 = vadd.f32 %v6142, %v6872
        %v6874 = vrot.slane %v6873, 2
        %v6875 = vadd.f32 %v6873, %v6874
        %v6876 = vrot.slane %v6875, 1
        %v6877 = vadd.f32 %v6875, %v6876
        %v6878 = vrot.slane %v6143, 4
        %v6879 = vadd.f32 %v6143, %v6878
        %v6880 = vrot.slane %v6879, 2
        %v6881 = vadd.f32 %v6879, %v6880
        %v6882 = vrot.slane %v6881, 1
        %v6883 = vadd.f32 %v6881, %v6882
        %v6884 = vrot.slane %v6144, 4
        %v6885 = vadd.f32 %v6144, %v6884
        %v6886 = vrot.slane %v6885, 2
        %v6887 = vadd.f32 %v6885, %v6886
        %v6888 = vrot.slane %v6887, 1
        %v6889 = vadd.f32 %v6887, %v6888
        %v6890 = vrot.slane %v6145, 4
        %v6891 = vadd.f32 %v6145, %v6890
        %v6892 = vrot.slane %v6891, 2
        %v6893 = vadd.f32 %v6891, %v6892
        %v6894 = vrot.slane %v6893, 1
        %v6895 = vadd.f32 %v6893, %v6894
        %v6896 = vrot.slane %v6146, 4
        %v6897 = vadd.f32 %v6146, %v6896
        %v6898 = vrot.slane %v6897, 2
        %v6899 = vadd.f32 %v6897, %v6898
        %v6900 = vrot.slane %v6899, 1
        %v6901 = vadd.f32 %v6899, %v6900
        %v6902 = vrot.slane %v6147, 4
        %v6903 = vadd.f32 %v6147, %v6902
        %v6904 = vrot.slane %v6903, 2
        %v6905 = vadd.f32 %v6903, %v6904
        %v6906 = vrot.slane %v6905, 1
        %v6907 = vadd.f32 %v6905, %v6906
        %v6908 = vrot.slane %v6148, 4
        %v6909 = vadd.f32 %v6148, %v6908
        %v6910 = vrot.slane %v6909, 2
        %v6911 = vadd.f32 %v6909, %v6910
        %v6912 = vrot.slane %v6911, 1
        %v6913 = vadd.f32 %v6911, %v6912
        %v6914 = vrot.slane %v6149, 4
        %v6915 = vadd.f32 %v6149, %v6914
        %v6916 = vrot.slane %v6915, 2
        %v6917 = vadd.f32 %v6915, %v6916
        %v6918 = vrot.slane %v6917, 1
        %v6919 = vadd.f32 %v6917, %v6918
        %v6920 = vrot.slane %v6150, 4
        %v6921 = vadd.f32 %v6150, %v6920
        %v6922 = vrot.slane %v6921, 2
        %v6923 = vadd.f32 %v6921, %v6922
        %v6924 = vrot.slane %v6923, 1
        %v6925 = vadd.f32 %v6923, %v6924
        %v6926 = vrot.slane %v6151, 4
        %v6927 = vadd.f32 %v6151, %v6926
        %v6928 = vrot.slane %v6927, 2
        %v6929 = vadd.f32 %v6927, %v6928
        %v6930 = vrot.slane %v6929, 1
        %v6931 = vadd.f32 %v6929, %v6930
        %v6932 = vrot.slane %v6152, 4
        %v6933 = vadd.f32 %v6152, %v6932
        %v6934 = vrot.slane %v6933, 2
        %v6935 = vadd.f32 %v6933, %v6934
        %v6936 = vrot.slane %v6935, 1
        %v6937 = vadd.f32 %v6935, %v6936
        %v6938 = vrot.slane %v6153, 4
        %v6939 = vadd.f32 %v6153, %v6938
        %v6940 = vrot.slane %v6939, 2
        %v6941 = vadd.f32 %v6939, %v6940
        %v6942 = vrot.slane %v6941, 1
        %v6943 = vadd.f32 %v6941, %v6942
        %v6944 = vrot.slane %v6154, 4
        %v6945 = vadd.f32 %v6154, %v6944
        %v6946 = vrot.slane %v6945, 2
        %v6947 = vadd.f32 %v6945, %v6946
        %v6948 = vrot.slane %v6947, 1
        %v6949 = vadd.f32 %v6947, %v6948
        %v6950 = vrot.slane %v6155, 4
        %v6951 = vadd.f32 %v6155, %v6950
        %v6952 = vrot.slane %v6951, 2
        %v6953 = vadd.f32 %v6951, %v6952
        %v6954 = vrot.slane %v6953, 1
        %v6955 = vadd.f32 %v6953, %v6954
        %v6956 = vrot.slane %v6156, 4
        %v6957 = vadd.f32 %v6156, %v6956
        %v6958 = vrot.slane %v6957, 2
        %v6959 = vadd.f32 %v6957, %v6958
        %v6960 = vrot.slane %v6959, 1
        %v6961 = vadd.f32 %v6959, %v6960
        %v6962 = vrot.slane %v6157, 4
        %v6963 = vadd.f32 %v6157, %v6962
        %v6964 = vrot.slane %v6963, 2
        %v6965 = vadd.f32 %v6963, %v6964
        %v6966 = vrot.slane %v6965, 1
        %v6967 = vadd.f32 %v6965, %v6966
        %v6968 = vrot.slane %v6158, 4
        %v6969 = vadd.f32 %v6158, %v6968
        %v6970 = vrot.slane %v6969, 2
        %v6971 = vadd.f32 %v6969, %v6970
        %v6972 = vrot.slane %v6971, 1
        %v6973 = vadd.f32 %v6971, %v6972
        %v6974 = vrot.slane %v6159, 4
        %v6975 = vadd.f32 %v6159, %v6974
        %v6976 = vrot.slane %v6975, 2
        %v6977 = vadd.f32 %v6975, %v6976
        %v6978 = vrot.slane %v6977, 1
        %v6979 = vadd.f32 %v6977, %v6978
        %v6980 = vrot.slane %v6160, 4
        %v6981 = vadd.f32 %v6160, %v6980
        %v6982 = vrot.slane %v6981, 2
        %v6983 = vadd.f32 %v6981, %v6982
        %v6984 = vrot.slane %v6983, 1
        %v6985 = vadd.f32 %v6983, %v6984
        %v6986 = vrot.slane %v6161, 4
        %v6987 = vadd.f32 %v6161, %v6986
        %v6988 = vrot.slane %v6987, 2
        %v6989 = vadd.f32 %v6987, %v6988
        %v6990 = vrot.slane %v6989, 1
        %v6991 = vadd.f32 %v6989, %v6990
        %v6992 = vrot.slane %v6162, 4
        %v6993 = vadd.f32 %v6162, %v6992
        %v6994 = vrot.slane %v6993, 2
        %v6995 = vadd.f32 %v6993, %v6994
        %v6996 = vrot.slane %v6995, 1
        %v6997 = vadd.f32 %v6995, %v6996
        %v6998 = vrot.slane %v6163, 4
        %v6999 = vadd.f32 %v6163, %v6998
        %v7000 = vrot.slane %v6999, 2
        %v7001 = vadd.f32 %v6999, %v7000
        %v7002 = vrot.slane %v7001, 1
        %v7003 = vadd.f32 %v7001, %v7002
        %v7004 = vrot.slane %v6164, 4
        %v7005 = vadd.f32 %v6164, %v7004
        %v7006 = vrot.slane %v7005, 2
        %v7007 = vadd.f32 %v7005, %v7006
        %v7008 = vrot.slane %v7007, 1
        %v7009 = vadd.f32 %v7007, %v7008
        %v7010 = vrot.slane %v6165, 4
        %v7011 = vadd.f32 %v6165, %v7010
        %v7012 = vrot.slane %v7011, 2
        %v7013 = vadd.f32 %v7011, %v7012
        %v7014 = vrot.slane %v7013, 1
        %v7015 = vadd.f32 %v7013, %v7014
        %v7016 = vrot.slane %v6166, 4
        %v7017 = vadd.f32 %v6166, %v7016
        %v7018 = vrot.slane %v7017, 2
        %v7019 = vadd.f32 %v7017, %v7018
        %v7020 = vrot.slane %v7019, 1
        %v7021 = vadd.f32 %v7019, %v7020
        %v7022 = vrot.slane %v6167, 4
        %v7023 = vadd.f32 %v6167, %v7022
        %v7024 = vrot.slane %v7023, 2
        %v7025 = vadd.f32 %v7023, %v7024
        %v7026 = vrot.slane %v7025, 1
        %v7027 = vadd.f32 %v7025, %v7026
        %v7028 = vrot.slane %v6168, 4
        %v7029 = vadd.f32 %v6168, %v7028
        %v7030 = vrot.slane %v7029, 2
        %v7031 = vadd.f32 %v7029, %v7030
        %v7032 = vrot.slane %v7031, 1
        %v7033 = vadd.f32 %v7031, %v7032
        %v7034 = vrot.slane %v6169, 4
        %v7035 = vadd.f32 %v6169, %v7034
        %v7036 = vrot.slane %v7035, 2
        %v7037 = vadd.f32 %v7035, %v7036
        %v7038 = vrot.slane %v7037, 1
        %v7039 = vadd.f32 %v7037, %v7038
        %v7040 = vrot.slane %v6170, 4
        %v7041 = vadd.f32 %v6170, %v7040
        %v7042 = vrot.slane %v7041, 2
        %v7043 = vadd.f32 %v7041, %v7042
        %v7044 = vrot.slane %v7043, 1
        %v7045 = vadd.f32 %v7043, %v7044
        %v7046 = vrot.slane %v6171, 4
        %v7047 = vadd.f32 %v6171, %v7046
        %v7048 = vrot.slane %v7047, 2
        %v7049 = vadd.f32 %v7047, %v7048
        %v7050 = vrot.slane %v7049, 1
        %v7051 = vadd.f32 %v7049, %v7050
        %v7052 = vrot.slane %v6172, 4
        %v7053 = vadd.f32 %v6172, %v7052
        %v7054 = vrot.slane %v7053, 2
        %v7055 = vadd.f32 %v7053, %v7054
        %v7056 = vrot.slane %v7055, 1
        %v7057 = vadd.f32 %v7055, %v7056
        %v7058 = vrot.slane %v6173, 4
        %v7059 = vadd.f32 %v6173, %v7058
        %v7060 = vrot.slane %v7059, 2
        %v7061 = vadd.f32 %v7059, %v7060
        %v7062 = vrot.slane %v7061, 1
        %v7063 = vadd.f32 %v7061, %v7062
        %v7064 = vrot.slane %v6174, 4
        %v7065 = vadd.f32 %v6174, %v7064
        %v7066 = vrot.slane %v7065, 2
        %v7067 = vadd.f32 %v7065, %v7066
        %v7068 = vrot.slane %v7067, 1
        %v7069 = vadd.f32 %v7067, %v7068
        %v7070 = vrot.slane %v6175, 4
        %v7071 = vadd.f32 %v6175, %v7070
        %v7072 = vrot.slane %v7071, 2
        %v7073 = vadd.f32 %v7071, %v7072
        %v7074 = vrot.slane %v7073, 1
        %v7075 = vadd.f32 %v7073, %v7074
        %v7076 = vrot.slane %v6176, 4
        %v7077 = vadd.f32 %v6176, %v7076
        %v7078 = vrot.slane %v7077, 2
        %v7079 = vadd.f32 %v7077, %v7078
        %v7080 = vrot.slane %v7079, 1
        %v7081 = vadd.f32 %v7079, %v7080
        %v7082 = vrot.slane %v6177, 4
        %v7083 = vadd.f32 %v6177, %v7082
        %v7084 = vrot.slane %v7083, 2
        %v7085 = vadd.f32 %v7083, %v7084
        %v7086 = vrot.slane %v7085, 1
        %v7087 = vadd.f32 %v7085, %v7086
        %v7088 = vrot.slane %v6178, 4
        %v7089 = vadd.f32 %v6178, %v7088
        %v7090 = vrot.slane %v7089, 2
        %v7091 = vadd.f32 %v7089, %v7090
        %v7092 = vrot.slane %v7091, 1
        %v7093 = vadd.f32 %v7091, %v7092
        %v7094 = vrot.slane %v6179, 4
        %v7095 = vadd.f32 %v6179, %v7094
        %v7096 = vrot.slane %v7095, 2
        %v7097 = vadd.f32 %v7095, %v7096
        %v7098 = vrot.slane %v7097, 1
        %v7099 = vadd.f32 %v7097, %v7098
        %v7100 = vrot.slane %v6180, 4
        %v7101 = vadd.f32 %v6180, %v7100
        %v7102 = vrot.slane %v7101, 2
        %v7103 = vadd.f32 %v7101, %v7102
        %v7104 = vrot.slane %v7103, 1
        %v7105 = vadd.f32 %v7103, %v7104
        %v7106 = vrot.slane %v6181, 4
        %v7107 = vadd.f32 %v6181, %v7106
        %v7108 = vrot.slane %v7107, 2
        %v7109 = vadd.f32 %v7107, %v7108
        %v7110 = vrot.slane %v7109, 1
        %v7111 = vadd.f32 %v7109, %v7110
        %v7112 = vrot.slane %v6182, 4
        %v7113 = vadd.f32 %v6182, %v7112
        %v7114 = vrot.slane %v7113, 2
        %v7115 = vadd.f32 %v7113, %v7114
        %v7116 = vrot.slane %v7115, 1
        %v7117 = vadd.f32 %v7115, %v7116
        %v7118 = vrot.slane %v6183, 4
        %v7119 = vadd.f32 %v6183, %v7118
        %v7120 = vrot.slane %v7119, 2
        %v7121 = vadd.f32 %v7119, %v7120
        %v7122 = vrot.slane %v7121, 1
        %v7123 = vadd.f32 %v7121, %v7122
        %v7124 = vrot.slane %v6184, 4
        %v7125 = vadd.f32 %v6184, %v7124
        %v7126 = vrot.slane %v7125, 2
        %v7127 = vadd.f32 %v7125, %v7126
        %v7128 = vrot.slane %v7127, 1
        %v7129 = vadd.f32 %v7127, %v7128
        %v7130 = vrot.slane %v6185, 4
        %v7131 = vadd.f32 %v6185, %v7130
        %v7132 = vrot.slane %v7131, 2
        %v7133 = vadd.f32 %v7131, %v7132
        %v7134 = vrot.slane %v7133, 1
        %v7135 = vadd.f32 %v7133, %v7134
        %v7136 = vrot.slane %v6186, 4
        %v7137 = vadd.f32 %v6186, %v7136
        %v7138 = vrot.slane %v7137, 2
        %v7139 = vadd.f32 %v7137, %v7138
        %v7140 = vrot.slane %v7139, 1
        %v7141 = vadd.f32 %v7139, %v7140
        %v7142 = vrot.slane %v6187, 4
        %v7143 = vadd.f32 %v6187, %v7142
        %v7144 = vrot.slane %v7143, 2
        %v7145 = vadd.f32 %v7143, %v7144
        %v7146 = vrot.slane %v7145, 1
        %v7147 = vadd.f32 %v7145, %v7146
        %v7148 = vrot.slane %v6188, 4
        %v7149 = vadd.f32 %v6188, %v7148
        %v7150 = vrot.slane %v7149, 2
        %v7151 = vadd.f32 %v7149, %v7150
        %v7152 = vrot.slane %v7151, 1
        %v7153 = vadd.f32 %v7151, %v7152
        %v7154 = vrot.slane %v6189, 4
        %v7155 = vadd.f32 %v6189, %v7154
        %v7156 = vrot.slane %v7155, 2
        %v7157 = vadd.f32 %v7155, %v7156
        %v7158 = vrot.slane %v7157, 1
        %v7159 = vadd.f32 %v7157, %v7158
        %v7160 = vrot.slane %v6190, 4
        %v7161 = vadd.f32 %v6190, %v7160
        %v7162 = vrot.slane %v7161, 2
        %v7163 = vadd.f32 %v7161, %v7162
        %v7164 = vrot.slane %v7163, 1
        %v7165 = vadd.f32 %v7163, %v7164
        %v7166 = vrot.slane %v6191, 4
        %v7167 = vadd.f32 %v6191, %v7166
        %v7168 = vrot.slane %v7167, 2
        %v7169 = vadd.f32 %v7167, %v7168
        %v7170 = vrot.slane %v7169, 1
        %v7171 = vadd.f32 %v7169, %v7170
        %v7172 = vrot.slane %v6192, 4
        %v7173 = vadd.f32 %v6192, %v7172
        %v7174 = vrot.slane %v7173, 2
        %v7175 = vadd.f32 %v7173, %v7174
        %v7176 = vrot.slane %v7175, 1
        %v7177 = vadd.f32 %v7175, %v7176
        %v7178 = vrot.slane %v6193, 4
        %v7179 = vadd.f32 %v6193, %v7178
        %v7180 = vrot.slane %v7179, 2
        %v7181 = vadd.f32 %v7179, %v7180
        %v7182 = vrot.slane %v7181, 1
        %v7183 = vadd.f32 %v7181, %v7182
        %v7184 = vrot.slane %v6194, 4
        %v7185 = vadd.f32 %v6194, %v7184
        %v7186 = vrot.slane %v7185, 2
        %v7187 = vadd.f32 %v7185, %v7186
        %v7188 = vrot.slane %v7187, 1
        %v7189 = vadd.f32 %v7187, %v7188
        %v7190 = vrot.slane %v6195, 4
        %v7191 = vadd.f32 %v6195, %v7190
        %v7192 = vrot.slane %v7191, 2
        %v7193 = vadd.f32 %v7191, %v7192
        %v7194 = vrot.slane %v7193, 1
        %v7195 = vadd.f32 %v7193, %v7194
        %v7196 = vrot.slane %v6196, 4
        %v7197 = vadd.f32 %v6196, %v7196
        %v7198 = vrot.slane %v7197, 2
        %v7199 = vadd.f32 %v7197, %v7198
        %v7200 = vrot.slane %v7199, 1
        %v7201 = vadd.f32 %v7199, %v7200
        %v7202 = vrot.slane %v6197, 4
        %v7203 = vadd.f32 %v6197, %v7202
        %v7204 = vrot.slane %v7203, 2
        %v7205 = vadd.f32 %v7203, %v7204
        %v7206 = vrot.slane %v7205, 1
        %v7207 = vadd.f32 %v7205, %v7206
        %v7208 = vrot.slane %v6198, 4
        %v7209 = vadd.f32 %v6198, %v7208
        %v7210 = vrot.slane %v7209, 2
        %v7211 = vadd.f32 %v7209, %v7210
        %v7212 = vrot.slane %v7211, 1
        %v7213 = vadd.f32 %v7211, %v7212
        %v7214 = vrot.slane %v6199, 4
        %v7215 = vadd.f32 %v6199, %v7214
        %v7216 = vrot.slane %v7215, 2
        %v7217 = vadd.f32 %v7215, %v7216
        %v7218 = vrot.slane %v7217, 1
        %v7219 = vadd.f32 %v7217, %v7218
        %v7220 = vrot.slane %v6200, 4
        %v7221 = vadd.f32 %v6200, %v7220
        %v7222 = vrot.slane %v7221, 2
        %v7223 = vadd.f32 %v7221, %v7222
        %v7224 = vrot.slane %v7223, 1
        %v7225 = vadd.f32 %v7223, %v7224
        %v7226 = vrot.slane %v6201, 4
        %v7227 = vadd.f32 %v6201, %v7226
        %v7228 = vrot.slane %v7227, 2
        %v7229 = vadd.f32 %v7227, %v7228
        %v7230 = vrot.slane %v7229, 1
        %v7231 = vadd.f32 %v7229, %v7230
        %v7232 = vrot.slane %v6202, 4
        %v7233 = vadd.f32 %v6202, %v7232
        %v7234 = vrot.slane %v7233, 2
        %v7235 = vadd.f32 %v7233, %v7234
        %v7236 = vrot.slane %v7235, 1
        %v7237 = vadd.f32 %v7235, %v7236
        %v7238 = vrot.slane %v6203, 4
        %v7239 = vadd.f32 %v6203, %v7238
        %v7240 = vrot.slane %v7239, 2
        %v7241 = vadd.f32 %v7239, %v7240
        %v7242 = vrot.slane %v7241, 1
        %v7243 = vadd.f32 %v7241, %v7242
        %v7244 = vrot.slane %v6204, 4
        %v7245 = vadd.f32 %v6204, %v7244
        %v7246 = vrot.slane %v7245, 2
        %v7247 = vadd.f32 %v7245, %v7246
        %v7248 = vrot.slane %v7247, 1
        %v7249 = vadd.f32 %v7247, %v7248
        %v7250 = vrot.slane %v6205, 4
        %v7251 = vadd.f32 %v6205, %v7250
        %v7252 = vrot.slane %v7251, 2
        %v7253 = vadd.f32 %v7251, %v7252
        %v7254 = vrot.slane %v7253, 1
        %v7255 = vadd.f32 %v7253, %v7254
        %v7256 = vrot.slane %v6206, 4
        %v7257 = vadd.f32 %v6206, %v7256
        %v7258 = vrot.slane %v7257, 2
        %v7259 = vadd.f32 %v7257, %v7258
        %v7260 = vrot.slane %v7259, 1
        %v7261 = vadd.f32 %v7259, %v7260
        %v7262 = vrot.slane %v6207, 4
        %v7263 = vadd.f32 %v6207, %v7262
        %v7264 = vrot.slane %v7263, 2
        %v7265 = vadd.f32 %v7263, %v7264
        %v7266 = vrot.slane %v7265, 1
        %v7267 = vadd.f32 %v7265, %v7266
        %v7268 = vrot.slane %v6208, 4
        %v7269 = vadd.f32 %v6208, %v7268
        %v7270 = vrot.slane %v7269, 2
        %v7271 = vadd.f32 %v7269, %v7270
        %v7272 = vrot.slane %v7271, 1
        %v7273 = vadd.f32 %v7271, %v7272
        %v7274 = vrot.slane %v6209, 4
        %v7275 = vadd.f32 %v6209, %v7274
        %v7276 = vrot.slane %v7275, 2
        %v7277 = vadd.f32 %v7275, %v7276
        %v7278 = vrot.slane %v7277, 1
        %v7279 = vadd.f32 %v7277, %v7278
        %v7280 = vrot.slane %v6210, 4
        %v7281 = vadd.f32 %v6210, %v7280
        %v7282 = vrot.slane %v7281, 2
        %v7283 = vadd.f32 %v7281, %v7282
        %v7284 = vrot.slane %v7283, 1
        %v7285 = vadd.f32 %v7283, %v7284
        %v7286 = vrot.slane %v6211, 4
        %v7287 = vadd.f32 %v6211, %v7286
        %v7288 = vrot.slane %v7287, 2
        %v7289 = vadd.f32 %v7287, %v7288
        %v7290 = vrot.slane %v7289, 1
        %v7291 = vadd.f32 %v7289, %v7290
        %v7292 = vrot.slane %v6212, 4
        %v7293 = vadd.f32 %v6212, %v7292
        %v7294 = vrot.slane %v7293, 2
        %v7295 = vadd.f32 %v7293, %v7294
        %v7296 = vrot.slane %v7295, 1
        %v7297 = vadd.f32 %v7295, %v7296
        %v7298 = vrot.slane %v6213, 4
        %v7299 = vadd.f32 %v6213, %v7298
        %v7300 = vrot.slane %v7299, 2
        %v7301 = vadd.f32 %v7299, %v7300
        %v7302 = vrot.slane %v7301, 1
        %v7303 = vadd.f32 %v7301, %v7302
        %v7304 = vrot.slane %v6214, 4
        %v7305 = vadd.f32 %v6214, %v7304
        %v7306 = vrot.slane %v7305, 2
        %v7307 = vadd.f32 %v7305, %v7306
        %v7308 = vrot.slane %v7307, 1
        %v7309 = vadd.f32 %v7307, %v7308
        %v7310 = vrot.slane %v6215, 4
        %v7311 = vadd.f32 %v6215, %v7310
        %v7312 = vrot.slane %v7311, 2
        %v7313 = vadd.f32 %v7311, %v7312
        %v7314 = vrot.slane %v7313, 1
        %v7315 = vadd.f32 %v7313, %v7314
        %v7316 = vrot.slane %v6216, 4
        %v7317 = vadd.f32 %v6216, %v7316
        %v7318 = vrot.slane %v7317, 2
        %v7319 = vadd.f32 %v7317, %v7318
        %v7320 = vrot.slane %v7319, 1
        %v7321 = vadd.f32 %v7319, %v7320
        %v7322 = vrot.slane %v6217, 4
        %v7323 = vadd.f32 %v6217, %v7322
        %v7324 = vrot.slane %v7323, 2
        %v7325 = vadd.f32 %v7323, %v7324
        %v7326 = vrot.slane %v7325, 1
        %v7327 = vadd.f32 %v7325, %v7326
        %v7328 = vrot.slane %v6218, 4
        %v7329 = vadd.f32 %v6218, %v7328
        %v7330 = vrot.slane %v7329, 2
        %v7331 = vadd.f32 %v7329, %v7330
        %v7332 = vrot.slane %v7331, 1
        %v7333 = vadd.f32 %v7331, %v7332
        %v7334 = vrot.slane %v6219, 4
        %v7335 = vadd.f32 %v6219, %v7334
        %v7336 = vrot.slane %v7335, 2
        %v7337 = vadd.f32 %v7335, %v7336
        %v7338 = vrot.slane %v7337, 1
        %v7339 = vadd.f32 %v7337, %v7338
        %v7340 = vrot.slane %v6220, 4
        %v7341 = vadd.f32 %v6220, %v7340
        %v7342 = vrot.slane %v7341, 2
        %v7343 = vadd.f32 %v7341, %v7342
        %v7344 = vrot.slane %v7343, 1
        %v7345 = vadd.f32 %v7343, %v7344
        %v7346 = vrot.slane %v6221, 4
        %v7347 = vadd.f32 %v6221, %v7346
        %v7348 = vrot.slane %v7347, 2
        %v7349 = vadd.f32 %v7347, %v7348
        %v7350 = vrot.slane %v7349, 1
        %v7351 = vadd.f32 %v7349, %v7350
        %v7352 = vrot.slane %v6222, 4
        %v7353 = vadd.f32 %v6222, %v7352
        %v7354 = vrot.slane %v7353, 2
        %v7355 = vadd.f32 %v7353, %v7354
        %v7356 = vrot.slane %v7355, 1
        %v7357 = vadd.f32 %v7355, %v7356
        %v7358 = vrot.slane %v6223, 4
        %v7359 = vadd.f32 %v6223, %v7358
        %v7360 = vrot.slane %v7359, 2
        %v7361 = vadd.f32 %v7359, %v7360
        %v7362 = vrot.slane %v7361, 1
        %v7363 = vadd.f32 %v7361, %v7362
        %v7364 = vrot.slane %v6224, 4
        %v7365 = vadd.f32 %v6224, %v7364
        %v7366 = vrot.slane %v7365, 2
        %v7367 = vadd.f32 %v7365, %v7366
        %v7368 = vrot.slane %v7367, 1
        %v7369 = vadd.f32 %v7367, %v7368
        %v7370 = vrot.slane %v6225, 4
        %v7371 = vadd.f32 %v6225, %v7370
        %v7372 = vrot.slane %v7371, 2
        %v7373 = vadd.f32 %v7371, %v7372
        %v7374 = vrot.slane %v7373, 1
        %v7375 = vadd.f32 %v7373, %v7374
        %v7376 = vrot.slane %v6226, 4
        %v7377 = vadd.f32 %v6226, %v7376
        %v7378 = vrot.slane %v7377, 2
        %v7379 = vadd.f32 %v7377, %v7378
        %v7380 = vrot.slane %v7379, 1
        %v7381 = vadd.f32 %v7379, %v7380
        %v7382 = vrot.slane %v6227, 4
        %v7383 = vadd.f32 %v6227, %v7382
        %v7384 = vrot.slane %v7383, 2
        %v7385 = vadd.f32 %v7383, %v7384
        %v7386 = vrot.slane %v7385, 1
        %v7387 = vadd.f32 %v7385, %v7386
        %v7388 = vrot.slane %v6228, 4
        %v7389 = vadd.f32 %v6228, %v7388
        %v7390 = vrot.slane %v7389, 2
        %v7391 = vadd.f32 %v7389, %v7390
        %v7392 = vrot.slane %v7391, 1
        %v7393 = vadd.f32 %v7391, %v7392
        %v7394 = vrot.slane %v6229, 4
        %v7395 = vadd.f32 %v6229, %v7394
        %v7396 = vrot.slane %v7395, 2
        %v7397 = vadd.f32 %v7395, %v7396
        %v7398 = vrot.slane %v7397, 1
        %v7399 = vadd.f32 %v7397, %v7398
        %v7400 = vrot.slane %v6230, 4
        %v7401 = vadd.f32 %v6230, %v7400
        %v7402 = vrot.slane %v7401, 2
        %v7403 = vadd.f32 %v7401, %v7402
        %v7404 = vrot.slane %v7403, 1
        %v7405 = vadd.f32 %v7403, %v7404
        %v7406 = vrot.slane %v6231, 4
        %v7407 = vadd.f32 %v6231, %v7406
        %v7408 = vrot.slane %v7407, 2
        %v7409 = vadd.f32 %v7407, %v7408
        %v7410 = vrot.slane %v7409, 1
        %v7411 = vadd.f32 %v7409, %v7410
        %v7412 = vrot.slane %v6232, 4
        %v7413 = vadd.f32 %v6232, %v7412
        %v7414 = vrot.slane %v7413, 2
        %v7415 = vadd.f32 %v7413, %v7414
        %v7416 = vrot.slane %v7415, 1
        %v7417 = vadd.f32 %v7415, %v7416
        %v7418 = vrot.slane %v6233, 4
        %v7419 = vadd.f32 %v6233, %v7418
        %v7420 = vrot.slane %v7419, 2
        %v7421 = vadd.f32 %v7419, %v7420
        %v7422 = vrot.slane %v7421, 1
        %v7423 = vadd.f32 %v7421, %v7422
        %v7424 = vrot.slane %v6234, 4
        %v7425 = vadd.f32 %v6234, %v7424
        %v7426 = vrot.slane %v7425, 2
        %v7427 = vadd.f32 %v7425, %v7426
        %v7428 = vrot.slane %v7427, 1
        %v7429 = vadd.f32 %v7427, %v7428
        %v7430 = vrot.slane %v6235, 4
        %v7431 = vadd.f32 %v6235, %v7430
        %v7432 = vrot.slane %v7431, 2
        %v7433 = vadd.f32 %v7431, %v7432
        %v7434 = vrot.slane %v7433, 1
        %v7435 = vadd.f32 %v7433, %v7434
        %v7436 = vrot.slane %v6236, 4
        %v7437 = vadd.f32 %v6236, %v7436
        %v7438 = vrot.slane %v7437, 2
        %v7439 = vadd.f32 %v7437, %v7438
        %v7440 = vrot.slane %v7439, 1
        %v7441 = vadd.f32 %v7439, %v7440
        %v7442 = vrot.slane %v6237, 4
        %v7443 = vadd.f32 %v6237, %v7442
        %v7444 = vrot.slane %v7443, 2
        %v7445 = vadd.f32 %v7443, %v7444
        %v7446 = vrot.slane %v7445, 1
        %v7447 = vadd.f32 %v7445, %v7446
        %v7448 = vrot.slane %v6238, 4
        %v7449 = vadd.f32 %v6238, %v7448
        %v7450 = vrot.slane %v7449, 2
        %v7451 = vadd.f32 %v7449, %v7450
        %v7452 = vrot.slane %v7451, 1
        %v7453 = vadd.f32 %v7451, %v7452
        %v7454 = vrot.slane %v6239, 4
        %v7455 = vadd.f32 %v6239, %v7454
        %v7456 = vrot.slane %v7455, 2
        %v7457 = vadd.f32 %v7455, %v7456
        %v7458 = vrot.slane %v7457, 1
        %v7459 = vadd.f32 %v7457, %v7458
        %v7460 = vrot.slane %v6240, 4
        %v7461 = vadd.f32 %v6240, %v7460
        %v7462 = vrot.slane %v7461, 2
        %v7463 = vadd.f32 %v7461, %v7462
        %v7464 = vrot.slane %v7463, 1
        %v7465 = vadd.f32 %v7463, %v7464
        %v7466 = vrot.slane %v6241, 4
        %v7467 = vadd.f32 %v6241, %v7466
        %v7468 = vrot.slane %v7467, 2
        %v7469 = vadd.f32 %v7467, %v7468
        %v7470 = vrot.slane %v7469, 1
        %v7471 = vadd.f32 %v7469, %v7470
        %v7472 = vrot.slane %v6242, 4
        %v7473 = vadd.f32 %v6242, %v7472
        %v7474 = vrot.slane %v7473, 2
        %v7475 = vadd.f32 %v7473, %v7474
        %v7476 = vrot.slane %v7475, 1
        %v7477 = vadd.f32 %v7475, %v7476
        %v7478 = vrot.slane %v6243, 4
        %v7479 = vadd.f32 %v6243, %v7478
        %v7480 = vrot.slane %v7479, 2
        %v7481 = vadd.f32 %v7479, %v7480
        %v7482 = vrot.slane %v7481, 1
        %v7483 = vadd.f32 %v7481, %v7482
        %v7484 = vrot.slane %v6244, 4
        %v7485 = vadd.f32 %v6244, %v7484
        %v7486 = vrot.slane %v7485, 2
        %v7487 = vadd.f32 %v7485, %v7486
        %v7488 = vrot.slane %v7487, 1
        %v7489 = vadd.f32 %v7487, %v7488
        %v7490 = vrot.slane %v6245, 4
        %v7491 = vadd.f32 %v6245, %v7490
        %v7492 = vrot.slane %v7491, 2
        %v7493 = vadd.f32 %v7491, %v7492
        %v7494 = vrot.slane %v7493, 1
        %v7495 = vadd.f32 %v7493, %v7494
        %v7496 = vrot.slane %v6246, 4
        %v7497 = vadd.f32 %v6246, %v7496
        %v7498 = vrot.slane %v7497, 2
        %v7499 = vadd.f32 %v7497, %v7498
        %v7500 = vrot.slane %v7499, 1
        %v7501 = vadd.f32 %v7499, %v7500
        %v7502 = vrot.slane %v6247, 4
        %v7503 = vadd.f32 %v6247, %v7502
        %v7504 = vrot.slane %v7503, 2
        %v7505 = vadd.f32 %v7503, %v7504
        %v7506 = vrot.slane %v7505, 1
        %v7507 = vadd.f32 %v7505, %v7506
        %v7508 = vrot.slane %v6248, 4
        %v7509 = vadd.f32 %v6248, %v7508
        %v7510 = vrot.slane %v7509, 2
        %v7511 = vadd.f32 %v7509, %v7510
        %v7512 = vrot.slane %v7511, 1
        %v7513 = vadd.f32 %v7511, %v7512
        %v7514 = vrot.slane %v6249, 4
        %v7515 = vadd.f32 %v6249, %v7514
        %v7516 = vrot.slane %v7515, 2
        %v7517 = vadd.f32 %v7515, %v7516
        %v7518 = vrot.slane %v7517, 1
        %v7519 = vadd.f32 %v7517, %v7518
        %v7520 = vrot.slane %v6250, 4
        %v7521 = vadd.f32 %v6250, %v7520
        %v7522 = vrot.slane %v7521, 2
        %v7523 = vadd.f32 %v7521, %v7522
        %v7524 = vrot.slane %v7523, 1
        %v7525 = vadd.f32 %v7523, %v7524
        %v7526 = vrot.slane %v6251, 4
        %v7527 = vadd.f32 %v6251, %v7526
        %v7528 = vrot.slane %v7527, 2
        %v7529 = vadd.f32 %v7527, %v7528
        %v7530 = vrot.slane %v7529, 1
        %v7531 = vadd.f32 %v7529, %v7530
        %v7532 = vrot.slane %v6252, 4
        %v7533 = vadd.f32 %v6252, %v7532
        %v7534 = vrot.slane %v7533, 2
        %v7535 = vadd.f32 %v7533, %v7534
        %v7536 = vrot.slane %v7535, 1
        %v7537 = vadd.f32 %v7535, %v7536
        %v7538 = vrot.slane %v6253, 4
        %v7539 = vadd.f32 %v6253, %v7538
        %v7540 = vrot.slane %v7539, 2
        %v7541 = vadd.f32 %v7539, %v7540
        %v7542 = vrot.slane %v7541, 1
        %v7543 = vadd.f32 %v7541, %v7542
        %v7544 = vrot.slane %v6254, 4
        %v7545 = vadd.f32 %v6254, %v7544
        %v7546 = vrot.slane %v7545, 2
        %v7547 = vadd.f32 %v7545, %v7546
        %v7548 = vrot.slane %v7547, 1
        %v7549 = vadd.f32 %v7547, %v7548
        %v7550 = vrot.slane %v6255, 4
        %v7551 = vadd.f32 %v6255, %v7550
        %v7552 = vrot.slane %v7551, 2
        %v7553 = vadd.f32 %v7551, %v7552
        %v7554 = vrot.slane %v7553, 1
        %v7555 = vadd.f32 %v7553, %v7554
        %v7556 = vrot.slane %v6256, 4
        %v7557 = vadd.f32 %v6256, %v7556
        %v7558 = vrot.slane %v7557, 2
        %v7559 = vadd.f32 %v7557, %v7558
        %v7560 = vrot.slane %v7559, 1
        %v7561 = vadd.f32 %v7559, %v7560
        %v7562 = vrot.slane %v6257, 4
        %v7563 = vadd.f32 %v6257, %v7562
        %v7564 = vrot.slane %v7563, 2
        %v7565 = vadd.f32 %v7563, %v7564
        %v7566 = vrot.slane %v7565, 1
        %v7567 = vadd.f32 %v7565, %v7566
        %v7568 = vrot.slane %v6258, 4
        %v7569 = vadd.f32 %v6258, %v7568
        %v7570 = vrot.slane %v7569, 2
        %v7571 = vadd.f32 %v7569, %v7570
        %v7572 = vrot.slane %v7571, 1
        %v7573 = vadd.f32 %v7571, %v7572
        %v7574 = vrot.slane %v6259, 4
        %v7575 = vadd.f32 %v6259, %v7574
        %v7576 = vrot.slane %v7575, 2
        %v7577 = vadd.f32 %v7575, %v7576
        %v7578 = vrot.slane %v7577, 1
        %v7579 = vadd.f32 %v7577, %v7578
        %v7580 = vrot.slane %v6260, 4
        %v7581 = vadd.f32 %v6260, %v7580
        %v7582 = vrot.slane %v7581, 2
        %v7583 = vadd.f32 %v7581, %v7582
        %v7584 = vrot.slane %v7583, 1
        %v7585 = vadd.f32 %v7583, %v7584
        %v7586 = vrot.slane %v6261, 4
        %v7587 = vadd.f32 %v6261, %v7586
        %v7588 = vrot.slane %v7587, 2
        %v7589 = vadd.f32 %v7587, %v7588
        %v7590 = vrot.slane %v7589, 1
        %v7591 = vadd.f32 %v7589, %v7590
        %v7592 = vrot.slane %v6262, 4
        %v7593 = vadd.f32 %v6262, %v7592
        %v7594 = vrot.slane %v7593, 2
        %v7595 = vadd.f32 %v7593, %v7594
        %v7596 = vrot.slane %v7595, 1
        %v7597 = vadd.f32 %v7595, %v7596
        %v7598 = vrot.slane %v6263, 4
        %v7599 = vadd.f32 %v6263, %v7598
        %v7600 = vrot.slane %v7599, 2
        %v7601 = vadd.f32 %v7599, %v7600
        %v7602 = vrot.slane %v7601, 1
        %v7603 = vadd.f32 %v7601, %v7602
        %v7604 = vrot.slane %v6264, 4
        %v7605 = vadd.f32 %v6264, %v7604
        %v7606 = vrot.slane %v7605, 2
        %v7607 = vadd.f32 %v7605, %v7606
        %v7608 = vrot.slane %v7607, 1
        %v7609 = vadd.f32 %v7607, %v7608
        %v7610 = vrot.slane %v6265, 4
        %v7611 = vadd.f32 %v6265, %v7610
        %v7612 = vrot.slane %v7611, 2
        %v7613 = vadd.f32 %v7611, %v7612
        %v7614 = vrot.slane %v7613, 1
        %v7615 = vadd.f32 %v7613, %v7614
        %v7616 = vrot.slane %v6266, 4
        %v7617 = vadd.f32 %v6266, %v7616
        %v7618 = vrot.slane %v7617, 2
        %v7619 = vadd.f32 %v7617, %v7618
        %v7620 = vrot.slane %v7619, 1
        %v7621 = vadd.f32 %v7619, %v7620
        %v7622 = vrot.slane %v6267, 4
        %v7623 = vadd.f32 %v6267, %v7622
        %v7624 = vrot.slane %v7623, 2
        %v7625 = vadd.f32 %v7623, %v7624
        %v7626 = vrot.slane %v7625, 1
        %v7627 = vadd.f32 %v7625, %v7626
        %v7628 = vrot.slane %v6268, 4
        %v7629 = vadd.f32 %v6268, %v7628
        %v7630 = vrot.slane %v7629, 2
        %v7631 = vadd.f32 %v7629, %v7630
        %v7632 = vrot.slane %v7631, 1
        %v7633 = vadd.f32 %v7631, %v7632
        %v7634 = vrot.slane %v6269, 4
        %v7635 = vadd.f32 %v6269, %v7634
        %v7636 = vrot.slane %v7635, 2
        %v7637 = vadd.f32 %v7635, %v7636
        %v7638 = vrot.slane %v7637, 1
        %v7639 = vadd.f32 %v7637, %v7638
        %v7640 = vrot.slane %v6270, 4
        %v7641 = vadd.f32 %v6270, %v7640
        %v7642 = vrot.slane %v7641, 2
        %v7643 = vadd.f32 %v7641, %v7642
        %v7644 = vrot.slane %v7643, 1
        %v7645 = vadd.f32 %v7643, %v7644
        %v7646 = vrot.slane %v6271, 4
        %v7647 = vadd.f32 %v6271, %v7646
        %v7648 = vrot.slane %v7647, 2
        %v7649 = vadd.f32 %v7647, %v7648
        %v7650 = vrot.slane %v7649, 1
        %v7651 = vadd.f32 %v7649, %v7650
        %v7652 = vrot.slane %v6272, 4
        %v7653 = vadd.f32 %v6272, %v7652
        %v7654 = vrot.slane %v7653, 2
        %v7655 = vadd.f32 %v7653, %v7654
        %v7656 = vrot.slane %v7655, 1
        %v7657 = vadd.f32 %v7655, %v7656
        %v7658 = vrot.slane %v6273, 4
        %v7659 = vadd.f32 %v6273, %v7658
        %v7660 = vrot.slane %v7659, 2
        %v7661 = vadd.f32 %v7659, %v7660
        %v7662 = vrot.slane %v7661, 1
        %v7663 = vadd.f32 %v7661, %v7662
        %v7664 = vrot.slane %v6274, 4
        %v7665 = vadd.f32 %v6274, %v7664
        %v7666 = vrot.slane %v7665, 2
        %v7667 = vadd.f32 %v7665, %v7666
        %v7668 = vrot.slane %v7667, 1
        %v7669 = vadd.f32 %v7667, %v7668
        %v7670 = vrot.slane %v6275, 4
        %v7671 = vadd.f32 %v6275, %v7670
        %v7672 = vrot.slane %v7671, 2
        %v7673 = vadd.f32 %v7671, %v7672
        %v7674 = vrot.slane %v7673, 1
        %v7675 = vadd.f32 %v7673, %v7674
        %v7676 = vrot.slane %v6276, 4
        %v7677 = vadd.f32 %v6276, %v7676
        %v7678 = vrot.slane %v7677, 2
        %v7679 = vadd.f32 %v7677, %v7678
        %v7680 = vrot.slane %v7679, 1
        %v7681 = vadd.f32 %v7679, %v7680
        %v7682 = vrot.slane %v6277, 4
        %v7683 = vadd.f32 %v6277, %v7682
        %v7684 = vrot.slane %v7683, 2
        %v7685 = vadd.f32 %v7683, %v7684
        %v7686 = vrot.slane %v7685, 1
        %v7687 = vadd.f32 %v7685, %v7686
        %v7688 = vrot.slane %v6278, 4
        %v7689 = vadd.f32 %v6278, %v7688
        %v7690 = vrot.slane %v7689, 2
        %v7691 = vadd.f32 %v7689, %v7690
        %v7692 = vrot.slane %v7691, 1
        %v7693 = vadd.f32 %v7691, %v7692
        %v7694 = vrot.slane %v6279, 4
        %v7695 = vadd.f32 %v6279, %v7694
        %v7696 = vrot.slane %v7695, 2
        %v7697 = vadd.f32 %v7695, %v7696
        %v7698 = vrot.slane %v7697, 1
        %v7699 = vadd.f32 %v7697, %v7698
        %v7700 = vrot.slane %v6280, 4
        %v7701 = vadd.f32 %v6280, %v7700
        %v7702 = vrot.slane %v7701, 2
        %v7703 = vadd.f32 %v7701, %v7702
        %v7704 = vrot.slane %v7703, 1
        %v7705 = vadd.f32 %v7703, %v7704
        %v7706 = vrot.slane %v6281, 4
        %v7707 = vadd.f32 %v6281, %v7706
        %v7708 = vrot.slane %v7707, 2
        %v7709 = vadd.f32 %v7707, %v7708
        %v7710 = vrot.slane %v7709, 1
        %v7711 = vadd.f32 %v7709, %v7710
        %v7712 = vrot.slane %v6282, 4
        %v7713 = vadd.f32 %v6282, %v7712
        %v7714 = vrot.slane %v7713, 2
        %v7715 = vadd.f32 %v7713, %v7714
        %v7716 = vrot.slane %v7715, 1
        %v7717 = vadd.f32 %v7715, %v7716
        %v7718 = vrot.slane %v6283, 4
        %v7719 = vadd.f32 %v6283, %v7718
        %v7720 = vrot.slane %v7719, 2
        %v7721 = vadd.f32 %v7719, %v7720
        %v7722 = vrot.slane %v7721, 1
        %v7723 = vadd.f32 %v7721, %v7722
        %v7724 = vpack.c.bf16 %v6289, %v6289
        %v7725 = vpack.c.bf16 %v6295, %v6295
        %v7726 = vpack.c.bf16 %v6301, %v6301
        %v7727 = vpack.c.bf16 %v6307, %v6307
        %v7728 = vpack.c.bf16 %v6313, %v6313
        %v7729 = vpack.c.bf16 %v6319, %v6319
        %v7730 = vpack.c.bf16 %v6325, %v6325
        %v7731 = vpack.c.bf16 %v6331, %v6331
        %v7732 = vpack.c.bf16 %v6337, %v6337
        %v7733 = vpack.c.bf16 %v6343, %v6343
        %v7734 = vpack.c.bf16 %v6349, %v6349
        %v7735 = vpack.c.bf16 %v6355, %v6355
        %v7736 = vpack.c.bf16 %v6361, %v6361
        %v7737 = vpack.c.bf16 %v6367, %v6367
        %v7738 = vpack.c.bf16 %v6373, %v6373
        %v7739 = vpack.c.bf16 %v6379, %v6379
        %v7740 = vpack.c.bf16 %v6385, %v6385
        %v7741 = vpack.c.bf16 %v6391, %v6391
        %v7742 = vpack.c.bf16 %v6397, %v6397
        %v7743 = vpack.c.bf16 %v6403, %v6403
        %v7744 = vpack.c.bf16 %v6409, %v6409
        %v7745 = vpack.c.bf16 %v6415, %v6415
        %v7746 = vpack.c.bf16 %v6421, %v6421
        %v7747 = vpack.c.bf16 %v6427, %v6427
        %v7748 = vpack.c.bf16 %v6433, %v6433
        %v7749 = vpack.c.bf16 %v6439, %v6439
        %v7750 = vpack.c.bf16 %v6445, %v6445
        %v7751 = vpack.c.bf16 %v6451, %v6451
        %v7752 = vpack.c.bf16 %v6457, %v6457
        %v7753 = vpack.c.bf16 %v6463, %v6463
        %v7754 = vpack.c.bf16 %v6469, %v6469
        %v7755 = vpack.c.bf16 %v6475, %v6475
        %v7756 = vpack.c.bf16 %v6481, %v6481
        %v7757 = vpack.c.bf16 %v6487, %v6487
        %v7758 = vpack.c.bf16 %v6493, %v6493
        %v7759 = vpack.c.bf16 %v6499, %v6499
        %v7760 = vpack.c.bf16 %v6505, %v6505
        %v7761 = vpack.c.bf16 %v6511, %v6511
        %v7762 = vpack.c.bf16 %v6517, %v6517
        %v7763 = vpack.c.bf16 %v6523, %v6523
        %v7764 = vpack.c.bf16 %v6529, %v6529
        %v7765 = vpack.c.bf16 %v6535, %v6535
        %v7766 = vpack.c.bf16 %v6541, %v6541
        %v7767 = vpack.c.bf16 %v6547, %v6547
        %v7768 = vpack.c.bf16 %v6553, %v6553
        %v7769 = vpack.c.bf16 %v6559, %v6559
        %v7770 = vpack.c.bf16 %v6565, %v6565
        %v7771 = vpack.c.bf16 %v6571, %v6571
        %v7772 = vpack.c.bf16 %v6577, %v6577
        %v7773 = vpack.c.bf16 %v6583, %v6583
        %v7774 = vpack.c.bf16 %v6589, %v6589
        %v7775 = vpack.c.bf16 %v6595, %v6595
        %v7776 = vpack.c.bf16 %v6601, %v6601
        %v7777 = vpack.c.bf16 %v6607, %v6607
        %v7778 = vpack.c.bf16 %v6613, %v6613
        %v7779 = vpack.c.bf16 %v6619, %v6619
        %v7780 = vpack.c.bf16 %v6625, %v6625
        %v7781 = vpack.c.bf16 %v6631, %v6631
        %v7782 = vpack.c.bf16 %v6637, %v6637
        %v7783 = vpack.c.bf16 %v6643, %v6643
        %v7784 = vpack.c.bf16 %v6649, %v6649
        %v7785 = vpack.c.bf16 %v6655, %v6655
        %v7786 = vpack.c.bf16 %v6661, %v6661
        %v7787 = vpack.c.bf16 %v6667, %v6667
        %v7788 = vpack.c.bf16 %v6673, %v6673
        %v7789 = vpack.c.bf16 %v6679, %v6679
        %v7790 = vpack.c.bf16 %v6685, %v6685
        %v7791 = vpack.c.bf16 %v6691, %v6691
        %v7792 = vpack.c.bf16 %v6697, %v6697
        %v7793 = vpack.c.bf16 %v6703, %v6703
        %v7794 = vpack.c.bf16 %v6709, %v6709
        %v7795 = vpack.c.bf16 %v6715, %v6715
        %v7796 = vpack.c.bf16 %v6721, %v6721
        %v7797 = vpack.c.bf16 %v6727, %v6727
        %v7798 = vpack.c.bf16 %v6733, %v6733
        %v7799 = vpack.c.bf16 %v6739, %v6739
        %v7800 = vpack.c.bf16 %v6745, %v6745
        %v7801 = vpack.c.bf16 %v6751, %v6751
        %v7802 = vpack.c.bf16 %v6757, %v6757
        %v7803 = vpack.c.bf16 %v6763, %v6763
        %v7804 = vpack.c.bf16 %v6769, %v6769
        %v7805 = vpack.c.bf16 %v6775, %v6775
        %v7806 = vpack.c.bf16 %v6781, %v6781
        %v7807 = vpack.c.bf16 %v6787, %v6787
        %v7808 = vpack.c.bf16 %v6793, %v6793
        %v7809 = vpack.c.bf16 %v6799, %v6799
        %v7810 = vpack.c.bf16 %v6805, %v6805
        %v7811 = vpack.c.bf16 %v6811, %v6811
        %v7812 = vpack.c.bf16 %v6817, %v6817
        %v7813 = vpack.c.bf16 %v6823, %v6823
        %v7814 = vpack.c.bf16 %v6829, %v6829
        %v7815 = vpack.c.bf16 %v6835, %v6835
        %v7816 = vpack.c.bf16 %v6841, %v6841
        %v7817 = vpack.c.bf16 %v6847, %v6847
        %v7818 = vpack.c.bf16 %v6853, %v6853
        %v7819 = vpack.c.bf16 %v6859, %v6859
        %v7820 = vpack.c.bf16 %v6865, %v6865
        %v7821 = vpack.c.bf16 %v6871, %v6871
        %v7822 = vpack.c.bf16 %v6877, %v6877
        %v7823 = vpack.c.bf16 %v6883, %v6883
        %v7824 = vpack.c.bf16 %v6889, %v6889
        %v7825 = vpack.c.bf16 %v6895, %v6895
        %v7826 = vpack.c.bf16 %v6901, %v6901
        %v7827 = vpack.c.bf16 %v6907, %v6907
        %v7828 = vpack.c.bf16 %v6913, %v6913
        %v7829 = vpack.c.bf16 %v6919, %v6919
        %v7830 = vpack.c.bf16 %v6925, %v6925
        %v7831 = vpack.c.bf16 %v6931, %v6931
        %v7832 = vpack.c.bf16 %v6937, %v6937
        %v7833 = vpack.c.bf16 %v6943, %v6943
        %v7834 = vpack.c.bf16 %v6949, %v6949
        %v7835 = vpack.c.bf16 %v6955, %v6955
        %v7836 = vpack.c.bf16 %v6961, %v6961
        %v7837 = vpack.c.bf16 %v6967, %v6967
        %v7838 = vpack.c.bf16 %v6973, %v6973
        %v7839 = vpack.c.bf16 %v6979, %v6979
        %v7840 = vpack.c.bf16 %v6985, %v6985
        %v7841 = vpack.c.bf16 %v6991, %v6991
        %v7842 = vpack.c.bf16 %v6997, %v6997
        %v7843 = vpack.c.bf16 %v7003, %v7003
        %v7844 = vpack.c.bf16 %v7009, %v7009
        %v7845 = vpack.c.bf16 %v7015, %v7015
        %v7846 = vpack.c.bf16 %v7021, %v7021
        %v7847 = vpack.c.bf16 %v7027, %v7027
        %v7848 = vpack.c.bf16 %v7033, %v7033
        %v7849 = vpack.c.bf16 %v7039, %v7039
        %v7850 = vpack.c.bf16 %v7045, %v7045
        %v7851 = vpack.c.bf16 %v7051, %v7051
        %v7852 = vpack.c.bf16 %v7057, %v7057
        %v7853 = vpack.c.bf16 %v7063, %v7063
        %v7854 = vpack.c.bf16 %v7069, %v7069
        %v7855 = vpack.c.bf16 %v7075, %v7075
        %v7856 = vpack.c.bf16 %v7081, %v7081
        %v7857 = vpack.c.bf16 %v7087, %v7087
        %v7858 = vpack.c.bf16 %v7093, %v7093
        %v7859 = vpack.c.bf16 %v7099, %v7099
        %v7860 = vpack.c.bf16 %v7105, %v7105
        %v7861 = vpack.c.bf16 %v7111, %v7111
        %v7862 = vpack.c.bf16 %v7117, %v7117
        %v7863 = vpack.c.bf16 %v7123, %v7123
        %v7864 = vpack.c.bf16 %v7129, %v7129
        %v7865 = vpack.c.bf16 %v7135, %v7135
        %v7866 = vpack.c.bf16 %v7141, %v7141
        %v7867 = vpack.c.bf16 %v7147, %v7147
        %v7868 = vpack.c.bf16 %v7153, %v7153
        %v7869 = vpack.c.bf16 %v7159, %v7159
        %v7870 = vpack.c.bf16 %v7165, %v7165
        %v7871 = vpack.c.bf16 %v7171, %v7171
        %v7872 = vpack.c.bf16 %v7177, %v7177
        %v7873 = vpack.c.bf16 %v7183, %v7183
        %v7874 = vpack.c.bf16 %v7189, %v7189
        %v7875 = vpack.c.bf16 %v7195, %v7195
        %v7876 = vpack.c.bf16 %v7201, %v7201
        %v7877 = vpack.c.bf16 %v7207, %v7207
        %v7878 = vpack.c.bf16 %v7213, %v7213
        %v7879 = vpack.c.bf16 %v7219, %v7219
        %v7880 = vpack.c.bf16 %v7225, %v7225
        %v7881 = vpack.c.bf16 %v7231, %v7231
        %v7882 = vpack.c.bf16 %v7237, %v7237
        %v7883 = vpack.c.bf16 %v7243, %v7243
        %v7884 = vpack.c.bf16 %v7249, %v7249
        %v7885 = vpack.c.bf16 %v7255, %v7255
        %v7886 = vpack.c.bf16 %v7261, %v7261
        %v7887 = vpack.c.bf16 %v7267, %v7267
        %v7888 = vpack.c.bf16 %v7273, %v7273
        %v7889 = vpack.c.bf16 %v7279, %v7279
        %v7890 = vpack.c.bf16 %v7285, %v7285
        %v7891 = vpack.c.bf16 %v7291, %v7291
        %v7892 = vpack.c.bf16 %v7297, %v7297
        %v7893 = vpack.c.bf16 %v7303, %v7303
        %v7894 = vpack.c.bf16 %v7309, %v7309
        %v7895 = vpack.c.bf16 %v7315, %v7315
        %v7896 = vpack.c.bf16 %v7321, %v7321
        %v7897 = vpack.c.bf16 %v7327, %v7327
        %v7898 = vpack.c.bf16 %v7333, %v7333
        %v7899 = vpack.c.bf16 %v7339, %v7339
        %v7900 = vpack.c.bf16 %v7345, %v7345
        %v7901 = vpack.c.bf16 %v7351, %v7351
        %v7902 = vpack.c.bf16 %v7357, %v7357
        %v7903 = vpack.c.bf16 %v7363, %v7363
        %v7904 = vpack.c.bf16 %v7369, %v7369
        %v7905 = vpack.c.bf16 %v7375, %v7375
        %v7906 = vpack.c.bf16 %v7381, %v7381
        %v7907 = vpack.c.bf16 %v7387, %v7387
        %v7908 = vpack.c.bf16 %v7393, %v7393
        %v7909 = vpack.c.bf16 %v7399, %v7399
        %v7910 = vpack.c.bf16 %v7405, %v7405
        %v7911 = vpack.c.bf16 %v7411, %v7411
        %v7912 = vpack.c.bf16 %v7417, %v7417
        %v7913 = vpack.c.bf16 %v7423, %v7423
        %v7914 = vpack.c.bf16 %v7429, %v7429
        %v7915 = vpack.c.bf16 %v7435, %v7435
        %v7916 = vpack.c.bf16 %v7441, %v7441
        %v7917 = vpack.c.bf16 %v7447, %v7447
        %v7918 = vpack.c.bf16 %v7453, %v7453
        %v7919 = vpack.c.bf16 %v7459, %v7459
        %v7920 = vpack.c.bf16 %v7465, %v7465
        %v7921 = vpack.c.bf16 %v7471, %v7471
        %v7922 = vpack.c.bf16 %v7477, %v7477
        %v7923 = vpack.c.bf16 %v7483, %v7483
        %v7924 = vpack.c.bf16 %v7489, %v7489
        %v7925 = vpack.c.bf16 %v7495, %v7495
        %v7926 = vpack.c.bf16 %v7501, %v7501
        %v7927 = vpack.c.bf16 %v7507, %v7507
        %v7928 = vpack.c.bf16 %v7513, %v7513
        %v7929 = vpack.c.bf16 %v7519, %v7519
        %v7930 = vpack.c.bf16 %v7525, %v7525
        %v7931 = vpack.c.bf16 %v7531, %v7531
        %v7932 = vpack.c.bf16 %v7537, %v7537
        %v7933 = vpack.c.bf16 %v7543, %v7543
        %v7934 = vpack.c.bf16 %v7549, %v7549
        %v7935 = vpack.c.bf16 %v7555, %v7555
        %v7936 = vpack.c.bf16 %v7561, %v7561
        %v7937 = vpack.c.bf16 %v7567, %v7567
        %v7938 = vpack.c.bf16 %v7573, %v7573
        %v7939 = vpack.c.bf16 %v7579, %v7579
        %v7940 = vpack.c.bf16 %v7585, %v7585
        %v7941 = vpack.c.bf16 %v7591, %v7591
        %v7942 = vpack.c.bf16 %v7597, %v7597
        %v7943 = vpack.c.bf16 %v7603, %v7603
        %v7944 = vpack.c.bf16 %v7609, %v7609
        %v7945 = vpack.c.bf16 %v7615, %v7615
        %v7946 = vpack.c.bf16 %v7621, %v7621
        %v7947 = vpack.c.bf16 %v7627, %v7627
        %v7948 = vpack.c.bf16 %v7633, %v7633
        %v7949 = vpack.c.bf16 %v7639, %v7639
        %v7950 = vpack.c.bf16 %v7645, %v7645
        %v7951 = vpack.c.bf16 %v7651, %v7651
        %v7952 = vpack.c.bf16 %v7657, %v7657
        %v7953 = vpack.c.bf16 %v7663, %v7663
        %v7954 = vpack.c.bf16 %v7669, %v7669
        %v7955 = vpack.c.bf16 %v7675, %v7675
        %v7956 = vpack.c.bf16 %v7681, %v7681
        %v7957 = vpack.c.bf16 %v7687, %v7687
        %v7958 = vpack.c.bf16 %v7693, %v7693
        %v7959 = vpack.c.bf16 %v7699, %v7699
        %v7960 = vpack.c.bf16 %v7705, %v7705
        %v7961 = vpack.c.bf16 %v7711, %v7711
        %v7962 = vpack.c.bf16 %v7717, %v7717
        %v7963 = vpack.c.bf16 %v7723, %v7723
        %v8204 = vunpack.c.l.b16 %v7724
        %v8205 = vunpack.c.l.b16 %v7725
        %v8206 = vunpack.c.l.b16 %v7726
        %v8207 = vunpack.c.l.b16 %v7727
        %v8208 = vunpack.c.l.b16 %v7728
        %v8209 = vunpack.c.l.b16 %v7729
        %v8210 = vunpack.c.l.b16 %v7730
        %v8211 = vunpack.c.l.b16 %v7731
        %v8212 = vunpack.c.l.b16 %v7732
        %v8213 = vunpack.c.l.b16 %v7733
        %v8214 = vunpack.c.l.b16 %v7734
        %v8215 = vunpack.c.l.b16 %v7735
        %v8216 = vunpack.c.l.b16 %v7736
        %v8217 = vunpack.c.l.b16 %v7737
        %v8218 = vunpack.c.l.b16 %v7738
        %v8219 = vunpack.c.l.b16 %v7739
        %v8220 = vunpack.c.l.b16 %v7740
        %v8221 = vunpack.c.l.b16 %v7741
        %v8222 = vunpack.c.l.b16 %v7742
        %v8223 = vunpack.c.l.b16 %v7743
        %v8224 = vunpack.c.l.b16 %v7744
        %v8225 = vunpack.c.l.b16 %v7745
        %v8226 = vunpack.c.l.b16 %v7746
        %v8227 = vunpack.c.l.b16 %v7747
        %v8228 = vunpack.c.l.b16 %v7748
        %v8229 = vunpack.c.l.b16 %v7749
        %v8230 = vunpack.c.l.b16 %v7750
        %v8231 = vunpack.c.l.b16 %v7751
        %v8232 = vunpack.c.l.b16 %v7752
        %v8233 = vunpack.c.l.b16 %v7753
        %v8234 = vunpack.c.l.b16 %v7754
        %v8235 = vunpack.c.l.b16 %v7755
        %v8236 = vunpack.c.l.b16 %v7756
        %v8237 = vunpack.c.l.b16 %v7757
        %v8238 = vunpack.c.l.b16 %v7758
        %v8239 = vunpack.c.l.b16 %v7759
        %v8240 = vunpack.c.l.b16 %v7760
        %v8241 = vunpack.c.l.b16 %v7761
        %v8242 = vunpack.c.l.b16 %v7762
        %v8243 = vunpack.c.l.b16 %v7763
        %v8244 = vunpack.c.l.b16 %v7764
        %v8245 = vunpack.c.l.b16 %v7765
        %v8246 = vunpack.c.l.b16 %v7766
        %v8247 = vunpack.c.l.b16 %v7767
        %v8248 = vunpack.c.l.b16 %v7768
        %v8249 = vunpack.c.l.b16 %v7769
        %v8250 = vunpack.c.l.b16 %v7770
        %v8251 = vunpack.c.l.b16 %v7771
        %v8252 = vunpack.c.l.b16 %v7772
        %v8253 = vunpack.c.l.b16 %v7773
        %v8254 = vunpack.c.l.b16 %v7774
        %v8255 = vunpack.c.l.b16 %v7775
        %v8256 = vunpack.c.l.b16 %v7776
        %v8257 = vunpack.c.l.b16 %v7777
        %v8258 = vunpack.c.l.b16 %v7778
        %v8259 = vunpack.c.l.b16 %v7779
        %v8260 = vunpack.c.l.b16 %v7780
        %v8261 = vunpack.c.l.b16 %v7781
        %v8262 = vunpack.c.l.b16 %v7782
        %v8263 = vunpack.c.l.b16 %v7783
        %v8264 = vunpack.c.l.b16 %v7784
        %v8265 = vunpack.c.l.b16 %v7785
        %v8266 = vunpack.c.l.b16 %v7786
        %v8267 = vunpack.c.l.b16 %v7787
        %v8268 = vunpack.c.l.b16 %v7788
        %v8269 = vunpack.c.l.b16 %v7789
        %v8270 = vunpack.c.l.b16 %v7790
        %v8271 = vunpack.c.l.b16 %v7791
        %v8272 = vunpack.c.l.b16 %v7792
        %v8273 = vunpack.c.l.b16 %v7793
        %v8274 = vunpack.c.l.b16 %v7794
        %v8275 = vunpack.c.l.b16 %v7795
        %v8276 = vunpack.c.l.b16 %v7796
        %v8277 = vunpack.c.l.b16 %v7797
        %v8278 = vunpack.c.l.b16 %v7798
        %v8279 = vunpack.c.l.b16 %v7799
        %v8280 = vunpack.c.l.b16 %v7800
        %v8281 = vunpack.c.l.b16 %v7801
        %v8282 = vunpack.c.l.b16 %v7802
        %v8283 = vunpack.c.l.b16 %v7803
        %v8284 = vunpack.c.l.b16 %v7804
        %v8285 = vunpack.c.l.b16 %v7805
        %v8286 = vunpack.c.l.b16 %v7806
        %v8287 = vunpack.c.l.b16 %v7807
        %v8288 = vunpack.c.l.b16 %v7808
        %v8289 = vunpack.c.l.b16 %v7809
        %v8290 = vunpack.c.l.b16 %v7810
        %v8291 = vunpack.c.l.b16 %v7811
        %v8292 = vunpack.c.l.b16 %v7812
        %v8293 = vunpack.c.l.b16 %v7813
        %v8294 = vunpack.c.l.b16 %v7814
        %v8295 = vunpack.c.l.b16 %v7815
        %v8296 = vunpack.c.l.b16 %v7816
        %v8297 = vunpack.c.l.b16 %v7817
        %v8298 = vunpack.c.l.b16 %v7818
        %v8299 = vunpack.c.l.b16 %v7819
        %v8300 = vunpack.c.l.b16 %v7820
        %v8301 = vunpack.c.l.b16 %v7821
        %v8302 = vunpack.c.l.b16 %v7822
        %v8303 = vunpack.c.l.b16 %v7823
        %v8304 = vunpack.c.l.b16 %v7824
        %v8305 = vunpack.c.l.b16 %v7825
        %v8306 = vunpack.c.l.b16 %v7826
        %v8307 = vunpack.c.l.b16 %v7827
        %v8308 = vunpack.c.l.b16 %v7828
        %v8309 = vunpack.c.l.b16 %v7829
        %v8310 = vunpack.c.l.b16 %v7830
        %v8311 = vunpack.c.l.b16 %v7831
        %v8312 = vunpack.c.l.b16 %v7832
        %v8313 = vunpack.c.l.b16 %v7833
        %v8314 = vunpack.c.l.b16 %v7834
        %v8315 = vunpack.c.l.b16 %v7835
        %v8316 = vunpack.c.l.b16 %v7836
        %v8317 = vunpack.c.l.b16 %v7837
        %v8318 = vunpack.c.l.b16 %v7838
        %v8319 = vunpack.c.l.b16 %v7839
        %v8320 = vunpack.c.l.b16 %v7840
        %v8321 = vunpack.c.l.b16 %v7841
        %v8322 = vunpack.c.l.b16 %v7842
        %v8323 = vunpack.c.l.b16 %v7843
        %v8324 = vunpack.c.l.b16 %v7844
        %v8325 = vunpack.c.l.b16 %v7845
        %v8326 = vunpack.c.l.b16 %v7846
        %v8327 = vunpack.c.l.b16 %v7847
        %v8328 = vunpack.c.l.b16 %v7848
        %v8329 = vunpack.c.l.b16 %v7849
        %v8330 = vunpack.c.l.b16 %v7850
        %v8331 = vunpack.c.l.b16 %v7851
        %v8332 = vunpack.c.l.b16 %v7852
        %v8333 = vunpack.c.l.b16 %v7853
        %v8334 = vunpack.c.l.b16 %v7854
        %v8335 = vunpack.c.l.b16 %v7855
        %v8336 = vunpack.c.l.b16 %v7856
        %v8337 = vunpack.c.l.b16 %v7857
        %v8338 = vunpack.c.l.b16 %v7858
        %v8339 = vunpack.c.l.b16 %v7859
        %v8340 = vunpack.c.l.b16 %v7860
        %v8341 = vunpack.c.l.b16 %v7861
        %v8342 = vunpack.c.l.b16 %v7862
        %v8343 = vunpack.c.l.b16 %v7863
        %v8344 = vunpack.c.l.b16 %v7864
        %v8345 = vunpack.c.l.b16 %v7865
        %v8346 = vunpack.c.l.b16 %v7866
        %v8347 = vunpack.c.l.b16 %v7867
        %v8348 = vunpack.c.l.b16 %v7868
        %v8349 = vunpack.c.l.b16 %v7869
        %v8350 = vunpack.c.l.b16 %v7870
        %v8351 = vunpack.c.l.b16 %v7871
        %v8352 = vunpack.c.l.b16 %v7872
        %v8353 = vunpack.c.l.b16 %v7873
        %v8354 = vunpack.c.l.b16 %v7874
        %v8355 = vunpack.c.l.b16 %v7875
        %v8356 = vunpack.c.l.b16 %v7876
        %v8357 = vunpack.c.l.b16 %v7877
        %v8358 = vunpack.c.l.b16 %v7878
        %v8359 = vunpack.c.l.b16 %v7879
        %v8360 = vunpack.c.l.b16 %v7880
        %v8361 = vunpack.c.l.b16 %v7881
        %v8362 = vunpack.c.l.b16 %v7882
        %v8363 = vunpack.c.l.b16 %v7883
        %v8364 = vunpack.c.l.b16 %v7884
        %v8365 = vunpack.c.l.b16 %v7885
        %v8366 = vunpack.c.l.b16 %v7886
        %v8367 = vunpack.c.l.b16 %v7887
        %v8368 = vunpack.c.l.b16 %v7888
        %v8369 = vunpack.c.l.b16 %v7889
        %v8370 = vunpack.c.l.b16 %v7890
        %v8371 = vunpack.c.l.b16 %v7891
        %v8372 = vunpack.c.l.b16 %v7892
        %v8373 = vunpack.c.l.b16 %v7893
        %v8374 = vunpack.c.l.b16 %v7894
        %v8375 = vunpack.c.l.b16 %v7895
        %v8376 = vunpack.c.l.b16 %v7896
        %v8377 = vunpack.c.l.b16 %v7897
        %v8378 = vunpack.c.l.b16 %v7898
        %v8379 = vunpack.c.l.b16 %v7899
        %v8380 = vunpack.c.l.b16 %v7900
        %v8381 = vunpack.c.l.b16 %v7901
        %v8382 = vunpack.c.l.b16 %v7902
        %v8383 = vunpack.c.l.b16 %v7903
        %v8384 = vunpack.c.l.b16 %v7904
        %v8385 = vunpack.c.l.b16 %v7905
        %v8386 = vunpack.c.l.b16 %v7906
        %v8387 = vunpack.c.l.b16 %v7907
        %v8388 = vunpack.c.l.b16 %v7908
        %v8389 = vunpack.c.l.b16 %v7909
        %v8390 = vunpack.c.l.b16 %v7910
        %v8391 = vunpack.c.l.b16 %v7911
        %v8392 = vunpack.c.l.b16 %v7912
        %v8393 = vunpack.c.l.b16 %v7913
        %v8394 = vunpack.c.l.b16 %v7914
        %v8395 = vunpack.c.l.b16 %v7915
        %v8396 = vunpack.c.l.b16 %v7916
        %v8397 = vunpack.c.l.b16 %v7917
        %v8398 = vunpack.c.l.b16 %v7918
        %v8399 = vunpack.c.l.b16 %v7919
        %v8400 = vunpack.c.l.b16 %v7920
        %v8401 = vunpack.c.l.b16 %v7921
        %v8402 = vunpack.c.l.b16 %v7922
        %v8403 = vunpack.c.l.b16 %v7923
        %v8404 = vunpack.c.l.b16 %v7924
        %v8405 = vunpack.c.l.b16 %v7925
        %v8406 = vunpack.c.l.b16 %v7926
        %v8407 = vunpack.c.l.b16 %v7927
        %v8408 = vunpack.c.l.b16 %v7928
        %v8409 = vunpack.c.l.b16 %v7929
        %v8410 = vunpack.c.l.b16 %v7930
        %v8411 = vunpack.c.l.b16 %v7931
        %v8412 = vunpack.c.l.b16 %v7932
        %v8413 = vunpack.c.l.b16 %v7933
        %v8414 = vunpack.c.l.b16 %v7934
        %v8415 = vunpack.c.l.b16 %v7935
        %v8416 = vunpack.c.l.b16 %v7936
        %v8417 = vunpack.c.l.b16 %v7937
        %v8418 = vunpack.c.l.b16 %v7938
        %v8419 = vunpack.c.l.b16 %v7939
        %v8420 = vunpack.c.l.b16 %v7940
        %v8421 = vunpack.c.l.b16 %v7941
        %v8422 = vunpack.c.l.b16 %v7942
        %v8423 = vunpack.c.l.b16 %v7943
        %v8424 = vunpack.c.l.b16 %v7944
        %v8425 = vunpack.c.l.b16 %v7945
        %v8426 = vunpack.c.l.b16 %v7946
        %v8427 = vunpack.c.l.b16 %v7947
        %v8428 = vunpack.c.l.b16 %v7948
        %v8429 = vunpack.c.l.b16 %v7949
        %v8430 = vunpack.c.l.b16 %v7950
        %v8431 = vunpack.c.l.b16 %v7951
        %v8432 = vunpack.c.l.b16 %v7952
        %v8433 = vunpack.c.l.b16 %v7953
        %v8434 = vunpack.c.l.b16 %v7954
        %v8435 = vunpack.c.l.b16 %v7955
        %v8436 = vunpack.c.l.b16 %v7956
        %v8437 = vunpack.c.l.b16 %v7957
        %v8438 = vunpack.c.l.b16 %v7958
        %v8439 = vunpack.c.l.b16 %v7959
        %v8440 = vunpack.c.l.b16 %v7960
        %v8441 = vunpack.c.l.b16 %v7961
        %v8442 = vunpack.c.l.b16 %v7962
        %v8443 = vunpack.c.l.b16 %v7963
        %v8444 = vsel %vm3127, %v8219, %v8204
        %v8445 = vsel %vm3129, %v8234, %v8444
        %v8446 = vsel %vm3131, %v8249, %v8445
        %v8447 = vsel %vm3133, %v8264, %v8446
        %v8448 = vsel %vm3135, %v8279, %v8447
        %v8449 = vsel %vm3137, %v8294, %v8448
        %v8450 = vsel %vm3139, %v8309, %v8449
        %v8451 = vsel %vm3127, %v8220, %v8205
        %v8452 = vsel %vm3129, %v8235, %v8451
        %v8453 = vsel %vm3131, %v8250, %v8452
        %v8454 = vsel %vm3133, %v8265, %v8453
        %v8455 = vsel %vm3135, %v8280, %v8454
        %v8456 = vsel %vm3137, %v8295, %v8455
        %v8457 = vsel %vm3139, %v8310, %v8456
        %v8458 = vsel %vm3127, %v8221, %v8206
        %v8459 = vsel %vm3129, %v8236, %v8458
        %v8460 = vsel %vm3131, %v8251, %v8459
        %v8461 = vsel %vm3133, %v8266, %v8460
        %v8462 = vsel %vm3135, %v8281, %v8461
        %v8463 = vsel %vm3137, %v8296, %v8462
        %v8464 = vsel %vm3139, %v8311, %v8463
        %v8465 = vsel %vm3127, %v8222, %v8207
        %v8466 = vsel %vm3129, %v8237, %v8465
        %v8467 = vsel %vm3131, %v8252, %v8466
        %v8468 = vsel %vm3133, %v8267, %v8467
        %v8469 = vsel %vm3135, %v8282, %v8468
        %v8470 = vsel %vm3137, %v8297, %v8469
        %v8471 = vsel %vm3139, %v8312, %v8470
        %v8472 = vsel %vm3127, %v8223, %v8208
        %v8473 = vsel %vm3129, %v8238, %v8472
        %v8474 = vsel %vm3131, %v8253, %v8473
        %v8475 = vsel %vm3133, %v8268, %v8474
        %v8476 = vsel %vm3135, %v8283, %v8475
        %v8477 = vsel %vm3137, %v8298, %v8476
        %v8478 = vsel %vm3139, %v8313, %v8477
        %v8479 = vsel %vm3127, %v8224, %v8209
        %v8480 = vsel %vm3129, %v8239, %v8479
        %v8481 = vsel %vm3131, %v8254, %v8480
        %v8482 = vsel %vm3133, %v8269, %v8481
        %v8483 = vsel %vm3135, %v8284, %v8482
        %v8484 = vsel %vm3137, %v8299, %v8483
        %v8485 = vsel %vm3139, %v8314, %v8484
        %v8486 = vsel %vm3127, %v8225, %v8210
        %v8487 = vsel %vm3129, %v8240, %v8486
        %v8488 = vsel %vm3131, %v8255, %v8487
        %v8489 = vsel %vm3133, %v8270, %v8488
        %v8490 = vsel %vm3135, %v8285, %v8489
        %v8491 = vsel %vm3137, %v8300, %v8490
        %v8492 = vsel %vm3139, %v8315, %v8491
        %v8493 = vsel %vm3127, %v8226, %v8211
        %v8494 = vsel %vm3129, %v8241, %v8493
        %v8495 = vsel %vm3131, %v8256, %v8494
        %v8496 = vsel %vm3133, %v8271, %v8495
        %v8497 = vsel %vm3135, %v8286, %v8496
        %v8498 = vsel %vm3137, %v8301, %v8497
        %v8499 = vsel %vm3139, %v8316, %v8498
        %v8500 = vsel %vm3127, %v8227, %v8212
        %v8501 = vsel %vm3129, %v8242, %v8500
        %v8502 = vsel %vm3131, %v8257, %v8501
        %v8503 = vsel %vm3133, %v8272, %v8502
        %v8504 = vsel %vm3135, %v8287, %v8503
        %v8505 = vsel %vm3137, %v8302, %v8504
        %v8506 = vsel %vm3139, %v8317, %v8505
        %v8507 = vsel %vm3127, %v8228, %v8213
        %v8508 = vsel %vm3129, %v8243, %v8507
        %v8509 = vsel %vm3131, %v8258, %v8508
        %v8510 = vsel %vm3133, %v8273, %v8509
        %v8511 = vsel %vm3135, %v8288, %v8510
        %v8512 = vsel %vm3137, %v8303, %v8511
        %v8513 = vsel %vm3139, %v8318, %v8512
        %v8514 = vsel %vm3127, %v8229, %v8214
        %v8515 = vsel %vm3129, %v8244, %v8514
        %v8516 = vsel %vm3131, %v8259, %v8515
        %v8517 = vsel %vm3133, %v8274, %v8516
        %v8518 = vsel %vm3135, %v8289, %v8517
        %v8519 = vsel %vm3137, %v8304, %v8518
        %v8520 = vsel %vm3139, %v8319, %v8519
        %v8521 = vsel %vm3127, %v8230, %v8215
        %v8522 = vsel %vm3129, %v8245, %v8521
        %v8523 = vsel %vm3131, %v8260, %v8522
        %v8524 = vsel %vm3133, %v8275, %v8523
        %v8525 = vsel %vm3135, %v8290, %v8524
        %v8526 = vsel %vm3137, %v8305, %v8525
        %v8527 = vsel %vm3139, %v8320, %v8526
        %v8528 = vsel %vm3127, %v8231, %v8216
        %v8529 = vsel %vm3129, %v8246, %v8528
        %v8530 = vsel %vm3131, %v8261, %v8529
        %v8531 = vsel %vm3133, %v8276, %v8530
        %v8532 = vsel %vm3135, %v8291, %v8531
        %v8533 = vsel %vm3137, %v8306, %v8532
        %v8534 = vsel %vm3139, %v8321, %v8533
        %v8535 = vsel %vm3127, %v8232, %v8217
        %v8536 = vsel %vm3129, %v8247, %v8535
        %v8537 = vsel %vm3131, %v8262, %v8536
        %v8538 = vsel %vm3133, %v8277, %v8537
        %v8539 = vsel %vm3135, %v8292, %v8538
        %v8540 = vsel %vm3137, %v8307, %v8539
        %v8541 = vsel %vm3139, %v8322, %v8540
        %v8542 = vsel %vm3127, %v8233, %v8218
        %v8543 = vsel %vm3129, %v8248, %v8542
        %v8544 = vsel %vm3131, %v8263, %v8543
        %v8545 = vsel %vm3133, %v8278, %v8544
        %v8546 = vsel %vm3135, %v8293, %v8545
        %v8547 = vsel %vm3137, %v8308, %v8546
        %v8548 = vsel %vm3139, %v8323, %v8547
        %v8549 = vsel %vm3127, %v8339, %v8324
        %v8550 = vsel %vm3129, %v8354, %v8549
        %v8551 = vsel %vm3131, %v8369, %v8550
        %v8552 = vsel %vm3133, %v8384, %v8551
        %v8553 = vsel %vm3135, %v8399, %v8552
        %v8554 = vsel %vm3137, %v8414, %v8553
        %v8555 = vsel %vm3139, %v8429, %v8554
        %v8556 = vsel %vm3127, %v8340, %v8325
        %v8557 = vsel %vm3129, %v8355, %v8556
        %v8558 = vsel %vm3131, %v8370, %v8557
        %v8559 = vsel %vm3133, %v8385, %v8558
        %v8560 = vsel %vm3135, %v8400, %v8559
        %v8561 = vsel %vm3137, %v8415, %v8560
        %v8562 = vsel %vm3139, %v8430, %v8561
        %v8563 = vsel %vm3127, %v8341, %v8326
        %v8564 = vsel %vm3129, %v8356, %v8563
        %v8565 = vsel %vm3131, %v8371, %v8564
        %v8566 = vsel %vm3133, %v8386, %v8565
        %v8567 = vsel %vm3135, %v8401, %v8566
        %v8568 = vsel %vm3137, %v8416, %v8567
        %v8569 = vsel %vm3139, %v8431, %v8568
        %v8570 = vsel %vm3127, %v8342, %v8327
        %v8571 = vsel %vm3129, %v8357, %v8570
        %v8572 = vsel %vm3131, %v8372, %v8571
        %v8573 = vsel %vm3133, %v8387, %v8572
        %v8574 = vsel %vm3135, %v8402, %v8573
        %v8575 = vsel %vm3137, %v8417, %v8574
        %v8576 = vsel %vm3139, %v8432, %v8575
        %v8577 = vsel %vm3127, %v8343, %v8328
        %v8578 = vsel %vm3129, %v8358, %v8577
        %v8579 = vsel %vm3131, %v8373, %v8578
        %v8580 = vsel %vm3133, %v8388, %v8579
        %v8581 = vsel %vm3135, %v8403, %v8580
        %v8582 = vsel %vm3137, %v8418, %v8581
        %v8583 = vsel %vm3139, %v8433, %v8582
        %v8584 = vsel %vm3127, %v8344, %v8329
        %v8585 = vsel %vm3129, %v8359, %v8584
        %v8586 = vsel %vm3131, %v8374, %v8585
        %v8587 = vsel %vm3133, %v8389, %v8586
        %v8588 = vsel %vm3135, %v8404, %v8587
        %v8589 = vsel %vm3137, %v8419, %v8588
        %v8590 = vsel %vm3139, %v8434, %v8589
        %v8591 = vsel %vm3127, %v8345, %v8330
        %v8592 = vsel %vm3129, %v8360, %v8591
        %v8593 = vsel %vm3131, %v8375, %v8592
        %v8594 = vsel %vm3133, %v8390, %v8593
        %v8595 = vsel %vm3135, %v8405, %v8594
        %v8596 = vsel %vm3137, %v8420, %v8595
        %v8597 = vsel %vm3139, %v8435, %v8596
        %v8598 = vsel %vm3127, %v8346, %v8331
        %v8599 = vsel %vm3129, %v8361, %v8598
        %v8600 = vsel %vm3131, %v8376, %v8599
        %v8601 = vsel %vm3133, %v8391, %v8600
        %v8602 = vsel %vm3135, %v8406, %v8601
        %v8603 = vsel %vm3137, %v8421, %v8602
        %v8604 = vsel %vm3139, %v8436, %v8603
        %v8605 = vsel %vm3127, %v8347, %v8332
        %v8606 = vsel %vm3129, %v8362, %v8605
        %v8607 = vsel %vm3131, %v8377, %v8606
        %v8608 = vsel %vm3133, %v8392, %v8607
        %v8609 = vsel %vm3135, %v8407, %v8608
        %v8610 = vsel %vm3137, %v8422, %v8609
        %v8611 = vsel %vm3139, %v8437, %v8610
        %v8612 = vsel %vm3127, %v8348, %v8333
        %v8613 = vsel %vm3129, %v8363, %v8612
        %v8614 = vsel %vm3131, %v8378, %v8613
        %v8615 = vsel %vm3133, %v8393, %v8614
        %v8616 = vsel %vm3135, %v8408, %v8615
        %v8617 = vsel %vm3137, %v8423, %v8616
        %v8618 = vsel %vm3139, %v8438, %v8617
        %v8619 = vsel %vm3127, %v8349, %v8334
        %v8620 = vsel %vm3129, %v8364, %v8619
        %v8621 = vsel %vm3131, %v8379, %v8620
        %v8622 = vsel %vm3133, %v8394, %v8621
        %v8623 = vsel %vm3135, %v8409, %v8622
        %v8624 = vsel %vm3137, %v8424, %v8623
        %v8625 = vsel %vm3139, %v8439, %v8624
        %v8626 = vsel %vm3127, %v8350, %v8335
        %v8627 = vsel %vm3129, %v8365, %v8626
        %v8628 = vsel %vm3131, %v8380, %v8627
        %v8629 = vsel %vm3133, %v8395, %v8628
        %v8630 = vsel %vm3135, %v8410, %v8629
        %v8631 = vsel %vm3137, %v8425, %v8630
        %v8632 = vsel %vm3139, %v8440, %v8631
        %v8633 = vsel %vm3127, %v8351, %v8336
        %v8634 = vsel %vm3129, %v8366, %v8633
        %v8635 = vsel %vm3131, %v8381, %v8634
        %v8636 = vsel %vm3133, %v8396, %v8635
        %v8637 = vsel %vm3135, %v8411, %v8636
        %v8638 = vsel %vm3137, %v8426, %v8637
        %v8639 = vsel %vm3139, %v8441, %v8638
        %v8640 = vsel %vm3127, %v8352, %v8337
        %v8641 = vsel %vm3129, %v8367, %v8640
        %v8642 = vsel %vm3131, %v8382, %v8641
        %v8643 = vsel %vm3133, %v8397, %v8642
        %v8644 = vsel %vm3135, %v8412, %v8643
        %v8645 = vsel %vm3137, %v8427, %v8644
        %v8646 = vsel %vm3139, %v8442, %v8645
        %v8647 = vsel %vm3127, %v8353, %v8338
        %v8648 = vsel %vm3129, %v8368, %v8647
        %v8649 = vsel %vm3131, %v8383, %v8648
        %v8650 = vsel %vm3133, %v8398, %v8649
        %v8651 = vsel %vm3135, %v8413, %v8650
        %v8652 = vsel %vm3137, %v8428, %v8651
        %v8653 = vsel %vm3139, %v8443, %v8652
        %v8654 = vpack.c.b16 %v8555, %v8450
        %v8655 = vpack.c.b16 %v8562, %v8457
        %v8656 = vpack.c.b16 %v8569, %v8464
        %v8657 = vpack.c.b16 %v8576, %v8471
        %v8658 = vpack.c.b16 %v8583, %v8478
        %v8659 = vpack.c.b16 %v8590, %v8485
        %v8660 = vpack.c.b16 %v8597, %v8492
        %v8661 = vpack.c.b16 %v8604, %v8499
        %v8662 = vpack.c.b16 %v8611, %v8506
        %v8663 = vpack.c.b16 %v8618, %v8513
        %v8664 = vpack.c.b16 %v8625, %v8520
        %v8665 = vpack.c.b16 %v8632, %v8527
        %v8666 = vpack.c.b16 %v8639, %v8534
        %v8667 = vpack.c.b16 %v8646, %v8541
        %v8668 = vpack.c.b16 %v8653, %v8548
        %8684 = vst [vmem:[#allocation2 + $0xf0] sm:$0xff] %v8654
        %8685 = vst [vmem:[#allocation2 + $0xf8] sm:$0xff] %v8655
        %8686 = vst [vmem:[#allocation2 + $0x100] sm:$0xff] %v8656
        %8687 = vst [vmem:[#allocation2 + $0x108] sm:$0xff] %v8657
        %8688 = vst [vmem:[#allocation2 + $0x110] sm:$0xff] %v8658
        %8689 = vst [vmem:[#allocation2 + $0x118] sm:$0xff] %v8659
        %8690 = vst [vmem:[#allocation2 + $0x120] sm:$0xff] %v8660
        %8691 = vst [vmem:[#allocation2 + $0x128] sm:$0xff] %v8661
        %8692 = vst [vmem:[#allocation2 + $0x130] sm:$0xff] %v8662
        %8693 = vst [vmem:[#allocation2 + $0x138] sm:$0xff] %v8663
        %8694 = vst [vmem:[#allocation2 + $0x140] sm:$0xff] %v8664
        %8695 = vst [vmem:[#allocation2 + $0x148] sm:$0xff] %v8665
        %8696 = vst [vmem:[#allocation2 + $0x150] sm:$0xff] %v8666
        %8697 = vst [vmem:[#allocation2 + $0x158] sm:$0xff] %v8667
        %8698 = vst [vmem:[#allocation2 + $0x160] sm:$0xff] %v8668
        %v8699 = vmul.f32 %v395, %v712
        %v8700 = vmul.f32 %v396, %v713
        %v8701 = vmul.f32 %v397, %v714
        %v8702 = vmul.f32 %v398, %v715
        %v8703 = vmul.f32 %v399, %v716
        %v8704 = vmul.f32 %v400, %v717
        %v8705 = vmul.f32 %v401, %v718
        %v8706 = vmul.f32 %v402, %v719
        %v8707 = vmul.f32 %v403, %v720
        %v8708 = vmul.f32 %v404, %v721
        %v8709 = vmul.f32 %v405, %v722
        %v8710 = vmul.f32 %v406, %v723
        %v8711 = vmul.f32 %v407, %v724
        %v8712 = vmul.f32 %v408, %v725
        %v8713 = vmul.f32 %v409, %v726
        %v8714 = vmul.f32 %v410, %v712
        %v8715 = vmul.f32 %v411, %v713
        %v8716 = vmul.f32 %v412, %v714
        %v8717 = vmul.f32 %v413, %v715
        %v8718 = vmul.f32 %v414, %v716
        %v8719 = vmul.f32 %v415, %v717
        %v8720 = vmul.f32 %v416, %v718
        %v8721 = vmul.f32 %v417, %v719
        %v8722 = vmul.f32 %v418, %v720
        %v8723 = vmul.f32 %v419, %v721
        %v8724 = vmul.f32 %v420, %v722
        %v8725 = vmul.f32 %v421, %v723
        %v8726 = vmul.f32 %v422, %v724
        %v8727 = vmul.f32 %v423, %v725
        %v8728 = vmul.f32 %v424, %v726
        %v8729 = vmul.f32 %v425, %v712
        %v8730 = vmul.f32 %v426, %v713
        %v8731 = vmul.f32 %v427, %v714
        %v8732 = vmul.f32 %v428, %v715
        %v8733 = vmul.f32 %v429, %v716
        %v8734 = vmul.f32 %v430, %v717
        %v8735 = vmul.f32 %v431, %v718
        %v8736 = vmul.f32 %v432, %v719
        %v8737 = vmul.f32 %v433, %v720
        %v8738 = vmul.f32 %v434, %v721
        %v8739 = vmul.f32 %v435, %v722
        %v8740 = vmul.f32 %v436, %v723
        %v8741 = vmul.f32 %v437, %v724
        %v8742 = vmul.f32 %v438, %v725
        %v8743 = vmul.f32 %v439, %v726
        %v8744 = vmul.f32 %v440, %v712
        %v8745 = vmul.f32 %v441, %v713
        %v8746 = vmul.f32 %v442, %v714
        %v8747 = vmul.f32 %v443, %v715
        %v8748 = vmul.f32 %v444, %v716
        %v8749 = vmul.f32 %v445, %v717
        %v8750 = vmul.f32 %v446, %v718
        %v8751 = vmul.f32 %v447, %v719
        %v8752 = vmul.f32 %v448, %v720
        %v8753 = vmul.f32 %v449, %v721
        %v8754 = vmul.f32 %v450, %v722
        %v8755 = vmul.f32 %v451, %v723
        %v8756 = vmul.f32 %v452, %v724
        %v8757 = vmul.f32 %v453, %v725
        %v8758 = vmul.f32 %v454, %v726
        %v8759 = vmul.f32 %v455, %v712
        %v8760 = vmul.f32 %v456, %v713
        %v8761 = vmul.f32 %v457, %v714
        %v8762 = vmul.f32 %v458, %v715
        %v8763 = vmul.f32 %v459, %v716
        %v8764 = vmul.f32 %v460, %v717
        %v8765 = vmul.f32 %v461, %v718
        %v8766 = vmul.f32 %v462, %v719
        %v8767 = vmul.f32 %v463, %v720
        %v8768 = vmul.f32 %v464, %v721
        %v8769 = vmul.f32 %v465, %v722
        %v8770 = vmul.f32 %v466, %v723
        %v8771 = vmul.f32 %v467, %v724
        %v8772 = vmul.f32 %v468, %v725
        %v8773 = vmul.f32 %v469, %v726
        %v8774 = vmul.f32 %v470, %v712
        %v8775 = vmul.f32 %v471, %v713
        %v8776 = vmul.f32 %v472, %v714
        %v8777 = vmul.f32 %v473, %v715
        %v8778 = vmul.f32 %v474, %v716
        %v8779 = vmul.f32 %v475, %v717
        %v8780 = vmul.f32 %v476, %v718
        %v8781 = vmul.f32 %v477, %v719
        %v8782 = vmul.f32 %v478, %v720
        %v8783 = vmul.f32 %v479, %v721
        %v8784 = vmul.f32 %v480, %v722
        %v8785 = vmul.f32 %v481, %v723
        %v8786 = vmul.f32 %v482, %v724
        %v8787 = vmul.f32 %v483, %v725
        %v8788 = vmul.f32 %v484, %v726
        %v8789 = vmul.f32 %v485, %v712
        %v8790 = vmul.f32 %v486, %v713
        %v8791 = vmul.f32 %v487, %v714
        %v8792 = vmul.f32 %v488, %v715
        %v8793 = vmul.f32 %v489, %v716
        %v8794 = vmul.f32 %v490, %v717
        %v8795 = vmul.f32 %v491, %v718
        %v8796 = vmul.f32 %v492, %v719
        %v8797 = vmul.f32 %v493, %v720
        %v8798 = vmul.f32 %v494, %v721
        %v8799 = vmul.f32 %v495, %v722
        %v8800 = vmul.f32 %v496, %v723
        %v8801 = vmul.f32 %v497, %v724
        %v8802 = vmul.f32 %v498, %v725
        %v8803 = vmul.f32 %v499, %v726
        %v8804 = vmul.f32 %v500, %v712
        %v8805 = vmul.f32 %v501, %v713
        %v8806 = vmul.f32 %v502, %v714
        %v8807 = vmul.f32 %v503, %v715
        %v8808 = vmul.f32 %v504, %v716
        %v8809 = vmul.f32 %v505, %v717
        %v8810 = vmul.f32 %v506, %v718
        %v8811 = vmul.f32 %v507, %v719
        %v8812 = vmul.f32 %v508, %v720
        %v8813 = vmul.f32 %v509, %v721
        %v8814 = vmul.f32 %v510, %v722
        %v8815 = vmul.f32 %v511, %v723
        %v8816 = vmul.f32 %v512, %v724
        %v8817 = vmul.f32 %v513, %v725
        %v8818 = vmul.f32 %v514, %v726
        %v8819 = vmul.f32 %v515, %v712
        %v8820 = vmul.f32 %v516, %v713
        %v8821 = vmul.f32 %v517, %v714
        %v8822 = vmul.f32 %v518, %v715
        %v8823 = vmul.f32 %v519, %v716
        %v8824 = vmul.f32 %v520, %v717
        %v8825 = vmul.f32 %v521, %v718
        %v8826 = vmul.f32 %v522, %v719
        %v8827 = vmul.f32 %v523, %v720
        %v8828 = vmul.f32 %v524, %v721
        %v8829 = vmul.f32 %v525, %v722
        %v8830 = vmul.f32 %v526, %v723
        %v8831 = vmul.f32 %v527, %v724
        %v8832 = vmul.f32 %v528, %v725
        %v8833 = vmul.f32 %v529, %v726
        %v8834 = vmul.f32 %v530, %v712
        %v8835 = vmul.f32 %v531, %v713
        %v8836 = vmul.f32 %v532, %v714
        %v8837 = vmul.f32 %v533, %v715
        %v8838 = vmul.f32 %v534, %v716
        %v8839 = vmul.f32 %v535, %v717
        %v8840 = vmul.f32 %v536, %v718
        %v8841 = vmul.f32 %v537, %v719
        %v8842 = vmul.f32 %v538, %v720
        %v8843 = vmul.f32 %v539, %v721
        %v8844 = vmul.f32 %v540, %v722
        %v8845 = vmul.f32 %v541, %v723
        %v8846 = vmul.f32 %v542, %v724
        %v8847 = vmul.f32 %v543, %v725
        %v8848 = vmul.f32 %v544, %v726
        %v8849 = vmul.f32 %v545, %v712
        %v8850 = vmul.f32 %v546, %v713
        %v8851 = vmul.f32 %v547, %v714
        %v8852 = vmul.f32 %v548, %v715
        %v8853 = vmul.f32 %v549, %v716
        %v8854 = vmul.f32 %v550, %v717
        %v8855 = vmul.f32 %v551, %v718
        %v8856 = vmul.f32 %v552, %v719
        %v8857 = vmul.f32 %v553, %v720
        %v8858 = vmul.f32 %v554, %v721
        %v8859 = vmul.f32 %v555, %v722
        %v8860 = vmul.f32 %v556, %v723
        %v8861 = vmul.f32 %v557, %v724
        %v8862 = vmul.f32 %v558, %v725
        %v8863 = vmul.f32 %v559, %v726
        %v8864 = vmul.f32 %v560, %v712
        %v8865 = vmul.f32 %v561, %v713
        %v8866 = vmul.f32 %v562, %v714
        %v8867 = vmul.f32 %v563, %v715
        %v8868 = vmul.f32 %v564, %v716
        %v8869 = vmul.f32 %v565, %v717
        %v8870 = vmul.f32 %v566, %v718
        %v8871 = vmul.f32 %v567, %v719
        %v8872 = vmul.f32 %v568, %v720
        %v8873 = vmul.f32 %v569, %v721
        %v8874 = vmul.f32 %v570, %v722
        %v8875 = vmul.f32 %v571, %v723
        %v8876 = vmul.f32 %v572, %v724
        %v8877 = vmul.f32 %v573, %v725
        %v8878 = vmul.f32 %v574, %v726
        %v8879 = vmul.f32 %v575, %v712
        %v8880 = vmul.f32 %v576, %v713
        %v8881 = vmul.f32 %v577, %v714
        %v8882 = vmul.f32 %v578, %v715
        %v8883 = vmul.f32 %v579, %v716
        %v8884 = vmul.f32 %v580, %v717
        %v8885 = vmul.f32 %v581, %v718
        %v8886 = vmul.f32 %v582, %v719
        %v8887 = vmul.f32 %v583, %v720
        %v8888 = vmul.f32 %v584, %v721
        %v8889 = vmul.f32 %v585, %v722
        %v8890 = vmul.f32 %v586, %v723
        %v8891 = vmul.f32 %v587, %v724
        %v8892 = vmul.f32 %v588, %v725
        %v8893 = vmul.f32 %v589, %v726
        %v8894 = vmul.f32 %v590, %v712
        %v8895 = vmul.f32 %v591, %v713
        %v8896 = vmul.f32 %v592, %v714
        %v8897 = vmul.f32 %v593, %v715
        %v8898 = vmul.f32 %v594, %v716
        %v8899 = vmul.f32 %v595, %v717
        %v8900 = vmul.f32 %v596, %v718
        %v8901 = vmul.f32 %v597, %v719
        %v8902 = vmul.f32 %v598, %v720
        %v8903 = vmul.f32 %v599, %v721
        %v8904 = vmul.f32 %v600, %v722
        %v8905 = vmul.f32 %v601, %v723
        %v8906 = vmul.f32 %v602, %v724
        %v8907 = vmul.f32 %v603, %v725
        %v8908 = vmul.f32 %v604, %v726
        %v8909 = vmul.f32 %v605, %v712
        %v8910 = vmul.f32 %v606, %v713
        %v8911 = vmul.f32 %v607, %v714
        %v8912 = vmul.f32 %v608, %v715
        %v8913 = vmul.f32 %v609, %v716
        %v8914 = vmul.f32 %v610, %v717
        %v8915 = vmul.f32 %v611, %v718
        %v8916 = vmul.f32 %v612, %v719
        %v8917 = vmul.f32 %v613, %v720
        %v8918 = vmul.f32 %v614, %v721
        %v8919 = vmul.f32 %v615, %v722
        %v8920 = vmul.f32 %v616, %v723
        %v8921 = vmul.f32 %v617, %v724
        %v8922 = vmul.f32 %v618, %v725
        %v8923 = vmul.f32 %v619, %v726
        %v8924 = vmul.f32 %v620, %v712
        %v8925 = vmul.f32 %v621, %v713
        %v8926 = vmul.f32 %v622, %v714
        %v8927 = vmul.f32 %v623, %v715
        %v8928 = vmul.f32 %v624, %v716
        %v8929 = vmul.f32 %v625, %v717
        %v8930 = vmul.f32 %v626, %v718
        %v8931 = vmul.f32 %v627, %v719
        %v8932 = vmul.f32 %v628, %v720
        %v8933 = vmul.f32 %v629, %v721
        %v8934 = vmul.f32 %v630, %v722
        %v8935 = vmul.f32 %v631, %v723
        %v8936 = vmul.f32 %v632, %v724
        %v8937 = vmul.f32 %v633, %v725
        %v8938 = vmul.f32 %v634, %v726
        %v8939 = vrot.slane %v8699, 4
        %v8940 = vadd.f32 %v8699, %v8939
        %v8941 = vrot.slane %v8940, 2
        %v8942 = vadd.f32 %v8940, %v8941
        %v8943 = vrot.slane %v8942, 1
        %v8944 = vadd.f32 %v8942, %v8943
        %v8945 = vrot.slane %v8700, 4
        %v8946 = vadd.f32 %v8700, %v8945
        %v8947 = vrot.slane %v8946, 2
        %v8948 = vadd.f32 %v8946, %v8947
        %v8949 = vrot.slane %v8948, 1
        %v8950 = vadd.f32 %v8948, %v8949
        %v8951 = vrot.slane %v8701, 4
        %v8952 = vadd.f32 %v8701, %v8951
        %v8953 = vrot.slane %v8952, 2
        %v8954 = vadd.f32 %v8952, %v8953
        %v8955 = vrot.slane %v8954, 1
        %v8956 = vadd.f32 %v8954, %v8955
        %v8957 = vrot.slane %v8702, 4
        %v8958 = vadd.f32 %v8702, %v8957
        %v8959 = vrot.slane %v8958, 2
        %v8960 = vadd.f32 %v8958, %v8959
        %v8961 = vrot.slane %v8960, 1
        %v8962 = vadd.f32 %v8960, %v8961
        %v8963 = vrot.slane %v8703, 4
        %v8964 = vadd.f32 %v8703, %v8963
        %v8965 = vrot.slane %v8964, 2
        %v8966 = vadd.f32 %v8964, %v8965
        %v8967 = vrot.slane %v8966, 1
        %v8968 = vadd.f32 %v8966, %v8967
        %v8969 = vrot.slane %v8704, 4
        %v8970 = vadd.f32 %v8704, %v8969
        %v8971 = vrot.slane %v8970, 2
        %v8972 = vadd.f32 %v8970, %v8971
        %v8973 = vrot.slane %v8972, 1
        %v8974 = vadd.f32 %v8972, %v8973
        %v8975 = vrot.slane %v8705, 4
        %v8976 = vadd.f32 %v8705, %v8975
        %v8977 = vrot.slane %v8976, 2
        %v8978 = vadd.f32 %v8976, %v8977
        %v8979 = vrot.slane %v8978, 1
        %v8980 = vadd.f32 %v8978, %v8979
        %v8981 = vrot.slane %v8706, 4
        %v8982 = vadd.f32 %v8706, %v8981
        %v8983 = vrot.slane %v8982, 2
        %v8984 = vadd.f32 %v8982, %v8983
        %v8985 = vrot.slane %v8984, 1
        %v8986 = vadd.f32 %v8984, %v8985
        %v8987 = vrot.slane %v8707, 4
        %v8988 = vadd.f32 %v8707, %v8987
        %v8989 = vrot.slane %v8988, 2
        %v8990 = vadd.f32 %v8988, %v8989
        %v8991 = vrot.slane %v8990, 1
        %v8992 = vadd.f32 %v8990, %v8991
        %v8993 = vrot.slane %v8708, 4
        %v8994 = vadd.f32 %v8708, %v8993
        %v8995 = vrot.slane %v8994, 2
        %v8996 = vadd.f32 %v8994, %v8995
        %v8997 = vrot.slane %v8996, 1
        %v8998 = vadd.f32 %v8996, %v8997
        %v8999 = vrot.slane %v8709, 4
        %v9000 = vadd.f32 %v8709, %v8999
        %v9001 = vrot.slane %v9000, 2
        %v9002 = vadd.f32 %v9000, %v9001
        %v9003 = vrot.slane %v9002, 1
        %v9004 = vadd.f32 %v9002, %v9003
        %v9005 = vrot.slane %v8710, 4
        %v9006 = vadd.f32 %v8710, %v9005
        %v9007 = vrot.slane %v9006, 2
        %v9008 = vadd.f32 %v9006, %v9007
        %v9009 = vrot.slane %v9008, 1
        %v9010 = vadd.f32 %v9008, %v9009
        %v9011 = vrot.slane %v8711, 4
        %v9012 = vadd.f32 %v8711, %v9011
        %v9013 = vrot.slane %v9012, 2
        %v9014 = vadd.f32 %v9012, %v9013
        %v9015 = vrot.slane %v9014, 1
        %v9016 = vadd.f32 %v9014, %v9015
        %v9017 = vrot.slane %v8712, 4
        %v9018 = vadd.f32 %v8712, %v9017
        %v9019 = vrot.slane %v9018, 2
        %v9020 = vadd.f32 %v9018, %v9019
        %v9021 = vrot.slane %v9020, 1
        %v9022 = vadd.f32 %v9020, %v9021
        %v9023 = vrot.slane %v8713, 4
        %v9024 = vadd.f32 %v8713, %v9023
        %v9025 = vrot.slane %v9024, 2
        %v9026 = vadd.f32 %v9024, %v9025
        %v9027 = vrot.slane %v9026, 1
        %v9028 = vadd.f32 %v9026, %v9027
        %v9029 = vrot.slane %v8714, 4
        %v9030 = vadd.f32 %v8714, %v9029
        %v9031 = vrot.slane %v9030, 2
        %v9032 = vadd.f32 %v9030, %v9031
        %v9033 = vrot.slane %v9032, 1
        %v9034 = vadd.f32 %v9032, %v9033
        %v9035 = vrot.slane %v8715, 4
        %v9036 = vadd.f32 %v8715, %v9035
        %v9037 = vrot.slane %v9036, 2
        %v9038 = vadd.f32 %v9036, %v9037
        %v9039 = vrot.slane %v9038, 1
        %v9040 = vadd.f32 %v9038, %v9039
        %v9041 = vrot.slane %v8716, 4
        %v9042 = vadd.f32 %v8716, %v9041
        %v9043 = vrot.slane %v9042, 2
        %v9044 = vadd.f32 %v9042, %v9043
        %v9045 = vrot.slane %v9044, 1
        %v9046 = vadd.f32 %v9044, %v9045
        %v9047 = vrot.slane %v8717, 4
        %v9048 = vadd.f32 %v8717, %v9047
        %v9049 = vrot.slane %v9048, 2
        %v9050 = vadd.f32 %v9048, %v9049
        %v9051 = vrot.slane %v9050, 1
        %v9052 = vadd.f32 %v9050, %v9051
        %v9053 = vrot.slane %v8718, 4
        %v9054 = vadd.f32 %v8718, %v9053
        %v9055 = vrot.slane %v9054, 2
        %v9056 = vadd.f32 %v9054, %v9055
        %v9057 = vrot.slane %v9056, 1
        %v9058 = vadd.f32 %v9056, %v9057
        %v9059 = vrot.slane %v8719, 4
        %v9060 = vadd.f32 %v8719, %v9059
        %v9061 = vrot.slane %v9060, 2
        %v9062 = vadd.f32 %v9060, %v9061
        %v9063 = vrot.slane %v9062, 1
        %v9064 = vadd.f32 %v9062, %v9063
        %v9065 = vrot.slane %v8720, 4
        %v9066 = vadd.f32 %v8720, %v9065
        %v9067 = vrot.slane %v9066, 2
        %v9068 = vadd.f32 %v9066, %v9067
        %v9069 = vrot.slane %v9068, 1
        %v9070 = vadd.f32 %v9068, %v9069
        %v9071 = vrot.slane %v8721, 4
        %v9072 = vadd.f32 %v8721, %v9071
        %v9073 = vrot.slane %v9072, 2
        %v9074 = vadd.f32 %v9072, %v9073
        %v9075 = vrot.slane %v9074, 1
        %v9076 = vadd.f32 %v9074, %v9075
        %v9077 = vrot.slane %v8722, 4
        %v9078 = vadd.f32 %v8722, %v9077
        %v9079 = vrot.slane %v9078, 2
        %v9080 = vadd.f32 %v9078, %v9079
        %v9081 = vrot.slane %v9080, 1
        %v9082 = vadd.f32 %v9080, %v9081
        %v9083 = vrot.slane %v8723, 4
        %v9084 = vadd.f32 %v8723, %v9083
        %v9085 = vrot.slane %v9084, 2
        %v9086 = vadd.f32 %v9084, %v9085
        %v9087 = vrot.slane %v9086, 1
        %v9088 = vadd.f32 %v9086, %v9087
        %v9089 = vrot.slane %v8724, 4
        %v9090 = vadd.f32 %v8724, %v9089
        %v9091 = vrot.slane %v9090, 2
        %v9092 = vadd.f32 %v9090, %v9091
        %v9093 = vrot.slane %v9092, 1
        %v9094 = vadd.f32 %v9092, %v9093
        %v9095 = vrot.slane %v8725, 4
        %v9096 = vadd.f32 %v8725, %v9095
        %v9097 = vrot.slane %v9096, 2
        %v9098 = vadd.f32 %v9096, %v9097
        %v9099 = vrot.slane %v9098, 1
        %v9100 = vadd.f32 %v9098, %v9099
        %v9101 = vrot.slane %v8726, 4
        %v9102 = vadd.f32 %v8726, %v9101
        %v9103 = vrot.slane %v9102, 2
        %v9104 = vadd.f32 %v9102, %v9103
        %v9105 = vrot.slane %v9104, 1
        %v9106 = vadd.f32 %v9104, %v9105
        %v9107 = vrot.slane %v8727, 4
        %v9108 = vadd.f32 %v8727, %v9107
        %v9109 = vrot.slane %v9108, 2
        %v9110 = vadd.f32 %v9108, %v9109
        %v9111 = vrot.slane %v9110, 1
        %v9112 = vadd.f32 %v9110, %v9111
        %v9113 = vrot.slane %v8728, 4
        %v9114 = vadd.f32 %v8728, %v9113
        %v9115 = vrot.slane %v9114, 2
        %v9116 = vadd.f32 %v9114, %v9115
        %v9117 = vrot.slane %v9116, 1
        %v9118 = vadd.f32 %v9116, %v9117
        %v9119 = vrot.slane %v8729, 4
        %v9120 = vadd.f32 %v8729, %v9119
        %v9121 = vrot.slane %v9120, 2
        %v9122 = vadd.f32 %v9120, %v9121
        %v9123 = vrot.slane %v9122, 1
        %v9124 = vadd.f32 %v9122, %v9123
        %v9125 = vrot.slane %v8730, 4
        %v9126 = vadd.f32 %v8730, %v9125
        %v9127 = vrot.slane %v9126, 2
        %v9128 = vadd.f32 %v9126, %v9127
        %v9129 = vrot.slane %v9128, 1
        %v9130 = vadd.f32 %v9128, %v9129
        %v9131 = vrot.slane %v8731, 4
        %v9132 = vadd.f32 %v8731, %v9131
        %v9133 = vrot.slane %v9132, 2
        %v9134 = vadd.f32 %v9132, %v9133
        %v9135 = vrot.slane %v9134, 1
        %v9136 = vadd.f32 %v9134, %v9135
        %v9137 = vrot.slane %v8732, 4
        %v9138 = vadd.f32 %v8732, %v9137
        %v9139 = vrot.slane %v9138, 2
        %v9140 = vadd.f32 %v9138, %v9139
        %v9141 = vrot.slane %v9140, 1
        %v9142 = vadd.f32 %v9140, %v9141
        %v9143 = vrot.slane %v8733, 4
        %v9144 = vadd.f32 %v8733, %v9143
        %v9145 = vrot.slane %v9144, 2
        %v9146 = vadd.f32 %v9144, %v9145
        %v9147 = vrot.slane %v9146, 1
        %v9148 = vadd.f32 %v9146, %v9147
        %v9149 = vrot.slane %v8734, 4
        %v9150 = vadd.f32 %v8734, %v9149
        %v9151 = vrot.slane %v9150, 2
        %v9152 = vadd.f32 %v9150, %v9151
        %v9153 = vrot.slane %v9152, 1
        %v9154 = vadd.f32 %v9152, %v9153
        %v9155 = vrot.slane %v8735, 4
        %v9156 = vadd.f32 %v8735, %v9155
        %v9157 = vrot.slane %v9156, 2
        %v9158 = vadd.f32 %v9156, %v9157
        %v9159 = vrot.slane %v9158, 1
        %v9160 = vadd.f32 %v9158, %v9159
        %v9161 = vrot.slane %v8736, 4
        %v9162 = vadd.f32 %v8736, %v9161
        %v9163 = vrot.slane %v9162, 2
        %v9164 = vadd.f32 %v9162, %v9163
        %v9165 = vrot.slane %v9164, 1
        %v9166 = vadd.f32 %v9164, %v9165
        %v9167 = vrot.slane %v8737, 4
        %v9168 = vadd.f32 %v8737, %v9167
        %v9169 = vrot.slane %v9168, 2
        %v9170 = vadd.f32 %v9168, %v9169
        %v9171 = vrot.slane %v9170, 1
        %v9172 = vadd.f32 %v9170, %v9171
        %v9173 = vrot.slane %v8738, 4
        %v9174 = vadd.f32 %v8738, %v9173
        %v9175 = vrot.slane %v9174, 2
        %v9176 = vadd.f32 %v9174, %v9175
        %v9177 = vrot.slane %v9176, 1
        %v9178 = vadd.f32 %v9176, %v9177
        %v9179 = vrot.slane %v8739, 4
        %v9180 = vadd.f32 %v8739, %v9179
        %v9181 = vrot.slane %v9180, 2
        %v9182 = vadd.f32 %v9180, %v9181
        %v9183 = vrot.slane %v9182, 1
        %v9184 = vadd.f32 %v9182, %v9183
        %v9185 = vrot.slane %v8740, 4
        %v9186 = vadd.f32 %v8740, %v9185
        %v9187 = vrot.slane %v9186, 2
        %v9188 = vadd.f32 %v9186, %v9187
        %v9189 = vrot.slane %v9188, 1
        %v9190 = vadd.f32 %v9188, %v9189
        %v9191 = vrot.slane %v8741, 4
        %v9192 = vadd.f32 %v8741, %v9191
        %v9193 = vrot.slane %v9192, 2
        %v9194 = vadd.f32 %v9192, %v9193
        %v9195 = vrot.slane %v9194, 1
        %v9196 = vadd.f32 %v9194, %v9195
        %v9197 = vrot.slane %v8742, 4
        %v9198 = vadd.f32 %v8742, %v9197
        %v9199 = vrot.slane %v9198, 2
        %v9200 = vadd.f32 %v9198, %v9199
        %v9201 = vrot.slane %v9200, 1
        %v9202 = vadd.f32 %v9200, %v9201
        %v9203 = vrot.slane %v8743, 4
        %v9204 = vadd.f32 %v8743, %v9203
        %v9205 = vrot.slane %v9204, 2
        %v9206 = vadd.f32 %v9204, %v9205
        %v9207 = vrot.slane %v9206, 1
        %v9208 = vadd.f32 %v9206, %v9207
        %v9209 = vrot.slane %v8744, 4
        %v9210 = vadd.f32 %v8744, %v9209
        %v9211 = vrot.slane %v9210, 2
        %v9212 = vadd.f32 %v9210, %v9211
        %v9213 = vrot.slane %v9212, 1
        %v9214 = vadd.f32 %v9212, %v9213
        %v9215 = vrot.slane %v8745, 4
        %v9216 = vadd.f32 %v8745, %v9215
        %v9217 = vrot.slane %v9216, 2
        %v9218 = vadd.f32 %v9216, %v9217
        %v9219 = vrot.slane %v9218, 1
        %v9220 = vadd.f32 %v9218, %v9219
        %v9221 = vrot.slane %v8746, 4
        %v9222 = vadd.f32 %v8746, %v9221
        %v9223 = vrot.slane %v9222, 2
        %v9224 = vadd.f32 %v9222, %v9223
        %v9225 = vrot.slane %v9224, 1
        %v9226 = vadd.f32 %v9224, %v9225
        %v9227 = vrot.slane %v8747, 4
        %v9228 = vadd.f32 %v8747, %v9227
        %v9229 = vrot.slane %v9228, 2
        %v9230 = vadd.f32 %v9228, %v9229
        %v9231 = vrot.slane %v9230, 1
        %v9232 = vadd.f32 %v9230, %v9231
        %v9233 = vrot.slane %v8748, 4
        %v9234 = vadd.f32 %v8748, %v9233
        %v9235 = vrot.slane %v9234, 2
        %v9236 = vadd.f32 %v9234, %v9235
        %v9237 = vrot.slane %v9236, 1
        %v9238 = vadd.f32 %v9236, %v9237
        %v9239 = vrot.slane %v8749, 4
        %v9240 = vadd.f32 %v8749, %v9239
        %v9241 = vrot.slane %v9240, 2
        %v9242 = vadd.f32 %v9240, %v9241
        %v9243 = vrot.slane %v9242, 1
        %v9244 = vadd.f32 %v9242, %v9243
        %v9245 = vrot.slane %v8750, 4
        %v9246 = vadd.f32 %v8750, %v9245
        %v9247 = vrot.slane %v9246, 2
        %v9248 = vadd.f32 %v9246, %v9247
        %v9249 = vrot.slane %v9248, 1
        %v9250 = vadd.f32 %v9248, %v9249
        %v9251 = vrot.slane %v8751, 4
        %v9252 = vadd.f32 %v8751, %v9251
        %v9253 = vrot.slane %v9252, 2
        %v9254 = vadd.f32 %v9252, %v9253
        %v9255 = vrot.slane %v9254, 1
        %v9256 = vadd.f32 %v9254, %v9255
        %v9257 = vrot.slane %v8752, 4
        %v9258 = vadd.f32 %v8752, %v9257
        %v9259 = vrot.slane %v9258, 2
        %v9260 = vadd.f32 %v9258, %v9259
        %v9261 = vrot.slane %v9260, 1
        %v9262 = vadd.f32 %v9260, %v9261
        %v9263 = vrot.slane %v8753, 4
        %v9264 = vadd.f32 %v8753, %v9263
        %v9265 = vrot.slane %v9264, 2
        %v9266 = vadd.f32 %v9264, %v9265
        %v9267 = vrot.slane %v9266, 1
        %v9268 = vadd.f32 %v9266, %v9267
        %v9269 = vrot.slane %v8754, 4
        %v9270 = vadd.f32 %v8754, %v9269
        %v9271 = vrot.slane %v9270, 2
        %v9272 = vadd.f32 %v9270, %v9271
        %v9273 = vrot.slane %v9272, 1
        %v9274 = vadd.f32 %v9272, %v9273
        %v9275 = vrot.slane %v8755, 4
        %v9276 = vadd.f32 %v8755, %v9275
        %v9277 = vrot.slane %v9276, 2
        %v9278 = vadd.f32 %v9276, %v9277
        %v9279 = vrot.slane %v9278, 1
        %v9280 = vadd.f32 %v9278, %v9279
        %v9281 = vrot.slane %v8756, 4
        %v9282 = vadd.f32 %v8756, %v9281
        %v9283 = vrot.slane %v9282, 2
        %v9284 = vadd.f32 %v9282, %v9283
        %v9285 = vrot.slane %v9284, 1
        %v9286 = vadd.f32 %v9284, %v9285
        %v9287 = vrot.slane %v8757, 4
        %v9288 = vadd.f32 %v8757, %v9287
        %v9289 = vrot.slane %v9288, 2
        %v9290 = vadd.f32 %v9288, %v9289
        %v9291 = vrot.slane %v9290, 1
        %v9292 = vadd.f32 %v9290, %v9291
        %v9293 = vrot.slane %v8758, 4
        %v9294 = vadd.f32 %v8758, %v9293
        %v9295 = vrot.slane %v9294, 2
        %v9296 = vadd.f32 %v9294, %v9295
        %v9297 = vrot.slane %v9296, 1
        %v9298 = vadd.f32 %v9296, %v9297
        %v9299 = vrot.slane %v8759, 4
        %v9300 = vadd.f32 %v8759, %v9299
        %v9301 = vrot.slane %v9300, 2
        %v9302 = vadd.f32 %v9300, %v9301
        %v9303 = vrot.slane %v9302, 1
        %v9304 = vadd.f32 %v9302, %v9303
        %v9305 = vrot.slane %v8760, 4
        %v9306 = vadd.f32 %v8760, %v9305
        %v9307 = vrot.slane %v9306, 2
        %v9308 = vadd.f32 %v9306, %v9307
        %v9309 = vrot.slane %v9308, 1
        %v9310 = vadd.f32 %v9308, %v9309
        %v9311 = vrot.slane %v8761, 4
        %v9312 = vadd.f32 %v8761, %v9311
        %v9313 = vrot.slane %v9312, 2
        %v9314 = vadd.f32 %v9312, %v9313
        %v9315 = vrot.slane %v9314, 1
        %v9316 = vadd.f32 %v9314, %v9315
        %v9317 = vrot.slane %v8762, 4
        %v9318 = vadd.f32 %v8762, %v9317
        %v9319 = vrot.slane %v9318, 2
        %v9320 = vadd.f32 %v9318, %v9319
        %v9321 = vrot.slane %v9320, 1
        %v9322 = vadd.f32 %v9320, %v9321
        %v9323 = vrot.slane %v8763, 4
        %v9324 = vadd.f32 %v8763, %v9323
        %v9325 = vrot.slane %v9324, 2
        %v9326 = vadd.f32 %v9324, %v9325
        %v9327 = vrot.slane %v9326, 1
        %v9328 = vadd.f32 %v9326, %v9327
        %v9329 = vrot.slane %v8764, 4
        %v9330 = vadd.f32 %v8764, %v9329
        %v9331 = vrot.slane %v9330, 2
        %v9332 = vadd.f32 %v9330, %v9331
        %v9333 = vrot.slane %v9332, 1
        %v9334 = vadd.f32 %v9332, %v9333
        %v9335 = vrot.slane %v8765, 4
        %v9336 = vadd.f32 %v8765, %v9335
        %v9337 = vrot.slane %v9336, 2
        %v9338 = vadd.f32 %v9336, %v9337
        %v9339 = vrot.slane %v9338, 1
        %v9340 = vadd.f32 %v9338, %v9339
        %v9341 = vrot.slane %v8766, 4
        %v9342 = vadd.f32 %v8766, %v9341
        %v9343 = vrot.slane %v9342, 2
        %v9344 = vadd.f32 %v9342, %v9343
        %v9345 = vrot.slane %v9344, 1
        %v9346 = vadd.f32 %v9344, %v9345
        %v9347 = vrot.slane %v8767, 4
        %v9348 = vadd.f32 %v8767, %v9347
        %v9349 = vrot.slane %v9348, 2
        %v9350 = vadd.f32 %v9348, %v9349
        %v9351 = vrot.slane %v9350, 1
        %v9352 = vadd.f32 %v9350, %v9351
        %v9353 = vrot.slane %v8768, 4
        %v9354 = vadd.f32 %v8768, %v9353
        %v9355 = vrot.slane %v9354, 2
        %v9356 = vadd.f32 %v9354, %v9355
        %v9357 = vrot.slane %v9356, 1
        %v9358 = vadd.f32 %v9356, %v9357
        %v9359 = vrot.slane %v8769, 4
        %v9360 = vadd.f32 %v8769, %v9359
        %v9361 = vrot.slane %v9360, 2
        %v9362 = vadd.f32 %v9360, %v9361
        %v9363 = vrot.slane %v9362, 1
        %v9364 = vadd.f32 %v9362, %v9363
        %v9365 = vrot.slane %v8770, 4
        %v9366 = vadd.f32 %v8770, %v9365
        %v9367 = vrot.slane %v9366, 2
        %v9368 = vadd.f32 %v9366, %v9367
        %v9369 = vrot.slane %v9368, 1
        %v9370 = vadd.f32 %v9368, %v9369
        %v9371 = vrot.slane %v8771, 4
        %v9372 = vadd.f32 %v8771, %v9371
        %v9373 = vrot.slane %v9372, 2
        %v9374 = vadd.f32 %v9372, %v9373
        %v9375 = vrot.slane %v9374, 1
        %v9376 = vadd.f32 %v9374, %v9375
        %v9377 = vrot.slane %v8772, 4
        %v9378 = vadd.f32 %v8772, %v9377
        %v9379 = vrot.slane %v9378, 2
        %v9380 = vadd.f32 %v9378, %v9379
        %v9381 = vrot.slane %v9380, 1
        %v9382 = vadd.f32 %v9380, %v9381
        %v9383 = vrot.slane %v8773, 4
        %v9384 = vadd.f32 %v8773, %v9383
        %v9385 = vrot.slane %v9384, 2
        %v9386 = vadd.f32 %v9384, %v9385
        %v9387 = vrot.slane %v9386, 1
        %v9388 = vadd.f32 %v9386, %v9387
        %v9389 = vrot.slane %v8774, 4
        %v9390 = vadd.f32 %v8774, %v9389
        %v9391 = vrot.slane %v9390, 2
        %v9392 = vadd.f32 %v9390, %v9391
        %v9393 = vrot.slane %v9392, 1
        %v9394 = vadd.f32 %v9392, %v9393
        %v9395 = vrot.slane %v8775, 4
        %v9396 = vadd.f32 %v8775, %v9395
        %v9397 = vrot.slane %v9396, 2
        %v9398 = vadd.f32 %v9396, %v9397
        %v9399 = vrot.slane %v9398, 1
        %v9400 = vadd.f32 %v9398, %v9399
        %v9401 = vrot.slane %v8776, 4
        %v9402 = vadd.f32 %v8776, %v9401
        %v9403 = vrot.slane %v9402, 2
        %v9404 = vadd.f32 %v9402, %v9403
        %v9405 = vrot.slane %v9404, 1
        %v9406 = vadd.f32 %v9404, %v9405
        %v9407 = vrot.slane %v8777, 4
        %v9408 = vadd.f32 %v8777, %v9407
        %v9409 = vrot.slane %v9408, 2
        %v9410 = vadd.f32 %v9408, %v9409
        %v9411 = vrot.slane %v9410, 1
        %v9412 = vadd.f32 %v9410, %v9411
        %v9413 = vrot.slane %v8778, 4
        %v9414 = vadd.f32 %v8778, %v9413
        %v9415 = vrot.slane %v9414, 2
        %v9416 = vadd.f32 %v9414, %v9415
        %v9417 = vrot.slane %v9416, 1
        %v9418 = vadd.f32 %v9416, %v9417
        %v9419 = vrot.slane %v8779, 4
        %v9420 = vadd.f32 %v8779, %v9419
        %v9421 = vrot.slane %v9420, 2
        %v9422 = vadd.f32 %v9420, %v9421
        %v9423 = vrot.slane %v9422, 1
        %v9424 = vadd.f32 %v9422, %v9423
        %v9425 = vrot.slane %v8780, 4
        %v9426 = vadd.f32 %v8780, %v9425
        %v9427 = vrot.slane %v9426, 2
        %v9428 = vadd.f32 %v9426, %v9427
        %v9429 = vrot.slane %v9428, 1
        %v9430 = vadd.f32 %v9428, %v9429
        %v9431 = vrot.slane %v8781, 4
        %v9432 = vadd.f32 %v8781, %v9431
        %v9433 = vrot.slane %v9432, 2
        %v9434 = vadd.f32 %v9432, %v9433
        %v9435 = vrot.slane %v9434, 1
        %v9436 = vadd.f32 %v9434, %v9435
        %v9437 = vrot.slane %v8782, 4
        %v9438 = vadd.f32 %v8782, %v9437
        %v9439 = vrot.slane %v9438, 2
        %v9440 = vadd.f32 %v9438, %v9439
        %v9441 = vrot.slane %v9440, 1
        %v9442 = vadd.f32 %v9440, %v9441
        %v9443 = vrot.slane %v8783, 4
        %v9444 = vadd.f32 %v8783, %v9443
        %v9445 = vrot.slane %v9444, 2
        %v9446 = vadd.f32 %v9444, %v9445
        %v9447 = vrot.slane %v9446, 1
        %v9448 = vadd.f32 %v9446, %v9447
        %v9449 = vrot.slane %v8784, 4
        %v9450 = vadd.f32 %v8784, %v9449
        %v9451 = vrot.slane %v9450, 2
        %v9452 = vadd.f32 %v9450, %v9451
        %v9453 = vrot.slane %v9452, 1
        %v9454 = vadd.f32 %v9452, %v9453
        %v9455 = vrot.slane %v8785, 4
        %v9456 = vadd.f32 %v8785, %v9455
        %v9457 = vrot.slane %v9456, 2
        %v9458 = vadd.f32 %v9456, %v9457
        %v9459 = vrot.slane %v9458, 1
        %v9460 = vadd.f32 %v9458, %v9459
        %v9461 = vrot.slane %v8786, 4
        %v9462 = vadd.f32 %v8786, %v9461
        %v9463 = vrot.slane %v9462, 2
        %v9464 = vadd.f32 %v9462, %v9463
        %v9465 = vrot.slane %v9464, 1
        %v9466 = vadd.f32 %v9464, %v9465
        %v9467 = vrot.slane %v8787, 4
        %v9468 = vadd.f32 %v8787, %v9467
        %v9469 = vrot.slane %v9468, 2
        %v9470 = vadd.f32 %v9468, %v9469
        %v9471 = vrot.slane %v9470, 1
        %v9472 = vadd.f32 %v9470, %v9471
        %v9473 = vrot.slane %v8788, 4
        %v9474 = vadd.f32 %v8788, %v9473
        %v9475 = vrot.slane %v9474, 2
        %v9476 = vadd.f32 %v9474, %v9475
        %v9477 = vrot.slane %v9476, 1
        %v9478 = vadd.f32 %v9476, %v9477
        %v9479 = vrot.slane %v8789, 4
        %v9480 = vadd.f32 %v8789, %v9479
        %v9481 = vrot.slane %v9480, 2
        %v9482 = vadd.f32 %v9480, %v9481
        %v9483 = vrot.slane %v9482, 1
        %v9484 = vadd.f32 %v9482, %v9483
        %v9485 = vrot.slane %v8790, 4
        %v9486 = vadd.f32 %v8790, %v9485
        %v9487 = vrot.slane %v9486, 2
        %v9488 = vadd.f32 %v9486, %v9487
        %v9489 = vrot.slane %v9488, 1
        %v9490 = vadd.f32 %v9488, %v9489
        %v9491 = vrot.slane %v8791, 4
        %v9492 = vadd.f32 %v8791, %v9491
        %v9493 = vrot.slane %v9492, 2
        %v9494 = vadd.f32 %v9492, %v9493
        %v9495 = vrot.slane %v9494, 1
        %v9496 = vadd.f32 %v9494, %v9495
        %v9497 = vrot.slane %v8792, 4
        %v9498 = vadd.f32 %v8792, %v9497
        %v9499 = vrot.slane %v9498, 2
        %v9500 = vadd.f32 %v9498, %v9499
        %v9501 = vrot.slane %v9500, 1
        %v9502 = vadd.f32 %v9500, %v9501
        %v9503 = vrot.slane %v8793, 4
        %v9504 = vadd.f32 %v8793, %v9503
        %v9505 = vrot.slane %v9504, 2
        %v9506 = vadd.f32 %v9504, %v9505
        %v9507 = vrot.slane %v9506, 1
        %v9508 = vadd.f32 %v9506, %v9507
        %v9509 = vrot.slane %v8794, 4
        %v9510 = vadd.f32 %v8794, %v9509
        %v9511 = vrot.slane %v9510, 2
        %v9512 = vadd.f32 %v9510, %v9511
        %v9513 = vrot.slane %v9512, 1
        %v9514 = vadd.f32 %v9512, %v9513
        %v9515 = vrot.slane %v8795, 4
        %v9516 = vadd.f32 %v8795, %v9515
        %v9517 = vrot.slane %v9516, 2
        %v9518 = vadd.f32 %v9516, %v9517
        %v9519 = vrot.slane %v9518, 1
        %v9520 = vadd.f32 %v9518, %v9519
        %v9521 = vrot.slane %v8796, 4
        %v9522 = vadd.f32 %v8796, %v9521
        %v9523 = vrot.slane %v9522, 2
        %v9524 = vadd.f32 %v9522, %v9523
        %v9525 = vrot.slane %v9524, 1
        %v9526 = vadd.f32 %v9524, %v9525
        %v9527 = vrot.slane %v8797, 4
        %v9528 = vadd.f32 %v8797, %v9527
        %v9529 = vrot.slane %v9528, 2
        %v9530 = vadd.f32 %v9528, %v9529
        %v9531 = vrot.slane %v9530, 1
        %v9532 = vadd.f32 %v9530, %v9531
        %v9533 = vrot.slane %v8798, 4
        %v9534 = vadd.f32 %v8798, %v9533
        %v9535 = vrot.slane %v9534, 2
        %v9536 = vadd.f32 %v9534, %v9535
        %v9537 = vrot.slane %v9536, 1
        %v9538 = vadd.f32 %v9536, %v9537
        %v9539 = vrot.slane %v8799, 4
        %v9540 = vadd.f32 %v8799, %v9539
        %v9541 = vrot.slane %v9540, 2
        %v9542 = vadd.f32 %v9540, %v9541
        %v9543 = vrot.slane %v9542, 1
        %v9544 = vadd.f32 %v9542, %v9543
        %v9545 = vrot.slane %v8800, 4
        %v9546 = vadd.f32 %v8800, %v9545
        %v9547 = vrot.slane %v9546, 2
        %v9548 = vadd.f32 %v9546, %v9547
        %v9549 = vrot.slane %v9548, 1
        %v9550 = vadd.f32 %v9548, %v9549
        %v9551 = vrot.slane %v8801, 4
        %v9552 = vadd.f32 %v8801, %v9551
        %v9553 = vrot.slane %v9552, 2
        %v9554 = vadd.f32 %v9552, %v9553
        %v9555 = vrot.slane %v9554, 1
        %v9556 = vadd.f32 %v9554, %v9555
        %v9557 = vrot.slane %v8802, 4
        %v9558 = vadd.f32 %v8802, %v9557
        %v9559 = vrot.slane %v9558, 2
        %v9560 = vadd.f32 %v9558, %v9559
        %v9561 = vrot.slane %v9560, 1
        %v9562 = vadd.f32 %v9560, %v9561
        %v9563 = vrot.slane %v8803, 4
        %v9564 = vadd.f32 %v8803, %v9563
        %v9565 = vrot.slane %v9564, 2
        %v9566 = vadd.f32 %v9564, %v9565
        %v9567 = vrot.slane %v9566, 1
        %v9568 = vadd.f32 %v9566, %v9567
        %v9569 = vrot.slane %v8804, 4
        %v9570 = vadd.f32 %v8804, %v9569
        %v9571 = vrot.slane %v9570, 2
        %v9572 = vadd.f32 %v9570, %v9571
        %v9573 = vrot.slane %v9572, 1
        %v9574 = vadd.f32 %v9572, %v9573
        %v9575 = vrot.slane %v8805, 4
        %v9576 = vadd.f32 %v8805, %v9575
        %v9577 = vrot.slane %v9576, 2
        %v9578 = vadd.f32 %v9576, %v9577
        %v9579 = vrot.slane %v9578, 1
        %v9580 = vadd.f32 %v9578, %v9579
        %v9581 = vrot.slane %v8806, 4
        %v9582 = vadd.f32 %v8806, %v9581
        %v9583 = vrot.slane %v9582, 2
        %v9584 = vadd.f32 %v9582, %v9583
        %v9585 = vrot.slane %v9584, 1
        %v9586 = vadd.f32 %v9584, %v9585
        %v9587 = vrot.slane %v8807, 4
        %v9588 = vadd.f32 %v8807, %v9587
        %v9589 = vrot.slane %v9588, 2
        %v9590 = vadd.f32 %v9588, %v9589
        %v9591 = vrot.slane %v9590, 1
        %v9592 = vadd.f32 %v9590, %v9591
        %v9593 = vrot.slane %v8808, 4
        %v9594 = vadd.f32 %v8808, %v9593
        %v9595 = vrot.slane %v9594, 2
        %v9596 = vadd.f32 %v9594, %v9595
        %v9597 = vrot.slane %v9596, 1
        %v9598 = vadd.f32 %v9596, %v9597
        %v9599 = vrot.slane %v8809, 4
        %v9600 = vadd.f32 %v8809, %v9599
        %v9601 = vrot.slane %v9600, 2
        %v9602 = vadd.f32 %v9600, %v9601
        %v9603 = vrot.slane %v9602, 1
        %v9604 = vadd.f32 %v9602, %v9603
        %v9605 = vrot.slane %v8810, 4
        %v9606 = vadd.f32 %v8810, %v9605
        %v9607 = vrot.slane %v9606, 2
        %v9608 = vadd.f32 %v9606, %v9607
        %v9609 = vrot.slane %v9608, 1
        %v9610 = vadd.f32 %v9608, %v9609
        %v9611 = vrot.slane %v8811, 4
        %v9612 = vadd.f32 %v8811, %v9611
        %v9613 = vrot.slane %v9612, 2
        %v9614 = vadd.f32 %v9612, %v9613
        %v9615 = vrot.slane %v9614, 1
        %v9616 = vadd.f32 %v9614, %v9615
        %v9617 = vrot.slane %v8812, 4
        %v9618 = vadd.f32 %v8812, %v9617
        %v9619 = vrot.slane %v9618, 2
        %v9620 = vadd.f32 %v9618, %v9619
        %v9621 = vrot.slane %v9620, 1
        %v9622 = vadd.f32 %v9620, %v9621
        %v9623 = vrot.slane %v8813, 4
        %v9624 = vadd.f32 %v8813, %v9623
        %v9625 = vrot.slane %v9624, 2
        %v9626 = vadd.f32 %v9624, %v9625
        %v9627 = vrot.slane %v9626, 1
        %v9628 = vadd.f32 %v9626, %v9627
        %v9629 = vrot.slane %v8814, 4
        %v9630 = vadd.f32 %v8814, %v9629
        %v9631 = vrot.slane %v9630, 2
        %v9632 = vadd.f32 %v9630, %v9631
        %v9633 = vrot.slane %v9632, 1
        %v9634 = vadd.f32 %v9632, %v9633
        %v9635 = vrot.slane %v8815, 4
        %v9636 = vadd.f32 %v8815, %v9635
        %v9637 = vrot.slane %v9636, 2
        %v9638 = vadd.f32 %v9636, %v9637
        %v9639 = vrot.slane %v9638, 1
        %v9640 = vadd.f32 %v9638, %v9639
        %v9641 = vrot.slane %v8816, 4
        %v9642 = vadd.f32 %v8816, %v9641
        %v9643 = vrot.slane %v9642, 2
        %v9644 = vadd.f32 %v9642, %v9643
        %v9645 = vrot.slane %v9644, 1
        %v9646 = vadd.f32 %v9644, %v9645
        %v9647 = vrot.slane %v8817, 4
        %v9648 = vadd.f32 %v8817, %v9647
        %v9649 = vrot.slane %v9648, 2
        %v9650 = vadd.f32 %v9648, %v9649
        %v9651 = vrot.slane %v9650, 1
        %v9652 = vadd.f32 %v9650, %v9651
        %v9653 = vrot.slane %v8818, 4
        %v9654 = vadd.f32 %v8818, %v9653
        %v9655 = vrot.slane %v9654, 2
        %v9656 = vadd.f32 %v9654, %v9655
        %v9657 = vrot.slane %v9656, 1
        %v9658 = vadd.f32 %v9656, %v9657
        %v9659 = vrot.slane %v8819, 4
        %v9660 = vadd.f32 %v8819, %v9659
        %v9661 = vrot.slane %v9660, 2
        %v9662 = vadd.f32 %v9660, %v9661
        %v9663 = vrot.slane %v9662, 1
        %v9664 = vadd.f32 %v9662, %v9663
        %v9665 = vrot.slane %v8820, 4
        %v9666 = vadd.f32 %v8820, %v9665
        %v9667 = vrot.slane %v9666, 2
        %v9668 = vadd.f32 %v9666, %v9667
        %v9669 = vrot.slane %v9668, 1
        %v9670 = vadd.f32 %v9668, %v9669
        %v9671 = vrot.slane %v8821, 4
        %v9672 = vadd.f32 %v8821, %v9671
        %v9673 = vrot.slane %v9672, 2
        %v9674 = vadd.f32 %v9672, %v9673
        %v9675 = vrot.slane %v9674, 1
        %v9676 = vadd.f32 %v9674, %v9675
        %v9677 = vrot.slane %v8822, 4
        %v9678 = vadd.f32 %v8822, %v9677
        %v9679 = vrot.slane %v9678, 2
        %v9680 = vadd.f32 %v9678, %v9679
        %v9681 = vrot.slane %v9680, 1
        %v9682 = vadd.f32 %v9680, %v9681
        %v9683 = vrot.slane %v8823, 4
        %v9684 = vadd.f32 %v8823, %v9683
        %v9685 = vrot.slane %v9684, 2
        %v9686 = vadd.f32 %v9684, %v9685
        %v9687 = vrot.slane %v9686, 1
        %v9688 = vadd.f32 %v9686, %v9687
        %v9689 = vrot.slane %v8824, 4
        %v9690 = vadd.f32 %v8824, %v9689
        %v9691 = vrot.slane %v9690, 2
        %v9692 = vadd.f32 %v9690, %v9691
        %v9693 = vrot.slane %v9692, 1
        %v9694 = vadd.f32 %v9692, %v9693
        %v9695 = vrot.slane %v8825, 4
        %v9696 = vadd.f32 %v8825, %v9695
        %v9697 = vrot.slane %v9696, 2
        %v9698 = vadd.f32 %v9696, %v9697
        %v9699 = vrot.slane %v9698, 1
        %v9700 = vadd.f32 %v9698, %v9699
        %v9701 = vrot.slane %v8826, 4
        %v9702 = vadd.f32 %v8826, %v9701
        %v9703 = vrot.slane %v9702, 2
        %v9704 = vadd.f32 %v9702, %v9703
        %v9705 = vrot.slane %v9704, 1
        %v9706 = vadd.f32 %v9704, %v9705
        %v9707 = vrot.slane %v8827, 4
        %v9708 = vadd.f32 %v8827, %v9707
        %v9709 = vrot.slane %v9708, 2
        %v9710 = vadd.f32 %v9708, %v9709
        %v9711 = vrot.slane %v9710, 1
        %v9712 = vadd.f32 %v9710, %v9711
        %v9713 = vrot.slane %v8828, 4
        %v9714 = vadd.f32 %v8828, %v9713
        %v9715 = vrot.slane %v9714, 2
        %v9716 = vadd.f32 %v9714, %v9715
        %v9717 = vrot.slane %v9716, 1
        %v9718 = vadd.f32 %v9716, %v9717
        %v9719 = vrot.slane %v8829, 4
        %v9720 = vadd.f32 %v8829, %v9719
        %v9721 = vrot.slane %v9720, 2
        %v9722 = vadd.f32 %v9720, %v9721
        %v9723 = vrot.slane %v9722, 1
        %v9724 = vadd.f32 %v9722, %v9723
        %v9725 = vrot.slane %v8830, 4
        %v9726 = vadd.f32 %v8830, %v9725
        %v9727 = vrot.slane %v9726, 2
        %v9728 = vadd.f32 %v9726, %v9727
        %v9729 = vrot.slane %v9728, 1
        %v9730 = vadd.f32 %v9728, %v9729
        %v9731 = vrot.slane %v8831, 4
        %v9732 = vadd.f32 %v8831, %v9731
        %v9733 = vrot.slane %v9732, 2
        %v9734 = vadd.f32 %v9732, %v9733
        %v9735 = vrot.slane %v9734, 1
        %v9736 = vadd.f32 %v9734, %v9735
        %v9737 = vrot.slane %v8832, 4
        %v9738 = vadd.f32 %v8832, %v9737
        %v9739 = vrot.slane %v9738, 2
        %v9740 = vadd.f32 %v9738, %v9739
        %v9741 = vrot.slane %v9740, 1
        %v9742 = vadd.f32 %v9740, %v9741
        %v9743 = vrot.slane %v8833, 4
        %v9744 = vadd.f32 %v8833, %v9743
        %v9745 = vrot.slane %v9744, 2
        %v9746 = vadd.f32 %v9744, %v9745
        %v9747 = vrot.slane %v9746, 1
        %v9748 = vadd.f32 %v9746, %v9747
        %v9749 = vrot.slane %v8834, 4
        %v9750 = vadd.f32 %v8834, %v9749
        %v9751 = vrot.slane %v9750, 2
        %v9752 = vadd.f32 %v9750, %v9751
        %v9753 = vrot.slane %v9752, 1
        %v9754 = vadd.f32 %v9752, %v9753
        %v9755 = vrot.slane %v8835, 4
        %v9756 = vadd.f32 %v8835, %v9755
        %v9757 = vrot.slane %v9756, 2
        %v9758 = vadd.f32 %v9756, %v9757
        %v9759 = vrot.slane %v9758, 1
        %v9760 = vadd.f32 %v9758, %v9759
        %v9761 = vrot.slane %v8836, 4
        %v9762 = vadd.f32 %v8836, %v9761
        %v9763 = vrot.slane %v9762, 2
        %v9764 = vadd.f32 %v9762, %v9763
        %v9765 = vrot.slane %v9764, 1
        %v9766 = vadd.f32 %v9764, %v9765
        %v9767 = vrot.slane %v8837, 4
        %v9768 = vadd.f32 %v8837, %v9767
        %v9769 = vrot.slane %v9768, 2
        %v9770 = vadd.f32 %v9768, %v9769
        %v9771 = vrot.slane %v9770, 1
        %v9772 = vadd.f32 %v9770, %v9771
        %v9773 = vrot.slane %v8838, 4
        %v9774 = vadd.f32 %v8838, %v9773
        %v9775 = vrot.slane %v9774, 2
        %v9776 = vadd.f32 %v9774, %v9775
        %v9777 = vrot.slane %v9776, 1
        %v9778 = vadd.f32 %v9776, %v9777
        %v9779 = vrot.slane %v8839, 4
        %v9780 = vadd.f32 %v8839, %v9779
        %v9781 = vrot.slane %v9780, 2
        %v9782 = vadd.f32 %v9780, %v9781
        %v9783 = vrot.slane %v9782, 1
        %v9784 = vadd.f32 %v9782, %v9783
        %v9785 = vrot.slane %v8840, 4
        %v9786 = vadd.f32 %v8840, %v9785
        %v9787 = vrot.slane %v9786, 2
        %v9788 = vadd.f32 %v9786, %v9787
        %v9789 = vrot.slane %v9788, 1
        %v9790 = vadd.f32 %v9788, %v9789
        %v9791 = vrot.slane %v8841, 4
        %v9792 = vadd.f32 %v8841, %v9791
        %v9793 = vrot.slane %v9792, 2
        %v9794 = vadd.f32 %v9792, %v9793
        %v9795 = vrot.slane %v9794, 1
        %v9796 = vadd.f32 %v9794, %v9795
        %v9797 = vrot.slane %v8842, 4
        %v9798 = vadd.f32 %v8842, %v9797
        %v9799 = vrot.slane %v9798, 2
        %v9800 = vadd.f32 %v9798, %v9799
        %v9801 = vrot.slane %v9800, 1
        %v9802 = vadd.f32 %v9800, %v9801
        %v9803 = vrot.slane %v8843, 4
        %v9804 = vadd.f32 %v8843, %v9803
        %v9805 = vrot.slane %v9804, 2
        %v9806 = vadd.f32 %v9804, %v9805
        %v9807 = vrot.slane %v9806, 1
        %v9808 = vadd.f32 %v9806, %v9807
        %v9809 = vrot.slane %v8844, 4
        %v9810 = vadd.f32 %v8844, %v9809
        %v9811 = vrot.slane %v9810, 2
        %v9812 = vadd.f32 %v9810, %v9811
        %v9813 = vrot.slane %v9812, 1
        %v9814 = vadd.f32 %v9812, %v9813
        %v9815 = vrot.slane %v8845, 4
        %v9816 = vadd.f32 %v8845, %v9815
        %v9817 = vrot.slane %v9816, 2
        %v9818 = vadd.f32 %v9816, %v9817
        %v9819 = vrot.slane %v9818, 1
        %v9820 = vadd.f32 %v9818, %v9819
        %v9821 = vrot.slane %v8846, 4
        %v9822 = vadd.f32 %v8846, %v9821
        %v9823 = vrot.slane %v9822, 2
        %v9824 = vadd.f32 %v9822, %v9823
        %v9825 = vrot.slane %v9824, 1
        %v9826 = vadd.f32 %v9824, %v9825
        %v9827 = vrot.slane %v8847, 4
        %v9828 = vadd.f32 %v8847, %v9827
        %v9829 = vrot.slane %v9828, 2
        %v9830 = vadd.f32 %v9828, %v9829
        %v9831 = vrot.slane %v9830, 1
        %v9832 = vadd.f32 %v9830, %v9831
        %v9833 = vrot.slane %v8848, 4
        %v9834 = vadd.f32 %v8848, %v9833
        %v9835 = vrot.slane %v9834, 2
        %v9836 = vadd.f32 %v9834, %v9835
        %v9837 = vrot.slane %v9836, 1
        %v9838 = vadd.f32 %v9836, %v9837
        %v9839 = vrot.slane %v8849, 4
        %v9840 = vadd.f32 %v8849, %v9839
        %v9841 = vrot.slane %v9840, 2
        %v9842 = vadd.f32 %v9840, %v9841
        %v9843 = vrot.slane %v9842, 1
        %v9844 = vadd.f32 %v9842, %v9843
        %v9845 = vrot.slane %v8850, 4
        %v9846 = vadd.f32 %v8850, %v9845
        %v9847 = vrot.slane %v9846, 2
        %v9848 = vadd.f32 %v9846, %v9847
        %v9849 = vrot.slane %v9848, 1
        %v9850 = vadd.f32 %v9848, %v9849
        %v9851 = vrot.slane %v8851, 4
        %v9852 = vadd.f32 %v8851, %v9851
        %v9853 = vrot.slane %v9852, 2
        %v9854 = vadd.f32 %v9852, %v9853
        %v9855 = vrot.slane %v9854, 1
        %v9856 = vadd.f32 %v9854, %v9855
        %v9857 = vrot.slane %v8852, 4
        %v9858 = vadd.f32 %v8852, %v9857
        %v9859 = vrot.slane %v9858, 2
        %v9860 = vadd.f32 %v9858, %v9859
        %v9861 = vrot.slane %v9860, 1
        %v9862 = vadd.f32 %v9860, %v9861
        %v9863 = vrot.slane %v8853, 4
        %v9864 = vadd.f32 %v8853, %v9863
        %v9865 = vrot.slane %v9864, 2
        %v9866 = vadd.f32 %v9864, %v9865
        %v9867 = vrot.slane %v9866, 1
        %v9868 = vadd.f32 %v9866, %v9867
        %v9869 = vrot.slane %v8854, 4
        %v9870 = vadd.f32 %v8854, %v9869
        %v9871 = vrot.slane %v9870, 2
        %v9872 = vadd.f32 %v9870, %v9871
        %v9873 = vrot.slane %v9872, 1
        %v9874 = vadd.f32 %v9872, %v9873
        %v9875 = vrot.slane %v8855, 4
        %v9876 = vadd.f32 %v8855, %v9875
        %v9877 = vrot.slane %v9876, 2
        %v9878 = vadd.f32 %v9876, %v9877
        %v9879 = vrot.slane %v9878, 1
        %v9880 = vadd.f32 %v9878, %v9879
        %v9881 = vrot.slane %v8856, 4
        %v9882 = vadd.f32 %v8856, %v9881
        %v9883 = vrot.slane %v9882, 2
        %v9884 = vadd.f32 %v9882, %v9883
        %v9885 = vrot.slane %v9884, 1
        %v9886 = vadd.f32 %v9884, %v9885
        %v9887 = vrot.slane %v8857, 4
        %v9888 = vadd.f32 %v8857, %v9887
        %v9889 = vrot.slane %v9888, 2
        %v9890 = vadd.f32 %v9888, %v9889
        %v9891 = vrot.slane %v9890, 1
        %v9892 = vadd.f32 %v9890, %v9891
        %v9893 = vrot.slane %v8858, 4
        %v9894 = vadd.f32 %v8858, %v9893
        %v9895 = vrot.slane %v9894, 2
        %v9896 = vadd.f32 %v9894, %v9895
        %v9897 = vrot.slane %v9896, 1
        %v9898 = vadd.f32 %v9896, %v9897
        %v9899 = vrot.slane %v8859, 4
        %v9900 = vadd.f32 %v8859, %v9899
        %v9901 = vrot.slane %v9900, 2
        %v9902 = vadd.f32 %v9900, %v9901
        %v9903 = vrot.slane %v9902, 1
        %v9904 = vadd.f32 %v9902, %v9903
        %v9905 = vrot.slane %v8860, 4
        %v9906 = vadd.f32 %v8860, %v9905
        %v9907 = vrot.slane %v9906, 2
        %v9908 = vadd.f32 %v9906, %v9907
        %v9909 = vrot.slane %v9908, 1
        %v9910 = vadd.f32 %v9908, %v9909
        %v9911 = vrot.slane %v8861, 4
        %v9912 = vadd.f32 %v8861, %v9911
        %v9913 = vrot.slane %v9912, 2
        %v9914 = vadd.f32 %v9912, %v9913
        %v9915 = vrot.slane %v9914, 1
        %v9916 = vadd.f32 %v9914, %v9915
        %v9917 = vrot.slane %v8862, 4
        %v9918 = vadd.f32 %v8862, %v9917
        %v9919 = vrot.slane %v9918, 2
        %v9920 = vadd.f32 %v9918, %v9919
        %v9921 = vrot.slane %v9920, 1
        %v9922 = vadd.f32 %v9920, %v9921
        %v9923 = vrot.slane %v8863, 4
        %v9924 = vadd.f32 %v8863, %v9923
        %v9925 = vrot.slane %v9924, 2
        %v9926 = vadd.f32 %v9924, %v9925
        %v9927 = vrot.slane %v9926, 1
        %v9928 = vadd.f32 %v9926, %v9927
        %v9929 = vrot.slane %v8864, 4
        %v9930 = vadd.f32 %v8864, %v9929
        %v9931 = vrot.slane %v9930, 2
        %v9932 = vadd.f32 %v9930, %v9931
        %v9933 = vrot.slane %v9932, 1
        %v9934 = vadd.f32 %v9932, %v9933
        %v9935 = vrot.slane %v8865, 4
        %v9936 = vadd.f32 %v8865, %v9935
        %v9937 = vrot.slane %v9936, 2
        %v9938 = vadd.f32 %v9936, %v9937
        %v9939 = vrot.slane %v9938, 1
        %v9940 = vadd.f32 %v9938, %v9939
        %v9941 = vrot.slane %v8866, 4
        %v9942 = vadd.f32 %v8866, %v9941
        %v9943 = vrot.slane %v9942, 2
        %v9944 = vadd.f32 %v9942, %v9943
        %v9945 = vrot.slane %v9944, 1
        %v9946 = vadd.f32 %v9944, %v9945
        %v9947 = vrot.slane %v8867, 4
        %v9948 = vadd.f32 %v8867, %v9947
        %v9949 = vrot.slane %v9948, 2
        %v9950 = vadd.f32 %v9948, %v9949
        %v9951 = vrot.slane %v9950, 1
        %v9952 = vadd.f32 %v9950, %v9951
        %v9953 = vrot.slane %v8868, 4
        %v9954 = vadd.f32 %v8868, %v9953
        %v9955 = vrot.slane %v9954, 2
        %v9956 = vadd.f32 %v9954, %v9955
        %v9957 = vrot.slane %v9956, 1
        %v9958 = vadd.f32 %v9956, %v9957
        %v9959 = vrot.slane %v8869, 4
        %v9960 = vadd.f32 %v8869, %v9959
        %v9961 = vrot.slane %v9960, 2
        %v9962 = vadd.f32 %v9960, %v9961
        %v9963 = vrot.slane %v9962, 1
        %v9964 = vadd.f32 %v9962, %v9963
        %v9965 = vrot.slane %v8870, 4
        %v9966 = vadd.f32 %v8870, %v9965
        %v9967 = vrot.slane %v9966, 2
        %v9968 = vadd.f32 %v9966, %v9967
        %v9969 = vrot.slane %v9968, 1
        %v9970 = vadd.f32 %v9968, %v9969
        %v9971 = vrot.slane %v8871, 4
        %v9972 = vadd.f32 %v8871, %v9971
        %v9973 = vrot.slane %v9972, 2
        %v9974 = vadd.f32 %v9972, %v9973
        %v9975 = vrot.slane %v9974, 1
        %v9976 = vadd.f32 %v9974, %v9975
        %v9977 = vrot.slane %v8872, 4
        %v9978 = vadd.f32 %v8872, %v9977
        %v9979 = vrot.slane %v9978, 2
        %v9980 = vadd.f32 %v9978, %v9979
        %v9981 = vrot.slane %v9980, 1
        %v9982 = vadd.f32 %v9980, %v9981
        %v9983 = vrot.slane %v8873, 4
        %v9984 = vadd.f32 %v8873, %v9983
        %v9985 = vrot.slane %v9984, 2
        %v9986 = vadd.f32 %v9984, %v9985
        %v9987 = vrot.slane %v9986, 1
        %v9988 = vadd.f32 %v9986, %v9987
        %v9989 = vrot.slane %v8874, 4
        %v9990 = vadd.f32 %v8874, %v9989
        %v9991 = vrot.slane %v9990, 2
        %v9992 = vadd.f32 %v9990, %v9991
        %v9993 = vrot.slane %v9992, 1
        %v9994 = vadd.f32 %v9992, %v9993
        %v9995 = vrot.slane %v8875, 4
        %v9996 = vadd.f32 %v8875, %v9995
        %v9997 = vrot.slane %v9996, 2
        %v9998 = vadd.f32 %v9996, %v9997
        %v9999 = vrot.slane %v9998, 1
        %v10000 = vadd.f32 %v9998, %v9999
        %v10001 = vrot.slane %v8876, 4
        %v10002 = vadd.f32 %v8876, %v10001
        %v10003 = vrot.slane %v10002, 2
        %v10004 = vadd.f32 %v10002, %v10003
        %v10005 = vrot.slane %v10004, 1
        %v10006 = vadd.f32 %v10004, %v10005
        %v10007 = vrot.slane %v8877, 4
        %v10008 = vadd.f32 %v8877, %v10007
        %v10009 = vrot.slane %v10008, 2
        %v10010 = vadd.f32 %v10008, %v10009
        %v10011 = vrot.slane %v10010, 1
        %v10012 = vadd.f32 %v10010, %v10011
        %v10013 = vrot.slane %v8878, 4
        %v10014 = vadd.f32 %v8878, %v10013
        %v10015 = vrot.slane %v10014, 2
        %v10016 = vadd.f32 %v10014, %v10015
        %v10017 = vrot.slane %v10016, 1
        %v10018 = vadd.f32 %v10016, %v10017
        %v10019 = vrot.slane %v8879, 4
        %v10020 = vadd.f32 %v8879, %v10019
        %v10021 = vrot.slane %v10020, 2
        %v10022 = vadd.f32 %v10020, %v10021
        %v10023 = vrot.slane %v10022, 1
        %v10024 = vadd.f32 %v10022, %v10023
        %v10025 = vrot.slane %v8880, 4
        %v10026 = vadd.f32 %v8880, %v10025
        %v10027 = vrot.slane %v10026, 2
        %v10028 = vadd.f32 %v10026, %v10027
        %v10029 = vrot.slane %v10028, 1
        %v10030 = vadd.f32 %v10028, %v10029
        %v10031 = vrot.slane %v8881, 4
        %v10032 = vadd.f32 %v8881, %v10031
        %v10033 = vrot.slane %v10032, 2
        %v10034 = vadd.f32 %v10032, %v10033
        %v10035 = vrot.slane %v10034, 1
        %v10036 = vadd.f32 %v10034, %v10035
        %v10037 = vrot.slane %v8882, 4
        %v10038 = vadd.f32 %v8882, %v10037
        %v10039 = vrot.slane %v10038, 2
        %v10040 = vadd.f32 %v10038, %v10039
        %v10041 = vrot.slane %v10040, 1
        %v10042 = vadd.f32 %v10040, %v10041
        %v10043 = vrot.slane %v8883, 4
        %v10044 = vadd.f32 %v8883, %v10043
        %v10045 = vrot.slane %v10044, 2
        %v10046 = vadd.f32 %v10044, %v10045
        %v10047 = vrot.slane %v10046, 1
        %v10048 = vadd.f32 %v10046, %v10047
        %v10049 = vrot.slane %v8884, 4
        %v10050 = vadd.f32 %v8884, %v10049
        %v10051 = vrot.slane %v10050, 2
        %v10052 = vadd.f32 %v10050, %v10051
        %v10053 = vrot.slane %v10052, 1
        %v10054 = vadd.f32 %v10052, %v10053
        %v10055 = vrot.slane %v8885, 4
        %v10056 = vadd.f32 %v8885, %v10055
        %v10057 = vrot.slane %v10056, 2
        %v10058 = vadd.f32 %v10056, %v10057
        %v10059 = vrot.slane %v10058, 1
        %v10060 = vadd.f32 %v10058, %v10059
        %v10061 = vrot.slane %v8886, 4
        %v10062 = vadd.f32 %v8886, %v10061
        %v10063 = vrot.slane %v10062, 2
        %v10064 = vadd.f32 %v10062, %v10063
        %v10065 = vrot.slane %v10064, 1
        %v10066 = vadd.f32 %v10064, %v10065
        %v10067 = vrot.slane %v8887, 4
        %v10068 = vadd.f32 %v8887, %v10067
        %v10069 = vrot.slane %v10068, 2
        %v10070 = vadd.f32 %v10068, %v10069
        %v10071 = vrot.slane %v10070, 1
        %v10072 = vadd.f32 %v10070, %v10071
        %v10073 = vrot.slane %v8888, 4
        %v10074 = vadd.f32 %v8888, %v10073
        %v10075 = vrot.slane %v10074, 2
        %v10076 = vadd.f32 %v10074, %v10075
        %v10077 = vrot.slane %v10076, 1
        %v10078 = vadd.f32 %v10076, %v10077
        %v10079 = vrot.slane %v8889, 4
        %v10080 = vadd.f32 %v8889, %v10079
        %v10081 = vrot.slane %v10080, 2
        %v10082 = vadd.f32 %v10080, %v10081
        %v10083 = vrot.slane %v10082, 1
        %v10084 = vadd.f32 %v10082, %v10083
        %v10085 = vrot.slane %v8890, 4
        %v10086 = vadd.f32 %v8890, %v10085
        %v10087 = vrot.slane %v10086, 2
        %v10088 = vadd.f32 %v10086, %v10087
        %v10089 = vrot.slane %v10088, 1
        %v10090 = vadd.f32 %v10088, %v10089
        %v10091 = vrot.slane %v8891, 4
        %v10092 = vadd.f32 %v8891, %v10091
        %v10093 = vrot.slane %v10092, 2
        %v10094 = vadd.f32 %v10092, %v10093
        %v10095 = vrot.slane %v10094, 1
        %v10096 = vadd.f32 %v10094, %v10095
        %v10097 = vrot.slane %v8892, 4
        %v10098 = vadd.f32 %v8892, %v10097
        %v10099 = vrot.slane %v10098, 2
        %v10100 = vadd.f32 %v10098, %v10099
        %v10101 = vrot.slane %v10100, 1
        %v10102 = vadd.f32 %v10100, %v10101
        %v10103 = vrot.slane %v8893, 4
        %v10104 = vadd.f32 %v8893, %v10103
        %v10105 = vrot.slane %v10104, 2
        %v10106 = vadd.f32 %v10104, %v10105
        %v10107 = vrot.slane %v10106, 1
        %v10108 = vadd.f32 %v10106, %v10107
        %v10109 = vrot.slane %v8894, 4
        %v10110 = vadd.f32 %v8894, %v10109
        %v10111 = vrot.slane %v10110, 2
        %v10112 = vadd.f32 %v10110, %v10111
        %v10113 = vrot.slane %v10112, 1
        %v10114 = vadd.f32 %v10112, %v10113
        %v10115 = vrot.slane %v8895, 4
        %v10116 = vadd.f32 %v8895, %v10115
        %v10117 = vrot.slane %v10116, 2
        %v10118 = vadd.f32 %v10116, %v10117
        %v10119 = vrot.slane %v10118, 1
        %v10120 = vadd.f32 %v10118, %v10119
        %v10121 = vrot.slane %v8896, 4
        %v10122 = vadd.f32 %v8896, %v10121
        %v10123 = vrot.slane %v10122, 2
        %v10124 = vadd.f32 %v10122, %v10123
        %v10125 = vrot.slane %v10124, 1
        %v10126 = vadd.f32 %v10124, %v10125
        %v10127 = vrot.slane %v8897, 4
        %v10128 = vadd.f32 %v8897, %v10127
        %v10129 = vrot.slane %v10128, 2
        %v10130 = vadd.f32 %v10128, %v10129
        %v10131 = vrot.slane %v10130, 1
        %v10132 = vadd.f32 %v10130, %v10131
        %v10133 = vrot.slane %v8898, 4
        %v10134 = vadd.f32 %v8898, %v10133
        %v10135 = vrot.slane %v10134, 2
        %v10136 = vadd.f32 %v10134, %v10135
        %v10137 = vrot.slane %v10136, 1
        %v10138 = vadd.f32 %v10136, %v10137
        %v10139 = vrot.slane %v8899, 4
        %v10140 = vadd.f32 %v8899, %v10139
        %v10141 = vrot.slane %v10140, 2
        %v10142 = vadd.f32 %v10140, %v10141
        %v10143 = vrot.slane %v10142, 1
        %v10144 = vadd.f32 %v10142, %v10143
        %v10145 = vrot.slane %v8900, 4
        %v10146 = vadd.f32 %v8900, %v10145
        %v10147 = vrot.slane %v10146, 2
        %v10148 = vadd.f32 %v10146, %v10147
        %v10149 = vrot.slane %v10148, 1
        %v10150 = vadd.f32 %v10148, %v10149
        %v10151 = vrot.slane %v8901, 4
        %v10152 = vadd.f32 %v8901, %v10151
        %v10153 = vrot.slane %v10152, 2
        %v10154 = vadd.f32 %v10152, %v10153
        %v10155 = vrot.slane %v10154, 1
        %v10156 = vadd.f32 %v10154, %v10155
        %v10157 = vrot.slane %v8902, 4
        %v10158 = vadd.f32 %v8902, %v10157
        %v10159 = vrot.slane %v10158, 2
        %v10160 = vadd.f32 %v10158, %v10159
        %v10161 = vrot.slane %v10160, 1
        %v10162 = vadd.f32 %v10160, %v10161
        %v10163 = vrot.slane %v8903, 4
        %v10164 = vadd.f32 %v8903, %v10163
        %v10165 = vrot.slane %v10164, 2
        %v10166 = vadd.f32 %v10164, %v10165
        %v10167 = vrot.slane %v10166, 1
        %v10168 = vadd.f32 %v10166, %v10167
        %v10169 = vrot.slane %v8904, 4
        %v10170 = vadd.f32 %v8904, %v10169
        %v10171 = vrot.slane %v10170, 2
        %v10172 = vadd.f32 %v10170, %v10171
        %v10173 = vrot.slane %v10172, 1
        %v10174 = vadd.f32 %v10172, %v10173
        %v10175 = vrot.slane %v8905, 4
        %v10176 = vadd.f32 %v8905, %v10175
        %v10177 = vrot.slane %v10176, 2
        %v10178 = vadd.f32 %v10176, %v10177
        %v10179 = vrot.slane %v10178, 1
        %v10180 = vadd.f32 %v10178, %v10179
        %v10181 = vrot.slane %v8906, 4
        %v10182 = vadd.f32 %v8906, %v10181
        %v10183 = vrot.slane %v10182, 2
        %v10184 = vadd.f32 %v10182, %v10183
        %v10185 = vrot.slane %v10184, 1
        %v10186 = vadd.f32 %v10184, %v10185
        %v10187 = vrot.slane %v8907, 4
        %v10188 = vadd.f32 %v8907, %v10187
        %v10189 = vrot.slane %v10188, 2
        %v10190 = vadd.f32 %v10188, %v10189
        %v10191 = vrot.slane %v10190, 1
        %v10192 = vadd.f32 %v10190, %v10191
        %v10193 = vrot.slane %v8908, 4
        %v10194 = vadd.f32 %v8908, %v10193
        %v10195 = vrot.slane %v10194, 2
        %v10196 = vadd.f32 %v10194, %v10195
        %v10197 = vrot.slane %v10196, 1
        %v10198 = vadd.f32 %v10196, %v10197
        %v10199 = vrot.slane %v8909, 4
        %v10200 = vadd.f32 %v8909, %v10199
        %v10201 = vrot.slane %v10200, 2
        %v10202 = vadd.f32 %v10200, %v10201
        %v10203 = vrot.slane %v10202, 1
        %v10204 = vadd.f32 %v10202, %v10203
        %v10205 = vrot.slane %v8910, 4
        %v10206 = vadd.f32 %v8910, %v10205
        %v10207 = vrot.slane %v10206, 2
        %v10208 = vadd.f32 %v10206, %v10207
        %v10209 = vrot.slane %v10208, 1
        %v10210 = vadd.f32 %v10208, %v10209
        %v10211 = vrot.slane %v8911, 4
        %v10212 = vadd.f32 %v8911, %v10211
        %v10213 = vrot.slane %v10212, 2
        %v10214 = vadd.f32 %v10212, %v10213
        %v10215 = vrot.slane %v10214, 1
        %v10216 = vadd.f32 %v10214, %v10215
        %v10217 = vrot.slane %v8912, 4
        %v10218 = vadd.f32 %v8912, %v10217
        %v10219 = vrot.slane %v10218, 2
        %v10220 = vadd.f32 %v10218, %v10219
        %v10221 = vrot.slane %v10220, 1
        %v10222 = vadd.f32 %v10220, %v10221
        %v10223 = vrot.slane %v8913, 4
        %v10224 = vadd.f32 %v8913, %v10223
        %v10225 = vrot.slane %v10224, 2
        %v10226 = vadd.f32 %v10224, %v10225
        %v10227 = vrot.slane %v10226, 1
        %v10228 = vadd.f32 %v10226, %v10227
        %v10229 = vrot.slane %v8914, 4
        %v10230 = vadd.f32 %v8914, %v10229
        %v10231 = vrot.slane %v10230, 2
        %v10232 = vadd.f32 %v10230, %v10231
        %v10233 = vrot.slane %v10232, 1
        %v10234 = vadd.f32 %v10232, %v10233
        %v10235 = vrot.slane %v8915, 4
        %v10236 = vadd.f32 %v8915, %v10235
        %v10237 = vrot.slane %v10236, 2
        %v10238 = vadd.f32 %v10236, %v10237
        %v10239 = vrot.slane %v10238, 1
        %v10240 = vadd.f32 %v10238, %v10239
        %v10241 = vrot.slane %v8916, 4
        %v10242 = vadd.f32 %v8916, %v10241
        %v10243 = vrot.slane %v10242, 2
        %v10244 = vadd.f32 %v10242, %v10243
        %v10245 = vrot.slane %v10244, 1
        %v10246 = vadd.f32 %v10244, %v10245
        %v10247 = vrot.slane %v8917, 4
        %v10248 = vadd.f32 %v8917, %v10247
        %v10249 = vrot.slane %v10248, 2
        %v10250 = vadd.f32 %v10248, %v10249
        %v10251 = vrot.slane %v10250, 1
        %v10252 = vadd.f32 %v10250, %v10251
        %v10253 = vrot.slane %v8918, 4
        %v10254 = vadd.f32 %v8918, %v10253
        %v10255 = vrot.slane %v10254, 2
        %v10256 = vadd.f32 %v10254, %v10255
        %v10257 = vrot.slane %v10256, 1
        %v10258 = vadd.f32 %v10256, %v10257
        %v10259 = vrot.slane %v8919, 4
        %v10260 = vadd.f32 %v8919, %v10259
        %v10261 = vrot.slane %v10260, 2
        %v10262 = vadd.f32 %v10260, %v10261
        %v10263 = vrot.slane %v10262, 1
        %v10264 = vadd.f32 %v10262, %v10263
        %v10265 = vrot.slane %v8920, 4
        %v10266 = vadd.f32 %v8920, %v10265
        %v10267 = vrot.slane %v10266, 2
        %v10268 = vadd.f32 %v10266, %v10267
        %v10269 = vrot.slane %v10268, 1
        %v10270 = vadd.f32 %v10268, %v10269
        %v10271 = vrot.slane %v8921, 4
        %v10272 = vadd.f32 %v8921, %v10271
        %v10273 = vrot.slane %v10272, 2
        %v10274 = vadd.f32 %v10272, %v10273
        %v10275 = vrot.slane %v10274, 1
        %v10276 = vadd.f32 %v10274, %v10275
        %v10277 = vrot.slane %v8922, 4
        %v10278 = vadd.f32 %v8922, %v10277
        %v10279 = vrot.slane %v10278, 2
        %v10280 = vadd.f32 %v10278, %v10279
        %v10281 = vrot.slane %v10280, 1
        %v10282 = vadd.f32 %v10280, %v10281
        %v10283 = vrot.slane %v8923, 4
        %v10284 = vadd.f32 %v8923, %v10283
        %v10285 = vrot.slane %v10284, 2
        %v10286 = vadd.f32 %v10284, %v10285
        %v10287 = vrot.slane %v10286, 1
        %v10288 = vadd.f32 %v10286, %v10287
        %v10289 = vrot.slane %v8924, 4
        %v10290 = vadd.f32 %v8924, %v10289
        %v10291 = vrot.slane %v10290, 2
        %v10292 = vadd.f32 %v10290, %v10291
        %v10293 = vrot.slane %v10292, 1
        %v10294 = vadd.f32 %v10292, %v10293
        %v10295 = vrot.slane %v8925, 4
        %v10296 = vadd.f32 %v8925, %v10295
        %v10297 = vrot.slane %v10296, 2
        %v10298 = vadd.f32 %v10296, %v10297
        %v10299 = vrot.slane %v10298, 1
        %v10300 = vadd.f32 %v10298, %v10299
        %v10301 = vrot.slane %v8926, 4
        %v10302 = vadd.f32 %v8926, %v10301
        %v10303 = vrot.slane %v10302, 2
        %v10304 = vadd.f32 %v10302, %v10303
        %v10305 = vrot.slane %v10304, 1
        %v10306 = vadd.f32 %v10304, %v10305
        %v10307 = vrot.slane %v8927, 4
        %v10308 = vadd.f32 %v8927, %v10307
        %v10309 = vrot.slane %v10308, 2
        %v10310 = vadd.f32 %v10308, %v10309
        %v10311 = vrot.slane %v10310, 1
        %v10312 = vadd.f32 %v10310, %v10311
        %v10313 = vrot.slane %v8928, 4
        %v10314 = vadd.f32 %v8928, %v10313
        %v10315 = vrot.slane %v10314, 2
        %v10316 = vadd.f32 %v10314, %v10315
        %v10317 = vrot.slane %v10316, 1
        %v10318 = vadd.f32 %v10316, %v10317
        %v10319 = vrot.slane %v8929, 4
        %v10320 = vadd.f32 %v8929, %v10319
        %v10321 = vrot.slane %v10320, 2
        %v10322 = vadd.f32 %v10320, %v10321
        %v10323 = vrot.slane %v10322, 1
        %v10324 = vadd.f32 %v10322, %v10323
        %v10325 = vrot.slane %v8930, 4
        %v10326 = vadd.f32 %v8930, %v10325
        %v10327 = vrot.slane %v10326, 2
        %v10328 = vadd.f32 %v10326, %v10327
        %v10329 = vrot.slane %v10328, 1
        %v10330 = vadd.f32 %v10328, %v10329
        %v10331 = vrot.slane %v8931, 4
        %v10332 = vadd.f32 %v8931, %v10331
        %v10333 = vrot.slane %v10332, 2
        %v10334 = vadd.f32 %v10332, %v10333
        %v10335 = vrot.slane %v10334, 1
        %v10336 = vadd.f32 %v10334, %v10335
        %v10337 = vrot.slane %v8932, 4
        %v10338 = vadd.f32 %v8932, %v10337
        %v10339 = vrot.slane %v10338, 2
        %v10340 = vadd.f32 %v10338, %v10339
        %v10341 = vrot.slane %v10340, 1
        %v10342 = vadd.f32 %v10340, %v10341
        %v10343 = vrot.slane %v8933, 4
        %v10344 = vadd.f32 %v8933, %v10343
        %v10345 = vrot.slane %v10344, 2
        %v10346 = vadd.f32 %v10344, %v10345
        %v10347 = vrot.slane %v10346, 1
        %v10348 = vadd.f32 %v10346, %v10347
        %v10349 = vrot.slane %v8934, 4
        %v10350 = vadd.f32 %v8934, %v10349
        %v10351 = vrot.slane %v10350, 2
        %v10352 = vadd.f32 %v10350, %v10351
        %v10353 = vrot.slane %v10352, 1
        %v10354 = vadd.f32 %v10352, %v10353
        %v10355 = vrot.slane %v8935, 4
        %v10356 = vadd.f32 %v8935, %v10355
        %v10357 = vrot.slane %v10356, 2
        %v10358 = vadd.f32 %v10356, %v10357
        %v10359 = vrot.slane %v10358, 1
        %v10360 = vadd.f32 %v10358, %v10359
        %v10361 = vrot.slane %v8936, 4
        %v10362 = vadd.f32 %v8936, %v10361
        %v10363 = vrot.slane %v10362, 2
        %v10364 = vadd.f32 %v10362, %v10363
        %v10365 = vrot.slane %v10364, 1
        %v10366 = vadd.f32 %v10364, %v10365
        %v10367 = vrot.slane %v8937, 4
        %v10368 = vadd.f32 %v8937, %v10367
        %v10369 = vrot.slane %v10368, 2
        %v10370 = vadd.f32 %v10368, %v10369
        %v10371 = vrot.slane %v10370, 1
        %v10372 = vadd.f32 %v10370, %v10371
        %v10373 = vrot.slane %v8938, 4
        %v10374 = vadd.f32 %v8938, %v10373
        %v10375 = vrot.slane %v10374, 2
        %v10376 = vadd.f32 %v10374, %v10375
        %v10377 = vrot.slane %v10376, 1
        %v10378 = vadd.f32 %v10376, %v10377
        %v10379 = vpack.c.bf16 %v8944, %v8944
        %v10380 = vpack.c.bf16 %v8950, %v8950
        %v10381 = vpack.c.bf16 %v8956, %v8956
        %v10382 = vpack.c.bf16 %v8962, %v8962
        %v10383 = vpack.c.bf16 %v8968, %v8968
        %v10384 = vpack.c.bf16 %v8974, %v8974
        %v10385 = vpack.c.bf16 %v8980, %v8980
        %v10386 = vpack.c.bf16 %v8986, %v8986
        %v10387 = vpack.c.bf16 %v8992, %v8992
        %v10388 = vpack.c.bf16 %v8998, %v8998
        %v10389 = vpack.c.bf16 %v9004, %v9004
        %v10390 = vpack.c.bf16 %v9010, %v9010
        %v10391 = vpack.c.bf16 %v9016, %v9016
        %v10392 = vpack.c.bf16 %v9022, %v9022
        %v10393 = vpack.c.bf16 %v9028, %v9028
        %v10394 = vpack.c.bf16 %v9034, %v9034
        %v10395 = vpack.c.bf16 %v9040, %v9040
        %v10396 = vpack.c.bf16 %v9046, %v9046
        %v10397 = vpack.c.bf16 %v9052, %v9052
        %v10398 = vpack.c.bf16 %v9058, %v9058
        %v10399 = vpack.c.bf16 %v9064, %v9064
        %v10400 = vpack.c.bf16 %v9070, %v9070
        %v10401 = vpack.c.bf16 %v9076, %v9076
        %v10402 = vpack.c.bf16 %v9082, %v9082
        %v10403 = vpack.c.bf16 %v9088, %v9088
        %v10404 = vpack.c.bf16 %v9094, %v9094
        %v10405 = vpack.c.bf16 %v9100, %v9100
        %v10406 = vpack.c.bf16 %v9106, %v9106
        %v10407 = vpack.c.bf16 %v9112, %v9112
        %v10408 = vpack.c.bf16 %v9118, %v9118
        %v10409 = vpack.c.bf16 %v9124, %v9124
        %v10410 = vpack.c.bf16 %v9130, %v9130
        %v10411 = vpack.c.bf16 %v9136, %v9136
        %v10412 = vpack.c.bf16 %v9142, %v9142
        %v10413 = vpack.c.bf16 %v9148, %v9148
        %v10414 = vpack.c.bf16 %v9154, %v9154
        %v10415 = vpack.c.bf16 %v9160, %v9160
        %v10416 = vpack.c.bf16 %v9166, %v9166
        %v10417 = vpack.c.bf16 %v9172, %v9172
        %v10418 = vpack.c.bf16 %v9178, %v9178
        %v10419 = vpack.c.bf16 %v9184, %v9184
        %v10420 = vpack.c.bf16 %v9190, %v9190
        %v10421 = vpack.c.bf16 %v9196, %v9196
        %v10422 = vpack.c.bf16 %v9202, %v9202
        %v10423 = vpack.c.bf16 %v9208, %v9208
        %v10424 = vpack.c.bf16 %v9214, %v9214
        %v10425 = vpack.c.bf16 %v9220, %v9220
        %v10426 = vpack.c.bf16 %v9226, %v9226
        %v10427 = vpack.c.bf16 %v9232, %v9232
        %v10428 = vpack.c.bf16 %v9238, %v9238
        %v10429 = vpack.c.bf16 %v9244, %v9244
        %v10430 = vpack.c.bf16 %v9250, %v9250
        %v10431 = vpack.c.bf16 %v9256, %v9256
        %v10432 = vpack.c.bf16 %v9262, %v9262
        %v10433 = vpack.c.bf16 %v9268, %v9268
        %v10434 = vpack.c.bf16 %v9274, %v9274
        %v10435 = vpack.c.bf16 %v9280, %v9280
        %v10436 = vpack.c.bf16 %v9286, %v9286
        %v10437 = vpack.c.bf16 %v9292, %v9292
        %v10438 = vpack.c.bf16 %v9298, %v9298
        %v10439 = vpack.c.bf16 %v9304, %v9304
        %v10440 = vpack.c.bf16 %v9310, %v9310
        %v10441 = vpack.c.bf16 %v9316, %v9316
        %v10442 = vpack.c.bf16 %v9322, %v9322
        %v10443 = vpack.c.bf16 %v9328, %v9328
        %v10444 = vpack.c.bf16 %v9334, %v9334
        %v10445 = vpack.c.bf16 %v9340, %v9340
        %v10446 = vpack.c.bf16 %v9346, %v9346
        %v10447 = vpack.c.bf16 %v9352, %v9352
        %v10448 = vpack.c.bf16 %v9358, %v9358
        %v10449 = vpack.c.bf16 %v9364, %v9364
        %v10450 = vpack.c.bf16 %v9370, %v9370
        %v10451 = vpack.c.bf16 %v9376, %v9376
        %v10452 = vpack.c.bf16 %v9382, %v9382
        %v10453 = vpack.c.bf16 %v9388, %v9388
        %v10454 = vpack.c.bf16 %v9394, %v9394
        %v10455 = vpack.c.bf16 %v9400, %v9400
        %v10456 = vpack.c.bf16 %v9406, %v9406
        %v10457 = vpack.c.bf16 %v9412, %v9412
        %v10458 = vpack.c.bf16 %v9418, %v9418
        %v10459 = vpack.c.bf16 %v9424, %v9424
        %v10460 = vpack.c.bf16 %v9430, %v9430
        %v10461 = vpack.c.bf16 %v9436, %v9436
        %v10462 = vpack.c.bf16 %v9442, %v9442
        %v10463 = vpack.c.bf16 %v9448, %v9448
        %v10464 = vpack.c.bf16 %v9454, %v9454
        %v10465 = vpack.c.bf16 %v9460, %v9460
        %v10466 = vpack.c.bf16 %v9466, %v9466
        %v10467 = vpack.c.bf16 %v9472, %v9472
        %v10468 = vpack.c.bf16 %v9478, %v9478
        %v10469 = vpack.c.bf16 %v9484, %v9484
        %v10470 = vpack.c.bf16 %v9490, %v9490
        %v10471 = vpack.c.bf16 %v9496, %v9496
        %v10472 = vpack.c.bf16 %v9502, %v9502
        %v10473 = vpack.c.bf16 %v9508, %v9508
        %v10474 = vpack.c.bf16 %v9514, %v9514
        %v10475 = vpack.c.bf16 %v9520, %v9520
        %v10476 = vpack.c.bf16 %v9526, %v9526
        %v10477 = vpack.c.bf16 %v9532, %v9532
        %v10478 = vpack.c.bf16 %v9538, %v9538
        %v10479 = vpack.c.bf16 %v9544, %v9544
        %v10480 = vpack.c.bf16 %v9550, %v9550
        %v10481 = vpack.c.bf16 %v9556, %v9556
        %v10482 = vpack.c.bf16 %v9562, %v9562
        %v10483 = vpack.c.bf16 %v9568, %v9568
        %v10484 = vpack.c.bf16 %v9574, %v9574
        %v10485 = vpack.c.bf16 %v9580, %v9580
        %v10486 = vpack.c.bf16 %v9586, %v9586
        %v10487 = vpack.c.bf16 %v9592, %v9592
        %v10488 = vpack.c.bf16 %v9598, %v9598
        %v10489 = vpack.c.bf16 %v9604, %v9604
        %v10490 = vpack.c.bf16 %v9610, %v9610
        %v10491 = vpack.c.bf16 %v9616, %v9616
        %v10492 = vpack.c.bf16 %v9622, %v9622
        %v10493 = vpack.c.bf16 %v9628, %v9628
        %v10494 = vpack.c.bf16 %v9634, %v9634
        %v10495 = vpack.c.bf16 %v9640, %v9640
        %v10496 = vpack.c.bf16 %v9646, %v9646
        %v10497 = vpack.c.bf16 %v9652, %v9652
        %v10498 = vpack.c.bf16 %v9658, %v9658
        %v10499 = vpack.c.bf16 %v9664, %v9664
        %v10500 = vpack.c.bf16 %v9670, %v9670
        %v10501 = vpack.c.bf16 %v9676, %v9676
        %v10502 = vpack.c.bf16 %v9682, %v9682
        %v10503 = vpack.c.bf16 %v9688, %v9688
        %v10504 = vpack.c.bf16 %v9694, %v9694
        %v10505 = vpack.c.bf16 %v9700, %v9700
        %v10506 = vpack.c.bf16 %v9706, %v9706
        %v10507 = vpack.c.bf16 %v9712, %v9712
        %v10508 = vpack.c.bf16 %v9718, %v9718
        %v10509 = vpack.c.bf16 %v9724, %v9724
        %v10510 = vpack.c.bf16 %v9730, %v9730
        %v10511 = vpack.c.bf16 %v9736, %v9736
        %v10512 = vpack.c.bf16 %v9742, %v9742
        %v10513 = vpack.c.bf16 %v9748, %v9748
        %v10514 = vpack.c.bf16 %v9754, %v9754
        %v10515 = vpack.c.bf16 %v9760, %v9760
        %v10516 = vpack.c.bf16 %v9766, %v9766
        %v10517 = vpack.c.bf16 %v9772, %v9772
        %v10518 = vpack.c.bf16 %v9778, %v9778
        %v10519 = vpack.c.bf16 %v9784, %v9784
        %v10520 = vpack.c.bf16 %v9790, %v9790
        %v10521 = vpack.c.bf16 %v9796, %v9796
        %v10522 = vpack.c.bf16 %v9802, %v9802
        %v10523 = vpack.c.bf16 %v9808, %v9808
        %v10524 = vpack.c.bf16 %v9814, %v9814
        %v10525 = vpack.c.bf16 %v9820, %v9820
        %v10526 = vpack.c.bf16 %v9826, %v9826
        %v10527 = vpack.c.bf16 %v9832, %v9832
        %v10528 = vpack.c.bf16 %v9838, %v9838
        %v10529 = vpack.c.bf16 %v9844, %v9844
        %v10530 = vpack.c.bf16 %v9850, %v9850
        %v10531 = vpack.c.bf16 %v9856, %v9856
        %v10532 = vpack.c.bf16 %v9862, %v9862
        %v10533 = vpack.c.bf16 %v9868, %v9868
        %v10534 = vpack.c.bf16 %v9874, %v9874
        %v10535 = vpack.c.bf16 %v9880, %v9880
        %v10536 = vpack.c.bf16 %v9886, %v9886
        %v10537 = vpack.c.bf16 %v9892, %v9892
        %v10538 = vpack.c.bf16 %v9898, %v9898
        %v10539 = vpack.c.bf16 %v9904, %v9904
        %v10540 = vpack.c.bf16 %v9910, %v9910
        %v10541 = vpack.c.bf16 %v9916, %v9916
        %v10542 = vpack.c.bf16 %v9922, %v9922
        %v10543 = vpack.c.bf16 %v9928, %v9928
        %v10544 = vpack.c.bf16 %v9934, %v9934
        %v10545 = vpack.c.bf16 %v9940, %v9940
        %v10546 = vpack.c.bf16 %v9946, %v9946
        %v10547 = vpack.c.bf16 %v9952, %v9952
        %v10548 = vpack.c.bf16 %v9958, %v9958
        %v10549 = vpack.c.bf16 %v9964, %v9964
        %v10550 = vpack.c.bf16 %v9970, %v9970
        %v10551 = vpack.c.bf16 %v9976, %v9976
        %v10552 = vpack.c.bf16 %v9982, %v9982
        %v10553 = vpack.c.bf16 %v9988, %v9988
        %v10554 = vpack.c.bf16 %v9994, %v9994
        %v10555 = vpack.c.bf16 %v10000, %v10000
        %v10556 = vpack.c.bf16 %v10006, %v10006
        %v10557 = vpack.c.bf16 %v10012, %v10012
        %v10558 = vpack.c.bf16 %v10018, %v10018
        %v10559 = vpack.c.bf16 %v10024, %v10024
        %v10560 = vpack.c.bf16 %v10030, %v10030
        %v10561 = vpack.c.bf16 %v10036, %v10036
        %v10562 = vpack.c.bf16 %v10042, %v10042
        %v10563 = vpack.c.bf16 %v10048, %v10048
        %v10564 = vpack.c.bf16 %v10054, %v10054
        %v10565 = vpack.c.bf16 %v10060, %v10060
        %v10566 = vpack.c.bf16 %v10066, %v10066
        %v10567 = vpack.c.bf16 %v10072, %v10072
        %v10568 = vpack.c.bf16 %v10078, %v10078
        %v10569 = vpack.c.bf16 %v10084, %v10084
        %v10570 = vpack.c.bf16 %v10090, %v10090
        %v10571 = vpack.c.bf16 %v10096, %v10096
        %v10572 = vpack.c.bf16 %v10102, %v10102
        %v10573 = vpack.c.bf16 %v10108, %v10108
        %v10574 = vpack.c.bf16 %v10114, %v10114
        %v10575 = vpack.c.bf16 %v10120, %v10120
        %v10576 = vpack.c.bf16 %v10126, %v10126
        %v10577 = vpack.c.bf16 %v10132, %v10132
        %v10578 = vpack.c.bf16 %v10138, %v10138
        %v10579 = vpack.c.bf16 %v10144, %v10144
        %v10580 = vpack.c.bf16 %v10150, %v10150
        %v10581 = vpack.c.bf16 %v10156, %v10156
        %v10582 = vpack.c.bf16 %v10162, %v10162
        %v10583 = vpack.c.bf16 %v10168, %v10168
        %v10584 = vpack.c.bf16 %v10174, %v10174
        %v10585 = vpack.c.bf16 %v10180, %v10180
        %v10586 = vpack.c.bf16 %v10186, %v10186
        %v10587 = vpack.c.bf16 %v10192, %v10192
        %v10588 = vpack.c.bf16 %v10198, %v10198
        %v10589 = vpack.c.bf16 %v10204, %v10204
        %v10590 = vpack.c.bf16 %v10210, %v10210
        %v10591 = vpack.c.bf16 %v10216, %v10216
        %v10592 = vpack.c.bf16 %v10222, %v10222
        %v10593 = vpack.c.bf16 %v10228, %v10228
        %v10594 = vpack.c.bf16 %v10234, %v10234
        %v10595 = vpack.c.bf16 %v10240, %v10240
        %v10596 = vpack.c.bf16 %v10246, %v10246
        %v10597 = vpack.c.bf16 %v10252, %v10252
        %v10598 = vpack.c.bf16 %v10258, %v10258
        %v10599 = vpack.c.bf16 %v10264, %v10264
        %v10600 = vpack.c.bf16 %v10270, %v10270
        %v10601 = vpack.c.bf16 %v10276, %v10276
        %v10602 = vpack.c.bf16 %v10282, %v10282
        %v10603 = vpack.c.bf16 %v10288, %v10288
        %v10604 = vpack.c.bf16 %v10294, %v10294
        %v10605 = vpack.c.bf16 %v10300, %v10300
        %v10606 = vpack.c.bf16 %v10306, %v10306
        %v10607 = vpack.c.bf16 %v10312, %v10312
        %v10608 = vpack.c.bf16 %v10318, %v10318
        %v10609 = vpack.c.bf16 %v10324, %v10324
        %v10610 = vpack.c.bf16 %v10330, %v10330
        %v10611 = vpack.c.bf16 %v10336, %v10336
        %v10612 = vpack.c.bf16 %v10342, %v10342
        %v10613 = vpack.c.bf16 %v10348, %v10348
        %v10614 = vpack.c.bf16 %v10354, %v10354
        %v10615 = vpack.c.bf16 %v10360, %v10360
        %v10616 = vpack.c.bf16 %v10366, %v10366
        %v10617 = vpack.c.bf16 %v10372, %v10372
        %v10618 = vpack.c.bf16 %v10378, %v10378
        %v10859 = vunpack.c.l.b16 %v10379
        %v10860 = vunpack.c.l.b16 %v10380
        %v10861 = vunpack.c.l.b16 %v10381
        %v10862 = vunpack.c.l.b16 %v10382
        %v10863 = vunpack.c.l.b16 %v10383
        %v10864 = vunpack.c.l.b16 %v10384
        %v10865 = vunpack.c.l.b16 %v10385
        %v10866 = vunpack.c.l.b16 %v10386
        %v10867 = vunpack.c.l.b16 %v10387
        %v10868 = vunpack.c.l.b16 %v10388
        %v10869 = vunpack.c.l.b16 %v10389
        %v10870 = vunpack.c.l.b16 %v10390
        %v10871 = vunpack.c.l.b16 %v10391
        %v10872 = vunpack.c.l.b16 %v10392
        %v10873 = vunpack.c.l.b16 %v10393
        %v10874 = vunpack.c.l.b16 %v10394
        %v10875 = vunpack.c.l.b16 %v10395
        %v10876 = vunpack.c.l.b16 %v10396
        %v10877 = vunpack.c.l.b16 %v10397
        %v10878 = vunpack.c.l.b16 %v10398
        %v10879 = vunpack.c.l.b16 %v10399
        %v10880 = vunpack.c.l.b16 %v10400
        %v10881 = vunpack.c.l.b16 %v10401
        %v10882 = vunpack.c.l.b16 %v10402
        %v10883 = vunpack.c.l.b16 %v10403
        %v10884 = vunpack.c.l.b16 %v10404
        %v10885 = vunpack.c.l.b16 %v10405
        %v10886 = vunpack.c.l.b16 %v10406
        %v10887 = vunpack.c.l.b16 %v10407
        %v10888 = vunpack.c.l.b16 %v10408
        %v10889 = vunpack.c.l.b16 %v10409
        %v10890 = vunpack.c.l.b16 %v10410
        %v10891 = vunpack.c.l.b16 %v10411
        %v10892 = vunpack.c.l.b16 %v10412
        %v10893 = vunpack.c.l.b16 %v10413
        %v10894 = vunpack.c.l.b16 %v10414
        %v10895 = vunpack.c.l.b16 %v10415
        %v10896 = vunpack.c.l.b16 %v10416
        %v10897 = vunpack.c.l.b16 %v10417
        %v10898 = vunpack.c.l.b16 %v10418
        %v10899 = vunpack.c.l.b16 %v10419
        %v10900 = vunpack.c.l.b16 %v10420
        %v10901 = vunpack.c.l.b16 %v10421
        %v10902 = vunpack.c.l.b16 %v10422
        %v10903 = vunpack.c.l.b16 %v10423
        %v10904 = vunpack.c.l.b16 %v10424
        %v10905 = vunpack.c.l.b16 %v10425
        %v10906 = vunpack.c.l.b16 %v10426
        %v10907 = vunpack.c.l.b16 %v10427
        %v10908 = vunpack.c.l.b16 %v10428
        %v10909 = vunpack.c.l.b16 %v10429
        %v10910 = vunpack.c.l.b16 %v10430
        %v10911 = vunpack.c.l.b16 %v10431
        %v10912 = vunpack.c.l.b16 %v10432
        %v10913 = vunpack.c.l.b16 %v10433
        %v10914 = vunpack.c.l.b16 %v10434
        %v10915 = vunpack.c.l.b16 %v10435
        %v10916 = vunpack.c.l.b16 %v10436
        %v10917 = vunpack.c.l.b16 %v10437
        %v10918 = vunpack.c.l.b16 %v10438
        %v10919 = vunpack.c.l.b16 %v10439
        %v10920 = vunpack.c.l.b16 %v10440
        %v10921 = vunpack.c.l.b16 %v10441
        %v10922 = vunpack.c.l.b16 %v10442
        %v10923 = vunpack.c.l.b16 %v10443
        %v10924 = vunpack.c.l.b16 %v10444
        %v10925 = vunpack.c.l.b16 %v10445
        %v10926 = vunpack.c.l.b16 %v10446
        %v10927 = vunpack.c.l.b16 %v10447
        %v10928 = vunpack.c.l.b16 %v10448
        %v10929 = vunpack.c.l.b16 %v10449
        %v10930 = vunpack.c.l.b16 %v10450
        %v10931 = vunpack.c.l.b16 %v10451
        %v10932 = vunpack.c.l.b16 %v10452
        %v10933 = vunpack.c.l.b16 %v10453
        %v10934 = vunpack.c.l.b16 %v10454
        %v10935 = vunpack.c.l.b16 %v10455
        %v10936 = vunpack.c.l.b16 %v10456
        %v10937 = vunpack.c.l.b16 %v10457
        %v10938 = vunpack.c.l.b16 %v10458
        %v10939 = vunpack.c.l.b16 %v10459
        %v10940 = vunpack.c.l.b16 %v10460
        %v10941 = vunpack.c.l.b16 %v10461
        %v10942 = vunpack.c.l.b16 %v10462
        %v10943 = vunpack.c.l.b16 %v10463
        %v10944 = vunpack.c.l.b16 %v10464
        %v10945 = vunpack.c.l.b16 %v10465
        %v10946 = vunpack.c.l.b16 %v10466
        %v10947 = vunpack.c.l.b16 %v10467
        %v10948 = vunpack.c.l.b16 %v10468
        %v10949 = vunpack.c.l.b16 %v10469
        %v10950 = vunpack.c.l.b16 %v10470
        %v10951 = vunpack.c.l.b16 %v10471
        %v10952 = vunpack.c.l.b16 %v10472
        %v10953 = vunpack.c.l.b16 %v10473
        %v10954 = vunpack.c.l.b16 %v10474
        %v10955 = vunpack.c.l.b16 %v10475
        %v10956 = vunpack.c.l.b16 %v10476
        %v10957 = vunpack.c.l.b16 %v10477
        %v10958 = vunpack.c.l.b16 %v10478
        %v10959 = vunpack.c.l.b16 %v10479
        %v10960 = vunpack.c.l.b16 %v10480
        %v10961 = vunpack.c.l.b16 %v10481
        %v10962 = vunpack.c.l.b16 %v10482
        %v10963 = vunpack.c.l.b16 %v10483
        %v10964 = vunpack.c.l.b16 %v10484
        %v10965 = vunpack.c.l.b16 %v10485
        %v10966 = vunpack.c.l.b16 %v10486
        %v10967 = vunpack.c.l.b16 %v10487
        %v10968 = vunpack.c.l.b16 %v10488
        %v10969 = vunpack.c.l.b16 %v10489
        %v10970 = vunpack.c.l.b16 %v10490
        %v10971 = vunpack.c.l.b16 %v10491
        %v10972 = vunpack.c.l.b16 %v10492
        %v10973 = vunpack.c.l.b16 %v10493
        %v10974 = vunpack.c.l.b16 %v10494
        %v10975 = vunpack.c.l.b16 %v10495
        %v10976 = vunpack.c.l.b16 %v10496
        %v10977 = vunpack.c.l.b16 %v10497
        %v10978 = vunpack.c.l.b16 %v10498
        %v10979 = vunpack.c.l.b16 %v10499
        %v10980 = vunpack.c.l.b16 %v10500
        %v10981 = vunpack.c.l.b16 %v10501
        %v10982 = vunpack.c.l.b16 %v10502
        %v10983 = vunpack.c.l.b16 %v10503
        %v10984 = vunpack.c.l.b16 %v10504
        %v10985 = vunpack.c.l.b16 %v10505
        %v10986 = vunpack.c.l.b16 %v10506
        %v10987 = vunpack.c.l.b16 %v10507
        %v10988 = vunpack.c.l.b16 %v10508
        %v10989 = vunpack.c.l.b16 %v10509
        %v10990 = vunpack.c.l.b16 %v10510
        %v10991 = vunpack.c.l.b16 %v10511
        %v10992 = vunpack.c.l.b16 %v10512
        %v10993 = vunpack.c.l.b16 %v10513
        %v10994 = vunpack.c.l.b16 %v10514
        %v10995 = vunpack.c.l.b16 %v10515
        %v10996 = vunpack.c.l.b16 %v10516
        %v10997 = vunpack.c.l.b16 %v10517
        %v10998 = vunpack.c.l.b16 %v10518
        %v10999 = vunpack.c.l.b16 %v10519
        %v11000 = vunpack.c.l.b16 %v10520
        %v11001 = vunpack.c.l.b16 %v10521
        %v11002 = vunpack.c.l.b16 %v10522
        %v11003 = vunpack.c.l.b16 %v10523
        %v11004 = vunpack.c.l.b16 %v10524
        %v11005 = vunpack.c.l.b16 %v10525
        %v11006 = vunpack.c.l.b16 %v10526
        %v11007 = vunpack.c.l.b16 %v10527
        %v11008 = vunpack.c.l.b16 %v10528
        %v11009 = vunpack.c.l.b16 %v10529
        %v11010 = vunpack.c.l.b16 %v10530
        %v11011 = vunpack.c.l.b16 %v10531
        %v11012 = vunpack.c.l.b16 %v10532
        %v11013 = vunpack.c.l.b16 %v10533
        %v11014 = vunpack.c.l.b16 %v10534
        %v11015 = vunpack.c.l.b16 %v10535
        %v11016 = vunpack.c.l.b16 %v10536
        %v11017 = vunpack.c.l.b16 %v10537
        %v11018 = vunpack.c.l.b16 %v10538
        %v11019 = vunpack.c.l.b16 %v10539
        %v11020 = vunpack.c.l.b16 %v10540
        %v11021 = vunpack.c.l.b16 %v10541
        %v11022 = vunpack.c.l.b16 %v10542
        %v11023 = vunpack.c.l.b16 %v10543
        %v11024 = vunpack.c.l.b16 %v10544
        %v11025 = vunpack.c.l.b16 %v10545
        %v11026 = vunpack.c.l.b16 %v10546
        %v11027 = vunpack.c.l.b16 %v10547
        %v11028 = vunpack.c.l.b16 %v10548
        %v11029 = vunpack.c.l.b16 %v10549
        %v11030 = vunpack.c.l.b16 %v10550
        %v11031 = vunpack.c.l.b16 %v10551
        %v11032 = vunpack.c.l.b16 %v10552
        %v11033 = vunpack.c.l.b16 %v10553
        %v11034 = vunpack.c.l.b16 %v10554
        %v11035 = vunpack.c.l.b16 %v10555
        %v11036 = vunpack.c.l.b16 %v10556
        %v11037 = vunpack.c.l.b16 %v10557
        %v11038 = vunpack.c.l.b16 %v10558
        %v11039 = vunpack.c.l.b16 %v10559
        %v11040 = vunpack.c.l.b16 %v10560
        %v11041 = vunpack.c.l.b16 %v10561
        %v11042 = vunpack.c.l.b16 %v10562
        %v11043 = vunpack.c.l.b16 %v10563
        %v11044 = vunpack.c.l.b16 %v10564
        %v11045 = vunpack.c.l.b16 %v10565
        %v11046 = vunpack.c.l.b16 %v10566
        %v11047 = vunpack.c.l.b16 %v10567
        %v11048 = vunpack.c.l.b16 %v10568
        %v11049 = vunpack.c.l.b16 %v10569
        %v11050 = vunpack.c.l.b16 %v10570
        %v11051 = vunpack.c.l.b16 %v10571
        %v11052 = vunpack.c.l.b16 %v10572
        %v11053 = vunpack.c.l.b16 %v10573
        %v11054 = vunpack.c.l.b16 %v10574
        %v11055 = vunpack.c.l.b16 %v10575
        %v11056 = vunpack.c.l.b16 %v10576
        %v11057 = vunpack.c.l.b16 %v10577
        %v11058 = vunpack.c.l.b16 %v10578
        %v11059 = vunpack.c.l.b16 %v10579
        %v11060 = vunpack.c.l.b16 %v10580
        %v11061 = vunpack.c.l.b16 %v10581
        %v11062 = vunpack.c.l.b16 %v10582
        %v11063 = vunpack.c.l.b16 %v10583
        %v11064 = vunpack.c.l.b16 %v10584
        %v11065 = vunpack.c.l.b16 %v10585
        %v11066 = vunpack.c.l.b16 %v10586
        %v11067 = vunpack.c.l.b16 %v10587
        %v11068 = vunpack.c.l.b16 %v10588
        %v11069 = vunpack.c.l.b16 %v10589
        %v11070 = vunpack.c.l.b16 %v10590
        %v11071 = vunpack.c.l.b16 %v10591
        %v11072 = vunpack.c.l.b16 %v10592
        %v11073 = vunpack.c.l.b16 %v10593
        %v11074 = vunpack.c.l.b16 %v10594
        %v11075 = vunpack.c.l.b16 %v10595
        %v11076 = vunpack.c.l.b16 %v10596
        %v11077 = vunpack.c.l.b16 %v10597
        %v11078 = vunpack.c.l.b16 %v10598
        %v11079 = vunpack.c.l.b16 %v10599
        %v11080 = vunpack.c.l.b16 %v10600
        %v11081 = vunpack.c.l.b16 %v10601
        %v11082 = vunpack.c.l.b16 %v10602
        %v11083 = vunpack.c.l.b16 %v10603
        %v11084 = vunpack.c.l.b16 %v10604
        %v11085 = vunpack.c.l.b16 %v10605
        %v11086 = vunpack.c.l.b16 %v10606
        %v11087 = vunpack.c.l.b16 %v10607
        %v11088 = vunpack.c.l.b16 %v10608
        %v11089 = vunpack.c.l.b16 %v10609
        %v11090 = vunpack.c.l.b16 %v10610
        %v11091 = vunpack.c.l.b16 %v10611
        %v11092 = vunpack.c.l.b16 %v10612
        %v11093 = vunpack.c.l.b16 %v10613
        %v11094 = vunpack.c.l.b16 %v10614
        %v11095 = vunpack.c.l.b16 %v10615
        %v11096 = vunpack.c.l.b16 %v10616
        %v11097 = vunpack.c.l.b16 %v10617
        %v11098 = vunpack.c.l.b16 %v10618
        %v11099 = vsel %vm3127, %v10874, %v10859
        %v11100 = vsel %vm3129, %v10889, %v11099
        %v11101 = vsel %vm3131, %v10904, %v11100
        %v11102 = vsel %vm3133, %v10919, %v11101
        %v11103 = vsel %vm3135, %v10934, %v11102
        %v11104 = vsel %vm3137, %v10949, %v11103
        %v11105 = vsel %vm3139, %v10964, %v11104
        %v11106 = vsel %vm3127, %v10875, %v10860
        %v11107 = vsel %vm3129, %v10890, %v11106
        %v11108 = vsel %vm3131, %v10905, %v11107
        %v11109 = vsel %vm3133, %v10920, %v11108
        %v11110 = vsel %vm3135, %v10935, %v11109
        %v11111 = vsel %vm3137, %v10950, %v11110
        %v11112 = vsel %vm3139, %v10965, %v11111
        %v11113 = vsel %vm3127, %v10876, %v10861
        %v11114 = vsel %vm3129, %v10891, %v11113
        %v11115 = vsel %vm3131, %v10906, %v11114
        %v11116 = vsel %vm3133, %v10921, %v11115
        %v11117 = vsel %vm3135, %v10936, %v11116
        %v11118 = vsel %vm3137, %v10951, %v11117
        %v11119 = vsel %vm3139, %v10966, %v11118
        %v11120 = vsel %vm3127, %v10877, %v10862
        %v11121 = vsel %vm3129, %v10892, %v11120
        %v11122 = vsel %vm3131, %v10907, %v11121
        %v11123 = vsel %vm3133, %v10922, %v11122
        %v11124 = vsel %vm3135, %v10937, %v11123
        %v11125 = vsel %vm3137, %v10952, %v11124
        %v11126 = vsel %vm3139, %v10967, %v11125
        %v11127 = vsel %vm3127, %v10878, %v10863
        %v11128 = vsel %vm3129, %v10893, %v11127
        %v11129 = vsel %vm3131, %v10908, %v11128
        %v11130 = vsel %vm3133, %v10923, %v11129
        %v11131 = vsel %vm3135, %v10938, %v11130
        %v11132 = vsel %vm3137, %v10953, %v11131
        %v11133 = vsel %vm3139, %v10968, %v11132
        %v11134 = vsel %vm3127, %v10879, %v10864
        %v11135 = vsel %vm3129, %v10894, %v11134
        %v11136 = vsel %vm3131, %v10909, %v11135
        %v11137 = vsel %vm3133, %v10924, %v11136
        %v11138 = vsel %vm3135, %v10939, %v11137
        %v11139 = vsel %vm3137, %v10954, %v11138
        %v11140 = vsel %vm3139, %v10969, %v11139
        %v11141 = vsel %vm3127, %v10880, %v10865
        %v11142 = vsel %vm3129, %v10895, %v11141
        %v11143 = vsel %vm3131, %v10910, %v11142
        %v11144 = vsel %vm3133, %v10925, %v11143
        %v11145 = vsel %vm3135, %v10940, %v11144
        %v11146 = vsel %vm3137, %v10955, %v11145
        %v11147 = vsel %vm3139, %v10970, %v11146
        %v11148 = vsel %vm3127, %v10881, %v10866
        %v11149 = vsel %vm3129, %v10896, %v11148
        %v11150 = vsel %vm3131, %v10911, %v11149
        %v11151 = vsel %vm3133, %v10926, %v11150
        %v11152 = vsel %vm3135, %v10941, %v11151
        %v11153 = vsel %vm3137, %v10956, %v11152
        %v11154 = vsel %vm3139, %v10971, %v11153
        %v11155 = vsel %vm3127, %v10882, %v10867
        %v11156 = vsel %vm3129, %v10897, %v11155
        %v11157 = vsel %vm3131, %v10912, %v11156
        %v11158 = vsel %vm3133, %v10927, %v11157
        %v11159 = vsel %vm3135, %v10942, %v11158
        %v11160 = vsel %vm3137, %v10957, %v11159
        %v11161 = vsel %vm3139, %v10972, %v11160
        %v11162 = vsel %vm3127, %v10883, %v10868
        %v11163 = vsel %vm3129, %v10898, %v11162
        %v11164 = vsel %vm3131, %v10913, %v11163
        %v11165 = vsel %vm3133, %v10928, %v11164
        %v11166 = vsel %vm3135, %v10943, %v11165
        %v11167 = vsel %vm3137, %v10958, %v11166
        %v11168 = vsel %vm3139, %v10973, %v11167
        %v11169 = vsel %vm3127, %v10884, %v10869
        %v11170 = vsel %vm3129, %v10899, %v11169
        %v11171 = vsel %vm3131, %v10914, %v11170
        %v11172 = vsel %vm3133, %v10929, %v11171
        %v11173 = vsel %vm3135, %v10944, %v11172
        %v11174 = vsel %vm3137, %v10959, %v11173
        %v11175 = vsel %vm3139, %v10974, %v11174
        %v11176 = vsel %vm3127, %v10885, %v10870
        %v11177 = vsel %vm3129, %v10900, %v11176
        %v11178 = vsel %vm3131, %v10915, %v11177
        %v11179 = vsel %vm3133, %v10930, %v11178
        %v11180 = vsel %vm3135, %v10945, %v11179
        %v11181 = vsel %vm3137, %v10960, %v11180
        %v11182 = vsel %vm3139, %v10975, %v11181
        %v11183 = vsel %vm3127, %v10886, %v10871
        %v11184 = vsel %vm3129, %v10901, %v11183
        %v11185 = vsel %vm3131, %v10916, %v11184
        %v11186 = vsel %vm3133, %v10931, %v11185
        %v11187 = vsel %vm3135, %v10946, %v11186
        %v11188 = vsel %vm3137, %v10961, %v11187
        %v11189 = vsel %vm3139, %v10976, %v11188
        %v11190 = vsel %vm3127, %v10887, %v10872
        %v11191 = vsel %vm3129, %v10902, %v11190
        %v11192 = vsel %vm3131, %v10917, %v11191
        %v11193 = vsel %vm3133, %v10932, %v11192
        %v11194 = vsel %vm3135, %v10947, %v11193
        %v11195 = vsel %vm3137, %v10962, %v11194
        %v11196 = vsel %vm3139, %v10977, %v11195
        %v11197 = vsel %vm3127, %v10888, %v10873
        %v11198 = vsel %vm3129, %v10903, %v11197
        %v11199 = vsel %vm3131, %v10918, %v11198
        %v11200 = vsel %vm3133, %v10933, %v11199
        %v11201 = vsel %vm3135, %v10948, %v11200
        %v11202 = vsel %vm3137, %v10963, %v11201
        %v11203 = vsel %vm3139, %v10978, %v11202
        %v11204 = vsel %vm3127, %v10994, %v10979
        %v11205 = vsel %vm3129, %v11009, %v11204
        %v11206 = vsel %vm3131, %v11024, %v11205
        %v11207 = vsel %vm3133, %v11039, %v11206
        %v11208 = vsel %vm3135, %v11054, %v11207
        %v11209 = vsel %vm3137, %v11069, %v11208
        %v11210 = vsel %vm3139, %v11084, %v11209
        %v11211 = vsel %vm3127, %v10995, %v10980
        %v11212 = vsel %vm3129, %v11010, %v11211
        %v11213 = vsel %vm3131, %v11025, %v11212
        %v11214 = vsel %vm3133, %v11040, %v11213
        %v11215 = vsel %vm3135, %v11055, %v11214
        %v11216 = vsel %vm3137, %v11070, %v11215
        %v11217 = vsel %vm3139, %v11085, %v11216
        %v11218 = vsel %vm3127, %v10996, %v10981
        %v11219 = vsel %vm3129, %v11011, %v11218
        %v11220 = vsel %vm3131, %v11026, %v11219
        %v11221 = vsel %vm3133, %v11041, %v11220
        %v11222 = vsel %vm3135, %v11056, %v11221
        %v11223 = vsel %vm3137, %v11071, %v11222
        %v11224 = vsel %vm3139, %v11086, %v11223
        %v11225 = vsel %vm3127, %v10997, %v10982
        %v11226 = vsel %vm3129, %v11012, %v11225
        %v11227 = vsel %vm3131, %v11027, %v11226
        %v11228 = vsel %vm3133, %v11042, %v11227
        %v11229 = vsel %vm3135, %v11057, %v11228
        %v11230 = vsel %vm3137, %v11072, %v11229
        %v11231 = vsel %vm3139, %v11087, %v11230
        %v11232 = vsel %vm3127, %v10998, %v10983
        %v11233 = vsel %vm3129, %v11013, %v11232
        %v11234 = vsel %vm3131, %v11028, %v11233
        %v11235 = vsel %vm3133, %v11043, %v11234
        %v11236 = vsel %vm3135, %v11058, %v11235
        %v11237 = vsel %vm3137, %v11073, %v11236
        %v11238 = vsel %vm3139, %v11088, %v11237
        %v11239 = vsel %vm3127, %v10999, %v10984
        %v11240 = vsel %vm3129, %v11014, %v11239
        %v11241 = vsel %vm3131, %v11029, %v11240
        %v11242 = vsel %vm3133, %v11044, %v11241
        %v11243 = vsel %vm3135, %v11059, %v11242
        %v11244 = vsel %vm3137, %v11074, %v11243
        %v11245 = vsel %vm3139, %v11089, %v11244
        %v11246 = vsel %vm3127, %v11000, %v10985
        %v11247 = vsel %vm3129, %v11015, %v11246
        %v11248 = vsel %vm3131, %v11030, %v11247
        %v11249 = vsel %vm3133, %v11045, %v11248
        %v11250 = vsel %vm3135, %v11060, %v11249
        %v11251 = vsel %vm3137, %v11075, %v11250
        %v11252 = vsel %vm3139, %v11090, %v11251
        %v11253 = vsel %vm3127, %v11001, %v10986
        %v11254 = vsel %vm3129, %v11016, %v11253
        %v11255 = vsel %vm3131, %v11031, %v11254
        %v11256 = vsel %vm3133, %v11046, %v11255
        %v11257 = vsel %vm3135, %v11061, %v11256
        %v11258 = vsel %vm3137, %v11076, %v11257
        %v11259 = vsel %vm3139, %v11091, %v11258
        %v11260 = vsel %vm3127, %v11002, %v10987
        %v11261 = vsel %vm3129, %v11017, %v11260
        %v11262 = vsel %vm3131, %v11032, %v11261
        %v11263 = vsel %vm3133, %v11047, %v11262
        %v11264 = vsel %vm3135, %v11062, %v11263
        %v11265 = vsel %vm3137, %v11077, %v11264
        %v11266 = vsel %vm3139, %v11092, %v11265
        %v11267 = vsel %vm3127, %v11003, %v10988
        %v11268 = vsel %vm3129, %v11018, %v11267
        %v11269 = vsel %vm3131, %v11033, %v11268
        %v11270 = vsel %vm3133, %v11048, %v11269
        %v11271 = vsel %vm3135, %v11063, %v11270
        %v11272 = vsel %vm3137, %v11078, %v11271
        %v11273 = vsel %vm3139, %v11093, %v11272
        %v11274 = vsel %vm3127, %v11004, %v10989
        %v11275 = vsel %vm3129, %v11019, %v11274
        %v11276 = vsel %vm3131, %v11034, %v11275
        %v11277 = vsel %vm3133, %v11049, %v11276
        %v11278 = vsel %vm3135, %v11064, %v11277
        %v11279 = vsel %vm3137, %v11079, %v11278
        %v11280 = vsel %vm3139, %v11094, %v11279
        %v11281 = vsel %vm3127, %v11005, %v10990
        %v11282 = vsel %vm3129, %v11020, %v11281
        %v11283 = vsel %vm3131, %v11035, %v11282
        %v11284 = vsel %vm3133, %v11050, %v11283
        %v11285 = vsel %vm3135, %v11065, %v11284
        %v11286 = vsel %vm3137, %v11080, %v11285
        %v11287 = vsel %vm3139, %v11095, %v11286
        %v11288 = vsel %vm3127, %v11006, %v10991
        %v11289 = vsel %vm3129, %v11021, %v11288
        %v11290 = vsel %vm3131, %v11036, %v11289
        %v11291 = vsel %vm3133, %v11051, %v11290
        %v11292 = vsel %vm3135, %v11066, %v11291
        %v11293 = vsel %vm3137, %v11081, %v11292
        %v11294 = vsel %vm3139, %v11096, %v11293
        %v11295 = vsel %vm3127, %v11007, %v10992
        %v11296 = vsel %vm3129, %v11022, %v11295
        %v11297 = vsel %vm3131, %v11037, %v11296
        %v11298 = vsel %vm3133, %v11052, %v11297
        %v11299 = vsel %vm3135, %v11067, %v11298
        %v11300 = vsel %vm3137, %v11082, %v11299
        %v11301 = vsel %vm3139, %v11097, %v11300
        %v11302 = vsel %vm3127, %v11008, %v10993
        %v11303 = vsel %vm3129, %v11023, %v11302
        %v11304 = vsel %vm3131, %v11038, %v11303
        %v11305 = vsel %vm3133, %v11053, %v11304
        %v11306 = vsel %vm3135, %v11068, %v11305
        %v11307 = vsel %vm3137, %v11083, %v11306
        %v11308 = vsel %vm3139, %v11098, %v11307
        %v11309 = vpack.c.b16 %v11210, %v11105
        %v11310 = vpack.c.b16 %v11217, %v11112
        %v11311 = vpack.c.b16 %v11224, %v11119
        %v11312 = vpack.c.b16 %v11231, %v11126
        %v11313 = vpack.c.b16 %v11238, %v11133
        %v11314 = vpack.c.b16 %v11245, %v11140
        %v11315 = vpack.c.b16 %v11252, %v11147
        %v11316 = vpack.c.b16 %v11259, %v11154
        %v11317 = vpack.c.b16 %v11266, %v11161
        %v11318 = vpack.c.b16 %v11273, %v11168
        %v11319 = vpack.c.b16 %v11280, %v11175
        %v11320 = vpack.c.b16 %v11287, %v11182
        %v11321 = vpack.c.b16 %v11294, %v11189
        %v11322 = vpack.c.b16 %v11301, %v11196
        %v11323 = vpack.c.b16 %v11308, %v11203
        %11339 = vst [vmem:[#allocation2 + $0x168] sm:$0xff] %v11309
        %11340 = vst [vmem:[#allocation2 + $0x170] sm:$0xff] %v11310
        %11341 = vst [vmem:[#allocation2 + $0x178] sm:$0xff] %v11311
        %11342 = vst [vmem:[#allocation2 + $0x180] sm:$0xff] %v11312
        %11343 = vst [vmem:[#allocation2 + $0x188] sm:$0xff] %v11313
        %11344 = vst [vmem:[#allocation2 + $0x190] sm:$0xff] %v11314
        %11345 = vst [vmem:[#allocation2 + $0x198] sm:$0xff] %v11315
        %11346 = vst [vmem:[#allocation2 + $0x1a0] sm:$0xff] %v11316
        %11347 = vst [vmem:[#allocation2 + $0x1a8] sm:$0xff] %v11317
        %11348 = vst [vmem:[#allocation2 + $0x1b0] sm:$0xff] %v11318
        %11349 = vst [vmem:[#allocation2 + $0x1b8] sm:$0xff] %v11319
        %11350 = vst [vmem:[#allocation2 + $0x1c0] sm:$0xff] %v11320
        %11351 = vst [vmem:[#allocation2 + $0x1c8] sm:$0xff] %v11321
        %11352 = vst [vmem:[#allocation2 + $0x1d0] sm:$0xff] %v11322
        %11353 = vst [vmem:[#allocation2 + $0x1d8] sm:$0xff] %v11323
        %v11354 = vld [vmem:[#allocation3] sm:$0xf]
        %v11355 = vld [vmem:[#allocation3 + $0x4] sm:$0xf]
        %v11356 = vld [vmem:[#allocation2] sm:$0xff]
        %v11357 = vld [vmem:[#allocation2 + $0x8] sm:$0xff]
        %v11358 = vld [vmem:[#allocation2 + $0x10] sm:$0xff]
        %v11359 = vld [vmem:[#allocation2 + $0x18] sm:$0xff]
        %v11360 = vld [vmem:[#allocation2 + $0x20] sm:$0xff]
        %v11361 = vld [vmem:[#allocation2 + $0x28] sm:$0xff]
        %v11362 = vld [vmem:[#allocation2 + $0x30] sm:$0xff]
        %v11363 = vld [vmem:[#allocation2 + $0x38] sm:$0xff]
        %v11364 = vld [vmem:[#allocation2 + $0x40] sm:$0xff]
        %v11365 = vld [vmem:[#allocation2 + $0x48] sm:$0xff]
        %v11366 = vld [vmem:[#allocation2 + $0x50] sm:$0xff]
        %v11367 = vld [vmem:[#allocation2 + $0x58] sm:$0xff]
        %v11368 = vld [vmem:[#allocation2 + $0x60] sm:$0xff]
        %v11369 = vld [vmem:[#allocation2 + $0x68] sm:$0xff]
        %v11370 = vld [vmem:[#allocation2 + $0x70] sm:$0xff]
        %v11371 = vld [vmem:[#allocation2 + $0x78] sm:$0xff]
        %v11372 = vld [vmem:[#allocation2 + $0x80] sm:$0xff]
        %v11373 = vld [vmem:[#allocation2 + $0x88] sm:$0xff]
        %v11374 = vld [vmem:[#allocation2 + $0x90] sm:$0xff]
        %v11375 = vld [vmem:[#allocation2 + $0x98] sm:$0xff]
        %v11376 = vld [vmem:[#allocation2 + $0xa0] sm:$0xff]
        %v11377 = vld [vmem:[#allocation2 + $0xa8] sm:$0xff]
        %v11378 = vld [vmem:[#allocation2 + $0xb0] sm:$0xff]
        %v11379 = vld [vmem:[#allocation2 + $0xb8] sm:$0xff]
        %v11380 = vld [vmem:[#allocation2 + $0xc0] sm:$0xff]
        %v11381 = vld [vmem:[#allocation2 + $0xc8] sm:$0xff]
        %v11382 = vld [vmem:[#allocation2 + $0xd0] sm:$0xff]
        %v11383 = vld [vmem:[#allocation2 + $0xd8] sm:$0xff]
        %v11384 = vld [vmem:[#allocation2 + $0xe0] sm:$0xff]
        %v11385 = vld [vmem:[#allocation2 + $0xe8] sm:$0xff]
        %v11386 = vld [vmem:[#allocation2 + $0xf0] sm:$0xff]
        %v11387 = vld [vmem:[#allocation2 + $0xf8] sm:$0xff]
        %v11388 = vld [vmem:[#allocation2 + $0x100] sm:$0xff]
        %v11389 = vld [vmem:[#allocation2 + $0x108] sm:$0xff]
        %v11390 = vld [vmem:[#allocation2 + $0x110] sm:$0xff]
        %v11391 = vld [vmem:[#allocation2 + $0x118] sm:$0xff]
        %v11392 = vld [vmem:[#allocation2 + $0x120] sm:$0xff]
        %v11393 = vld [vmem:[#allocation2 + $0x128] sm:$0xff]
        %v11394 = vld [vmem:[#allocation2 + $0x130] sm:$0xff]
        %v11395 = vld [vmem:[#allocation2 + $0x138] sm:$0xff]
        %v11396 = vld [vmem:[#allocation2 + $0x140] sm:$0xff]
        %v11397 = vld [vmem:[#allocation2 + $0x148] sm:$0xff]
        %v11398 = vld [vmem:[#allocation2 + $0x150] sm:$0xff]
        %v11399 = vld [vmem:[#allocation2 + $0x158] sm:$0xff]
        %v11400 = vld [vmem:[#allocation2 + $0x160] sm:$0xff]
        %v11401 = vld [vmem:[#allocation2 + $0x168] sm:$0xff]
        %v11402 = vld [vmem:[#allocation2 + $0x170] sm:$0xff]
        %v11403 = vld [vmem:[#allocation2 + $0x178] sm:$0xff]
        %v11404 = vld [vmem:[#allocation2 + $0x180] sm:$0xff]
        %v11405 = vld [vmem:[#allocation2 + $0x188] sm:$0xff]
        %v11406 = vld [vmem:[#allocation2 + $0x190] sm:$0xff]
        %v11407 = vld [vmem:[#allocation2 + $0x198] sm:$0xff]
        %v11408 = vld [vmem:[#allocation2 + $0x1a0] sm:$0xff]
        %v11409 = vld [vmem:[#allocation2 + $0x1a8] sm:$0xff]
        %v11410 = vld [vmem:[#allocation2 + $0x1b0] sm:$0xff]
        %v11411 = vld [vmem:[#allocation2 + $0x1b8] sm:$0xff]
        %v11412 = vld [vmem:[#allocation2 + $0x1c0] sm:$0xff]
        %v11413 = vld [vmem:[#allocation2 + $0x1c8] sm:$0xff]
        %v11414 = vld [vmem:[#allocation2 + $0x1d0] sm:$0xff]
        %v11415 = vld [vmem:[#allocation2 + $0x1d8] sm:$0xff]
        %v11418 = vunpack.c.l.b16 %v11354
        %v11419 = vunpack.c.l.b16 %v11355
        %v11420 = vpack.c.b16 %v11419, %v11418
        %vm11421 = vcmask 523264
        %v11423 = vsel %vm11421, %v11420, 0
        %11425 = vmatprep.subr.bf16.mxu0 %v11357
        %11426 = vmatpush1.bf16.msra.mxu0 %v11356
        %11427 = vmatprep.subr.bf16.mxu0 %v11372
        %11428 = vmatpush1.bf16.msra.mxu0 %v11371
        %11429 = vmatprep.subr.bf16.mxu0 %v11387
        %11430 = vmatpush1.bf16.msra.mxu0 %v11386
        %11431 = vmatprep.subr.bf16.mxu0 %v11402
        %11432 = vmatpush1.bf16.msra.mxu0 %v11401
        %11433 = vmatprep.subr.bf16.mxu0 0
        %11434 = vmatpush1.bf16.msra.mxu0 0
        %11435 = vmatprep.subr.bf16.mxu0 0
        %11436 = vmatpush1.bf16.msra.mxu0 0
        %11437 = vmatprep.subr.bf16.mxu0 0
        %11438 = vmatpush1.bf16.msra.mxu0 0
        %11439 = vmatprep.subr.bf16.mxu0 0
        %11440 = vmatpush1.bf16.msra.mxu0 0
        %11441 = vmatprep.subr.bf16.mxu0 0
        %11442 = vmatpush1.bf16.msra.mxu0 0
        %11443 = vmatprep.subr.bf16.mxu0 0
        %11444 = vmatpush1.bf16.msra.mxu0 0
        %11445 = vmatprep.subr.bf16.mxu0 0
        %11446 = vmatpush1.bf16.msra.mxu0 0
        %11447 = vmatprep.subr.bf16.mxu0 0
        %11448 = vmatpush1.bf16.msra.mxu0 0
        %11449 = vmatprep.subr.bf16.mxu0 0
        %11450 = vmatpush1.bf16.msra.mxu0 0
        %11451 = vmatprep.subr.bf16.mxu0 0
        %11452 = vmatpush1.bf16.msra.mxu0 0
        %11453 = vmatprep.subr.bf16.mxu0 0
        %11454 = vmatpush1.bf16.msra.mxu0 0
        %11455 = vmatprep.subr.bf16.mxu0 0
        %11456 = vmatpush1.bf16.msra.mxu0 0
        %11457 = vmatprep.mubr.bf16.mxu0 0
        %11458 = vmatmul.mubr.bf16.gmra.mrb[0].mxu0 %v11423
        %v11459 = vpop.f32.mrb[0].mxu0
        %v11460 = vadd.f32 0.0, %v11459
        %v11461 = vpop.f32.mrb[0].mxu0
        %v11462 = vadd.f32 0.0, %v11461
        %v11463 = vpop.f32.mrb[0].mxu0
        %v11464 = vadd.f32 0.0, %v11463
        %v11465 = vpop.f32.mrb[0].mxu0
        %v11466 = vadd.f32 0.0, %v11465
        %11467 = vdwg.mxu0
        %11468 = vmatprep.subr.bf16.mxu0 %v11359
        %11469 = vmatpush1.bf16.msra.mxu0 %v11358
        %11470 = vmatprep.subr.bf16.mxu0 %v11374
        %11471 = vmatpush1.bf16.msra.mxu0 %v11373
        %11472 = vmatprep.subr.bf16.mxu0 %v11389
        %11473 = vmatpush1.bf16.msra.mxu0 %v11388
        %11474 = vmatprep.subr.bf16.mxu0 %v11404
        %11475 = vmatpush1.bf16.msra.mxu0 %v11403
        %11476 = vmatprep.subr.bf16.mxu0 0
        %11477 = vmatpush1.bf16.msra.mxu0 0
        %11478 = vmatprep.subr.bf16.mxu0 0
        %11479 = vmatpush1.bf16.msra.mxu0 0
        %11480 = vmatprep.subr.bf16.mxu0 0
        %11481 = vmatpush1.bf16.msra.mxu0 0
        %11482 = vmatprep.subr.bf16.mxu0 0
        %11483 = vmatpush1.bf16.msra.mxu0 0
        %11484 = vmatprep.subr.bf16.mxu0 0
        %11485 = vmatpush1.bf16.msra.mxu0 0
        %11486 = vmatprep.subr.bf16.mxu0 0
        %11487 = vmatpush1.bf16.msra.mxu0 0
        %11488 = vmatprep.subr.bf16.mxu0 0
        %11489 = vmatpush1.bf16.msra.mxu0 0
        %11490 = vmatprep.subr.bf16.mxu0 0
        %11491 = vmatpush1.bf16.msra.mxu0 0
        %11492 = vmatprep.subr.bf16.mxu0 0
        %11493 = vmatpush1.bf16.msra.mxu0 0
        %11494 = vmatprep.subr.bf16.mxu0 0
        %11495 = vmatpush1.bf16.msra.mxu0 0
        %11496 = vmatprep.subr.bf16.mxu0 0
        %11497 = vmatpush1.bf16.msra.mxu0 0
        %11498 = vmatprep.subr.bf16.mxu0 0
        %11499 = vmatpush1.bf16.msra.mxu0 0
        %11500 = vmatprep.mubr.bf16.mxu0 0
        %11501 = vmatmul.mubr.bf16.gmra.mrb[0].mxu0 %v11423
        %v11502 = vpop.f32.mrb[0].mxu0
        %v11503 = vadd.f32 0.0, %v11502
        %v11504 = vpop.f32.mrb[0].mxu0
        %v11505 = vadd.f32 0.0, %v11504
        %v11506 = vpop.f32.mrb[0].mxu0
        %v11507 = vadd.f32 0.0, %v11506
        %v11508 = vpop.f32.mrb[0].mxu0
        %v11509 = vadd.f32 0.0, %v11508
        %11510 = vdwg.mxu0
        %11511 = vmatprep.subr.bf16.mxu0 %v11361
        %11512 = vmatpush1.bf16.msra.mxu0 %v11360
        %11513 = vmatprep.subr.bf16.mxu0 %v11376
        %11514 = vmatpush1.bf16.msra.mxu0 %v11375
        %11515 = vmatprep.subr.bf16.mxu0 %v11391
        %11516 = vmatpush1.bf16.msra.mxu0 %v11390
        %11517 = vmatprep.subr.bf16.mxu0 %v11406
        %11518 = vmatpush1.bf16.msra.mxu0 %v11405
        %11519 = vmatprep.subr.bf16.mxu0 0
        %11520 = vmatpush1.bf16.msra.mxu0 0
        %11521 = vmatprep.subr.bf16.mxu0 0
        %11522 = vmatpush1.bf16.msra.mxu0 0
        %11523 = vmatprep.subr.bf16.mxu0 0
        %11524 = vmatpush1.bf16.msra.mxu0 0
        %11525 = vmatprep.subr.bf16.mxu0 0
        %11526 = vmatpush1.bf16.msra.mxu0 0
        %11527 = vmatprep.subr.bf16.mxu0 0
        %11528 = vmatpush1.bf16.msra.mxu0 0
        %11529 = vmatprep.subr.bf16.mxu0 0
        %11530 = vmatpush1.bf16.msra.mxu0 0
        %11531 = vmatprep.subr.bf16.mxu0 0
        %11532 = vmatpush1.bf16.msra.mxu0 0
        %11533 = vmatprep.subr.bf16.mxu0 0
        %11534 = vmatpush1.bf16.msra.mxu0 0
        %11535 = vmatprep.subr.bf16.mxu0 0
        %11536 = vmatpush1.bf16.msra.mxu0 0
        %11537 = vmatprep.subr.bf16.mxu0 0
        %11538 = vmatpush1.bf16.msra.mxu0 0
        %11539 = vmatprep.subr.bf16.mxu0 0
        %11540 = vmatpush1.bf16.msra.mxu0 0
        %11541 = vmatprep.subr.bf16.mxu0 0
        %11542 = vmatpush1.bf16.msra.mxu0 0
        %11543 = vmatprep.mubr.bf16.mxu0 0
        %11544 = vmatmul.mubr.bf16.gmra.mrb[0].mxu0 %v11423
        %v11545 = vpop.f32.mrb[0].mxu0
        %v11546 = vadd.f32 0.0, %v11545
        %v11547 = vpop.f32.mrb[0].mxu0
        %v11548 = vadd.f32 0.0, %v11547
        %v11549 = vpop.f32.mrb[0].mxu0
        %v11550 = vadd.f32 0.0, %v11549
        %v11551 = vpop.f32.mrb[0].mxu0
        %v11552 = vadd.f32 0.0, %v11551
        %11553 = vdwg.mxu0
        %11554 = vmatprep.subr.bf16.mxu0 %v11363
        %11555 = vmatpush1.bf16.msra.mxu0 %v11362
        %11556 = vmatprep.subr.bf16.mxu0 %v11378
        %11557 = vmatpush1.bf16.msra.mxu0 %v11377
        %11558 = vmatprep.subr.bf16.mxu0 %v11393
        %11559 = vmatpush1.bf16.msra.mxu0 %v11392
        %11560 = vmatprep.subr.bf16.mxu0 %v11408
        %11561 = vmatpush1.bf16.msra.mxu0 %v11407
        %11562 = vmatprep.subr.bf16.mxu0 0
        %11563 = vmatpush1.bf16.msra.mxu0 0
        %11564 = vmatprep.subr.bf16.mxu0 0
        %11565 = vmatpush1.bf16.msra.mxu0 0
        %11566 = vmatprep.subr.bf16.mxu0 0
        %11567 = vmatpush1.bf16.msra.mxu0 0
        %11568 = vmatprep.subr.bf16.mxu0 0
        %11569 = vmatpush1.bf16.msra.mxu0 0
        %11570 = vmatprep.subr.bf16.mxu0 0
        %11571 = vmatpush1.bf16.msra.mxu0 0
        %11572 = vmatprep.subr.bf16.mxu0 0
        %11573 = vmatpush1.bf16.msra.mxu0 0
        %11574 = vmatprep.subr.bf16.mxu0 0
        %11575 = vmatpush1.bf16.msra.mxu0 0
        %11576 = vmatprep.subr.bf16.mxu0 0
        %11577 = vmatpush1.bf16.msra.mxu0 0
        %11578 = vmatprep.subr.bf16.mxu0 0
        %11579 = vmatpush1.bf16.msra.mxu0 0
        %11580 = vmatprep.subr.bf16.mxu0 0
        %11581 = vmatpush1.bf16.msra.mxu0 0
        %11582 = vmatprep.subr.bf16.mxu0 0
        %11583 = vmatpush1.bf16.msra.mxu0 0
        %11584 = vmatprep.subr.bf16.mxu0 0
        %11585 = vmatpush1.bf16.msra.mxu0 0
        %11586 = vmatprep.mubr.bf16.mxu0 0
        %11587 = vmatmul.mubr.bf16.gmra.mrb[0].mxu0 %v11423
        %v11588 = vpop.f32.mrb[0].mxu0
        %v11589 = vadd.f32 0.0, %v11588
        %v11590 = vpop.f32.mrb[0].mxu0
        %v11591 = vadd.f32 0.0, %v11590
        %v11592 = vpop.f32.mrb[0].mxu0
        %v11593 = vadd.f32 0.0, %v11592
        %v11594 = vpop.f32.mrb[0].mxu0
        %v11595 = vadd.f32 0.0, %v11594
        %11596 = vdwg.mxu0
        %11597 = vmatprep.subr.bf16.mxu0 %v11365
        %11598 = vmatpush1.bf16.msra.mxu0 %v11364
        %11599 = vmatprep.subr.bf16.mxu0 %v11380
        %11600 = vmatpush1.bf16.msra.mxu0 %v11379
        %11601 = vmatprep.subr.bf16.mxu0 %v11395
        %11602 = vmatpush1.bf16.msra.mxu0 %v11394
        %11603 = vmatprep.subr.bf16.mxu0 %v11410
        %11604 = vmatpush1.bf16.msra.mxu0 %v11409
        %11605 = vmatprep.subr.bf16.mxu0 0
        %11606 = vmatpush1.bf16.msra.mxu0 0
        %11607 = vmatprep.subr.bf16.mxu0 0
        %11608 = vmatpush1.bf16.msra.mxu0 0
        %11609 = vmatprep.subr.bf16.mxu0 0
        %11610 = vmatpush1.bf16.msra.mxu0 0
        %11611 = vmatprep.subr.bf16.mxu0 0
        %11612 = vmatpush1.bf16.msra.mxu0 0
        %11613 = vmatprep.subr.bf16.mxu0 0
        %11614 = vmatpush1.bf16.msra.mxu0 0
        %11615 = vmatprep.subr.bf16.mxu0 0
        %11616 = vmatpush1.bf16.msra.mxu0 0
        %11617 = vmatprep.subr.bf16.mxu0 0
        %11618 = vmatpush1.bf16.msra.mxu0 0
        %11619 = vmatprep.subr.bf16.mxu0 0
        %11620 = vmatpush1.bf16.msra.mxu0 0
        %11621 = vmatprep.subr.bf16.mxu0 0
        %11622 = vmatpush1.bf16.msra.mxu0 0
        %11623 = vmatprep.subr.bf16.mxu0 0
        %11624 = vmatpush1.bf16.msra.mxu0 0
        %11625 = vmatprep.subr.bf16.mxu0 0
        %11626 = vmatpush1.bf16.msra.mxu0 0
        %11627 = vmatprep.subr.bf16.mxu0 0
        %11628 = vmatpush1.bf16.msra.mxu0 0
        %11629 = vmatprep.mubr.bf16.mxu0 0
        %11630 = vmatmul.mubr.bf16.gmra.mrb[0].mxu0 %v11423
        %v11631 = vpop.f32.mrb[0].mxu0
        %v11632 = vadd.f32 0.0, %v11631
        %v11633 = vpop.f32.mrb[0].mxu0
        %v11634 = vadd.f32 0.0, %v11633
        %v11635 = vpop.f32.mrb[0].mxu0
        %v11636 = vadd.f32 0.0, %v11635
        %v11637 = vpop.f32.mrb[0].mxu0
        %v11638 = vadd.f32 0.0, %v11637
        %11639 = vdwg.mxu0
        %11640 = vmatprep.subr.bf16.mxu0 %v11367
        %11641 = vmatpush1.bf16.msra.mxu0 %v11366
        %11642 = vmatprep.subr.bf16.mxu0 %v11382
        %11643 = vmatpush1.bf16.msra.mxu0 %v11381
        %11644 = vmatprep.subr.bf16.mxu0 %v11397
        %11645 = vmatpush1.bf16.msra.mxu0 %v11396
        %11646 = vmatprep.subr.bf16.mxu0 %v11412
        %11647 = vmatpush1.bf16.msra.mxu0 %v11411
        %11648 = vmatprep.subr.bf16.mxu0 0
        %11649 = vmatpush1.bf16.msra.mxu0 0
        %11650 = vmatprep.subr.bf16.mxu0 0
        %11651 = vmatpush1.bf16.msra.mxu0 0
        %11652 = vmatprep.subr.bf16.mxu0 0
        %11653 = vmatpush1.bf16.msra.mxu0 0
        %11654 = vmatprep.subr.bf16.mxu0 0
        %11655 = vmatpush1.bf16.msra.mxu0 0
        %11656 = vmatprep.subr.bf16.mxu0 0
        %11657 = vmatpush1.bf16.msra.mxu0 0
        %11658 = vmatprep.subr.bf16.mxu0 0
        %11659 = vmatpush1.bf16.msra.mxu0 0
        %11660 = vmatprep.subr.bf16.mxu0 0
        %11661 = vmatpush1.bf16.msra.mxu0 0
        %11662 = vmatprep.subr.bf16.mxu0 0
        %11663 = vmatpush1.bf16.msra.mxu0 0
        %11664 = vmatprep.subr.bf16.mxu0 0
        %11665 = vmatpush1.bf16.msra.mxu0 0
        %11666 = vmatprep.subr.bf16.mxu0 0
        %11667 = vmatpush1.bf16.msra.mxu0 0
        %11668 = vmatprep.subr.bf16.mxu0 0
        %11669 = vmatpush1.bf16.msra.mxu0 0
        %11670 = vmatprep.subr.bf16.mxu0 0
        %11671 = vmatpush1.bf16.msra.mxu0 0
        %11672 = vmatprep.mubr.bf16.mxu0 0
        %11673 = vmatmul.mubr.bf16.gmra.mrb[0].mxu0 %v11423
        %v11674 = vpop.f32.mrb[0].mxu0
        %v11675 = vadd.f32 0.0, %v11674
        %v11676 = vpop.f32.mrb[0].mxu0
        %v11677 = vadd.f32 0.0, %v11676
        %v11678 = vpop.f32.mrb[0].mxu0
        %v11679 = vadd.f32 0.0, %v11678
        %v11680 = vpop.f32.mrb[0].mxu0
        %v11681 = vadd.f32 0.0, %v11680
        %11682 = vdwg.mxu0
        %11683 = vmatprep.subr.bf16.mxu0 %v11369
        %11684 = vmatpush1.bf16.msra.mxu0 %v11368
        %11685 = vmatprep.subr.bf16.mxu0 %v11384
        %11686 = vmatpush1.bf16.msra.mxu0 %v11383
        %11687 = vmatprep.subr.bf16.mxu0 %v11399
        %11688 = vmatpush1.bf16.msra.mxu0 %v11398
        %11689 = vmatprep.subr.bf16.mxu0 %v11414
        %11690 = vmatpush1.bf16.msra.mxu0 %v11413
        %11691 = vmatprep.subr.bf16.mxu0 0
        %11692 = vmatpush1.bf16.msra.mxu0 0
        %11693 = vmatprep.subr.bf16.mxu0 0
        %11694 = vmatpush1.bf16.msra.mxu0 0
        %11695 = vmatprep.subr.bf16.mxu0 0
        %11696 = vmatpush1.bf16.msra.mxu0 0
        %11697 = vmatprep.subr.bf16.mxu0 0
        %11698 = vmatpush1.bf16.msra.mxu0 0
        %11699 = vmatprep.subr.bf16.mxu0 0
        %11700 = vmatpush1.bf16.msra.mxu0 0
        %11701 = vmatprep.subr.bf16.mxu0 0
        %11702 = vmatpush1.bf16.msra.mxu0 0
        %11703 = vmatprep.subr.bf16.mxu0 0
        %11704 = vmatpush1.bf16.msra.mxu0 0
        %11705 = vmatprep.subr.bf16.mxu0 0
        %11706 = vmatpush1.bf16.msra.mxu0 0
        %11707 = vmatprep.subr.bf16.mxu0 0
        %11708 = vmatpush1.bf16.msra.mxu0 0
        %11709 = vmatprep.subr.bf16.mxu0 0
        %11710 = vmatpush1.bf16.msra.mxu0 0
        %11711 = vmatprep.subr.bf16.mxu0 0
        %11712 = vmatpush1.bf16.msra.mxu0 0
        %11713 = vmatprep.subr.bf16.mxu0 0
        %11714 = vmatpush1.bf16.msra.mxu0 0
        %11715 = vmatprep.mubr.bf16.mxu0 0
        %11716 = vmatmul.mubr.bf16.gmra.mrb[0].mxu0 %v11423
        %v11717 = vpop.f32.mrb[0].mxu0
        %v11718 = vadd.f32 0.0, %v11717
        %v11719 = vpop.f32.mrb[0].mxu0
        %v11720 = vadd.f32 0.0, %v11719
        %v11721 = vpop.f32.mrb[0].mxu0
        %v11722 = vadd.f32 0.0, %v11721
        %v11723 = vpop.f32.mrb[0].mxu0
        %v11724 = vadd.f32 0.0, %v11723
        %11725 = vdwg.mxu0
        %11726 = vmatprep.subr.bf16.mxu0 0
        %11727 = vmatpush1.bf16.msra.mxu0 %v11370
        %11728 = vmatprep.subr.bf16.mxu0 0
        %11729 = vmatpush1.bf16.msra.mxu0 %v11385
        %11730 = vmatprep.subr.bf16.mxu0 0
        %11731 = vmatpush1.bf16.msra.mxu0 %v11400
        %11732 = vmatprep.subr.bf16.mxu0 0
        %11733 = vmatpush1.bf16.msra.mxu0 %v11415
        %11734 = vmatprep.subr.bf16.mxu0 0
        %11735 = vmatpush1.bf16.msra.mxu0 0
        %11736 = vmatprep.subr.bf16.mxu0 0
        %11737 = vmatpush1.bf16.msra.mxu0 0
        %11738 = vmatprep.subr.bf16.mxu0 0
        %11739 = vmatpush1.bf16.msra.mxu0 0
        %11740 = vmatprep.subr.bf16.mxu0 0
        %11741 = vmatpush1.bf16.msra.mxu0 0
        %11742 = vmatprep.subr.bf16.mxu0 0
        %11743 = vmatpush1.bf16.msra.mxu0 0
        %11744 = vmatprep.subr.bf16.mxu0 0
        %11745 = vmatpush1.bf16.msra.mxu0 0
        %11746 = vmatprep.subr.bf16.mxu0 0
        %11747 = vmatpush1.bf16.msra.mxu0 0
        %11748 = vmatprep.subr.bf16.mxu0 0
        %11749 = vmatpush1.bf16.msra.mxu0 0
        %11750 = vmatprep.subr.bf16.mxu0 0
        %11751 = vmatpush1.bf16.msra.mxu0 0
        %11752 = vmatprep.subr.bf16.mxu0 0
        %11753 = vmatpush1.bf16.msra.mxu0 0
        %11754 = vmatprep.subr.bf16.mxu0 0
        %11755 = vmatpush1.bf16.msra.mxu0 0
        %11756 = vmatprep.subr.bf16.mxu0 0
        %11757 = vmatpush1.bf16.msra.mxu0 0
        %11758 = vmatprep.mubr.bf16.mxu0 0
        %11759 = vmatmul.mubr.bf16.gmra.mrb[0].mxu0 %v11423
        %v11760 = vpop.f32.mrb[0].mxu0
        %v11761 = vadd.f32 0.0, %v11760
        %v11762 = vpop.f32.mrb[0].mxu0
        %v11763 = vpop.f32.mrb[0].mxu0
        %v11764 = vadd.f32 0.0, %v11763
        %v11765 = vpop.f32.mrb[0].mxu0
        %11766 = vdwg.mxu0
        %11767 = vst [vmem:[%s262] sm:$0xff] %v11460
        %11768 = vst [vmem:[%s262 + $0x8] sm:$0xff] %v11462
        %11769 = vst [vmem:[%s262 + $0x10] sm:$0xff] %v11503
        %11770 = vst [vmem:[%s262 + $0x18] sm:$0xff] %v11505
        %11771 = vst [vmem:[%s262 + $0x20] sm:$0xff] %v11546
        %11772 = vst [vmem:[%s262 + $0x28] sm:$0xff] %v11548
        %11773 = vst [vmem:[%s262 + $0x30] sm:$0xff] %v11589
        %11774 = vst [vmem:[%s262 + $0x38] sm:$0xff] %v11591
        %11775 = vst [vmem:[%s262 + $0x40] sm:$0xff] %v11632
        %11776 = vst [vmem:[%s262 + $0x48] sm:$0xff] %v11634
        %11777 = vst [vmem:[%s262 + $0x50] sm:$0xff] %v11675
        %11778 = vst [vmem:[%s262 + $0x58] sm:$0xff] %v11677
        %11779 = vst [vmem:[%s262 + $0x60] sm:$0xff] %v11718
        %11780 = vst [vmem:[%s262 + $0x68] sm:$0xff] %v11720
        %11781 = vst [vmem:[%s262 + $0x70] sm:$0xff] %v11761
        %11782 = vst [vmem:[%s262 + $0x78] sm:$0xff] %v11464
        %11783 = vst [vmem:[%s262 + $0x80] sm:$0xff] %v11466
        %11784 = vst [vmem:[%s262 + $0x88] sm:$0xff] %v11507
        %11785 = vst [vmem:[%s262 + $0x90] sm:$0xff] %v11509
        %11786 = vst [vmem:[%s262 + $0x98] sm:$0xff] %v11550
        %11787 = vst [vmem:[%s262 + $0xa0] sm:$0xff] %v11552
        %11788 = vst [vmem:[%s262 + $0xa8] sm:$0xff] %v11593
        %11789 = vst [vmem:[%s262 + $0xb0] sm:$0xff] %v11595
        %11790 = vst [vmem:[%s262 + $0xb8] sm:$0xff] %v11636
        %11791 = vst [vmem:[%s262 + $0xc0] sm:$0xff] %v11638
        %11792 = vst [vmem:[%s262 + $0xc8] sm:$0xff] %v11679
        %11793 = vst [vmem:[%s262 + $0xd0] sm:$0xff] %v11681
        %11794 = vst [vmem:[%s262 + $0xd8] sm:$0xff] %v11722
        %11795 = vst [vmem:[%s262 + $0xe0] sm:$0xff] %v11724
        %11796 = vst [vmem:[%s262 + $0xe8] sm:$0xff] %v11764
        %s11797 = sand.u32 %s120, 1
        %s11798 = scalar_lea.sflag [#allocation5], %s11797
        %s11799 = sand.u32 %s120, 1
        %s11800 = smul.addr %s11799, 240
        %s11801 = scalar_lea.vmem [#allocation9], %s11800
        // Predicated region
        $region45: #{tpu_custom_call.1} parent=31 // pred_check
          %p11802 = pneg %p130
        $region46: #{tpu_custom_call.1} parent=31 // pred_check_branch
          %11804 = sbr.rel (%p11802) target = $region48
        $region47: #{tpu_custom_call.1} parent=31 // pred_region
          %s11805 = smul.u32 15, %s26
          %s11807 = ssub.s32 3840, 3840
          %11808 = vsyncadd %s11798, %s11807
          %s11809 = smul.addr %s25, 30
          %s11810 = sadd.s32 %s11805, %s11809
          %s11811 = smul.addr %s11810, 128
          %s11812 = scalar_lea.hbm %s3, %s11811
          %s11813 = sshll.u32 %s11801, 4
          %s11814 = int_to_ptr.vmem [resolvable:$true] %s11813
          %11819 = dma.vmem_to_hbm [thread:$0]  %s11814, 3840, %s11812, %s11798, 1920, 1920, 120
        $region48: #{tpu_custom_call.1} parent=31 // pred_fallthru
          _
      $region32: #{tpu_custom_call.1} parent=5 // pred_fallthru
        _
      %p11820 = scmp.le.s32.totalorder 2, %s16
      // Predicated region
      $region49: #{tpu_custom_call.1} parent=5 // pred_check
        %p11821 = pneg %p11820
      $region50: #{tpu_custom_call.1} parent=5 // pred_check_branch
        %11823 = sbr.rel (%p11821) target = $region52
      $region51: #{tpu_custom_call.1} parent=5 // pred_region
        %s11824 = ssub.s32 %s16, 2
        // Predicated region
        $region53: #{tpu_custom_call.1} parent=51 // pred_check
          %p11825 = pneg %p136
        $region54: #{tpu_custom_call.1} parent=51 // pred_check_branch
          %11827 = sbr.rel (%p11825) target = $region56
        $region55: #{tpu_custom_call.1} parent=51 // pred_region
          %s11828 = sand.u32 %s121, 1
          %s11829 = scalar_lea.sflag [#allocation5], %s11828
          %s11830 = sand.u32 %s121, 1
          %s11831 = smul.addr %s11830, 240
          %s11832 = scalar_lea.vmem [#allocation9], %s11831
          %11833 = dma.done %s11829, 3840
        $region56: #{tpu_custom_call.1} parent=51 // pred_fallthru
          _
      $region52: #{tpu_custom_call.1} parent=5 // pred_fallthru
        _
    $region6: #{tpu_custom_call.1} parent=1 // loop_footer
      %s20 = sadd.s32 1, %s16
    $region7: #{tpu_custom_call.1} parent=1 // loop_footer_branch
      %15 = sbr.rel target = $region3
    $region8: #{tpu_custom_call.1} parent=1 // loop_exit
      _
    %11834 = vsyncpa [#allocation4], 1
    %s11835 = scalar_lea.sflag [#allocation4], 1
    %11836 = vsyncpa %s11835, 1
    %11837 = vsyncpa [#allocation7], 1
    %s11838 = scalar_lea.sflag [#allocation7], 1
    %11839 = vsyncpa %s11838, 1
    %11840 = vsyncpa [#allocation5], 1
    %s11841 = scalar_lea.sflag [#allocation5], 1
    %11842 = vsyncpa %s11841, 1

</llo_original>
